<compile_context>
chip_gen: v7x
topology: tpu7x:2x2x1
jax: 0.10.0
libtpu: 0.0.40
codegen_flags: <defaults>
</compile_context>

<pallas_src>
import functools

import jax
import jax.numpy as jnp
from jax.experimental import pallas as pl
from jax.experimental.pallas import tpu as pltpu

_MAX_TBV = 1024                     # row (batch*node) tile upper bound
_VMEM_LIMIT = 32 * 1024 * 1024      # explicit scoped-VMEM budget (v5e/v6e/v7x safe)
# Activation STORAGE dtype between kernels.  f32 matches the PyTorch reference
# numerics.  On v6e/v7x, setting this to jnp.bfloat16 halves the HBM traffic of
# the (mem-bound) layer chain: it changes the pallas_call out_shape dtypes; the
# in-kernel compute/accumulation stays f32 (inputs are cast to f32 after load).
_ACT_DTYPE = jnp.float32


def _round_up(x, m):
    return (x + m - 1) // m * m


def _plan_bv(bv):
    """Pad batch*nodes rows to a multiple of 8 and pick one large row tile."""
    bvp8 = _round_up(max(bv, 1), 8)
    tbv = min(_MAX_TBV, bvp8)
    bvp = _round_up(bvp8, tbv)
    return bvp, tbv


def _cparams(ngrid):
    return pltpu.CompilerParams(
        dimension_semantics=("parallel",) * ngrid,
        vmem_limit_bytes=_VMEM_LIMIT)


# ----------------------------------------------------------------------------
# Kernel 1: fused bn_start + start_conv (single K<=8 MXU dot per tile).
# ----------------------------------------------------------------------------
def _start_kernel(x_ref, w_ref, b_ref, o_ref):
    x = x_ref[0].astype(jnp.float32)
    y = jnp.dot(x, w_ref[...], preferred_element_type=jnp.float32) + b_ref[...]
    o_ref[0] = y.astype(o_ref.dtype)


def start_conv_bn(x3, w_fold, b_fold, tbv):
    T0, BVp, Cinp = x3.shape
    C = w_fold.shape[1]
    n_bv = BVp // tbv
    return pl.pallas_call(
        _start_kernel,
        out_shape=jax.ShapeDtypeStruct((T0, BVp, C), _ACT_DTYPE),
        grid=(T0, n_bv),
        in_specs=[pl.BlockSpec((1, tbv, Cinp), lambda t, j: (t, j, 0)),
                  pl.BlockSpec((Cinp, C), lambda t, j: (0, 0)),
                  pl.BlockSpec((1, C), lambda t, j: (0, 0))],
        out_specs=pl.BlockSpec((1, tbv, C), lambda t, j: (t, j, 0)),
        compiler_params=_cparams(2),
    )(x3, w_fold, b_fold.reshape(1, C))


# ----------------------------------------------------------------------------
# Kernel 2: fused gated dilated conv.
#   * reads the SAME activation array twice (time blocks t and t+dilation) so
#     no [x(t)|x(t+d)] tensor is ever written to HBM,
#   * applies the previous layer's pending BatchNorm scale/shift,
#   * tanh(f)*sigmoid(g) + residual,
#   * emits masked per-tile BatchNorm partials (sum / sum-of-squares).
# ----------------------------------------------------------------------------
def _gated_kernel(x0_ref, x1_ref, sc_ref, sh_ref,
                  w0f_ref, w1f_ref, w0g_ref, w1g_ref, bf_ref, bg_ref,
                  o_ref, st_ref, *, bv_real, tbv):
    sc = sc_ref[...]
    sh = sh_ref[...]
    xn0 = x0_ref[0].astype(jnp.float32) * sc + sh     # BN of previous layer
    xn1 = x1_ref[0].astype(jnp.float32) * sc + sh     # t+d tap == residual
    f = (jnp.dot(xn0, w0f_ref[...], preferred_element_type=jnp.float32)
         + jnp.dot(xn1, w1f_ref[...], preferred_element_type=jnp.float32)
         + bf_ref[...])
    g = (jnp.dot(xn0, w0g_ref[...], preferred_element_type=jnp.float32)
         + jnp.dot(xn1, w1g_ref[...], preferred_element_type=jnp.float32)
         + bg_ref[...])
    out = jnp.tanh(f) * jax.nn.sigmoid(g) + xn1
    o_ref[0] = out.astype(o_ref.dtype)

    # masked per-tile BatchNorm partials: row 0 = sum, row 1 = sum of squares
    c = out.shape[1]
    rows = (jax.lax.broadcasted_iota(jnp.int32, (tbv, 1), 0)
            + pl.program_id(1) * tbv)
    om = jnp.where(rows < bv_real, out, 0.0)
    s = jnp.sum(om, axis=0, keepdims=True)
    ss = jnp.sum(om * om, axis=0, keepdims=True)
    st_ref[0, 0] = jnp.concatenate(
        [s, ss, jnp.zeros((6, c), jnp.float32)], axis=0)


def gated_layer(x_prev, scale, shift, w0f, w1f, w0g, w1g, bf, bg,
                dil, tbv, bv_real):
    T_in, BVp, C = x_prev.shape
    Tout = T_in - dil
    n_bv = BVp // tbv
    kern = functools.partial(_gated_kernel, bv_real=bv_real, tbv=tbv)
    act_spec = pl.BlockSpec((1, tbv, C), lambda t, j: (t, j, 0))
    tap_spec = pl.BlockSpec((1, tbv, C), lambda t, j: (t + dil, j, 0))
    vec_spec = pl.BlockSpec((1, C), lambda t, j: (0, 0))
    mat_spec = pl.BlockSpec((C, C), lambda t, j: (0, 0))
    return pl.pallas_call(
        kern,
        out_shape=(jax.ShapeDtypeStruct((Tout, BVp, C), _ACT_DTYPE),
                   jax.ShapeDtypeStruct((Tout, n_bv, 8, C), jnp.float32)),
        grid=(Tout, n_bv),
        in_specs=[act_spec, tap_spec, vec_spec, vec_spec,
                  mat_spec, mat_spec, mat_spec, mat_spec, vec_spec, vec_spec],
        out_specs=(act_spec,
                   pl.BlockSpec((1, 1, 8, C), lambda t, j: (t, j, 0, 0))),
        compiler_params=_cparams(2),
    )(x_prev, x_prev, scale, shift, w0f, w1f, w0g, w1g, bf, bg)


# ----------------------------------------------------------------------------
# Kernel 3: fused BN(x_i) -> skip convs (all layers summed) -> leaky_relu
#           -> end_conv_1 -> leaky_relu -> end_conv_2.
# The skip buffer never exists in HBM; output padded to 128 lanes.
# ----------------------------------------------------------------------------
def _final_kernel(*refs, n_layers):
    o_ref = refs[-1]
    xs = refs[0:n_layers]
    scs = refs[n_layers:2 * n_layers]
    shs = refs[2 * n_layers:3 * n_layers]
    wss = refs[3 * n_layers:4 * n_layers]
    bs_ref, we1_ref, be1_ref, we2_ref, be2_ref = refs[4 * n_layers:
                                                      4 * n_layers + 5]
    skip = bs_ref[...]
    for x_ref, sc_ref, sh_ref, ws_ref in zip(xs, scs, shs, wss):
        xn = x_ref[0].astype(jnp.float32) * sc_ref[...] + sh_ref[...]
        skip = skip + jnp.dot(xn, ws_ref[...],
                              preferred_element_type=jnp.float32)
    z = jnp.where(skip >= 0, skip, 0.01 * skip)                 # leaky_relu
    h = jnp.dot(z, we1_ref[...], preferred_element_type=jnp.float32) + be1_ref[...]
    h = jnp.where(h >= 0, h, 0.01 * h)
    o_ref[0] = (jnp.dot(h, we2_ref[...], preferred_element_type=jnp.float32)
                + be2_ref[...])


def final_skip_end(xs, scales, shifts, ws_list, bs_total,
                   we1, be1, we2p, be2p, T_final, tbv):
    n_layers = len(xs)
    _, BVp, C = xs[0].shape
    n_bv = BVp // tbv
    Cskip = ws_list[0].shape[1]
    Cend = we1.shape[1]
    No = we2p.shape[1]

    def _shifted_spec(off):
        return pl.BlockSpec((1, tbv, C), lambda t, j: (t + off, j, 0))

    in_specs = [_shifted_spec(x.shape[0] - T_final) for x in xs]
    vecC = pl.BlockSpec((1, C), lambda t, j: (0, 0))
    in_specs += [vecC] * n_layers                                    # scales
    in_specs += [vecC] * n_layers                                    # shifts
    in_specs += [pl.BlockSpec((C, Cskip), lambda t, j: (0, 0))] * n_layers
    in_specs += [pl.BlockSpec((1, Cskip), lambda t, j: (0, 0)),
                 pl.BlockSpec((Cskip, Cend), lambda t, j: (0, 0)),
                 pl.BlockSpec((1, Cend), lambda t, j: (0, 0)),
                 pl.BlockSpec((Cend, No), lambda t, j: (0, 0)),
                 pl.BlockSpec((1, No), lambda t, j: (0, 0))]
    kern = functools.partial(_final_kernel, n_layers=n_layers)
    return pl.pallas_call(
        kern,
        out_shape=jax.ShapeDtypeStruct((T_final, BVp, No), jnp.float32),
        grid=(T_final, n_bv),
        in_specs=in_specs,
        out_specs=pl.BlockSpec((1, tbv, No), lambda t, j: (t, j, 0)),
        compiler_params=_cparams(2),
    )(*xs, *scales, *shifts, *ws_list, bs_total, we1, be1, we2p, be2p)


# ----------------------------------------------------------------------------
# Kernel 4: adaptive adjacency softmax(relu(nodevec1 @ nodevec2), dim=1),
# row-tiled, output padded to 128 lanes (padded columns masked before softmax).
# ----------------------------------------------------------------------------
def _adp_kernel(nv1_ref, nv2_ref, o_ref, *, v_real):
    a = jnp.dot(nv1_ref[...], nv2_ref[...], preferred_element_type=jnp.float32)
    a = jnp.maximum(a, 0.0)
    cols = jax.lax.broadcasted_iota(jnp.int32, a.shape, 1)
    a = jnp.where(cols < v_real, a, -jnp.inf)
    m = jnp.max(a, axis=1, keepdims=True)
    e = jnp.exp(a - m)
    o_ref[...] = e / jnp.sum(e, axis=1, keepdims=True)


def pallas_adaptive_adj(nv1, nv2):
    V, K = nv1.shape
    Vr8 = _round_up(V, 8)
    tr = min(512, Vr8)
    Vrows = _round_up(Vr8, tr)
    Vcols = _round_up(V, 128)
    nv1p = jnp.pad(nv1, ((0, Vrows - V), (0, 0)))
    nv2p = jnp.pad(nv2, ((0, 0), (0, Vcols - V)))
    out = pl.pallas_call(
        functools.partial(_adp_kernel, v_real=V),
        out_shape=jax.ShapeDtypeStruct((Vrows, Vcols), jnp.float32),
        grid=(Vrows // tr,),
        in_specs=[pl.BlockSpec((tr, K), lambda i: (i, 0)),
                  pl.BlockSpec((K, Vcols), lambda i: (0, 0))],
        out_specs=pl.BlockSpec((tr, Vcols), lambda i: (i, 0)),
        compiler_params=_cparams(1),
    )(nv1p, nv2p)
    return out[:V, :V]


# ----------------------------------------------------------------------------
# HIDTA forward (well-defined data path)
# ----------------------------------------------------------------------------
def hidta_forward(params, x_in, *, blocks=3, layers=1, receptive_field=1,
                  dilation=2, eps=1e-5):
    B, Cin, V, T0 = x_in.shape
    if T0 < receptive_field:
        x_in = jnp.pad(x_in, ((0, 0), (0, 0), (0, 0),
                              (receptive_field - T0, 0)))
        T0 = receptive_field

    # ---- pre-loop graph tensor algebra (aux; downstream consumers use empty
    #      ModuleLists / external util code -> untranslatable) ----
    adp = pallas_adaptive_adj(params["nodevec1"], params["nodevec2"])
    edge_node_H = params["H_T_new"] * (params["edge_node_vec1"]
                                       @ params["edge_node_vec2"])
    H_a_ = params["H_a"] * (params["node_edge_vec1"] @ params["node_edge_vec2"])
    H_b_ = params["H_b"] * (params["node_edge_vec1"] @ params["node_edge_vec2"])
    G0G1_fwd = params["G0_all"] @ jnp.diag(params["w_edge_fwd"]) @ params["G1_all"]
    G0G1_bwd = params["G0_all"] @ jnp.diag(params["w_edge_bwd"]) @ params["G1_all"]
    # TODO(synk): feature_node_to_edge / SAt_* / hgconv_edge_At_* / dgconv /
    # gconv_dgcn_w / dhgconv / bn_g / bn_hg / fusion_edge_node reference
    # nn.ModuleLists never populated in __init__ plus external `util` code, so
    # the reference forward itself cannot execute them; not translated.

    # ---- bn_start (affine=False) folded into start_conv ----
    mean0 = jnp.mean(x_in, axis=(0, 2, 3))
    var0 = jnp.var(x_in, axis=(0, 2, 3))
    inv0 = 1.0 / jnp.sqrt(var0 + eps)
    w_start = params["start_w"]                    # (Cres, Cin)
    w_fold = (w_start * inv0[None, :]).T           # (Cin, Cres)
    b_fold = params["start_b"] - (w_start * (mean0 * inv0)[None, :]).sum(axis=1)
    Cres = w_start.shape[0]

    # ---- single entry layout change: NCHW -> time-major (T, B*V, C) ----
    BV = B * V
    BVp, tbv = _plan_bv(BV)
    Cinp = _round_up(Cin, 8)
    x_tm = jnp.transpose(x_in, (3, 0, 2, 1)).reshape(T0, BV, Cin)
    x_tm = jnp.pad(x_tm, ((0, 0), (0, BVp - BV), (0, Cinp - Cin)))
    w_fold_p = jnp.pad(w_fold, ((0, Cinp - Cin), (0, 0)))
    x_cur = start_conv_bn(x_tm, w_fold_p, b_fold, tbv)     # (T0, BVp, Cres)

    n_layers = blocks * layers
    T_final = T0 - dilation * n_layers
    assert T_final >= 1, "input sequence too short for the dilated stack"

    # pending per-channel BatchNorm affine of the previous layer
    scale = jnp.ones((1, Cres), jnp.float32)
    shift = jnp.zeros((1, Cres), jnp.float32)
    xs, scs, shs = [], [], []
    T = T0
    for i in range(n_layers):
        wf = params["filter_w"][i]                 # (Cdil, Cres, 2)
        wg = params["gate_w"][i]
        Cdil = wf.shape[0]
        assert Cdil == Cres                        # residual add requires this
        x_cur, stats = gated_layer(
            x_cur, scale, shift,
            wf[:, :, 0].T, wf[:, :, 1].T, wg[:, :, 0].T, wg[:, :, 1].T,
            params["filter_b"][i].reshape(1, Cdil),
            params["gate_b"][i].reshape(1, Cdil),
            dilation, tbv, BV)
        T -= dilation
        # finish BatchNorm (training mode, biased var) from in-kernel partials
        n_real = BV * T
        s = jnp.sum(stats[:, :, 0, :], axis=(0, 1))
        ss = jnp.sum(stats[:, :, 1, :], axis=(0, 1))
        mean = s / n_real
        var = jnp.maximum(ss / n_real - mean * mean, 0.0)
        inv = 1.0 / jnp.sqrt(var + eps)
        scale = (params["bn_gamma"][i] * inv).reshape(1, Cdil)
        shift = (params["bn_beta"][i]
                 - mean * params["bn_gamma"][i] * inv).reshape(1, Cdil)
        xs.append(x_cur)
        scs.append(scale)
        shs.append(shift)

    # ---- fused skip convs + leaky_relu -> end_conv_1 -> leaky_relu -> end_conv_2
    Cskip = params["skip_w"][0].shape[0]
    Cend = params["end1_w"].shape[0]
    out_dim = params["end2_w"].shape[0]
    No = _round_up(out_dim, 128)
    ws_list = [params["skip_w"][i].T for i in range(n_layers)]
    bs_total = jnp.sum(jnp.stack(params["skip_b"]), axis=0).reshape(1, Cskip)
    we2p = jnp.pad(params["end2_w"].T, ((0, 0), (0, No - out_dim)))
    be2p = jnp.pad(params["end2_b"], (0, No - out_dim)).reshape(1, No)
    y = final_skip_end(xs, scs, shs, ws_list, bs_total,
                       params["end1_w"].T, params["end1_b"].reshape(1, Cend),
                       we2p, be2p, T_final, tbv)

    # ---- single exit layout change back to NCHW ----
    y = y[:, :BV, :out_dim].reshape(T_final, B, V, out_dim)
    y = jnp.transpose(y, (1, 3, 2, 0))
    return y, (adp, edge_node_H, H_a_, H_b_, G0G1_fwd, G0G1_bwd)


# ----------------------------------------------------------------------------
# Pure-JAX reference of the same data path (used only for the self-check)
# ----------------------------------------------------------------------------
def reference_forward(params, x_in, *, blocks=3, layers=1, dilation=2, eps=1e-5):
    mean0 = jnp.mean(x_in, axis=(0, 2, 3), keepdims=True)
    var0 = jnp.var(x_in, axis=(0, 2, 3), keepdims=True)
    x = (x_in - mean0) / jnp.sqrt(var0 + eps)
    x = (jnp.einsum('bcvt,oc->bovt', x, params["start_w"])
         + params["start_b"][None, :, None, None])
    n_layers = blocks * layers
    T_final = x_in.shape[3] - dilation * n_layers
    skip = 0.0
    for i in range(n_layers):
        res = x
        wf, wg = params["filter_w"][i], params["gate_w"][i]
        x0, x1 = res[..., :-dilation], res[..., dilation:]
        f = (jnp.einsum('bcvt,oc->bovt', x0, wf[:, :, 0])
             + jnp.einsum('bcvt,oc->bovt', x1, wf[:, :, 1])
             + params["filter_b"][i][None, :, None, None])
        g = (jnp.einsum('bcvt,oc->bovt', x0, wg[:, :, 0])
             + jnp.einsum('bcvt,oc->bovt', x1, wg[:, :, 1])
             + params["gate_b"][i][None, :, None, None])
        x = jnp.tanh(f) * jax.nn.sigmoid(g) + x1
        mean = jnp.mean(x, axis=(0, 2, 3), keepdims=True)
        var = jnp.var(x, axis=(0, 2, 3), keepdims=True)
        x = ((x - mean) / jnp.sqrt(var + eps)
             * params["bn_gamma"][i][None, :, None, None]
             + params["bn_beta"][i][None, :, None, None])
        s = (jnp.einsum('bcvt,oc->bovt', x, params["skip_w"][i])
             + params["skip_b"][i][None, :, None, None])
        skip = skip + s[..., -T_final:]
    z = jnp.where(skip >= 0, skip, 0.01 * skip)
    h = (jnp.einsum('bcvt,oc->bovt', z, params["end1_w"])
         + params["end1_b"][None, :, None, None])
    h = jnp.where(h >= 0, h, 0.01 * h)
    return (jnp.einsum('bcvt,oc->bovt', h, params["end2_w"])
            + params["end2_b"][None, :, None, None])


# ----------------------------------------------------------------------------
# Deterministic parameter construction
# ----------------------------------------------------------------------------
def make_params(key, *, in_dim, num_nodes, n_edges, residual_channels=40,
                dilation_channels=40, skip_channels=320, end_channels=640,
                out_dim=12, blocks=3, layers=1):
    ks = iter(jax.random.split(key, 64))
    nrm = lambda shape, scale=0.1: (scale * jax.random.normal(next(ks), shape)
                                    ).astype(jnp.float32)
    p = {
        "start_w": nrm((residual_channels, in_dim)),
        "start_b": nrm((residual_channels,)),
        "end1_w": nrm((end_channels, skip_channels)),
        "end1_b": nrm((end_channels,)),
        "end2_w": nrm((out_dim, end_channels)),
        "end2_b": nrm((out_dim,)),
        "nodevec1": nrm((num_nodes, 10), 1.0),
        "nodevec2": nrm((10, num_nodes), 1.0),
        "edge_node_vec1": nrm((n_edges, 10), 1.0),
        "edge_node_vec2": nrm((10, num_nodes), 1.0),
        "node_edge_vec1": nrm((num_nodes, 10), 1.0),
        "node_edge_vec2": nrm((10, n_edges), 1.0),
        "w_edge_fwd": nrm((n_edges,), 1.0),
        "w_edge_bwd": nrm((n_edges,), 1.0),
        "H_a": nrm((num_nodes, n_edges), 1.0),
        "H_b": nrm((num_nodes, n_edges), 1.0),
        "H_T_new": nrm((n_edges, num_nodes), 1.0),
        "G0_all": nrm((n_edges, n_edges), 1.0),
        "G1_all": nrm((n_edges, n_edges), 1.0),
        "filter_w": [], "filter_b": [], "gate_w": [], "gate_b": [],
        "skip_w": [], "skip_b": [], "bn_gamma": [], "bn_beta": [],
    }
    for _ in range(blocks * layers):
        p["filter_w"].append(nrm((dilation_channels, residual_channels, 2)))
        p["filter_b"].append(nrm((dilation_channels,)))
        p["gate_w"].append(nrm((dilation_channels, residual_channels, 2)))
        p["gate_b"].append(nrm((dilation_channels,)))
        p["skip_w"].append(nrm((skip_channels, dilation_channels)))
        p["skip_b"].append(nrm((skip_channels,)))
        p["bn_gamma"].append(jnp.ones((residual_channels,), jnp.float32))
        p["bn_beta"].append(jnp.zeros((residual_channels,), jnp.float32))
    return p


if __name__ == "__main__":
    key = jax.random.PRNGKey(0)
    k_in, k_par = jax.random.split(key)

    # NCHW = (batch, in_dim, num_nodes, time) — small shapes consistent with
    # the module; num_nodes=9 exercises the row- and lane-padding/mask paths.
    B, in_dim, num_nodes, T = 2, 1, 9, 8
    n_edges = 12

    x = jax.random.normal(k_in, (B, in_dim, num_nodes, T), dtype=jnp.float32)
    params = make_params(k_par, in_dim=in_dim, num_nodes=num_nodes,
                         n_edges=n_edges)

    fwd = jax.jit(hidta_forward)
    out, aux = fwd(params, x)
    out = jax.block_until_ready(out)
    _ = jax.block_until_ready(aux)

    assert out.shape == (B, 12, num_nodes, T - 2 * 3)   # out_dim=12, 3 layers
    assert bool(jnp.all(jnp.isfinite(out)))

    # self-check against a pure-JAX reference of the same data path
    ref = reference_forward(params, x)
    assert out.shape == ref.shape
    assert bool(jnp.allclose(out, ref, rtol=5e-2, atol=5e-2)), \
        f"mismatch vs reference: {float(jnp.max(jnp.abs(out - ref)))}"
    ref_adp = jax.nn.softmax(
        jax.nn.relu(params["nodevec1"] @ params["nodevec2"]), axis=1)
    assert bool(jnp.allclose(aux[0], ref_adp, rtol=5e-2, atol=5e-2))

    print("KERNEL_OK")
</pallas_src>

<mosaic_0001>
module attributes {stable_mosaic.version = 11 : i64} {
  func.func @_start_kernel(%arg0: i32, %arg1: i32, %arg2: memref<1x24x8xf32, #tpu.memory_space<vmem>>, %arg3: memref<8x40xf32, #tpu.memory_space<vmem>>, %arg4: memref<1x40xf32, #tpu.memory_space<vmem>>, %arg5: memref<1x24x40xf32, #tpu.memory_space<vmem>>) attributes {dimension_semantics = [#tpu.dimension_semantics<parallel>, #tpu.dimension_semantics<parallel>], iteration_bounds = array<i64: 8, 1>, scalar_prefetch = 0 : i64, scratch_operands = 0 : i64, tpu.core_type = #tpu.core_type<tc>, window_params = [{transform_indices = @transform_0, window_bounds = array<i64: 1, 24, 8>}, {pipeline_mode = #tpu.pipeline_mode<synchronous>, transform_indices = @transform_1, window_bounds = array<i64: 8, 40>}, {pipeline_mode = #tpu.pipeline_mode<synchronous>, transform_indices = @transform_2, window_bounds = array<i64: 1, 40>}, {transform_indices = @transform_3, window_bounds = array<i64: 1, 24, 40>}]} {
    %c0 = arith.constant 0 : index
    %c0_0 = arith.constant 0 : index
    %c0_1 = arith.constant 0 : index
    %0 = vector.load %arg2[%c0, %c0_0, %c0_1] : memref<1x24x8xf32, #tpu.memory_space<vmem>>, vector<1x24x8xf32>
    %1 = vector.shape_cast %0 : vector<1x24x8xf32> to vector<24x8xf32>
    %c0_2 = arith.constant 0 : index
    %c0_3 = arith.constant 0 : index
    %2 = vector.load %arg3[%c0_2, %c0_3] : memref<8x40xf32, #tpu.memory_space<vmem>>, vector<8x40xf32>
    %cst = arith.constant dense<0.000000e+00> : vector<24x40xf32>
    %3 = tpu.matmul %1, %2, %cst {dimension_numbers = #tpu.dot_dimension_numbers<[1], [0], [0], [1], [0, 0, 1, 1], [], []>} : vector<24x8xf32>, vector<8x40xf32>, vector<24x40xf32> -> vector<24x40xf32>
    %c0_4 = arith.constant 0 : index
    %c0_5 = arith.constant 0 : index
    %4 = vector.load %arg4[%c0_4, %c0_5] : memref<1x40xf32, #tpu.memory_space<vmem>>, vector<1x40xf32>
    %5 = vector.broadcast %4 : vector<1x40xf32> to vector<24x40xf32>
    %6 = arith.addf %3, %5 : vector<24x40xf32>
    %c0_6 = arith.constant 0 : index
    %c0_7 = arith.constant 0 : index
    %c0_8 = arith.constant 0 : index
    %7 = vector.load %arg5[%c0_6, %c0_7, %c0_8] : memref<1x24x40xf32, #tpu.memory_space<vmem>>, vector<1x24x40xf32>
    %8 = vector.shape_cast %7 : vector<1x24x40xf32> to vector<24x40xf32>
    %9 = vector.shape_cast %6 : vector<24x40xf32> to vector<1x24x40xf32>
    tpu.vector_store %arg5[%c0_6, %c0_7, %c0_8], %9 {strides = array<i32>} : memref<1x24x40xf32, #tpu.memory_space<vmem>>, vector<1x24x40xf32>,
    return
  }
  func.func @transform_0(%arg0: i32, %arg1: i32) -> (i32, i32, i32) {
    %c0_i32 = arith.constant 0 : i32
    %c0_i32_0 = arith.constant 0 : i32
    return %arg0, %arg1, %c0_i32 : i32, i32, i32
  }
  func.func @transform_1(%arg0: i32, %arg1: i32) -> (i32, i32) {
    %c0_i32 = arith.constant 0 : i32
    %c0_i32_0 = arith.constant 0 : i32
    %c0_i32_1 = arith.constant 0 : i32
    return %c0_i32, %c0_i32_0 : i32, i32
  }
  func.func @transform_2(%arg0: i32, %arg1: i32) -> (i32, i32) {
    %c0_i32 = arith.constant 0 : i32
    %c0_i32_0 = arith.constant 0 : i32
    %c0_i32_1 = arith.constant 0 : i32
    return %c0_i32, %c0_i32_0 : i32, i32
  }
  func.func @transform_3(%arg0: i32, %arg1: i32) -> (i32, i32, i32) {
    %c0_i32 = arith.constant 0 : i32
    %c0_i32_0 = arith.constant 0 : i32
    return %arg0, %arg1, %c0_i32 : i32, i32, i32
  }
}

module attributes {stable_mosaic.version = 11 : i64} {
  func.func @_gated_kernel(%arg0: i32, %arg1: i32, %arg2: memref<1x24x40xf32, #tpu.memory_space<vmem>>, %arg3: memref<1x24x40xf32, #tpu.memory_space<vmem>>, %arg4: memref<1x40xf32, #tpu.memory_space<vmem>>, %arg5: memref<1x40xf32, #tpu.memory_space<vmem>>, %arg6: memref<40x40xf32, #tpu.memory_space<vmem>>, %arg7: memref<40x40xf32, #tpu.memory_space<vmem>>, %arg8: memref<40x40xf32, #tpu.memory_space<vmem>>, %arg9: memref<40x40xf32, #tpu.memory_space<vmem>>, %arg10: memref<1x40xf32, #tpu.memory_space<vmem>>, %arg11: memref<1x40xf32, #tpu.memory_space<vmem>>, %arg12: memref<1x24x40xf32, #tpu.memory_space<vmem>>, %arg13: memref<1x1x8x40xf32, #tpu.memory_space<vmem>>) attributes {dimension_semantics = [#tpu.dimension_semantics<parallel>, #tpu.dimension_semantics<parallel>], iteration_bounds = array<i64: 6, 1>, scalar_prefetch = 0 : i64, scratch_operands = 0 : i64, tpu.core_type = #tpu.core_type<tc>, window_params = [{transform_indices = @transform_0, window_bounds = array<i64: 1, 24, 40>}, {transform_indices = @transform_1, window_bounds = array<i64: 1, 24, 40>}, {pipeline_mode = #tpu.pipeline_mode<synchronous>, transform_indices = @transform_2, window_bounds = array<i64: 1, 40>}, {pipeline_mode = #tpu.pipeline_mode<synchronous>, transform_indices = @transform_3, window_bounds = array<i64: 1, 40>}, {pipeline_mode = #tpu.pipeline_mode<synchronous>, transform_indices = @transform_4, window_bounds = array<i64: 40, 40>}, {pipeline_mode = #tpu.pipeline_mode<synchronous>, transform_indices = @transform_5, window_bounds = array<i64: 40, 40>}, {pipeline_mode = #tpu.pipeline_mode<synchronous>, transform_indices = @transform_6, window_bounds = array<i64: 40, 40>}, {pipeline_mode = #tpu.pipeline_mode<synchronous>, transform_indices = @transform_7, window_bounds = array<i64: 40, 40>}, {pipeline_mode = #tpu.pipeline_mode<synchronous>, transform_indices = @transform_8, window_bounds = array<i64: 1, 40>}, {pipeline_mode = #tpu.pipeline_mode<synchronous>, transform_indices = @transform_9, window_bounds = array<i64: 1, 40>}, {transform_indices = @transform_10, window_bounds = array<i64: 1, 24, 40>}, {transform_indices = @transform_11, window_bounds = array<i64: 1, 1, 8, 40>}]} {
    %c0 = arith.constant 0 : index
    %c0_0 = arith.constant 0 : index
    %0 = vector.load %arg4[%c0, %c0_0] : memref<1x40xf32, #tpu.memory_space<vmem>>, vector<1x40xf32>
    %c0_1 = arith.constant 0 : index
    %c0_2 = arith.constant 0 : index
    %1 = vector.load %arg5[%c0_1, %c0_2] : memref<1x40xf32, #tpu.memory_space<vmem>>, vector<1x40xf32>
    %c0_3 = arith.constant 0 : index
    %c0_4 = arith.constant 0 : index
    %c0_5 = arith.constant 0 : index
    %2 = vector.load %arg2[%c0_3, %c0_4, %c0_5] : memref<1x24x40xf32, #tpu.memory_space<vmem>>, vector<1x24x40xf32>
    %3 = vector.shape_cast %2 : vector<1x24x40xf32> to vector<24x40xf32>
    %4 = vector.broadcast %0 : vector<1x40xf32> to vector<24x40xf32>
    %5 = arith.mulf %3, %4 : vector<24x40xf32>
    %6 = vector.broadcast %1 : vector<1x40xf32> to vector<24x40xf32>
    %7 = arith.addf %5, %6 : vector<24x40xf32>
    %c0_6 = arith.constant 0 : index
    %c0_7 = arith.constant 0 : index
    %c0_8 = arith.constant 0 : index
    %8 = vector.load %arg3[%c0_6, %c0_7, %c0_8] : memref<1x24x40xf32, #tpu.memory_space<vmem>>, vector<1x24x40xf32>
    %9 = vector.shape_cast %8 : vector<1x24x40xf32> to vector<24x40xf32>
    %10 = vector.broadcast %0 : vector<1x40xf32> to vector<24x40xf32>
    %11 = arith.mulf %9, %10 : vector<24x40xf32>
    %12 = vector.broadcast %1 : vector<1x40xf32> to vector<24x40xf32>
    %13 = arith.addf %11, %12 : vector<24x40xf32>
    %c0_9 = arith.constant 0 : index
    %c0_10 = arith.constant 0 : index
    %14 = vector.load %arg6[%c0_9, %c0_10] : memref<40x40xf32, #tpu.memory_space<vmem>>, vector<40x40xf32>
    %cst = arith.constant dense<0.000000e+00> : vector<24x40xf32>
    %15 = tpu.matmul %7, %14, %cst {dimension_numbers = #tpu.dot_dimension_numbers<[1], [0], [0], [1], [0, 0, 1, 1], [], []>} : vector<24x40xf32>, vector<40x40xf32>, vector<24x40xf32> -> vector<24x40xf32>
    %c0_11 = arith.constant 0 : index
    %c0_12 = arith.constant 0 : index
    %16 = vector.load %arg7[%c0_11, %c0_12] : memref<40x40xf32, #tpu.memory_space<vmem>>, vector<40x40xf32>
    %cst_13 = arith.constant dense<0.000000e+00> : vector<24x40xf32>
    %17 = tpu.matmul %13, %16, %cst_13 {dimension_numbers = #tpu.dot_dimension_numbers<[1], [0], [0], [1], [0, 0, 1, 1], [], []>} : vector<24x40xf32>, vector<40x40xf32>, vector<24x40xf32> -> vector<24x40xf32>
    %18 = arith.addf %15, %17 : vector<24x40xf32>
    %c0_14 = arith.constant 0 : index
    %c0_15 = arith.constant 0 : index
    %19 = vector.load %arg10[%c0_14, %c0_15] : memref<1x40xf32, #tpu.memory_space<vmem>>, vector<1x40xf32>
    %20 = vector.broadcast %19 : vector<1x40xf32> to vector<24x40xf32>
    %21 = arith.addf %18, %20 : vector<24x40xf32>
    %c0_16 = arith.constant 0 : index
    %c0_17 = arith.constant 0 : index
    %22 = vector.load %arg8[%c0_16, %c0_17] : memref<40x40xf32, #tpu.memory_space<vmem>>, vector<40x40xf32>
    %cst_18 = arith.constant dense<0.000000e+00> : vector<24x40xf32>
    %23 = tpu.matmul %7, %22, %cst_18 {dimension_numbers = #tpu.dot_dimension_numbers<[1], [0], [0], [1], [0, 0, 1, 1], [], []>} : vector<24x40xf32>, vector<40x40xf32>, vector<24x40xf32> -> vector<24x40xf32>
    %c0_19 = arith.constant 0 : index
    %c0_20 = arith.constant 0 : index
    %24 = vector.load %arg9[%c0_19, %c0_20] : memref<40x40xf32, #tpu.memory_space<vmem>>, vector<40x40xf32>
    %cst_21 = arith.constant dense<0.000000e+00> : vector<24x40xf32>
    %25 = tpu.matmul %13, %24, %cst_21 {dimension_numbers = #tpu.dot_dimension_numbers<[1], [0], [0], [1], [0, 0, 1, 1], [], []>} : vector<24x40xf32>, vector<40x40xf32>, vector<24x40xf32> -> vector<24x40xf32>
    %26 = arith.addf %23, %25 : vector<24x40xf32>
    %c0_22 = arith.constant 0 : index
    %c0_23 = arith.constant 0 : index
    %27 = vector.load %arg11[%c0_22, %c0_23] : memref<1x40xf32, #tpu.memory_space<vmem>>, vector<1x40xf32>
    %28 = vector.broadcast %27 : vector<1x40xf32> to vector<24x40xf32>
    %29 = arith.addf %26, %28 : vector<24x40xf32>
    %30 = math.tanh %21 : vector<24x40xf32>
    %31 = arith.negf %29 : vector<24x40xf32>
    %32 = math.exp %31 : vector<24x40xf32>
    %cst_24 = arith.constant 1.000000e+00 : f32
    %33 = vector.broadcast %cst_24 : f32 to vector<24x40xf32>
    %34 = arith.addf %33, %32 : vector<24x40xf32>
    %35 = arith.divf %33, %34 : vector<24x40xf32>
    %36 = arith.mulf %30, %35 : vector<24x40xf32>
    %37 = arith.addf %36, %13 : vector<24x40xf32>
    %c0_25 = arith.constant 0 : index
    %c0_26 = arith.constant 0 : index
    %c0_27 = arith.constant 0 : index
    %38 = vector.load %arg12[%c0_25, %c0_26, %c0_27] : memref<1x24x40xf32, #tpu.memory_space<vmem>>, vector<1x24x40xf32>
    %39 = vector.shape_cast %38 : vector<1x24x40xf32> to vector<24x40xf32>
    %40 = vector.shape_cast %37 : vector<24x40xf32> to vector<1x24x40xf32>
    tpu.vector_store %arg12[%c0_25, %c0_26, %c0_27], %40 {strides = array<i32>} : memref<1x24x40xf32, #tpu.memory_space<vmem>>, vector<1x24x40xf32>,
    %41 = tpu.iota {dimensions = array<i32: 0>} : vector<24x1xi32>
    %c24_i32 = arith.constant 24 : i32
    %42 = arith.muli %arg1, %c24_i32 : i32
    %43 = vector.broadcast %42 : i32 to vector<24x1xi32>
    %44 = arith.addi %41, %43 : vector<24x1xi32>
    %c18_i32 = arith.constant 18 : i32
    %45 = vector.broadcast %c18_i32 : i32 to vector<24x1xi32>
    %46 = arith.cmpi slt, %44, %45 : vector<24x1xi32>
    %cst_28 = arith.constant 0.000000e+00 : f32
    %47 = vector.shape_cast %46 : vector<24x1xi1> to vector<24x1xi1>
    %48 = vector.broadcast %47 : vector<24x1xi1> to vector<24x40xi1>
    %49 = vector.broadcast %cst_28 : f32 to vector<24x40xf32>
    %50 = arith.select %48, %37, %49 : vector<24x40xi1>, vector<24x40xf32>
    %cst_29 = arith.constant dense<0.000000e+00> : vector<40xf32>
    %51 = vector.multi_reduction <add>, %50, %cst_29 [0] : vector<24x40xf32> to vector<40xf32>
    %52 = vector.shape_cast %51 : vector<40xf32> to vector<1x40xf32>
    %53 = arith.mulf %50, %50 : vector<24x40xf32>
    %cst_30 = arith.constant dense<0.000000e+00> : vector<40xf32>
    %54 = vector.multi_reduction <add>, %53, %cst_30 [0] : vector<24x40xf32> to vector<40xf32>
    %55 = vector.shape_cast %54 : vector<40xf32> to vector<1x40xf32>
    %cst_31 = arith.constant 0.000000e+00 : f32
    %56 = vector.broadcast %cst_31 : f32 to vector<6x40xf32>
    %57 = tpu.concatenate %52, %55, %56 in 0 : vector<1x40xf32>, vector<1x40xf32>, vector<6x40xf32> -> vector<8x40xf32>
    %c0_32 = arith.constant 0 : index
    %c0_33 = arith.constant 0 : index
    %c0_34 = arith.constant 0 : index
    %c0_35 = arith.constant 0 : index
    %58 = vector.load %arg13[%c0_32, %c0_33, %c0_34, %c0_35] : memref<1x1x8x40xf32, #tpu.memory_space<vmem>>, vector<1x1x8x40xf32>
    %59 = vector.shape_cast %58 : vector<1x1x8x40xf32> to vector<8x40xf32>
    %60 = vector.shape_cast %57 : vector<8x40xf32> to vector<1x1x8x40xf32>
    tpu.vector_store %arg13[%c0_32, %c0_33, %c0_34, %c0_35], %60 {strides = array<i32>} : memref<1x1x8x40xf32, #tpu.memory_space<vmem>>, vector<1x1x8x40xf32>,
    return
  }
  func.func @transform_0(%arg0: i32, %arg1: i32) -> (i32, i32, i32) {
    %c0_i32 = arith.constant 0 : i32
    %c0_i32_0 = arith.constant 0 : i32
    return %arg0, %arg1, %c0_i32 : i32, i32, i32
  }
  func.func @transform_1(%arg0: i32, %arg1: i32) -> (i32, i32, i32) {
    %c2_i32 = arith.constant 2 : i32
    %0 = arith.addi %arg0, %c2_i32 : i32
    %c0_i32 = arith.constant 0 : i32
    %c0_i32_0 = arith.constant 0 : i32
    return %0, %arg1, %c0_i32 : i32, i32, i32
  }
  func.func @transform_2(%arg0: i32, %arg1: i32) -> (i32, i32) {
    %c0_i32 = arith.constant 0 : i32
    %c0_i32_0 = arith.constant 0 : i32
    %c0_i32_1 = arith.constant 0 : i32
    return %c0_i32, %c0_i32_0 : i32, i32
  }
  func.func @transform_3(%arg0: i32, %arg1: i32) -> (i32, i32) {
    %c0_i32 = arith.constant 0 : i32
    %c0_i32_0 = arith.constant 0 : i32
    %c0_i32_1 = arith.constant 0 : i32
    return %c0_i32, %c0_i32_0 : i32, i32
  }
  func.func @transform_4(%arg0: i32, %arg1: i32) -> (i32, i32) {
    %c0_i32 = arith.constant 0 : i32
    %c0_i32_0 = arith.constant 0 : i32
    %c0_i32_1 = arith.constant 0 : i32
    return %c0_i32, %c0_i32_0 : i32, i32
  }
  func.func @transform_5(%arg0: i32, %arg1: i32) -> (i32, i32) {
    %c0_i32 = arith.constant 0 : i32
    %c0_i32_0 = arith.constant 0 : i32
    %c0_i32_1 = arith.constant 0 : i32
    return %c0_i32, %c0_i32_0 : i32, i32
  }
  func.func @transform_6(%arg0: i32, %arg1: i32) -> (i32, i32) {
    %c0_i32 = arith.constant 0 : i32
    %c0_i32_0 = arith.constant 0 : i32
    %c0_i32_1 = arith.constant 0 : i32
    return %c0_i32, %c0_i32_0 : i32, i32
  }
  func.func @transform_7(%arg0: i32, %arg1: i32) -> (i32, i32) {
    %c0_i32 = arith.constant 0 : i32
    %c0_i32_0 = arith.constant 0 : i32
    %c0_i32_1 = arith.constant 0 : i32
    return %c0_i32, %c0_i32_0 : i32, i32
  }
  func.func @transform_8(%arg0: i32, %arg1: i32) -> (i32, i32) {
    %c0_i32 = arith.constant 0 : i32
    %c0_i32_0 = arith.constant 0 : i32
    %c0_i32_1 = arith.constant 0 : i32
    return %c0_i32, %c0_i32_0 : i32, i32
  }
  func.func @transform_9(%arg0: i32, %arg1: i32) -> (i32, i32) {
    %c0_i32 = arith.constant 0 : i32
    %c0_i32_0 = arith.constant 0 : i32
    %c0_i32_1 = arith.constant 0 : i32
    return %c0_i32, %c0_i32_0 : i32, i32
  }
  func.func @transform_10(%arg0: i32, %arg1: i32) -> (i32, i32, i32) {
    %c0_i32 = arith.constant 0 : i32
    %c0_i32_0 = arith.constant 0 : i32
    return %arg0, %arg1, %c0_i32 : i32, i32, i32
  }
  func.func @transform_11(%arg0: i32, %arg1: i32) -> (i32, i32, i32, i32) {
    %c0_i32 = arith.constant 0 : i32
    %c0_i32_0 = arith.constant 0 : i32
    %c0_i32_1 = arith.constant 0 : i32
    return %arg0, %arg1, %c0_i32, %c0_i32_0 : i32, i32, i32, i32
  }
}

module attributes {stable_mosaic.version = 11 : i64} {
  func.func @_gated_kernel(%arg0: i32, %arg1: i32, %arg2: memref<1x24x40xf32, #tpu.memory_space<vmem>>, %arg3: memref<1x24x40xf32, #tpu.memory_space<vmem>>, %arg4: memref<1x40xf32, #tpu.memory_space<vmem>>, %arg5: memref<1x40xf32, #tpu.memory_space<vmem>>, %arg6: memref<40x40xf32, #tpu.memory_space<vmem>>, %arg7: memref<40x40xf32, #tpu.memory_space<vmem>>, %arg8: memref<40x40xf32, #tpu.memory_space<vmem>>, %arg9: memref<40x40xf32, #tpu.memory_space<vmem>>, %arg10: memref<1x40xf32, #tpu.memory_space<vmem>>, %arg11: memref<1x40xf32, #tpu.memory_space<vmem>>, %arg12: memref<1x24x40xf32, #tpu.memory_space<vmem>>, %arg13: memref<1x1x8x40xf32, #tpu.memory_space<vmem>>) attributes {dimension_semantics = [#tpu.dimension_semantics<parallel>, #tpu.dimension_semantics<parallel>], iteration_bounds = array<i64: 4, 1>, scalar_prefetch = 0 : i64, scratch_operands = 0 : i64, tpu.core_type = #tpu.core_type<tc>, window_params = [{transform_indices = @transform_0, window_bounds = array<i64: 1, 24, 40>}, {transform_indices = @transform_1, window_bounds = array<i64: 1, 24, 40>}, {pipeline_mode = #tpu.pipeline_mode<synchronous>, transform_indices = @transform_2, window_bounds = array<i64: 1, 40>}, {pipeline_mode = #tpu.pipeline_mode<synchronous>, transform_indices = @transform_3, window_bounds = array<i64: 1, 40>}, {pipeline_mode = #tpu.pipeline_mode<synchronous>, transform_indices = @transform_4, window_bounds = array<i64: 40, 40>}, {pipeline_mode = #tpu.pipeline_mode<synchronous>, transform_indices = @transform_5, window_bounds = array<i64: 40, 40>}, {pipeline_mode = #tpu.pipeline_mode<synchronous>, transform_indices = @transform_6, window_bounds = array<i64: 40, 40>}, {pipeline_mode = #tpu.pipeline_mode<synchronous>, transform_indices = @transform_7, window_bounds = array<i64: 40, 40>}, {pipeline_mode = #tpu.pipeline_mode<synchronous>, transform_indices = @transform_8, window_bounds = array<i64: 1, 40>}, {pipeline_mode = #tpu.pipeline_mode<synchronous>, transform_indices = @transform_9, window_bounds = array<i64: 1, 40>}, {transform_indices = @transform_10, window_bounds = array<i64: 1, 24, 40>}, {transform_indices = @transform_11, window_bounds = array<i64: 1, 1, 8, 40>}]} {
    %c0 = arith.constant 0 : index
    %c0_0 = arith.constant 0 : index
    %0 = vector.load %arg4[%c0, %c0_0] : memref<1x40xf32, #tpu.memory_space<vmem>>, vector<1x40xf32>
    %c0_1 = arith.constant 0 : index
    %c0_2 = arith.constant 0 : index
    %1 = vector.load %arg5[%c0_1, %c0_2] : memref<1x40xf32, #tpu.memory_space<vmem>>, vector<1x40xf32>
    %c0_3 = arith.constant 0 : index
    %c0_4 = arith.constant 0 : index
    %c0_5 = arith.constant 0 : index
    %2 = vector.load %arg2[%c0_3, %c0_4, %c0_5] : memref<1x24x40xf32, #tpu.memory_space<vmem>>, vector<1x24x40xf32>
    %3 = vector.shape_cast %2 : vector<1x24x40xf32> to vector<24x40xf32>
    %4 = vector.broadcast %0 : vector<1x40xf32> to vector<24x40xf32>
    %5 = arith.mulf %3, %4 : vector<24x40xf32>
    %6 = vector.broadcast %1 : vector<1x40xf32> to vector<24x40xf32>
    %7 = arith.addf %5, %6 : vector<24x40xf32>
    %c0_6 = arith.constant 0 : index
    %c0_7 = arith.constant 0 : index
    %c0_8 = arith.constant 0 : index
    %8 = vector.load %arg3[%c0_6, %c0_7, %c0_8] : memref<1x24x40xf32, #tpu.memory_space<vmem>>, vector<1x24x40xf32>
    %9 = vector.shape_cast %8 : vector<1x24x40xf32> to vector<24x40xf32>
    %10 = vector.broadcast %0 : vector<1x40xf32> to vector<24x40xf32>
    %11 = arith.mulf %9, %10 : vector<24x40xf32>
    %12 = vector.broadcast %1 : vector<1x40xf32> to vector<24x40xf32>
    %13 = arith.addf %11, %12 : vector<24x40xf32>
    %c0_9 = arith.constant 0 : index
    %c0_10 = arith.constant 0 : index
    %14 = vector.load %arg6[%c0_9, %c0_10] : memref<40x40xf32, #tpu.memory_space<vmem>>, vector<40x40xf32>
    %cst = arith.constant dense<0.000000e+00> : vector<24x40xf32>
    %15 = tpu.matmul %7, %14, %cst {dimension_numbers = #tpu.dot_dimension_numbers<[1], [0], [0], [1], [0, 0, 1, 1], [], []>} : vector<24x40xf32>, vector<40x40xf32>, vector<24x40xf32> -> vector<24x40xf32>
    %c0_11 = arith.constant 0 : index
    %c0_12 = arith.constant 0 : index
    %16 = vector.load %arg7[%c0_11, %c0_12] : memref<40x40xf32, #tpu.memory_space<vmem>>, vector<40x40xf32>
    %cst_13 = arith.constant dense<0.000000e+00> : vector<24x40xf32>
    %17 = tpu.matmul %13, %16, %cst_13 {dimension_numbers = #tpu.dot_dimension_numbers<[1], [0], [0], [1], [0, 0, 1, 1], [], []>} : vector<24x40xf32>, vector<40x40xf32>, vector<24x40xf32> -> vector<24x40xf32>
    %18 = arith.addf %15, %17 : vector<24x40xf32>
    %c0_14 = arith.constant 0 : index
    %c0_15 = arith.constant 0 : index
    %19 = vector.load %arg10[%c0_14, %c0_15] : memref<1x40xf32, #tpu.memory_space<vmem>>, vector<1x40xf32>
    %20 = vector.broadcast %19 : vector<1x40xf32> to vector<24x40xf32>
    %21 = arith.addf %18, %20 : vector<24x40xf32>
    %c0_16 = arith.constant 0 : index
    %c0_17 = arith.constant 0 : index
    %22 = vector.load %arg8[%c0_16, %c0_17] : memref<40x40xf32, #tpu.memory_space<vmem>>, vector<40x40xf32>
    %cst_18 = arith.constant dense<0.000000e+00> : vector<24x40xf32>
    %23 = tpu.matmul %7, %22, %cst_18 {dimension_numbers = #tpu.dot_dimension_numbers<[1], [0], [0], [1], [0, 0, 1, 1], [], []>} : vector<24x40xf32>, vector<40x40xf32>, vector<24x40xf32> -> vector<24x40xf32>
    %c0_19 = arith.constant 0 : index
    %c0_20 = arith.constant 0 : index
    %24 = vector.load %arg9[%c0_19, %c0_20] : memref<40x40xf32, #tpu.memory_space<vmem>>, vector<40x40xf32>
    %cst_21 = arith.constant dense<0.000000e+00> : vector<24x40xf32>
    %25 = tpu.matmul %13, %24, %cst_21 {dimension_numbers = #tpu.dot_dimension_numbers<[1], [0], [0], [1], [0, 0, 1, 1], [], []>} : vector<24x40xf32>, vector<40x40xf32>, vector<24x40xf32> -> vector<24x40xf32>
    %26 = arith.addf %23, %25 : vector<24x40xf32>
    %c0_22 = arith.constant 0 : index
    %c0_23 = arith.constant 0 : index
    %27 = vector.load %arg11[%c0_22, %c0_23] : memref<1x40xf32, #tpu.memory_space<vmem>>, vector<1x40xf32>
    %28 = vector.broadcast %27 : vector<1x40xf32> to vector<24x40xf32>
    %29 = arith.addf %26, %28 : vector<24x40xf32>
    %30 = math.tanh %21 : vector<24x40xf32>
    %31 = arith.negf %29 : vector<24x40xf32>
    %32 = math.exp %31 : vector<24x40xf32>
    %cst_24 = arith.constant 1.000000e+00 : f32
    %33 = vector.broadcast %cst_24 : f32 to vector<24x40xf32>
    %34 = arith.addf %33, %32 : vector<24x40xf32>
    %35 = arith.divf %33, %34 : vector<24x40xf32>
    %36 = arith.mulf %30, %35 : vector<24x40xf32>
    %37 = arith.addf %36, %13 : vector<24x40xf32>
    %c0_25 = arith.constant 0 : index
    %c0_26 = arith.constant 0 : index
    %c0_27 = arith.constant 0 : index
    %38 = vector.load %arg12[%c0_25, %c0_26, %c0_27] : memref<1x24x40xf32, #tpu.memory_space<vmem>>, vector<1x24x40xf32>
    %39 = vector.shape_cast %38 : vector<1x24x40xf32> to vector<24x40xf32>
    %40 = vector.shape_cast %37 : vector<24x40xf32> to vector<1x24x40xf32>
    tpu.vector_store %arg12[%c0_25, %c0_26, %c0_27], %40 {strides = array<i32>} : memref<1x24x40xf32, #tpu.memory_space<vmem>>, vector<1x24x40xf32>,
    %41 = tpu.iota {dimensions = array<i32: 0>} : vector<24x1xi32>
    %c24_i32 = arith.constant 24 : i32
    %42 = arith.muli %arg1, %c24_i32 : i32
    %43 = vector.broadcast %42 : i32 to vector<24x1xi32>
    %44 = arith.addi %41, %43 : vector<24x1xi32>
    %c18_i32 = arith.constant 18 : i32
    %45 = vector.broadcast %c18_i32 : i32 to vector<24x1xi32>
    %46 = arith.cmpi slt, %44, %45 : vector<24x1xi32>
    %cst_28 = arith.constant 0.000000e+00 : f32
    %47 = vector.shape_cast %46 : vector<24x1xi1> to vector<24x1xi1>
    %48 = vector.broadcast %47 : vector<24x1xi1> to vector<24x40xi1>
    %49 = vector.broadcast %cst_28 : f32 to vector<24x40xf32>
    %50 = arith.select %48, %37, %49 : vector<24x40xi1>, vector<24x40xf32>
    %cst_29 = arith.constant dense<0.000000e+00> : vector<40xf32>
    %51 = vector.multi_reduction <add>, %50, %cst_29 [0] : vector<24x40xf32> to vector<40xf32>
    %52 = vector.shape_cast %51 : vector<40xf32> to vector<1x40xf32>
    %53 = arith.mulf %50, %50 : vector<24x40xf32>
    %cst_30 = arith.constant dense<0.000000e+00> : vector<40xf32>
    %54 = vector.multi_reduction <add>, %53, %cst_30 [0] : vector<24x40xf32> to vector<40xf32>
    %55 = vector.shape_cast %54 : vector<40xf32> to vector<1x40xf32>
    %cst_31 = arith.constant 0.000000e+00 : f32
    %56 = vector.broadcast %cst_31 : f32 to vector<6x40xf32>
    %57 = tpu.concatenate %52, %55, %56 in 0 : vector<1x40xf32>, vector<1x40xf32>, vector<6x40xf32> -> vector<8x40xf32>
    %c0_32 = arith.constant 0 : index
    %c0_33 = arith.constant 0 : index
    %c0_34 = arith.constant 0 : index
    %c0_35 = arith.constant 0 : index
    %58 = vector.load %arg13[%c0_32, %c0_33, %c0_34, %c0_35] : memref<1x1x8x40xf32, #tpu.memory_space<vmem>>, vector<1x1x8x40xf32>
    %59 = vector.shape_cast %58 : vector<1x1x8x40xf32> to vector<8x40xf32>
    %60 = vector.shape_cast %57 : vector<8x40xf32> to vector<1x1x8x40xf32>
    tpu.vector_store %arg13[%c0_32, %c0_33, %c0_34, %c0_35], %60 {strides = array<i32>} : memref<1x1x8x40xf32, #tpu.memory_space<vmem>>, vector<1x1x8x40xf32>,
    return
  }
  func.func @transform_0(%arg0: i32, %arg1: i32) -> (i32, i32, i32) {
    %c0_i32 = arith.constant 0 : i32
    %c0_i32_0 = arith.constant 0 : i32
    return %arg0, %arg1, %c0_i32 : i32, i32, i32
  }
  func.func @transform_1(%arg0: i32, %arg1: i32) -> (i32, i32, i32) {
    %c2_i32 = arith.constant 2 : i32
    %0 = arith.addi %arg0, %c2_i32 : i32
    %c0_i32 = arith.constant 0 : i32
    %c0_i32_0 = arith.constant 0 : i32
    return %0, %arg1, %c0_i32 : i32, i32, i32
  }
  func.func @transform_2(%arg0: i32, %arg1: i32) -> (i32, i32) {
    %c0_i32 = arith.constant 0 : i32
    %c0_i32_0 = arith.constant 0 : i32
    %c0_i32_1 = arith.constant 0 : i32
    return %c0_i32, %c0_i32_0 : i32, i32
  }
  func.func @transform_3(%arg0: i32, %arg1: i32) -> (i32, i32) {
    %c0_i32 = arith.constant 0 : i32
    %c0_i32_0 = arith.constant 0 : i32
    %c0_i32_1 = arith.constant 0 : i32
    return %c0_i32, %c0_i32_0 : i32, i32
  }
  func.func @transform_4(%arg0: i32, %arg1: i32) -> (i32, i32) {
    %c0_i32 = arith.constant 0 : i32
    %c0_i32_0 = arith.constant 0 : i32
    %c0_i32_1 = arith.constant 0 : i32
    return %c0_i32, %c0_i32_0 : i32, i32
  }
  func.func @transform_5(%arg0: i32, %arg1: i32) -> (i32, i32) {
    %c0_i32 = arith.constant 0 : i32
    %c0_i32_0 = arith.constant 0 : i32
    %c0_i32_1 = arith.constant 0 : i32
    return %c0_i32, %c0_i32_0 : i32, i32
  }
  func.func @transform_6(%arg0: i32, %arg1: i32) -> (i32, i32) {
    %c0_i32 = arith.constant 0 : i32
    %c0_i32_0 = arith.constant 0 : i32
    %c0_i32_1 = arith.constant 0 : i32
    return %c0_i32, %c0_i32_0 : i32, i32
  }
  func.func @transform_7(%arg0: i32, %arg1: i32) -> (i32, i32) {
    %c0_i32 = arith.constant 0 : i32
    %c0_i32_0 = arith.constant 0 : i32
    %c0_i32_1 = arith.constant 0 : i32
    return %c0_i32, %c0_i32_0 : i32, i32
  }
  func.func @transform_8(%arg0: i32, %arg1: i32) -> (i32, i32) {
    %c0_i32 = arith.constant 0 : i32
    %c0_i32_0 = arith.constant 0 : i32
    %c0_i32_1 = arith.constant 0 : i32
    return %c0_i32, %c0_i32_0 : i32, i32
  }
  func.func @transform_9(%arg0: i32, %arg1: i32) -> (i32, i32) {
    %c0_i32 = arith.constant 0 : i32
    %c0_i32_0 = arith.constant 0 : i32
    %c0_i32_1 = arith.constant 0 : i32
    return %c0_i32, %c0_i32_0 : i32, i32
  }
  func.func @transform_10(%arg0: i32, %arg1: i32) -> (i32, i32, i32) {
    %c0_i32 = arith.constant 0 : i32
    %c0_i32_0 = arith.constant 0 : i32
    return %arg0, %arg1, %c0_i32 : i32, i32, i32
  }
  func.func @transform_11(%arg0: i32, %arg1: i32) -> (i32, i32, i32, i32) {
    %c0_i32 = arith.constant 0 : i32
    %c0_i32_0 = arith.constant 0 : i32
    %c0_i32_1 = arith.constant 0 : i32
    return %arg0, %arg1, %c0_i32, %c0_i32_0 : i32, i32, i32, i32
  }
}

module attributes {stable_mosaic.version = 11 : i64} {
  func.func @_gated_kernel(%arg0: i32, %arg1: i32, %arg2: memref<1x24x40xf32, #tpu.memory_space<vmem>>, %arg3: memref<1x24x40xf32, #tpu.memory_space<vmem>>, %arg4: memref<1x40xf32, #tpu.memory_space<vmem>>, %arg5: memref<1x40xf32, #tpu.memory_space<vmem>>, %arg6: memref<40x40xf32, #tpu.memory_space<vmem>>, %arg7: memref<40x40xf32, #tpu.memory_space<vmem>>, %arg8: memref<40x40xf32, #tpu.memory_space<vmem>>, %arg9: memref<40x40xf32, #tpu.memory_space<vmem>>, %arg10: memref<1x40xf32, #tpu.memory_space<vmem>>, %arg11: memref<1x40xf32, #tpu.memory_space<vmem>>, %arg12: memref<1x24x40xf32, #tpu.memory_space<vmem>>, %arg13: memref<1x1x8x40xf32, #tpu.memory_space<vmem>>) attributes {dimension_semantics = [#tpu.dimension_semantics<parallel>, #tpu.dimension_semantics<parallel>], iteration_bounds = array<i64: 2, 1>, scalar_prefetch = 0 : i64, scratch_operands = 0 : i64, tpu.core_type = #tpu.core_type<tc>, window_params = [{transform_indices = @transform_0, window_bounds = array<i64: 1, 24, 40>}, {transform_indices = @transform_1, window_bounds = array<i64: 1, 24, 40>}, {pipeline_mode = #tpu.pipeline_mode<synchronous>, transform_indices = @transform_2, window_bounds = array<i64: 1, 40>}, {pipeline_mode = #tpu.pipeline_mode<synchronous>, transform_indices = @transform_3, window_bounds = array<i64: 1, 40>}, {pipeline_mode = #tpu.pipeline_mode<synchronous>, transform_indices = @transform_4, window_bounds = array<i64: 40, 40>}, {pipeline_mode = #tpu.pipeline_mode<synchronous>, transform_indices = @transform_5, window_bounds = array<i64: 40, 40>}, {pipeline_mode = #tpu.pipeline_mode<synchronous>, transform_indices = @transform_6, window_bounds = array<i64: 40, 40>}, {pipeline_mode = #tpu.pipeline_mode<synchronous>, transform_indices = @transform_7, window_bounds = array<i64: 40, 40>}, {pipeline_mode = #tpu.pipeline_mode<synchronous>, transform_indices = @transform_8, window_bounds = array<i64: 1, 40>}, {pipeline_mode = #tpu.pipeline_mode<synchronous>, transform_indices = @transform_9, window_bounds = array<i64: 1, 40>}, {transform_indices = @transform_10, window_bounds = array<i64: 1, 24, 40>}, {transform_indices = @transform_11, window_bounds = array<i64: 1, 1, 8, 40>}]} {
    %c0 = arith.constant 0 : index
    %c0_0 = arith.constant 0 : index
    %0 = vector.load %arg4[%c0, %c0_0] : memref<1x40xf32, #tpu.memory_space<vmem>>, vector<1x40xf32>
    %c0_1 = arith.constant 0 : index
    %c0_2 = arith.constant 0 : index
    %1 = vector.load %arg5[%c0_1, %c0_2] : memref<1x40xf32, #tpu.memory_space<vmem>>, vector<1x40xf32>
    %c0_3 = arith.constant 0 : index
    %c0_4 = arith.constant 0 : index
    %c0_5 = arith.constant 0 : index
    %2 = vector.load %arg2[%c0_3, %c0_4, %c0_5] : memref<1x24x40xf32, #tpu.memory_space<vmem>>, vector<1x24x40xf32>
    %3 = vector.shape_cast %2 : vector<1x24x40xf32> to vector<24x40xf32>
    %4 = vector.broadcast %0 : vector<1x40xf32> to vector<24x40xf32>
    %5 = arith.mulf %3, %4 : vector<24x40xf32>
    %6 = vector.broadcast %1 : vector<1x40xf32> to vector<24x40xf32>
    %7 = arith.addf %5, %6 : vector<24x40xf32>
    %c0_6 = arith.constant 0 : index
    %c0_7 = arith.constant 0 : index
    %c0_8 = arith.constant 0 : index
    %8 = vector.load %arg3[%c0_6, %c0_7, %c0_8] : memref<1x24x40xf32, #tpu.memory_space<vmem>>, vector<1x24x40xf32>
    %9 = vector.shape_cast %8 : vector<1x24x40xf32> to vector<24x40xf32>
    %10 = vector.broadcast %0 : vector<1x40xf32> to vector<24x40xf32>
    %11 = arith.mulf %9, %10 : vector<24x40xf32>
    %12 = vector.broadcast %1 : vector<1x40xf32> to vector<24x40xf32>
    %13 = arith.addf %11, %12 : vector<24x40xf32>
    %c0_9 = arith.constant 0 : index
    %c0_10 = arith.constant 0 : index
    %14 = vector.load %arg6[%c0_9, %c0_10] : memref<40x40xf32, #tpu.memory_space<vmem>>, vector<40x40xf32>
    %cst = arith.constant dense<0.000000e+00> : vector<24x40xf32>
    %15 = tpu.matmul %7, %14, %cst {dimension_numbers = #tpu.dot_dimension_numbers<[1], [0], [0], [1], [0, 0, 1, 1], [], []>} : vector<24x40xf32>, vector<40x40xf32>, vector<24x40xf32> -> vector<24x40xf32>
    %c0_11 = arith.constant 0 : index
    %c0_12 = arith.constant 0 : index
    %16 = vector.load %arg7[%c0_11, %c0_12] : memref<40x40xf32, #tpu.memory_space<vmem>>, vector<40x40xf32>
    %cst_13 = arith.constant dense<0.000000e+00> : vector<24x40xf32>
    %17 = tpu.matmul %13, %16, %cst_13 {dimension_numbers = #tpu.dot_dimension_numbers<[1], [0], [0], [1], [0, 0, 1, 1], [], []>} : vector<24x40xf32>, vector<40x40xf32>, vector<24x40xf32> -> vector<24x40xf32>
    %18 = arith.addf %15, %17 : vector<24x40xf32>
    %c0_14 = arith.constant 0 : index
    %c0_15 = arith.constant 0 : index
    %19 = vector.load %arg10[%c0_14, %c0_15] : memref<1x40xf32, #tpu.memory_space<vmem>>, vector<1x40xf32>
    %20 = vector.broadcast %19 : vector<1x40xf32> to vector<24x40xf32>
    %21 = arith.addf %18, %20 : vector<24x40xf32>
    %c0_16 = arith.constant 0 : index
    %c0_17 = arith.constant 0 : index
    %22 = vector.load %arg8[%c0_16, %c0_17] : memref<40x40xf32, #tpu.memory_space<vmem>>, vector<40x40xf32>
    %cst_18 = arith.constant dense<0.000000e+00> : vector<24x40xf32>
    %23 = tpu.matmul %7, %22, %cst_18 {dimension_numbers = #tpu.dot_dimension_numbers<[1], [0], [0], [1], [0, 0, 1, 1], [], []>} : vector<24x40xf32>, vector<40x40xf32>, vector<24x40xf32> -> vector<24x40xf32>
    %c0_19 = arith.constant 0 : index
    %c0_20 = arith.constant 0 : index
    %24 = vector.load %arg9[%c0_19, %c0_20] : memref<40x40xf32, #tpu.memory_space<vmem>>, vector<40x40xf32>
    %cst_21 = arith.constant dense<0.000000e+00> : vector<24x40xf32>
    %25 = tpu.matmul %13, %24, %cst_21 {dimension_numbers = #tpu.dot_dimension_numbers<[1], [0], [0], [1], [0, 0, 1, 1], [], []>} : vector<24x40xf32>, vector<40x40xf32>, vector<24x40xf32> -> vector<24x40xf32>
    %26 = arith.addf %23, %25 : vector<24x40xf32>
    %c0_22 = arith.constant 0 : index
    %c0_23 = arith.constant 0 : index
    %27 = vector.load %arg11[%c0_22, %c0_23] : memref<1x40xf32, #tpu.memory_space<vmem>>, vector<1x40xf32>
    %28 = vector.broadcast %27 : vector<1x40xf32> to vector<24x40xf32>
    %29 = arith.addf %26, %28 : vector<24x40xf32>
    %30 = math.tanh %21 : vector<24x40xf32>
    %31 = arith.negf %29 : vector<24x40xf32>
    %32 = math.exp %31 : vector<24x40xf32>
    %cst_24 = arith.constant 1.000000e+00 : f32
    %33 = vector.broadcast %cst_24 : f32 to vector<24x40xf32>
    %34 = arith.addf %33, %32 : vector<24x40xf32>
    %35 = arith.divf %33, %34 : vector<24x40xf32>
    %36 = arith.mulf %30, %35 : vector<24x40xf32>
    %37 = arith.addf %36, %13 : vector<24x40xf32>
    %c0_25 = arith.constant 0 : index
    %c0_26 = arith.constant 0 : index
    %c0_27 = arith.constant 0 : index
    %38 = vector.load %arg12[%c0_25, %c0_26, %c0_27] : memref<1x24x40xf32, #tpu.memory_space<vmem>>, vector<1x24x40xf32>
    %39 = vector.shape_cast %38 : vector<1x24x40xf32> to vector<24x40xf32>
    %40 = vector.shape_cast %37 : vector<24x40xf32> to vector<1x24x40xf32>
    tpu.vector_store %arg12[%c0_25, %c0_26, %c0_27], %40 {strides = array<i32>} : memref<1x24x40xf32, #tpu.memory_space<vmem>>, vector<1x24x40xf32>,
    %41 = tpu.iota {dimensions = array<i32: 0>} : vector<24x1xi32>
    %c24_i32 = arith.constant 24 : i32
    %42 = arith.muli %arg1, %c24_i32 : i32
    %43 = vector.broadcast %42 : i32 to vector<24x1xi32>
    %44 = arith.addi %41, %43 : vector<24x1xi32>
    %c18_i32 = arith.constant 18 : i32
    %45 = vector.broadcast %c18_i32 : i32 to vector<24x1xi32>
    %46 = arith.cmpi slt, %44, %45 : vector<24x1xi32>
    %cst_28 = arith.constant 0.000000e+00 : f32
    %47 = vector.shape_cast %46 : vector<24x1xi1> to vector<24x1xi1>
    %48 = vector.broadcast %47 : vector<24x1xi1> to vector<24x40xi1>
    %49 = vector.broadcast %cst_28 : f32 to vector<24x40xf32>
    %50 = arith.select %48, %37, %49 : vector<24x40xi1>, vector<24x40xf32>
    %cst_29 = arith.constant dense<0.000000e+00> : vector<40xf32>
    %51 = vector.multi_reduction <add>, %50, %cst_29 [0] : vector<24x40xf32> to vector<40xf32>
    %52 = vector.shape_cast %51 : vector<40xf32> to vector<1x40xf32>
    %53 = arith.mulf %50, %50 : vector<24x40xf32>
    %cst_30 = arith.constant dense<0.000000e+00> : vector<40xf32>
    %54 = vector.multi_reduction <add>, %53, %cst_30 [0] : vector<24x40xf32> to vector<40xf32>
    %55 = vector.shape_cast %54 : vector<40xf32> to vector<1x40xf32>
    %cst_31 = arith.constant 0.000000e+00 : f32
    %56 = vector.broadcast %cst_31 : f32 to vector<6x40xf32>
    %57 = tpu.concatenate %52, %55, %56 in 0 : vector<1x40xf32>, vector<1x40xf32>, vector<6x40xf32> -> vector<8x40xf32>
    %c0_32 = arith.constant 0 : index
    %c0_33 = arith.constant 0 : index
    %c0_34 = arith.constant 0 : index
    %c0_35 = arith.constant 0 : index
    %58 = vector.load %arg13[%c0_32, %c0_33, %c0_34, %c0_35] : memref<1x1x8x40xf32, #tpu.memory_space<vmem>>, vector<1x1x8x40xf32>
    %59 = vector.shape_cast %58 : vector<1x1x8x40xf32> to vector<8x40xf32>
    %60 = vector.shape_cast %57 : vector<8x40xf32> to vector<1x1x8x40xf32>
    tpu.vector_store %arg13[%c0_32, %c0_33, %c0_34, %c0_35], %60 {strides = array<i32>} : memref<1x1x8x40xf32, #tpu.memory_space<vmem>>, vector<1x1x8x40xf32>,
    return
  }
  func.func @transform_0(%arg0: i32, %arg1: i32) -> (i32, i32, i32) {
    %c0_i32 = arith.constant 0 : i32
    %c0_i32_0 = arith.constant 0 : i32
    return %arg0, %arg1, %c0_i32 : i32, i32, i32
  }
  func.func @transform_1(%arg0: i32, %arg1: i32) -> (i32, i32, i32) {
    %c2_i32 = arith.constant 2 : i32
    %0 = arith.addi %arg0, %c2_i32 : i32
    %c0_i32 = arith.constant 0 : i32
    %c0_i32_0 = arith.constant 0 : i32
    return %0, %arg1, %c0_i32 : i32, i32, i32
  }
  func.func @transform_2(%arg0: i32, %arg1: i32) -> (i32, i32) {
    %c0_i32 = arith.constant 0 : i32
    %c0_i32_0 = arith.constant 0 : i32
    %c0_i32_1 = arith.constant 0 : i32
    return %c0_i32, %c0_i32_0 : i32, i32
  }
  func.func @transform_3(%arg0: i32, %arg1: i32) -> (i32, i32) {
    %c0_i32 = arith.constant 0 : i32
    %c0_i32_0 = arith.constant 0 : i32
    %c0_i32_1 = arith.constant 0 : i32
    return %c0_i32, %c0_i32_0 : i32, i32
  }
  func.func @transform_4(%arg0: i32, %arg1: i32) -> (i32, i32) {
    %c0_i32 = arith.constant 0 : i32
    %c0_i32_0 = arith.constant 0 : i32
    %c0_i32_1 = arith.constant 0 : i32
    return %c0_i32, %c0_i32_0 : i32, i32
  }
  func.func @transform_5(%arg0: i32, %arg1: i32) -> (i32, i32) {
    %c0_i32 = arith.constant 0 : i32
    %c0_i32_0 = arith.constant 0 : i32
    %c0_i32_1 = arith.constant 0 : i32
    return %c0_i32, %c0_i32_0 : i32, i32
  }
  func.func @transform_6(%arg0: i32, %arg1: i32) -> (i32, i32) {
    %c0_i32 = arith.constant 0 : i32
    %c0_i32_0 = arith.constant 0 : i32
    %c0_i32_1 = arith.constant 0 : i32
    return %c0_i32, %c0_i32_0 : i32, i32
  }
  func.func @transform_7(%arg0: i32, %arg1: i32) -> (i32, i32) {
    %c0_i32 = arith.constant 0 : i32
    %c0_i32_0 = arith.constant 0 : i32
    %c0_i32_1 = arith.constant 0 : i32
    return %c0_i32, %c0_i32_0 : i32, i32
  }
  func.func @transform_8(%arg0: i32, %arg1: i32) -> (i32, i32) {
    %c0_i32 = arith.constant 0 : i32
    %c0_i32_0 = arith.constant 0 : i32
    %c0_i32_1 = arith.constant 0 : i32
    return %c0_i32, %c0_i32_0 : i32, i32
  }
  func.func @transform_9(%arg0: i32, %arg1: i32) -> (i32, i32) {
    %c0_i32 = arith.constant 0 : i32
    %c0_i32_0 = arith.constant 0 : i32
    %c0_i32_1 = arith.constant 0 : i32
    return %c0_i32, %c0_i32_0 : i32, i32
  }
  func.func @transform_10(%arg0: i32, %arg1: i32) -> (i32, i32, i32) {
    %c0_i32 = arith.constant 0 : i32
    %c0_i32_0 = arith.constant 0 : i32
    return %arg0, %arg1, %c0_i32 : i32, i32, i32
  }
  func.func @transform_11(%arg0: i32, %arg1: i32) -> (i32, i32, i32, i32) {
    %c0_i32 = arith.constant 0 : i32
    %c0_i32_0 = arith.constant 0 : i32
    %c0_i32_1 = arith.constant 0 : i32
    return %arg0, %arg1, %c0_i32, %c0_i32_0 : i32, i32, i32, i32
  }
}

module attributes {stable_mosaic.version = 11 : i64} {
  func.func @_final_kernel(%arg0: i32, %arg1: i32, %arg2: memref<1x24x40xf32, #tpu.memory_space<vmem>>, %arg3: memref<1x24x40xf32, #tpu.memory_space<vmem>>, %arg4: memref<1x24x40xf32, #tpu.memory_space<vmem>>, %arg5: memref<1x40xf32, #tpu.memory_space<vmem>>, %arg6: memref<1x40xf32, #tpu.memory_space<vmem>>, %arg7: memref<1x40xf32, #tpu.memory_space<vmem>>, %arg8: memref<1x40xf32, #tpu.memory_space<vmem>>, %arg9: memref<1x40xf32, #tpu.memory_space<vmem>>, %arg10: memref<1x40xf32, #tpu.memory_space<vmem>>, %arg11: memref<40x320xf32, #tpu.memory_space<vmem>>, %arg12: memref<40x320xf32, #tpu.memory_space<vmem>>, %arg13: memref<40x320xf32, #tpu.memory_space<vmem>>, %arg14: memref<1x320xf32, #tpu.memory_space<vmem>>, %arg15: memref<320x640xf32, #tpu.memory_space<vmem>>, %arg16: memref<1x640xf32, #tpu.memory_space<vmem>>, %arg17: memref<640x128xf32, #tpu.memory_space<vmem>>, %arg18: memref<1x128xf32, #tpu.memory_space<vmem>>, %arg19: memref<1x24x128xf32, #tpu.memory_space<vmem>>) attributes {dimension_semantics = [#tpu.dimension_semantics<parallel>, #tpu.dimension_semantics<parallel>], iteration_bounds = array<i64: 2, 1>, scalar_prefetch = 0 : i64, scratch_operands = 0 : i64, tpu.core_type = #tpu.core_type<tc>, window_params = [{transform_indices = @transform_0, window_bounds = array<i64: 1, 24, 40>}, {transform_indices = @transform_1, window_bounds = array<i64: 1, 24, 40>}, {transform_indices = @transform_2, window_bounds = array<i64: 1, 24, 40>}, {pipeline_mode = #tpu.pipeline_mode<synchronous>, transform_indices = @transform_3, window_bounds = array<i64: 1, 40>}, {pipeline_mode = #tpu.pipeline_mode<synchronous>, transform_indices = @transform_4, window_bounds = array<i64: 1, 40>}, {pipeline_mode = #tpu.pipeline_mode<synchronous>, transform_indices = @transform_5, window_bounds = array<i64: 1, 40>}, {pipeline_mode = #tpu.pipeline_mode<synchronous>, transform_indices = @transform_6, window_bounds = array<i64: 1, 40>}, {pipeline_mode = #tpu.pipeline_mode<synchronous>, transform_indices = @transform_7, window_bounds = array<i64: 1, 40>}, {pipeline_mode = #tpu.pipeline_mode<synchronous>, transform_indices = @transform_8, window_bounds = array<i64: 1, 40>}, {pipeline_mode = #tpu.pipeline_mode<synchronous>, transform_indices = @transform_9, window_bounds = array<i64: 40, 320>}, {pipeline_mode = #tpu.pipeline_mode<synchronous>, transform_indices = @transform_10, window_bounds = array<i64: 40, 320>}, {pipeline_mode = #tpu.pipeline_mode<synchronous>, transform_indices = @transform_11, window_bounds = array<i64: 40, 320>}, {pipeline_mode = #tpu.pipeline_mode<synchronous>, transform_indices = @transform_12, window_bounds = array<i64: 1, 320>}, {pipeline_mode = #tpu.pipeline_mode<synchronous>, transform_indices = @transform_13, window_bounds = array<i64: 320, 640>}, {pipeline_mode = #tpu.pipeline_mode<synchronous>, transform_indices = @transform_14, window_bounds = array<i64: 1, 640>}, {pipeline_mode = #tpu.pipeline_mode<synchronous>, transform_indices = @transform_15, window_bounds = array<i64: 640, 128>}, {pipeline_mode = #tpu.pipeline_mode<synchronous>, transform_indices = @transform_16, window_bounds = array<i64: 1, 128>}, {transform_indices = @transform_17, window_bounds = array<i64: 1, 24, 128>}]} {
    %c0 = arith.constant 0 : index
    %c0_0 = arith.constant 0 : index
    %0 = vector.load %arg14[%c0, %c0_0] : memref<1x320xf32, #tpu.memory_space<vmem>>, vector<1x320xf32>
    %c0_1 = arith.constant 0 : index
    %c0_2 = arith.constant 0 : index
    %c0_3 = arith.constant 0 : index
    %1 = vector.load %arg2[%c0_1, %c0_2, %c0_3] : memref<1x24x40xf32, #tpu.memory_space<vmem>>, vector<1x24x40xf32>
    %2 = vector.shape_cast %1 : vector<1x24x40xf32> to vector<24x40xf32>
    %c0_4 = arith.constant 0 : index
    %c0_5 = arith.constant 0 : index
    %3 = vector.load %arg5[%c0_4, %c0_5] : memref<1x40xf32, #tpu.memory_space<vmem>>, vector<1x40xf32>
    %4 = vector.broadcast %3 : vector<1x40xf32> to vector<24x40xf32>
    %5 = arith.mulf %2, %4 : vector<24x40xf32>
    %c0_6 = arith.constant 0 : index
    %c0_7 = arith.constant 0 : index
    %6 = vector.load %arg8[%c0_6, %c0_7] : memref<1x40xf32, #tpu.memory_space<vmem>>, vector<1x40xf32>
    %7 = vector.broadcast %6 : vector<1x40xf32> to vector<24x40xf32>
    %8 = arith.addf %5, %7 : vector<24x40xf32>
    %c0_8 = arith.constant 0 : index
    %c0_9 = arith.constant 0 : index
    %9 = vector.load %arg11[%c0_8, %c0_9] : memref<40x320xf32, #tpu.memory_space<vmem>>, vector<40x320xf32>
    %cst = arith.constant dense<0.000000e+00> : vector<24x320xf32>
    %10 = tpu.matmul %8, %9, %cst {dimension_numbers = #tpu.dot_dimension_numbers<[1], [0], [0], [1], [0, 0, 1, 1], [], []>} : vector<24x40xf32>, vector<40x320xf32>, vector<24x320xf32> -> vector<24x320xf32>
    %11 = vector.broadcast %0 : vector<1x320xf32> to vector<24x320xf32>
    %12 = arith.addf %11, %10 : vector<24x320xf32>
    %c0_10 = arith.constant 0 : index
    %c0_11 = arith.constant 0 : index
    %c0_12 = arith.constant 0 : index
    %13 = vector.load %arg3[%c0_10, %c0_11, %c0_12] : memref<1x24x40xf32, #tpu.memory_space<vmem>>, vector<1x24x40xf32>
    %14 = vector.shape_cast %13 : vector<1x24x40xf32> to vector<24x40xf32>
    %c0_13 = arith.constant 0 : index
    %c0_14 = arith.constant 0 : index
    %15 = vector.load %arg6[%c0_13, %c0_14] : memref<1x40xf32, #tpu.memory_space<vmem>>, vector<1x40xf32>
    %16 = vector.broadcast %15 : vector<1x40xf32> to vector<24x40xf32>
    %17 = arith.mulf %14, %16 : vector<24x40xf32>
    %c0_15 = arith.constant 0 : index
    %c0_16 = arith.constant 0 : index
    %18 = vector.load %arg9[%c0_15, %c0_16] : memref<1x40xf32, #tpu.memory_space<vmem>>, vector<1x40xf32>
    %19 = vector.broadcast %18 : vector<1x40xf32> to vector<24x40xf32>
    %20 = arith.addf %17, %19 : vector<24x40xf32>
    %c0_17 = arith.constant 0 : index
    %c0_18 = arith.constant 0 : index
    %21 = vector.load %arg12[%c0_17, %c0_18] : memref<40x320xf32, #tpu.memory_space<vmem>>, vector<40x320xf32>
    %cst_19 = arith.constant dense<0.000000e+00> : vector<24x320xf32>
    %22 = tpu.matmul %20, %21, %cst_19 {dimension_numbers = #tpu.dot_dimension_numbers<[1], [0], [0], [1], [0, 0, 1, 1], [], []>} : vector<24x40xf32>, vector<40x320xf32>, vector<24x320xf32> -> vector<24x320xf32>
    %23 = arith.addf %12, %22 : vector<24x320xf32>
    %c0_20 = arith.constant 0 : index
    %c0_21 = arith.constant 0 : index
    %c0_22 = arith.constant 0 : index
    %24 = vector.load %arg4[%c0_20, %c0_21, %c0_22] : memref<1x24x40xf32, #tpu.memory_space<vmem>>, vector<1x24x40xf32>
    %25 = vector.shape_cast %24 : vector<1x24x40xf32> to vector<24x40xf32>
    %c0_23 = arith.constant 0 : index
    %c0_24 = arith.constant 0 : index
    %26 = vector.load %arg7[%c0_23, %c0_24] : memref<1x40xf32, #tpu.memory_space<vmem>>, vector<1x40xf32>
    %27 = vector.broadcast %26 : vector<1x40xf32> to vector<24x40xf32>
    %28 = arith.mulf %25, %27 : vector<24x40xf32>
    %c0_25 = arith.constant 0 : index
    %c0_26 = arith.constant 0 : index
    %29 = vector.load %arg10[%c0_25, %c0_26] : memref<1x40xf32, #tpu.memory_space<vmem>>, vector<1x40xf32>
    %30 = vector.broadcast %29 : vector<1x40xf32> to vector<24x40xf32>
    %31 = arith.addf %28, %30 : vector<24x40xf32>
    %c0_27 = arith.constant 0 : index
    %c0_28 = arith.constant 0 : index
    %32 = vector.load %arg13[%c0_27, %c0_28] : memref<40x320xf32, #tpu.memory_space<vmem>>, vector<40x320xf32>
    %cst_29 = arith.constant dense<0.000000e+00> : vector<24x320xf32>
    %33 = tpu.matmul %31, %32, %cst_29 {dimension_numbers = #tpu.dot_dimension_numbers<[1], [0], [0], [1], [0, 0, 1, 1], [], []>} : vector<24x40xf32>, vector<40x320xf32>, vector<24x320xf32> -> vector<24x320xf32>
    %34 = arith.addf %23, %33 : vector<24x320xf32>
    %cst_30 = arith.constant 0.000000e+00 : f32
    %35 = vector.broadcast %cst_30 : f32 to vector<24x320xf32>
    %36 = arith.cmpf oge, %34, %35 : vector<24x320xf32>
    %cst_31 = arith.constant 0.00999999977 : f32
    %37 = vector.broadcast %cst_31 : f32 to vector<24x320xf32>
    %38 = arith.mulf %37, %34 : vector<24x320xf32>
    %39 = arith.select %36, %34, %38 : vector<24x320xi1>, vector<24x320xf32>
    %c0_32 = arith.constant 0 : index
    %c0_33 = arith.constant 0 : index
    %40 = vector.load %arg15[%c0_32, %c0_33] : memref<320x640xf32, #tpu.memory_space<vmem>>, vector<320x640xf32>
    %cst_34 = arith.constant dense<0.000000e+00> : vector<24x640xf32>
    %41 = tpu.matmul %39, %40, %cst_34 {dimension_numbers = #tpu.dot_dimension_numbers<[1], [0], [0], [1], [0, 0, 1, 1], [], []>} : vector<24x320xf32>, vector<320x640xf32>, vector<24x640xf32> -> vector<24x640xf32>
    %c0_35 = arith.constant 0 : index
    %c0_36 = arith.constant 0 : index
    %42 = vector.load %arg16[%c0_35, %c0_36] : memref<1x640xf32, #tpu.memory_space<vmem>>, vector<1x640xf32>
    %43 = vector.broadcast %42 : vector<1x640xf32> to vector<24x640xf32>
    %44 = arith.addf %41, %43 : vector<24x640xf32>
    %cst_37 = arith.constant 0.000000e+00 : f32
    %45 = vector.broadcast %cst_37 : f32 to vector<24x640xf32>
    %46 = arith.cmpf oge, %44, %45 : vector<24x640xf32>
    %cst_38 = arith.constant 0.00999999977 : f32
    %47 = vector.broadcast %cst_38 : f32 to vector<24x640xf32>
    %48 = arith.mulf %47, %44 : vector<24x640xf32>
    %49 = arith.select %46, %44, %48 : vector<24x640xi1>, vector<24x640xf32>
    %c0_39 = arith.constant 0 : index
    %c0_40 = arith.constant 0 : index
    %50 = vector.load %arg17[%c0_39, %c0_40] : memref<640x128xf32, #tpu.memory_space<vmem>>, vector<640x128xf32>
    %cst_41 = arith.constant dense<0.000000e+00> : vector<24x128xf32>
    %51 = tpu.matmul %49, %50, %cst_41 {dimension_numbers = #tpu.dot_dimension_numbers<[1], [0], [0], [1], [0, 0, 1, 1], [], []>} : vector<24x640xf32>, vector<640x128xf32>, vector<24x128xf32> -> vector<24x128xf32>
    %c0_42 = arith.constant 0 : index
    %c0_43 = arith.constant 0 : index
    %52 = vector.load %arg18[%c0_42, %c0_43] : memref<1x128xf32, #tpu.memory_space<vmem>>, vector<1x128xf32>
    %53 = vector.broadcast %52 : vector<1x128xf32> to vector<24x128xf32>
    %54 = arith.addf %51, %53 : vector<24x128xf32>
    %c0_44 = arith.constant 0 : index
    %c0_45 = arith.constant 0 : index
    %c0_46 = arith.constant 0 : index
    %55 = vector.load %arg19[%c0_44, %c0_45, %c0_46] : memref<1x24x128xf32, #tpu.memory_space<vmem>>, vector<1x24x128xf32>
    %56 = vector.shape_cast %55 : vector<1x24x128xf32> to vector<24x128xf32>
    %57 = vector.shape_cast %54 : vector<24x128xf32> to vector<1x24x128xf32>
    tpu.vector_store %arg19[%c0_44, %c0_45, %c0_46], %57 {strides = array<i32>} : memref<1x24x128xf32, #tpu.memory_space<vmem>>, vector<1x24x128xf32>,
    return
  }
  func.func @transform_0(%arg0: i32, %arg1: i32) -> (i32, i32, i32) {
    %c4_i32 = arith.constant 4 : i32
    %0 = arith.addi %arg0, %c4_i32 : i32
    %c0_i32 = arith.constant 0 : i32
    %c0_i32_0 = arith.constant 0 : i32
    return %0, %arg1, %c0_i32 : i32, i32, i32
  }
  func.func @transform_1(%arg0: i32, %arg1: i32) -> (i32, i32, i32) {
    %c2_i32 = arith.constant 2 : i32
    %0 = arith.addi %arg0, %c2_i32 : i32
    %c0_i32 = arith.constant 0 : i32
    %c0_i32_0 = arith.constant 0 : i32
    return %0, %arg1, %c0_i32 : i32, i32, i32
  }
  func.func @transform_2(%arg0: i32, %arg1: i32) -> (i32, i32, i32) {
    %c0_i32 = arith.constant 0 : i32
    %0 = arith.addi %arg0, %c0_i32 : i32
    %c0_i32_0 = arith.constant 0 : i32
    %c0_i32_1 = arith.constant 0 : i32
    return %0, %arg1, %c0_i32_0 : i32, i32, i32
  }
  func.func @transform_3(%arg0: i32, %arg1: i32) -> (i32, i32) {
    %c0_i32 = arith.constant 0 : i32
    %c0_i32_0 = arith.constant 0 : i32
    %c0_i32_1 = arith.constant 0 : i32
    return %c0_i32, %c0_i32_0 : i32, i32
  }
  func.func @transform_4(%arg0: i32, %arg1: i32) -> (i32, i32) {
    %c0_i32 = arith.constant 0 : i32
    %c0_i32_0 = arith.constant 0 : i32
    %c0_i32_1 = arith.constant 0 : i32
    return %c0_i32, %c0_i32_0 : i32, i32
  }
  func.func @transform_5(%arg0: i32, %arg1: i32) -> (i32, i32) {
    %c0_i32 = arith.constant 0 : i32
    %c0_i32_0 = arith.constant 0 : i32
    %c0_i32_1 = arith.constant 0 : i32
    return %c0_i32, %c0_i32_0 : i32, i32
  }
  func.func @transform_6(%arg0: i32, %arg1: i32) -> (i32, i32) {
    %c0_i32 = arith.constant 0 : i32
    %c0_i32_0 = arith.constant 0 : i32
    %c0_i32_1 = arith.constant 0 : i32
    return %c0_i32, %c0_i32_0 : i32, i32
  }
  func.func @transform_7(%arg0: i32, %arg1: i32) -> (i32, i32) {
    %c0_i32 = arith.constant 0 : i32
    %c0_i32_0 = arith.constant 0 : i32
    %c0_i32_1 = arith.constant 0 : i32
    return %c0_i32, %c0_i32_0 : i32, i32
  }
  func.func @transform_8(%arg0: i32, %arg1: i32) -> (i32, i32) {
    %c0_i32 = arith.constant 0 : i32
    %c0_i32_0 = arith.constant 0 : i32
    %c0_i32_1 = arith.constant 0 : i32
    return %c0_i32, %c0_i32_0 : i32, i32
  }
  func.func @transform_9(%arg0: i32, %arg1: i32) -> (i32, i32) {
    %c0_i32 = arith.constant 0 : i32
    %c0_i32_0 = arith.constant 0 : i32
    %c0_i32_1 = arith.constant 0 : i32
    return %c0_i32, %c0_i32_0 : i32, i32
  }
  func.func @transform_10(%arg0: i32, %arg1: i32) -> (i32, i32) {
    %c0_i32 = arith.constant 0 : i32
    %c0_i32_0 = arith.constant 0 : i32
    %c0_i32_1 = arith.constant 0 : i32
    return %c0_i32, %c0_i32_0 : i32, i32
  }
  func.func @transform_11(%arg0: i32, %arg1: i32) -> (i32, i32) {
    %c0_i32 = arith.constant 0 : i32
    %c0_i32_0 = arith.constant 0 : i32
    %c0_i32_1 = arith.constant 0 : i32
    return %c0_i32, %c0_i32_0 : i32, i32
  }
  func.func @transform_12(%arg0: i32, %arg1: i32) -> (i32, i32) {
    %c0_i32 = arith.constant 0 : i32
    %c0_i32_0 = arith.constant 0 : i32
    %c0_i32_1 = arith.constant 0 : i32
    return %c0_i32, %c0_i32_0 : i32, i32
  }
  func.func @transform_13(%arg0: i32, %arg1: i32) -> (i32, i32) {
    %c0_i32 = arith.constant 0 : i32
    %c0_i32_0 = arith.constant 0 : i32
    %c0_i32_1 = arith.constant 0 : i32
    return %c0_i32, %c0_i32_0 : i32, i32
  }
  func.func @transform_14(%arg0: i32, %arg1: i32) -> (i32, i32) {
    %c0_i32 = arith.constant 0 : i32
    %c0_i32_0 = arith.constant 0 : i32
    %c0_i32_1 = arith.constant 0 : i32
    return %c0_i32, %c0_i32_0 : i32, i32
  }
  func.func @transform_15(%arg0: i32, %arg1: i32) -> (i32, i32) {
    %c0_i32 = arith.constant 0 : i32
    %c0_i32_0 = arith.constant 0 : i32
    %c0_i32_1 = arith.constant 0 : i32
    return %c0_i32, %c0_i32_0 : i32, i32
  }
  func.func @transform_16(%arg0: i32, %arg1: i32) -> (i32, i32) {
    %c0_i32 = arith.constant 0 : i32
    %c0_i32_0 = arith.constant 0 : i32
    %c0_i32_1 = arith.constant 0 : i32
    return %c0_i32, %c0_i32_0 : i32, i32
  }
  func.func @transform_17(%arg0: i32, %arg1: i32) -> (i32, i32, i32) {
    %c0_i32 = arith.constant 0 : i32
    %c0_i32_0 = arith.constant 0 : i32
    return %arg0, %arg1, %c0_i32 : i32, i32, i32
  }
}

module attributes {stable_mosaic.version = 11 : i64} {
  func.func @_adp_kernel(%arg0: i32, %arg1: memref<16x10xf32, #tpu.memory_space<vmem>>, %arg2: memref<10x128xf32, #tpu.memory_space<vmem>>, %arg3: memref<16x128xf32, #tpu.memory_space<vmem>>) attributes {dimension_semantics = [#tpu.dimension_semantics<parallel>], iteration_bounds = array<i64: 1>, scalar_prefetch = 0 : i64, scratch_operands = 0 : i64, tpu.core_type = #tpu.core_type<tc>, window_params = [{transform_indices = @transform_0, window_bounds = array<i64: 16, 10>}, {pipeline_mode = #tpu.pipeline_mode<synchronous>, transform_indices = @transform_1, window_bounds = array<i64: 10, 128>}, {transform_indices = @transform_2, window_bounds = array<i64: 16, 128>}]} {
    %c0 = arith.constant 0 : index
    %c0_0 = arith.constant 0 : index
    %0 = vector.load %arg1[%c0, %c0_0] : memref<16x10xf32, #tpu.memory_space<vmem>>, vector<16x10xf32>
    %c0_1 = arith.constant 0 : index
    %c0_2 = arith.constant 0 : index
    %1 = vector.load %arg2[%c0_1, %c0_2] : memref<10x128xf32, #tpu.memory_space<vmem>>, vector<10x128xf32>
    %cst = arith.constant dense<0.000000e+00> : vector<16x128xf32>
    %2 = tpu.matmul %0, %1, %cst {dimension_numbers = #tpu.dot_dimension_numbers<[1], [0], [0], [1], [0, 0, 1, 1], [], []>} : vector<16x10xf32>, vector<10x128xf32>, vector<16x128xf32> -> vector<16x128xf32>
    %cst_3 = arith.constant 0.000000e+00 : f32
    %3 = vector.broadcast %cst_3 : f32 to vector<16x128xf32>
    %4 = arith.maximumf %2, %3 : vector<16x128xf32>
    %5 = tpu.iota {dimensions = array<i32: 1>} : vector<16x128xi32>
    %c9_i32 = arith.constant 9 : i32
    %6 = vector.broadcast %c9_i32 : i32 to vector<16x128xi32>
    %7 = arith.cmpi slt, %5, %6 : vector<16x128xi32>
    %cst_4 = arith.constant 0xFF800000 : f32
    %8 = vector.broadcast %cst_4 : f32 to vector<16x128xf32>
    %9 = arith.select %7, %4, %8 : vector<16x128xi1>, vector<16x128xf32>
    %cst_5 = arith.constant dense<0xFF800000> : vector<16xf32>
    %10 = vector.multi_reduction <maximumf>, %9, %cst_5 [1] : vector<16x128xf32> to vector<16xf32>
    %11 = vector.shape_cast %10 : vector<16xf32> to vector<16x1xf32>
    %12 = vector.broadcast %11 : vector<16x1xf32> to vector<16x128xf32>
    %13 = arith.subf %9, %12 : vector<16x128xf32>
    %14 = math.exp %13 : vector<16x128xf32>
    %cst_6 = arith.constant dense<0.000000e+00> : vector<16xf32>
    %15 = vector.multi_reduction <add>, %14, %cst_6 [1] : vector<16x128xf32> to vector<16xf32>
    %16 = vector.shape_cast %15 : vector<16xf32> to vector<16x1xf32>
    %17 = vector.broadcast %16 : vector<16x1xf32> to vector<16x128xf32>
    %18 = arith.divf %14, %17 : vector<16x128xf32>
    %c0_7 = arith.constant 0 : index
    %c0_8 = arith.constant 0 : index
    %19 = vector.load %arg3[%c0_7, %c0_8] : memref<16x128xf32, #tpu.memory_space<vmem>>, vector<16x128xf32>
    tpu.vector_store %arg3[%c0_7, %c0_8], %18 {strides = array<i32>} : memref<16x128xf32, #tpu.memory_space<vmem>>, vector<16x128xf32>,
    return
  }
  func.func @transform_0(%arg0: i32) -> (i32, i32) {
    %c0_i32 = arith.constant 0 : i32
    %c0_i32_0 = arith.constant 0 : i32
    return %arg0, %c0_i32 : i32, i32
  }
  func.func @transform_1(%arg0: i32) -> (i32, i32) {
    %c0_i32 = arith.constant 0 : i32
    %c0_i32_0 = arith.constant 0 : i32
    %c0_i32_1 = arith.constant 0 : i32
    return %c0_i32, %c0_i32_0 : i32, i32
  }
  func.func @transform_2(%arg0: i32) -> (i32, i32) {
    %c0_i32 = arith.constant 0 : i32
    %c0_i32_0 = arith.constant 0 : i32
    return %arg0, %c0_i32 : i32, i32
  }
}

</mosaic_0001>

<llo_original>
// kernel: hidta_forward.7
$region0: #{hidta_forward.7}
  #allocation0 [shape = 'u32[]', space=smem, size = 0x4, offset = 0x4, fixed_abs, tag = 'smem constant byte address 0x4 - core index']
  #allocation1 [shape = 'u32[144,128]{1,0:T(1,128)}', space=vmem, size = 0x12000, scoped, tag = 'internal scratch']
  %s0 = inlined_call_operand.vmem [shape: f32[8,24,8], index: 0, kind: input, shape index: {}]
  %s1 = inlined_call_operand.vmem [shape: f32[8,40], index: 1, kind: input, shape index: {}]
  %s2 = inlined_call_operand.vmem [shape: f32[1,40], index: 2, kind: input, shape index: {}]
  %s3 = inlined_call_operand.vmem [shape: f32[8,24,40], index: 3, kind: output, shape index: {}]
  %s4 = sld [smem:[#allocation0]]
  $region45: #{hidta_forward.7} parent=0
    _
  %s6 = ssub.s32 1, %s4
  %s7 = scalar_select 0, %s6, %s4
  loop: start=0, step=1, limit=10
  $region2: #{hidta_forward.7} parent=0 // loop_pre_header
    _
  $region3: #{hidta_forward.7} parent=0 // loop_header
    %s9 = sphi 0, %s13
    %p10 = scmp.ge.s32.totalorder %s9, 10
    %s16 = sphi 0, %s28
    %s17 = sphi 0, %s24
    %s18 = sphi 0, %s16
    %s19 = sphi 0, %s17
    %s20 = sphi 0, %s18
    %s21 = sphi 0, %s19
    %s33 = sphi 0, %s35
    %s36 = sphi 0, %s33
    %s37 = sphi 0, %s36
    %s53 = sphi 0, %s37
    %s57 = sphi 0, %s57
    %s59 = sphi 0, %s57
    %s60 = sphi 0, %s59
    %s74 = sphi 0, %s60
    %s78 = sphi 0, %s78
    %s80 = sphi 0, %s78
    %s81 = sphi 0, %s80
    %s95 = sphi 0, %s81
    %s103 = sphi 0, %s105
    %s106 = sphi 0, %s103
    %s107 = sphi 0, %s106
    %s123 = sphi 0, %s107
  $region4: #{hidta_forward.7} parent=0 // loop_header_branch
    %12 = sbr.rel (%p10) target = $region8
  $region5: #{hidta_forward.7} parent=0 // loop_body
    %s14 = ssub.s32 %s9, 1
    %s15 = ssub.s32 %s9, 2
    %s22 = sadd.s32 1, %s17
    %p23 = scmp.ge.s32.totalorder %s22, 1
    %s24 = scalar_select %p23, 0, %s22
    %s25 = sadd.s32 1, %s16
    %s26 = scalar_select %p23, %s25, %s16
    %p27 = scmp.ge.s32.totalorder %s26, 8
    %s28 = scalar_select %p27, 0, %s26
    %s29 = ssub.s32 %s16, %s28
    %s30 = ssub.s32 %s17, %s24
    %s31 = sor.u32 %s29, %s30
    %p32 = scmp.eq.s32.totalorder %s31, 0
    %s34 = sadd.s32 %s33, 1
    %s35 = scalar_select %p32, %s33, %s34
    %p38 = pneg %p32
    %p39 = scmp.eq.s32.totalorder %s9, 7
    %p40 = por %p38, %p39
    %p41 = scmp.ne.s32.totalorder %s33, %s36
    %p42 = scmp.eq.s32.totalorder %s9, 0
    %p43 = por %p41, %p42
    %p44 = scmp.ne.s32.totalorder %s33, %s36
    %p45 = scmp.eq.s32.totalorder %s14, 7
    %p46 = por %p44, %p45
    %p47 = scmp.ne.s32.totalorder %s36, %s37
    %p48 = scmp.eq.s32.totalorder %s14, 0
    %p49 = por %p47, %p48
    %p50 = scmp.ne.s32.totalorder %s36, %s37
    %p51 = scmp.eq.s32.totalorder %s15, 7
    %p52 = por %p50, %p51
    %p54 = scmp.ne.s32.totalorder %s37, %s53
    %p55 = scmp.eq.s32.totalorder %s15, 0
    %p56 = por %p54, %p55
    %s58 = sadd.s32 %s57, 1
    %p61 = scmp.eq.s32.totalorder %s9, 7
    %p62 = scmp.ne.s32.totalorder %s57, %s59
    %p63 = scmp.eq.s32.totalorder %s9, 0
    %p64 = por %p62, %p63
    %p65 = scmp.ne.s32.totalorder %s57, %s59
    %p66 = scmp.eq.s32.totalorder %s14, 7
    %p67 = por %p65, %p66
    %p68 = scmp.ne.s32.totalorder %s59, %s60
    %p69 = scmp.eq.s32.totalorder %s14, 0
    %p70 = por %p68, %p69
    %p71 = scmp.ne.s32.totalorder %s59, %s60
    %p72 = scmp.eq.s32.totalorder %s15, 7
    %p73 = por %p71, %p72
    %p75 = scmp.ne.s32.totalorder %s60, %s74
    %p76 = scmp.eq.s32.totalorder %s15, 0
    %p77 = por %p75, %p76
    %s79 = sadd.s32 %s78, 1
    %p82 = scmp.eq.s32.totalorder %s9, 7
    %p83 = scmp.ne.s32.totalorder %s78, %s80
    %p84 = scmp.eq.s32.totalorder %s9, 0
    %p85 = por %p83, %p84
    %p86 = scmp.ne.s32.totalorder %s78, %s80
    %p87 = scmp.eq.s32.totalorder %s14, 7
    %p88 = por %p86, %p87
    %p89 = scmp.ne.s32.totalorder %s80, %s81
    %p90 = scmp.eq.s32.totalorder %s14, 0
    %p91 = por %p89, %p90
    %p92 = scmp.ne.s32.totalorder %s80, %s81
    %p93 = scmp.eq.s32.totalorder %s15, 7
    %p94 = por %p92, %p93
    %p96 = scmp.ne.s32.totalorder %s81, %s95
    %p97 = scmp.eq.s32.totalorder %s15, 0
    %p98 = por %p96, %p97
    %s99 = ssub.s32 %s16, %s28
    %s100 = ssub.s32 %s17, %s24
    %s101 = sor.u32 %s99, %s100
    %p102 = scmp.eq.s32.totalorder %s101, 0
    %s104 = sadd.s32 %s103, 1
    %s105 = scalar_select %p102, %s103, %s104
    %p108 = pneg %p102
    %p109 = scmp.eq.s32.totalorder %s9, 7
    %p110 = por %p108, %p109
    %p111 = scmp.ne.s32.totalorder %s103, %s106
    %p112 = scmp.eq.s32.totalorder %s9, 0
    %p113 = por %p111, %p112
    %p114 = scmp.ne.s32.totalorder %s103, %s106
    %p115 = scmp.eq.s32.totalorder %s14, 7
    %p116 = por %p114, %p115
    %p117 = scmp.ne.s32.totalorder %s106, %s107
    %p118 = scmp.eq.s32.totalorder %s14, 0
    %p119 = por %p117, %p118
    %p120 = scmp.ne.s32.totalorder %s106, %s107
    %p121 = scmp.eq.s32.totalorder %s15, 7
    %p122 = por %p120, %p121
    %p124 = scmp.ne.s32.totalorder %s107, %s123
    %p125 = scmp.eq.s32.totalorder %s15, 0
    %p126 = por %p124, %p125
    %p127 = scmp.le.s32.totalorder 1, %s9
    %p128 = scmp.lt.s32.totalorder %s9, 9
    %p129 = pnand %p127, %p128
    %p130 = pneg %p129
    // Predicated region
    $region9: #{hidta_forward.7} parent=5 // pred_check
      _
    $region10: #{hidta_forward.7} parent=5 // pred_check_branch
      %132 = sbr.rel (%p129) target = $region12
    $region11: #{hidta_forward.7} parent=5 // pred_region
      %s133 = ssub.s32 %s9, 1
      // Predicated region
      $region13: #{hidta_forward.7} parent=11 // pred_check
        %p134 = pneg %p70
      $region14: #{hidta_forward.7} parent=11 // pred_check_branch
        %136 = sbr.rel (%p134) target = $region16
      $region15: #{hidta_forward.7} parent=11 // pred_region
        _
      $region16: #{hidta_forward.7} parent=11 // pred_fallthru
        _
      // Predicated region
      $region17: #{hidta_forward.7} parent=11 // pred_check
        %p137 = pneg %p91
      $region18: #{hidta_forward.7} parent=11 // pred_check_branch
        %139 = sbr.rel (%p137) target = $region20
      $region19: #{hidta_forward.7} parent=11 // pred_region
        _
      $region20: #{hidta_forward.7} parent=11 // pred_fallthru
        _
    $region12: #{hidta_forward.7} parent=5 // pred_fallthru
      _
    %p140 = scmp.lt.s32.totalorder %s9, 8
    // Predicated region
    $region21: #{hidta_forward.7} parent=5 // pred_check
      %p141 = pneg %p140
    $region22: #{hidta_forward.7} parent=5 // pred_check_branch
      %143 = sbr.rel (%p141) target = $region24
    $region23: #{hidta_forward.7} parent=5 // pred_region
      // Predicated region
      $region25: #{hidta_forward.7} parent=23 // pred_check
        %p144 = pneg %p43
      $region26: #{hidta_forward.7} parent=23 // pred_check_branch
        %146 = sbr.rel (%p144) target = $region28
      $region27: #{hidta_forward.7} parent=23 // pred_region
        %s147 = smul.u32 3, %s17
        %p148 = scmp.lt.s32.totalorder %s16, 7
        %s149 = scalar_select %p148, %s16, 7
        %p150 = scmp.lt.s32.totalorder %s147, 2
        %s151 = scalar_select %p150, %s147, 2
        %s152 = smul.addr %s149, 3
        %s153 = sadd.s32 %s151, %s152
        %s154 = smul.addr %s153, 8
        %s155 = scalar_lea.vmem %s0, %s154
        %s156 = smul.u32 3, %s17
      $region28: #{hidta_forward.7} parent=23 // pred_fallthru
        _
    $region24: #{hidta_forward.7} parent=5 // pred_fallthru
      _
    %p157 = scmp.le.s32.totalorder 1, %s9
    %p158 = scmp.lt.s32.totalorder %s9, 9
    %p159 = pnand %p157, %p158
    %p160 = pneg %p159
    // Predicated region
    $region29: #{hidta_forward.7} parent=5 // pred_check
      _
    $region30: #{hidta_forward.7} parent=5 // pred_check_branch
      %162 = sbr.rel (%p159) target = $region32
    $region31: #{hidta_forward.7} parent=5 // pred_region
      %s163 = ssub.s32 %s9, 1
      %s164 = smul.u32 3, %s19
      %p165 = scmp.lt.s32.totalorder %s18, 7
      %s166 = scalar_select %p165, %s18, 7
      %p167 = scmp.lt.s32.totalorder %s164, 2
      %s168 = scalar_select %p167, %s164, 2
      %s169 = smul.addr %s166, 3
      %s170 = sadd.s32 %s168, %s169
      %s171 = smul.addr %s170, 8
      %s172 = scalar_lea.vmem %s0, %s171
      %p173 = pneg %p49
      %p174 = pneg %p46
      %p175 = pneg %p70
      %p176 = pneg %p67
      %p177 = pneg %p91
      %p178 = pneg %p88
      %p179 = pneg %p119
      %p180 = pneg %p116
      %s181 = smul.u32 3, %s19
      %p182 = scmp.lt.s32.totalorder %s18, 7
      %s183 = scalar_select %p182, %s18, 7
      %p184 = scmp.lt.s32.totalorder %s181, 2
      %s185 = scalar_select %p184, %s181, 2
      %s186 = smul.addr %s183, 3
      %s187 = sadd.s32 %s185, %s186
      %s188 = smul.addr %s187, 8
      %s189 = scalar_lea.vmem %s3, %s188
      %s190 = smul.u32 3, %s19
      %p191 = scmp.lt.s32.totalorder %s18, 7
      %s192 = scalar_select %p191, %s18, 7
      %p193 = scmp.lt.s32.totalorder %s190, 2
      %s194 = scalar_select %p193, %s190, 2
      %s195 = smul.addr %s192, 3
      %s196 = sadd.s32 %s194, %s195
      %s197 = smul.addr %s196, 8
      %s198 = scalar_lea.vmem %s0, %s197
      %s199 = smul.u32 3, %s19
      %s200 = smul.u32 3, %s19
      %p201 = scmp.lt.s32.totalorder %s18, 7
      %s202 = scalar_select %p201, %s18, 7
      %p203 = scmp.lt.s32.totalorder %s200, 2
      %s204 = scalar_select %p203, %s200, 2
      %s205 = smul.addr %s202, 3
      %s206 = sadd.s32 %s204, %s205
      %s207 = smul.addr %s206, 8
      %s208 = scalar_lea.vmem %s3, %s207
      %s209 = smul.u32 3, %s19
      %v210 = vld [vmem:[%s198] sm:$0xff]
      %v211 = vld [vmem:[%s198 + $0x8] sm:$0xff]
      %v212 = vld [vmem:[%s198 + $0x10] sm:$0xff]
      %v213 = vld [vmem:[%s1] sm:$0xff]
      %v214 = vld [vmem:[%s2] sm:$0x1]
      %v216 = vlaneseq
      %v217 = vshrl.u32 %v216, 7
      %v218 = vsub.s32 0, %v217
      %v219 = vrot.slane %v214, %v218
      %vm221 = vcmask 64512
      %v223 = vsel %vm221, %v210, 0
      %v226 = vsel %vm221, %v211, 0
      %v229 = vsel %vm221, %v212, 0
      %231 = vmatprep.subr.mxu0 0.0
      %232 = vmatpush1.msra.mxu0 %v213
      %233 = vmatprep.subr.mxu0 0.0
      %234 = vmatpush1.msra.mxu0 0.0
      %235 = vmatprep.subr.mxu0 0.0
      %236 = vmatpush1.msra.mxu0 0.0
      %237 = vmatprep.subr.mxu0 0.0
      %238 = vmatpush1.msra.mxu0 0.0
      %239 = vmatprep.subr.mxu0 0.0
      %240 = vmatpush1.msra.mxu0 0.0
      %241 = vmatprep.subr.mxu0 0.0
      %242 = vmatpush1.msra.mxu0 0.0
      %243 = vmatprep.subr.mxu0 0.0
      %244 = vmatpush1.msra.mxu0 0.0
      %245 = vmatprep.subr.mxu0 0.0
      %246 = vmatpush1.msra.mxu0 0.0
      %247 = vmatprep.subr.mxu0 0.0
      %248 = vmatpush1.msra.mxu0 0.0
      %249 = vmatprep.subr.mxu0 0.0
      %250 = vmatpush1.msra.mxu0 0.0
      %251 = vmatprep.subr.mxu0 0.0
      %252 = vmatpush1.msra.mxu0 0.0
      %253 = vmatprep.subr.mxu0 0.0
      %254 = vmatpush1.msra.mxu0 0.0
      %255 = vmatprep.subr.mxu0 0.0
      %256 = vmatpush1.msra.mxu0 0.0
      %257 = vmatprep.subr.mxu0 0.0
      %258 = vmatpush1.msra.mxu0 0.0
      %259 = vmatprep.subr.mxu0 0.0
      %260 = vmatpush1.msra.mxu0 0.0
      %261 = vmatprep.subr.mxu0 0.0
      %262 = vmatpush1.msra.mxu0 0.0
      %263 = vmatprep.subr.mxu0 0.0
      %264 = vmatpush1.msra.mxu0 0.0
      %265 = vmatprep.subr.mxu0 0.0
      %266 = vmatpush1.msra.mxu0 0.0
      %267 = vmatprep.subr.mxu0 0.0
      %268 = vmatpush1.msra.mxu0 0.0
      %269 = vmatprep.subr.mxu0 0.0
      %270 = vmatpush1.msra.mxu0 0.0
      %271 = vmatprep.subr.mxu0 0.0
      %272 = vmatpush1.msra.mxu0 0.0
      %273 = vmatprep.subr.mxu0 0.0
      %274 = vmatpush1.msra.mxu0 0.0
      %275 = vmatprep.subr.mxu0 0.0
      %276 = vmatpush1.msra.mxu0 0.0
      %277 = vmatprep.subr.mxu0 0.0
      %278 = vmatpush1.msra.mxu0 0.0
      %279 = vmatprep.subr.mxu0 0.0
      %280 = vmatpush1.msra.mxu0 0.0
      %281 = vmatprep.subr.mxu0 0.0
      %282 = vmatpush1.msra.mxu0 0.0
      %283 = vmatprep.subr.mxu0 0.0
      %284 = vmatpush1.msra.mxu0 0.0
      %285 = vmatprep.subr.mxu0 0.0
      %286 = vmatpush1.msra.mxu0 0.0
      %287 = vmatprep.subr.mxu0 0.0
      %288 = vmatpush1.msra.mxu0 0.0
      %289 = vmatprep.subr.mxu0 0.0
      %290 = vmatpush1.msra.mxu0 0.0
      %291 = vmatprep.subr.mxu0 0.0
      %292 = vmatpush1.msra.mxu0 0.0
      %293 = vmatprep.subr.mxu0 0.0
      %294 = vmatpush1.msra.mxu0 0.0
      %295 = vmatprep.mubr.f32.mxu0 0.0
      %296 = vmatmul.mubr.f32.gmra.mrb[0].mxu0 %v223
      %v297 = vpop.f32.mrb[0].mxu0
      %v298 = vadd.f32 %v219, %v297
      %v299 = vpop.f32.mrb[0].mxu0
      %300 = vmatprep.mubr.f32.mxu0 0.0
      %301 = vmatmul.mubr.f32.gmra.mrb[0].mxu0 %v226
      %v302 = vpop.f32.mrb[0].mxu0
      %v303 = vadd.f32 %v219, %v302
      %v304 = vpop.f32.mrb[0].mxu0
      %305 = vmatprep.mubr.f32.mxu0 0.0
      %306 = vmatmul.mubr.f32.gmra.mrb[0].mxu0 %v229
      %v307 = vpop.f32.mrb[0].mxu0
      %v308 = vadd.f32 %v219, %v307
      %v309 = vpop.f32.mrb[0].mxu0
      %310 = vdwg.mxu0
      %vm311 = vcmask 326656
      %312 = vst.msk [vmem:[%s208] sm:$0xff] %vm311, %v298
      %313 = vst.msk [vmem:[%s208 + $0x8] sm:$0xff] %vm311, %v303
      %314 = vst.msk [vmem:[%s208 + $0x10] sm:$0xff] %vm311, %v308
      %s315 = smul.u32 3, %s19
      %p316 = scmp.lt.s32.totalorder %s18, 7
      %s317 = scalar_select %p316, %s18, 7
      %p318 = scmp.lt.s32.totalorder %s315, 2
      %s319 = scalar_select %p318, %s315, 2
      %s320 = smul.addr %s317, 3
      %s321 = sadd.s32 %s319, %s320
      %s322 = smul.addr %s321, 8
      %s323 = scalar_lea.vmem %s3, %s322
      // Predicated region
      $region33: #{hidta_forward.7} parent=31 // pred_check
        %p324 = pneg %p116
      $region34: #{hidta_forward.7} parent=31 // pred_check_branch
        %326 = sbr.rel (%p324) target = $region36
      $region35: #{hidta_forward.7} parent=31 // pred_region
        %s327 = smul.u32 3, %s19
      $region36: #{hidta_forward.7} parent=31 // pred_fallthru
        _
    $region32: #{hidta_forward.7} parent=5 // pred_fallthru
      _
    %p328 = scmp.le.s32.totalorder 2, %s9
    // Predicated region
    $region37: #{hidta_forward.7} parent=5 // pred_check
      %p329 = pneg %p328
    $region38: #{hidta_forward.7} parent=5 // pred_check_branch
      %331 = sbr.rel (%p329) target = $region40
    $region39: #{hidta_forward.7} parent=5 // pred_region
      %s332 = ssub.s32 %s9, 2
      // Predicated region
      $region41: #{hidta_forward.7} parent=39 // pred_check
        %p333 = pneg %p122
      $region42: #{hidta_forward.7} parent=39 // pred_check_branch
        %335 = sbr.rel (%p333) target = $region44
      $region43: #{hidta_forward.7} parent=39 // pred_region
        %s336 = smul.u32 3, %s21
        %p337 = scmp.lt.s32.totalorder %s20, 7
        %s338 = scalar_select %p337, %s20, 7
        %p339 = scmp.lt.s32.totalorder %s336, 2
        %s340 = scalar_select %p339, %s336, 2
        %s341 = smul.addr %s338, 3
        %s342 = sadd.s32 %s340, %s341
        %s343 = smul.addr %s342, 8
        %s344 = scalar_lea.vmem %s3, %s343
      $region44: #{hidta_forward.7} parent=39 // pred_fallthru
        _
    $region40: #{hidta_forward.7} parent=5 // pred_fallthru
      _
  $region6: #{hidta_forward.7} parent=0 // loop_footer
    %s13 = sadd.s32 1, %s9
  $region7: #{hidta_forward.7} parent=0 // loop_footer_branch
    %8 = sbr.rel target = $region3
  $region8: #{hidta_forward.7} parent=0 // loop_exit
    _

// kernel: hidta_forward.8
$region0: #{hidta_forward.8}
  #allocation0 [shape = 'u32[]', space=smem, size = 0x4, offset = 0x4, fixed_abs, tag = 'smem constant byte address 0x4 - core index']
  #allocation1 [shape = 'u32[144,128]{1,0:T(1,128)}', space=vmem, size = 0x12000, scoped, tag = 'internal scratch']
  %s0 = inlined_call_operand.vmem [shape: f32[8,24,40], index: 0, kind: input, shape index: {}, may-alias: {0,1}]
  %s1 = inlined_call_operand.vmem [shape: f32[8,24,40], index: 1, kind: input, shape index: {}, may-alias: {0,1}]
  %s2 = inlined_call_operand.vmem [shape: f32[1,40], index: 2, kind: input, shape index: {}]
  %s3 = inlined_call_operand.vmem [shape: f32[1,40], index: 3, kind: input, shape index: {}]
  %s4 = inlined_call_operand.vmem [shape: f32[40,40], index: 4, kind: input, shape index: {}]
  %s5 = inlined_call_operand.vmem [shape: f32[40,40], index: 5, kind: input, shape index: {}]
  %s6 = inlined_call_operand.vmem [shape: f32[40,40], index: 6, kind: input, shape index: {}]
  %s7 = inlined_call_operand.vmem [shape: f32[40,40], index: 7, kind: input, shape index: {}]
  %s8 = inlined_call_operand.vmem [shape: f32[1,40], index: 8, kind: input, shape index: {}]
  %s9 = inlined_call_operand.vmem [shape: f32[1,40], index: 9, kind: input, shape index: {}]
  %s10 = inlined_call_operand.vmem [shape: f32[6,24,40], index: 10, kind: output, shape index: {0}]
  %s11 = inlined_call_operand.vmem [shape: f32[6,1,8,40], index: 11, kind: output, shape index: {1}]
  %12 = xla_tuple %s10, %s11
  %s13 = sld [smem:[#allocation0]]
  $region81: #{hidta_forward.8} parent=0
    _
  %s15 = ssub.s32 1, %s13
  %s16 = scalar_select 0, %s15, %s13
  loop: start=0, step=1, limit=8
  $region2: #{hidta_forward.8} parent=0 // loop_pre_header
    _
  $region3: #{hidta_forward.8} parent=0 // loop_header
    %s18 = sphi 0, %s22
    %p19 = scmp.ge.s32.totalorder %s18, 8
    %s25 = sphi 0, %s37
    %s26 = sphi 0, %s33
    %s27 = sphi 0, %s25
    %s28 = sphi 0, %s26
    %s29 = sphi 0, %s27
    %s30 = sphi 0, %s28
    %s42 = sphi 0, %s44
    %s45 = sphi 0, %s42
    %s46 = sphi 0, %s45
    %s62 = sphi 0, %s46
    %s72 = sphi 0, %s74
    %s75 = sphi 0, %s72
    %s76 = sphi 0, %s75
    %s92 = sphi 0, %s76
    %s96 = sphi 0, %s96
    %s98 = sphi 0, %s96
    %s99 = sphi 0, %s98
    %s113 = sphi 0, %s99
    %s117 = sphi 0, %s117
    %s119 = sphi 0, %s117
    %s120 = sphi 0, %s119
    %s134 = sphi 0, %s120
    %s138 = sphi 0, %s138
    %s140 = sphi 0, %s138
    %s141 = sphi 0, %s140
    %s155 = sphi 0, %s141
    %s159 = sphi 0, %s159
    %s161 = sphi 0, %s159
    %s162 = sphi 0, %s161
    %s176 = sphi 0, %s162
    %s180 = sphi 0, %s180
    %s182 = sphi 0, %s180
    %s183 = sphi 0, %s182
    %s197 = sphi 0, %s183
    %s201 = sphi 0, %s201
    %s203 = sphi 0, %s201
    %s204 = sphi 0, %s203
    %s218 = sphi 0, %s204
    %s222 = sphi 0, %s222
    %s224 = sphi 0, %s222
    %s225 = sphi 0, %s224
    %s239 = sphi 0, %s225
    %s243 = sphi 0, %s243
    %s245 = sphi 0, %s243
    %s246 = sphi 0, %s245
    %s260 = sphi 0, %s246
    %s268 = sphi 0, %s270
    %s271 = sphi 0, %s268
    %s272 = sphi 0, %s271
    %s288 = sphi 0, %s272
    %s296 = sphi 0, %s298
    %s299 = sphi 0, %s296
    %s300 = sphi 0, %s299
    %s316 = sphi 0, %s300
  $region4: #{hidta_forward.8} parent=0 // loop_header_branch
    %21 = sbr.rel (%p19) target = $region8
  $region5: #{hidta_forward.8} parent=0 // loop_body
    %s23 = ssub.s32 %s18, 1
    %s24 = ssub.s32 %s18, 2
    %s31 = sadd.s32 1, %s26
    %p32 = scmp.ge.s32.totalorder %s31, 1
    %s33 = scalar_select %p32, 0, %s31
    %s34 = sadd.s32 1, %s25
    %s35 = scalar_select %p32, %s34, %s25
    %p36 = scmp.ge.s32.totalorder %s35, 6
    %s37 = scalar_select %p36, 0, %s35
    %s38 = ssub.s32 %s25, %s37
    %s39 = ssub.s32 %s26, %s33
    %s40 = sor.u32 %s38, %s39
    %p41 = scmp.eq.s32.totalorder %s40, 0
    %s43 = sadd.s32 %s42, 1
    %s44 = scalar_select %p41, %s42, %s43
    %p47 = pneg %p41
    %p48 = scmp.eq.s32.totalorder %s18, 5
    %p49 = por %p47, %p48
    %p50 = scmp.ne.s32.totalorder %s42, %s45
    %p51 = scmp.eq.s32.totalorder %s18, 0
    %p52 = por %p50, %p51
    %p53 = scmp.ne.s32.totalorder %s42, %s45
    %p54 = scmp.eq.s32.totalorder %s23, 5
    %p55 = por %p53, %p54
    %p56 = scmp.ne.s32.totalorder %s45, %s46
    %p57 = scmp.eq.s32.totalorder %s23, 0
    %p58 = por %p56, %p57
    %p59 = scmp.ne.s32.totalorder %s45, %s46
    %p60 = scmp.eq.s32.totalorder %s24, 5
    %p61 = por %p59, %p60
    %p63 = scmp.ne.s32.totalorder %s46, %s62
    %p64 = scmp.eq.s32.totalorder %s24, 0
    %p65 = por %p63, %p64
    %s66 = sadd.s32 %s25, 2
    %s67 = sadd.s32 %s37, 2
    %s68 = ssub.s32 %s66, %s67
    %s69 = ssub.s32 %s26, %s33
    %s70 = sor.u32 %s68, %s69
    %p71 = scmp.eq.s32.totalorder %s70, 0
    %s73 = sadd.s32 %s72, 1
    %s74 = scalar_select %p71, %s72, %s73
    %p77 = pneg %p71
    %p78 = scmp.eq.s32.totalorder %s18, 5
    %p79 = por %p77, %p78
    %p80 = scmp.ne.s32.totalorder %s72, %s75
    %p81 = scmp.eq.s32.totalorder %s18, 0
    %p82 = por %p80, %p81
    %p83 = scmp.ne.s32.totalorder %s72, %s75
    %p84 = scmp.eq.s32.totalorder %s23, 5
    %p85 = por %p83, %p84
    %p86 = scmp.ne.s32.totalorder %s75, %s76
    %p87 = scmp.eq.s32.totalorder %s23, 0
    %p88 = por %p86, %p87
    %p89 = scmp.ne.s32.totalorder %s75, %s76
    %p90 = scmp.eq.s32.totalorder %s24, 5
    %p91 = por %p89, %p90
    %p93 = scmp.ne.s32.totalorder %s76, %s92
    %p94 = scmp.eq.s32.totalorder %s24, 0
    %p95 = por %p93, %p94
    %s97 = sadd.s32 %s96, 1
    %p100 = scmp.eq.s32.totalorder %s18, 5
    %p101 = scmp.ne.s32.totalorder %s96, %s98
    %p102 = scmp.eq.s32.totalorder %s18, 0
    %p103 = por %p101, %p102
    %p104 = scmp.ne.s32.totalorder %s96, %s98
    %p105 = scmp.eq.s32.totalorder %s23, 5
    %p106 = por %p104, %p105
    %p107 = scmp.ne.s32.totalorder %s98, %s99
    %p108 = scmp.eq.s32.totalorder %s23, 0
    %p109 = por %p107, %p108
    %p110 = scmp.ne.s32.totalorder %s98, %s99
    %p111 = scmp.eq.s32.totalorder %s24, 5
    %p112 = por %p110, %p111
    %p114 = scmp.ne.s32.totalorder %s99, %s113
    %p115 = scmp.eq.s32.totalorder %s24, 0
    %p116 = por %p114, %p115
    %s118 = sadd.s32 %s117, 1
    %p121 = scmp.eq.s32.totalorder %s18, 5
    %p122 = scmp.ne.s32.totalorder %s117, %s119
    %p123 = scmp.eq.s32.totalorder %s18, 0
    %p124 = por %p122, %p123
    %p125 = scmp.ne.s32.totalorder %s117, %s119
    %p126 = scmp.eq.s32.totalorder %s23, 5
    %p127 = por %p125, %p126
    %p128 = scmp.ne.s32.totalorder %s119, %s120
    %p129 = scmp.eq.s32.totalorder %s23, 0
    %p130 = por %p128, %p129
    %p131 = scmp.ne.s32.totalorder %s119, %s120
    %p132 = scmp.eq.s32.totalorder %s24, 5
    %p133 = por %p131, %p132
    %p135 = scmp.ne.s32.totalorder %s120, %s134
    %p136 = scmp.eq.s32.totalorder %s24, 0
    %p137 = por %p135, %p136
    %s139 = sadd.s32 %s138, 1
    %p142 = scmp.eq.s32.totalorder %s18, 5
    %p143 = scmp.ne.s32.totalorder %s138, %s140
    %p144 = scmp.eq.s32.totalorder %s18, 0
    %p145 = por %p143, %p144
    %p146 = scmp.ne.s32.totalorder %s138, %s140
    %p147 = scmp.eq.s32.totalorder %s23, 5
    %p148 = por %p146, %p147
    %p149 = scmp.ne.s32.totalorder %s140, %s141
    %p150 = scmp.eq.s32.totalorder %s23, 0
    %p151 = por %p149, %p150
    %p152 = scmp.ne.s32.totalorder %s140, %s141
    %p153 = scmp.eq.s32.totalorder %s24, 5
    %p154 = por %p152, %p153
    %p156 = scmp.ne.s32.totalorder %s141, %s155
    %p157 = scmp.eq.s32.totalorder %s24, 0
    %p158 = por %p156, %p157
    %s160 = sadd.s32 %s159, 1
    %p163 = scmp.eq.s32.totalorder %s18, 5
    %p164 = scmp.ne.s32.totalorder %s159, %s161
    %p165 = scmp.eq.s32.totalorder %s18, 0
    %p166 = por %p164, %p165
    %p167 = scmp.ne.s32.totalorder %s159, %s161
    %p168 = scmp.eq.s32.totalorder %s23, 5
    %p169 = por %p167, %p168
    %p170 = scmp.ne.s32.totalorder %s161, %s162
    %p171 = scmp.eq.s32.totalorder %s23, 0
    %p172 = por %p170, %p171
    %p173 = scmp.ne.s32.totalorder %s161, %s162
    %p174 = scmp.eq.s32.totalorder %s24, 5
    %p175 = por %p173, %p174
    %p177 = scmp.ne.s32.totalorder %s162, %s176
    %p178 = scmp.eq.s32.totalorder %s24, 0
    %p179 = por %p177, %p178
    %s181 = sadd.s32 %s180, 1
    %p184 = scmp.eq.s32.totalorder %s18, 5
    %p185 = scmp.ne.s32.totalorder %s180, %s182
    %p186 = scmp.eq.s32.totalorder %s18, 0
    %p187 = por %p185, %p186
    %p188 = scmp.ne.s32.totalorder %s180, %s182
    %p189 = scmp.eq.s32.totalorder %s23, 5
    %p190 = por %p188, %p189
    %p191 = scmp.ne.s32.totalorder %s182, %s183
    %p192 = scmp.eq.s32.totalorder %s23, 0
    %p193 = por %p191, %p192
    %p194 = scmp.ne.s32.totalorder %s182, %s183
    %p195 = scmp.eq.s32.totalorder %s24, 5
    %p196 = por %p194, %p195
    %p198 = scmp.ne.s32.totalorder %s183, %s197
    %p199 = scmp.eq.s32.totalorder %s24, 0
    %p200 = por %p198, %p199
    %s202 = sadd.s32 %s201, 1
    %p205 = scmp.eq.s32.totalorder %s18, 5
    %p206 = scmp.ne.s32.totalorder %s201, %s203
    %p207 = scmp.eq.s32.totalorder %s18, 0
    %p208 = por %p206, %p207
    %p209 = scmp.ne.s32.totalorder %s201, %s203
    %p210 = scmp.eq.s32.totalorder %s23, 5
    %p211 = por %p209, %p210
    %p212 = scmp.ne.s32.totalorder %s203, %s204
    %p213 = scmp.eq.s32.totalorder %s23, 0
    %p214 = por %p212, %p213
    %p215 = scmp.ne.s32.totalorder %s203, %s204
    %p216 = scmp.eq.s32.totalorder %s24, 5
    %p217 = por %p215, %p216
    %p219 = scmp.ne.s32.totalorder %s204, %s218
    %p220 = scmp.eq.s32.totalorder %s24, 0
    %p221 = por %p219, %p220
    %s223 = sadd.s32 %s222, 1
    %p226 = scmp.eq.s32.totalorder %s18, 5
    %p227 = scmp.ne.s32.totalorder %s222, %s224
    %p228 = scmp.eq.s32.totalorder %s18, 0
    %p229 = por %p227, %p228
    %p230 = scmp.ne.s32.totalorder %s222, %s224
    %p231 = scmp.eq.s32.totalorder %s23, 5
    %p232 = por %p230, %p231
    %p233 = scmp.ne.s32.totalorder %s224, %s225
    %p234 = scmp.eq.s32.totalorder %s23, 0
    %p235 = por %p233, %p234
    %p236 = scmp.ne.s32.totalorder %s224, %s225
    %p237 = scmp.eq.s32.totalorder %s24, 5
    %p238 = por %p236, %p237
    %p240 = scmp.ne.s32.totalorder %s225, %s239
    %p241 = scmp.eq.s32.totalorder %s24, 0
    %p242 = por %p240, %p241
    %s244 = sadd.s32 %s243, 1
    %p247 = scmp.eq.s32.totalorder %s18, 5
    %p248 = scmp.ne.s32.totalorder %s243, %s245
    %p249 = scmp.eq.s32.totalorder %s18, 0
    %p250 = por %p248, %p249
    %p251 = scmp.ne.s32.totalorder %s243, %s245
    %p252 = scmp.eq.s32.totalorder %s23, 5
    %p253 = por %p251, %p252
    %p254 = scmp.ne.s32.totalorder %s245, %s246
    %p255 = scmp.eq.s32.totalorder %s23, 0
    %p256 = por %p254, %p255
    %p257 = scmp.ne.s32.totalorder %s245, %s246
    %p258 = scmp.eq.s32.totalorder %s24, 5
    %p259 = por %p257, %p258
    %p261 = scmp.ne.s32.totalorder %s246, %s260
    %p262 = scmp.eq.s32.totalorder %s24, 0
    %p263 = por %p261, %p262
    %s264 = ssub.s32 %s25, %s37
    %s265 = ssub.s32 %s26, %s33
    %s266 = sor.u32 %s264, %s265
    %p267 = scmp.eq.s32.totalorder %s266, 0
    %s269 = sadd.s32 %s268, 1
    %s270 = scalar_select %p267, %s268, %s269
    %p273 = pneg %p267
    %p274 = scmp.eq.s32.totalorder %s18, 5
    %p275 = por %p273, %p274
    %p276 = scmp.ne.s32.totalorder %s268, %s271
    %p277 = scmp.eq.s32.totalorder %s18, 0
    %p278 = por %p276, %p277
    %p279 = scmp.ne.s32.totalorder %s268, %s271
    %p280 = scmp.eq.s32.totalorder %s23, 5
    %p281 = por %p279, %p280
    %p282 = scmp.ne.s32.totalorder %s271, %s272
    %p283 = scmp.eq.s32.totalorder %s23, 0
    %p284 = por %p282, %p283
    %p285 = scmp.ne.s32.totalorder %s271, %s272
    %p286 = scmp.eq.s32.totalorder %s24, 5
    %p287 = por %p285, %p286
    %p289 = scmp.ne.s32.totalorder %s272, %s288
    %p290 = scmp.eq.s32.totalorder %s24, 0
    %p291 = por %p289, %p290
    %s292 = ssub.s32 %s25, %s37
    %s293 = ssub.s32 %s26, %s33
    %s294 = sor.u32 %s292, %s293
    %p295 = scmp.eq.s32.totalorder %s294, 0
    %s297 = sadd.s32 %s296, 1
    %s298 = scalar_select %p295, %s296, %s297
    %p301 = pneg %p295
    %p302 = scmp.eq.s32.totalorder %s18, 5
    %p303 = por %p301, %p302
    %p304 = scmp.ne.s32.totalorder %s296, %s299
    %p305 = scmp.eq.s32.totalorder %s18, 0
    %p306 = por %p304, %p305
    %p307 = scmp.ne.s32.totalorder %s296, %s299
    %p308 = scmp.eq.s32.totalorder %s23, 5
    %p309 = por %p307, %p308
    %p310 = scmp.ne.s32.totalorder %s299, %s300
    %p311 = scmp.eq.s32.totalorder %s23, 0
    %p312 = por %p310, %p311
    %p313 = scmp.ne.s32.totalorder %s299, %s300
    %p314 = scmp.eq.s32.totalorder %s24, 5
    %p315 = por %p313, %p314
    %p317 = scmp.ne.s32.totalorder %s300, %s316
    %p318 = scmp.eq.s32.totalorder %s24, 0
    %p319 = por %p317, %p318
    %p320 = scmp.le.s32.totalorder 1, %s18
    %p321 = scmp.lt.s32.totalorder %s18, 7
    %p322 = pnand %p320, %p321
    %p323 = pneg %p322
    // Predicated region
    $region9: #{hidta_forward.8} parent=5 // pred_check
      _
    $region10: #{hidta_forward.8} parent=5 // pred_check_branch
      %325 = sbr.rel (%p322) target = $region12
    $region11: #{hidta_forward.8} parent=5 // pred_region
      %s326 = ssub.s32 %s18, 1
      // Predicated region
      $region13: #{hidta_forward.8} parent=11 // pred_check
        %p327 = pneg %p109
      $region14: #{hidta_forward.8} parent=11 // pred_check_branch
        %329 = sbr.rel (%p327) target = $region16
      $region15: #{hidta_forward.8} parent=11 // pred_region
        _
      $region16: #{hidta_forward.8} parent=11 // pred_fallthru
        _
      // Predicated region
      $region17: #{hidta_forward.8} parent=11 // pred_check
        %p330 = pneg %p130
      $region18: #{hidta_forward.8} parent=11 // pred_check_branch
        %332 = sbr.rel (%p330) target = $region20
      $region19: #{hidta_forward.8} parent=11 // pred_region
        _
      $region20: #{hidta_forward.8} parent=11 // pred_fallthru
        _
      // Predicated region
      $region21: #{hidta_forward.8} parent=11 // pred_check
        %p333 = pneg %p151
      $region22: #{hidta_forward.8} parent=11 // pred_check_branch
        %335 = sbr.rel (%p333) target = $region24
      $region23: #{hidta_forward.8} parent=11 // pred_region
        _
      $region24: #{hidta_forward.8} parent=11 // pred_fallthru
        _
      // Predicated region
      $region25: #{hidta_forward.8} parent=11 // pred_check
        %p336 = pneg %p172
      $region26: #{hidta_forward.8} parent=11 // pred_check_branch
        %338 = sbr.rel (%p336) target = $region28
      $region27: #{hidta_forward.8} parent=11 // pred_region
        _
      $region28: #{hidta_forward.8} parent=11 // pred_fallthru
        _
      // Predicated region
      $region29: #{hidta_forward.8} parent=11 // pred_check
        %p339 = pneg %p193
      $region30: #{hidta_forward.8} parent=11 // pred_check_branch
        %341 = sbr.rel (%p339) target = $region32
      $region31: #{hidta_forward.8} parent=11 // pred_region
        _
      $region32: #{hidta_forward.8} parent=11 // pred_fallthru
        _
      // Predicated region
      $region33: #{hidta_forward.8} parent=11 // pred_check
        %p342 = pneg %p214
      $region34: #{hidta_forward.8} parent=11 // pred_check_branch
        %344 = sbr.rel (%p342) target = $region36
      $region35: #{hidta_forward.8} parent=11 // pred_region
        _
      $region36: #{hidta_forward.8} parent=11 // pred_fallthru
        _
      // Predicated region
      $region37: #{hidta_forward.8} parent=11 // pred_check
        %p345 = pneg %p235
      $region38: #{hidta_forward.8} parent=11 // pred_check_branch
        %347 = sbr.rel (%p345) target = $region40
      $region39: #{hidta_forward.8} parent=11 // pred_region
        _
      $region40: #{hidta_forward.8} parent=11 // pred_fallthru
        _
      // Predicated region
      $region41: #{hidta_forward.8} parent=11 // pred_check
        %p348 = pneg %p256
      $region42: #{hidta_forward.8} parent=11 // pred_check_branch
        %350 = sbr.rel (%p348) target = $region44
      $region43: #{hidta_forward.8} parent=11 // pred_region
        _
      $region44: #{hidta_forward.8} parent=11 // pred_fallthru
        _
    $region12: #{hidta_forward.8} parent=5 // pred_fallthru
      _
    %p351 = scmp.lt.s32.totalorder %s18, 6
    // Predicated region
    $region45: #{hidta_forward.8} parent=5 // pred_check
      %p352 = pneg %p351
    $region46: #{hidta_forward.8} parent=5 // pred_check_branch
      %354 = sbr.rel (%p352) target = $region48
    $region47: #{hidta_forward.8} parent=5 // pred_region
      // Predicated region
      $region49: #{hidta_forward.8} parent=47 // pred_check
        %p355 = pneg %p52
      $region50: #{hidta_forward.8} parent=47 // pred_check_branch
        %357 = sbr.rel (%p355) target = $region52
      $region51: #{hidta_forward.8} parent=47 // pred_region
        %s358 = smul.u32 3, %s26
        %p359 = scmp.lt.s32.totalorder %s25, 7
        %s360 = scalar_select %p359, %s25, 7
        %p361 = scmp.lt.s32.totalorder %s358, 2
        %s362 = scalar_select %p361, %s358, 2
        %s363 = smul.addr %s360, 3
        %s364 = sadd.s32 %s362, %s363
        %s365 = smul.addr %s364, 8
        %s366 = scalar_lea.vmem %s0, %s365
        %s367 = smul.u32 3, %s26
      $region52: #{hidta_forward.8} parent=47 // pred_fallthru
        _
      // Predicated region
      $region53: #{hidta_forward.8} parent=47 // pred_check
        %p368 = pneg %p82
      $region54: #{hidta_forward.8} parent=47 // pred_check_branch
        %370 = sbr.rel (%p368) target = $region56
      $region55: #{hidta_forward.8} parent=47 // pred_region
        %s371 = sadd.s32 %s25, 2
        %s372 = smul.u32 3, %s26
        %p373 = scmp.lt.s32.totalorder %s371, 7
        %s374 = scalar_select %p373, %s371, 7
        %p375 = scmp.lt.s32.totalorder %s372, 2
        %s376 = scalar_select %p375, %s372, 2
        %s377 = smul.addr %s374, 3
        %s378 = sadd.s32 %s376, %s377
        %s379 = smul.addr %s378, 8
        %s380 = scalar_lea.vmem %s1, %s379
        %s381 = sadd.s32 %s25, 2
        %s382 = smul.u32 3, %s26
      $region56: #{hidta_forward.8} parent=47 // pred_fallthru
        _
    $region48: #{hidta_forward.8} parent=5 // pred_fallthru
      _
    %p383 = scmp.le.s32.totalorder 1, %s18
    %p384 = scmp.lt.s32.totalorder %s18, 7
    %p385 = pnand %p383, %p384
    %p386 = pneg %p385
    // Predicated region
    $region57: #{hidta_forward.8} parent=5 // pred_check
      _
    $region58: #{hidta_forward.8} parent=5 // pred_check_branch
      %388 = sbr.rel (%p385) target = $region60
    $region59: #{hidta_forward.8} parent=5 // pred_region
      %s389 = ssub.s32 %s18, 1
      %s390 = smul.u32 3, %s28
      %p391 = scmp.lt.s32.totalorder %s27, 7
      %s392 = scalar_select %p391, %s27, 7
      %p393 = scmp.lt.s32.totalorder %s390, 2
      %s394 = scalar_select %p393, %s390, 2
      %s395 = smul.addr %s392, 3
      %s396 = sadd.s32 %s394, %s395
      %s397 = smul.addr %s396, 8
      %s398 = scalar_lea.vmem %s0, %s397
      %p399 = pneg %p58
      %p400 = pneg %p55
      %s401 = sadd.s32 %s27, 2
      %s402 = smul.u32 3, %s28
      %p403 = scmp.lt.s32.totalorder %s401, 7
      %s404 = scalar_select %p403, %s401, 7
      %p405 = scmp.lt.s32.totalorder %s402, 2
      %s406 = scalar_select %p405, %s402, 2
      %s407 = smul.addr %s404, 3
      %s408 = sadd.s32 %s406, %s407
      %s409 = smul.addr %s408, 8
      %s410 = scalar_lea.vmem %s1, %s409
      %p411 = pneg %p88
      %p412 = pneg %p85
      %p413 = pneg %p109
      %p414 = pneg %p106
      %p415 = pneg %p130
      %p416 = pneg %p127
      %p417 = pneg %p151
      %p418 = pneg %p148
      %p419 = pneg %p172
      %p420 = pneg %p169
      %p421 = pneg %p193
      %p422 = pneg %p190
      %p423 = pneg %p214
      %p424 = pneg %p211
      %p425 = pneg %p235
      %p426 = pneg %p232
      %p427 = pneg %p256
      %p428 = pneg %p253
      %p429 = pneg %p284
      %p430 = pneg %p281
      %s431 = smul.u32 3, %s28
      %p432 = scmp.lt.s32.totalorder %s27, 5
      %s433 = scalar_select %p432, %s27, 5
      %p434 = scmp.lt.s32.totalorder %s431, 2
      %s435 = scalar_select %p434, %s431, 2
      %s436 = smul.addr %s433, 3
      %s437 = sadd.s32 %s435, %s436
      %s438 = smul.addr %s437, 8
      %s439 = scalar_lea.vmem %s10, %s438
      %p440 = pneg %p312
      %p441 = pneg %p309
      %p442 = scmp.lt.s32.totalorder %s27, 5
      %s443 = scalar_select %p442, %s27, 5
      %p444 = scmp.lt.s32.totalorder %s28, 0
      %s445 = scalar_select %p444, %s28, 0
      %s446 = sadd.s32 %s445, %s443
      %s447 = smul.addr %s446, 8
      %s448 = scalar_lea.vmem %s11, %s447
      %s449 = smul.u32 3, %s28
      %p450 = scmp.lt.s32.totalorder %s27, 7
      %s451 = scalar_select %p450, %s27, 7
      %p452 = scmp.lt.s32.totalorder %s449, 2
      %s453 = scalar_select %p452, %s449, 2
      %s454 = smul.addr %s451, 3
      %s455 = sadd.s32 %s453, %s454
      %s456 = smul.addr %s455, 8
      %s457 = scalar_lea.vmem %s0, %s456
      %s458 = smul.u32 3, %s28
      %s459 = sadd.s32 %s27, 2
      %s460 = smul.u32 3, %s28
      %p461 = scmp.lt.s32.totalorder %s459, 7
      %s462 = scalar_select %p461, %s459, 7
      %p463 = scmp.lt.s32.totalorder %s460, 2
      %s464 = scalar_select %p463, %s460, 2
      %s465 = smul.addr %s462, 3
      %s466 = sadd.s32 %s464, %s465
      %s467 = smul.addr %s466, 8
      %s468 = scalar_lea.vmem %s1, %s467
      %s469 = sadd.s32 %s27, 2
      %s470 = smul.u32 3, %s28
      %s471 = smul.u32 3, %s28
      %p472 = scmp.lt.s32.totalorder %s27, 5
      %s473 = scalar_select %p472, %s27, 5
      %p474 = scmp.lt.s32.totalorder %s471, 2
      %s475 = scalar_select %p474, %s471, 2
      %s476 = smul.addr %s473, 3
      %s477 = sadd.s32 %s475, %s476
      %s478 = smul.addr %s477, 8
      %s479 = scalar_lea.vmem %s10, %s478
      %s480 = smul.u32 3, %s28
      %p481 = scmp.lt.s32.totalorder %s27, 5
      %s482 = scalar_select %p481, %s27, 5
      %p483 = scmp.lt.s32.totalorder %s28, 0
      %s484 = scalar_select %p483, %s28, 0
      %s485 = sadd.s32 %s484, %s482
      %s486 = smul.addr %s485, 8
      %s487 = scalar_lea.vmem %s11, %s486
      %v488 = vld [vmem:[%s2] sm:$0x1]
      %v489 = vld [vmem:[%s3] sm:$0x1]
      %v490 = vld [vmem:[%s457] sm:$0xff]
      %v491 = vld [vmem:[%s457 + $0x8] sm:$0xff]
      %v492 = vld [vmem:[%s457 + $0x10] sm:$0xff]
      %v494 = vlaneseq
      %v495 = vshrl.u32 %v494, 7
      %v496 = vsub.s32 0, %v495
      %v497 = vrot.slane %v488, %v496
      %v499 = vmul.f32 %v490, %v497
      %v500 = vmul.f32 %v491, %v497
      %v501 = vmul.f32 %v492, %v497
      %v503 = vlaneseq
      %v504 = vshrl.u32 %v503, 7
      %v505 = vsub.s32 0, %v504
      %v506 = vrot.slane %v489, %v505
      %v508 = vadd.f32 %v499, %v506
      %v509 = vadd.f32 %v500, %v506
      %v510 = vadd.f32 %v501, %v506
      %v511 = vld [vmem:[%s468] sm:$0xff]
      %v512 = vld [vmem:[%s468 + $0x8] sm:$0xff]
      %v513 = vld [vmem:[%s468 + $0x10] sm:$0xff]
      %v514 = vmul.f32 %v511, %v497
      %v515 = vmul.f32 %v512, %v497
      %v516 = vmul.f32 %v513, %v497
      %v517 = vadd.f32 %v514, %v506
      %v518 = vadd.f32 %v515, %v506
      %v519 = vadd.f32 %v516, %v506
      %v520 = vld [vmem:[%s4] sm:$0xff]
      %v521 = vld [vmem:[%s4 + $0x8] sm:$0xff]
      %v522 = vld [vmem:[%s4 + $0x10] sm:$0xff]
      %v523 = vld [vmem:[%s4 + $0x18] sm:$0xff]
      %v524 = vld [vmem:[%s4 + $0x20] sm:$0xff]
      %v525 = vld [vmem:[%s5] sm:$0xff]
      %v526 = vld [vmem:[%s5 + $0x8] sm:$0xff]
      %v527 = vld [vmem:[%s5 + $0x10] sm:$0xff]
      %v528 = vld [vmem:[%s5 + $0x18] sm:$0xff]
      %v529 = vld [vmem:[%s5 + $0x20] sm:$0xff]
      %vm530 = vcmask 326656
      %v532 = vsel %vm530, %v517, 0
      %v535 = vsel %vm530, %v518, 0
      %v538 = vsel %vm530, %v519, 0
      %540 = vmatprep.subr.mxu0 0.0
      %541 = vmatpush1.msra.mxu0 %v525
      %542 = vmatprep.subr.mxu0 0.0
      %543 = vmatpush1.msra.mxu0 %v526
      %544 = vmatprep.subr.mxu0 0.0
      %545 = vmatpush1.msra.mxu0 %v527
      %546 = vmatprep.subr.mxu0 0.0
      %547 = vmatpush1.msra.mxu0 %v528
      %548 = vmatprep.subr.mxu0 0.0
      %549 = vmatpush1.msra.mxu0 %v529
      %550 = vmatprep.subr.mxu0 0.0
      %551 = vmatpush1.msra.mxu0 0.0
      %552 = vmatprep.subr.mxu0 0.0
      %553 = vmatpush1.msra.mxu0 0.0
      %554 = vmatprep.subr.mxu0 0.0
      %555 = vmatpush1.msra.mxu0 0.0
      %556 = vmatprep.subr.mxu0 0.0
      %557 = vmatpush1.msra.mxu0 0.0
      %558 = vmatprep.subr.mxu0 0.0
      %559 = vmatpush1.msra.mxu0 0.0
      %560 = vmatprep.subr.mxu0 0.0
      %561 = vmatpush1.msra.mxu0 0.0
      %562 = vmatprep.subr.mxu0 0.0
      %563 = vmatpush1.msra.mxu0 0.0
      %564 = vmatprep.subr.mxu0 0.0
      %565 = vmatpush1.msra.mxu0 0.0
      %566 = vmatprep.subr.mxu0 0.0
      %567 = vmatpush1.msra.mxu0 0.0
      %568 = vmatprep.subr.mxu0 0.0
      %569 = vmatpush1.msra.mxu0 0.0
      %570 = vmatprep.subr.mxu0 0.0
      %571 = vmatpush1.msra.mxu0 0.0
      %572 = vmatprep.subr.mxu0 0.0
      %573 = vmatpush1.msra.mxu0 0.0
      %574 = vmatprep.subr.mxu0 0.0
      %575 = vmatpush1.msra.mxu0 0.0
      %576 = vmatprep.subr.mxu0 0.0
      %577 = vmatpush1.msra.mxu0 0.0
      %578 = vmatprep.subr.mxu0 0.0
      %579 = vmatpush1.msra.mxu0 0.0
      %580 = vmatprep.subr.mxu0 0.0
      %581 = vmatpush1.msra.mxu0 0.0
      %582 = vmatprep.subr.mxu0 0.0
      %583 = vmatpush1.msra.mxu0 0.0
      %584 = vmatprep.subr.mxu0 0.0
      %585 = vmatpush1.msra.mxu0 0.0
      %586 = vmatprep.subr.mxu0 0.0
      %587 = vmatpush1.msra.mxu0 0.0
      %588 = vmatprep.subr.mxu0 0.0
      %589 = vmatpush1.msra.mxu0 0.0
      %590 = vmatprep.subr.mxu0 0.0
      %591 = vmatpush1.msra.mxu0 0.0
      %592 = vmatprep.subr.mxu0 0.0
      %593 = vmatpush1.msra.mxu0 0.0
      %594 = vmatprep.subr.mxu0 0.0
      %595 = vmatpush1.msra.mxu0 0.0
      %596 = vmatprep.subr.mxu0 0.0
      %597 = vmatpush1.msra.mxu0 0.0
      %598 = vmatprep.subr.mxu0 0.0
      %599 = vmatpush1.msra.mxu0 0.0
      %600 = vmatprep.subr.mxu0 0.0
      %601 = vmatpush1.msra.mxu0 0.0
      %602 = vmatprep.subr.mxu0 0.0
      %603 = vmatpush1.msra.mxu0 0.0
      %604 = vmatprep.mubr.f32.mxu0 0.0
      %605 = vmatmul.mubr.f32.gmra.mrb[0].mxu0 %v532
      %v606 = vpop.f32.mrb[0].mxu0
      %v607 = vadd.f32 0.0, %v606
      %v608 = vpop.f32.mrb[0].mxu0
      %609 = vmatprep.mubr.f32.mxu0 0.0
      %610 = vmatmul.mubr.f32.gmra.mrb[0].mxu0 %v535
      %v611 = vpop.f32.mrb[0].mxu0
      %v612 = vadd.f32 0.0, %v611
      %v613 = vpop.f32.mrb[0].mxu0
      %614 = vmatprep.mubr.f32.mxu0 0.0
      %615 = vmatmul.mubr.f32.gmra.mrb[0].mxu0 %v538
      %v616 = vpop.f32.mrb[0].mxu0
      %v617 = vadd.f32 0.0, %v616
      %v618 = vpop.f32.mrb[0].mxu0
      %619 = vdwg.mxu0
      %v621 = vsel %vm530, %v508, 0
      %v624 = vsel %vm530, %v509, 0
      %v627 = vsel %vm530, %v510, 0
      %629 = vmatprep.subr.mxu0 0.0
      %630 = vmatpush1.msra.mxu0 %v520
      %631 = vmatprep.subr.mxu0 0.0
      %632 = vmatpush1.msra.mxu0 %v521
      %633 = vmatprep.subr.mxu0 0.0
      %634 = vmatpush1.msra.mxu0 %v522
      %635 = vmatprep.subr.mxu0 0.0
      %636 = vmatpush1.msra.mxu0 %v523
      %637 = vmatprep.subr.mxu0 0.0
      %638 = vmatpush1.msra.mxu0 %v524
      %639 = vmatprep.subr.mxu0 0.0
      %640 = vmatpush1.msra.mxu0 0.0
      %641 = vmatprep.subr.mxu0 0.0
      %642 = vmatpush1.msra.mxu0 0.0
      %643 = vmatprep.subr.mxu0 0.0
      %644 = vmatpush1.msra.mxu0 0.0
      %645 = vmatprep.subr.mxu0 0.0
      %646 = vmatpush1.msra.mxu0 0.0
      %647 = vmatprep.subr.mxu0 0.0
      %648 = vmatpush1.msra.mxu0 0.0
      %649 = vmatprep.subr.mxu0 0.0
      %650 = vmatpush1.msra.mxu0 0.0
      %651 = vmatprep.subr.mxu0 0.0
      %652 = vmatpush1.msra.mxu0 0.0
      %653 = vmatprep.subr.mxu0 0.0
      %654 = vmatpush1.msra.mxu0 0.0
      %655 = vmatprep.subr.mxu0 0.0
      %656 = vmatpush1.msra.mxu0 0.0
      %657 = vmatprep.subr.mxu0 0.0
      %658 = vmatpush1.msra.mxu0 0.0
      %659 = vmatprep.subr.mxu0 0.0
      %660 = vmatpush1.msra.mxu0 0.0
      %661 = vmatprep.subr.mxu0 0.0
      %662 = vmatpush1.msra.mxu0 0.0
      %663 = vmatprep.subr.mxu0 0.0
      %664 = vmatpush1.msra.mxu0 0.0
      %665 = vmatprep.subr.mxu0 0.0
      %666 = vmatpush1.msra.mxu0 0.0
      %667 = vmatprep.subr.mxu0 0.0
      %668 = vmatpush1.msra.mxu0 0.0
      %669 = vmatprep.subr.mxu0 0.0
      %670 = vmatpush1.msra.mxu0 0.0
      %671 = vmatprep.subr.mxu0 0.0
      %672 = vmatpush1.msra.mxu0 0.0
      %673 = vmatprep.subr.mxu0 0.0
      %674 = vmatpush1.msra.mxu0 0.0
      %675 = vmatprep.subr.mxu0 0.0
      %676 = vmatpush1.msra.mxu0 0.0
      %677 = vmatprep.subr.mxu0 0.0
      %678 = vmatpush1.msra.mxu0 0.0
      %679 = vmatprep.subr.mxu0 0.0
      %680 = vmatpush1.msra.mxu0 0.0
      %681 = vmatprep.subr.mxu0 0.0
      %682 = vmatpush1.msra.mxu0 0.0
      %683 = vmatprep.subr.mxu0 0.0
      %684 = vmatpush1.msra.mxu0 0.0
      %685 = vmatprep.subr.mxu0 0.0
      %686 = vmatpush1.msra.mxu0 0.0
      %687 = vmatprep.subr.mxu0 0.0
      %688 = vmatpush1.msra.mxu0 0.0
      %689 = vmatprep.subr.mxu0 0.0
      %690 = vmatpush1.msra.mxu0 0.0
      %691 = vmatprep.subr.mxu0 0.0
      %692 = vmatpush1.msra.mxu0 0.0
      %693 = vmatprep.mubr.f32.mxu0 0.0
      %694 = vmatmul.mubr.f32.gmra.mrb[0].mxu0 %v621
      %v695 = vpop.f32.mrb[0].mxu0
      %v696 = vadd.f32 %v607, %v695
      %v697 = vpop.f32.mrb[0].mxu0
      %698 = vmatprep.mubr.f32.mxu0 0.0
      %699 = vmatmul.mubr.f32.gmra.mrb[0].mxu0 %v624
      %v700 = vpop.f32.mrb[0].mxu0
      %v701 = vadd.f32 %v612, %v700
      %v702 = vpop.f32.mrb[0].mxu0
      %703 = vmatprep.mubr.f32.mxu0 0.0
      %704 = vmatmul.mubr.f32.gmra.mrb[0].mxu0 %v627
      %v705 = vpop.f32.mrb[0].mxu0
      %v706 = vadd.f32 %v617, %v705
      %v707 = vpop.f32.mrb[0].mxu0
      %708 = vdwg.mxu0
      %v709 = vld [vmem:[%s8] sm:$0x1]
      %v711 = vlaneseq
      %v712 = vshrl.u32 %v711, 7
      %v713 = vsub.s32 0, %v712
      %v714 = vrot.slane %v709, %v713
      %v716 = vadd.f32 %v696, %v714
      %v717 = vadd.f32 %v701, %v714
      %v718 = vadd.f32 %v706, %v714
      %v719 = vld [vmem:[%s6] sm:$0xff]
      %v720 = vld [vmem:[%s6 + $0x8] sm:$0xff]
      %v721 = vld [vmem:[%s6 + $0x10] sm:$0xff]
      %v722 = vld [vmem:[%s6 + $0x18] sm:$0xff]
      %v723 = vld [vmem:[%s6 + $0x20] sm:$0xff]
      %v724 = vld [vmem:[%s7] sm:$0xff]
      %v725 = vld [vmem:[%s7 + $0x8] sm:$0xff]
      %v726 = vld [vmem:[%s7 + $0x10] sm:$0xff]
      %v727 = vld [vmem:[%s7 + $0x18] sm:$0xff]
      %v728 = vld [vmem:[%s7 + $0x20] sm:$0xff]
      %729 = vmatprep.subr.mxu0 0.0
      %730 = vmatpush1.msra.mxu0 %v724
      %731 = vmatprep.subr.mxu0 0.0
      %732 = vmatpush1.msra.mxu0 %v725
      %733 = vmatprep.subr.mxu0 0.0
      %734 = vmatpush1.msra.mxu0 %v726
      %735 = vmatprep.subr.mxu0 0.0
      %736 = vmatpush1.msra.mxu0 %v727
      %737 = vmatprep.subr.mxu0 0.0
      %738 = vmatpush1.msra.mxu0 %v728
      %739 = vmatprep.subr.mxu0 0.0
      %740 = vmatpush1.msra.mxu0 0.0
      %741 = vmatprep.subr.mxu0 0.0
      %742 = vmatpush1.msra.mxu0 0.0
      %743 = vmatprep.subr.mxu0 0.0
      %744 = vmatpush1.msra.mxu0 0.0
      %745 = vmatprep.subr.mxu0 0.0
      %746 = vmatpush1.msra.mxu0 0.0
      %747 = vmatprep.subr.mxu0 0.0
      %748 = vmatpush1.msra.mxu0 0.0
      %749 = vmatprep.subr.mxu0 0.0
      %750 = vmatpush1.msra.mxu0 0.0
      %751 = vmatprep.subr.mxu0 0.0
      %752 = vmatpush1.msra.mxu0 0.0
      %753 = vmatprep.subr.mxu0 0.0
      %754 = vmatpush1.msra.mxu0 0.0
      %755 = vmatprep.subr.mxu0 0.0
      %756 = vmatpush1.msra.mxu0 0.0
      %757 = vmatprep.subr.mxu0 0.0
      %758 = vmatpush1.msra.mxu0 0.0
      %759 = vmatprep.subr.mxu0 0.0
      %760 = vmatpush1.msra.mxu0 0.0
      %761 = vmatprep.subr.mxu0 0.0
      %762 = vmatpush1.msra.mxu0 0.0
      %763 = vmatprep.subr.mxu0 0.0
      %764 = vmatpush1.msra.mxu0 0.0
      %765 = vmatprep.subr.mxu0 0.0
      %766 = vmatpush1.msra.mxu0 0.0
      %767 = vmatprep.subr.mxu0 0.0
      %768 = vmatpush1.msra.mxu0 0.0
      %769 = vmatprep.subr.mxu0 0.0
      %770 = vmatpush1.msra.mxu0 0.0
      %771 = vmatprep.subr.mxu0 0.0
      %772 = vmatpush1.msra.mxu0 0.0
      %773 = vmatprep.subr.mxu0 0.0
      %774 = vmatpush1.msra.mxu0 0.0
      %775 = vmatprep.subr.mxu0 0.0
      %776 = vmatpush1.msra.mxu0 0.0
      %777 = vmatprep.subr.mxu0 0.0
      %778 = vmatpush1.msra.mxu0 0.0
      %779 = vmatprep.subr.mxu0 0.0
      %780 = vmatpush1.msra.mxu0 0.0
      %781 = vmatprep.subr.mxu0 0.0
      %782 = vmatpush1.msra.mxu0 0.0
      %783 = vmatprep.subr.mxu0 0.0
      %784 = vmatpush1.msra.mxu0 0.0
      %785 = vmatprep.subr.mxu0 0.0
      %786 = vmatpush1.msra.mxu0 0.0
      %787 = vmatprep.subr.mxu0 0.0
      %788 = vmatpush1.msra.mxu0 0.0
      %789 = vmatprep.subr.mxu0 0.0
      %790 = vmatpush1.msra.mxu0 0.0
      %791 = vmatprep.subr.mxu0 0.0
      %792 = vmatpush1.msra.mxu0 0.0
      %793 = vmatprep.mubr.f32.mxu0 0.0
      %794 = vmatmul.mubr.f32.gmra.mrb[0].mxu0 %v532
      %v795 = vpop.f32.mrb[0].mxu0
      %v796 = vadd.f32 0.0, %v795
      %v797 = vpop.f32.mrb[0].mxu0
      %798 = vmatprep.mubr.f32.mxu0 0.0
      %799 = vmatmul.mubr.f32.gmra.mrb[0].mxu0 %v535
      %v800 = vpop.f32.mrb[0].mxu0
      %v801 = vadd.f32 0.0, %v800
      %v802 = vpop.f32.mrb[0].mxu0
      %803 = vmatprep.mubr.f32.mxu0 0.0
      %804 = vmatmul.mubr.f32.gmra.mrb[0].mxu0 %v538
      %v805 = vpop.f32.mrb[0].mxu0
      %v806 = vadd.f32 0.0, %v805
      %v807 = vpop.f32.mrb[0].mxu0
      %808 = vdwg.mxu0
      %809 = vmatprep.subr.mxu0 0.0
      %810 = vmatpush1.msra.mxu0 %v719
      %811 = vmatprep.subr.mxu0 0.0
      %812 = vmatpush1.msra.mxu0 %v720
      %813 = vmatprep.subr.mxu0 0.0
      %814 = vmatpush1.msra.mxu0 %v721
      %815 = vmatprep.subr.mxu0 0.0
      %816 = vmatpush1.msra.mxu0 %v722
      %817 = vmatprep.subr.mxu0 0.0
      %818 = vmatpush1.msra.mxu0 %v723
      %819 = vmatprep.subr.mxu0 0.0
      %820 = vmatpush1.msra.mxu0 0.0
      %821 = vmatprep.subr.mxu0 0.0
      %822 = vmatpush1.msra.mxu0 0.0
      %823 = vmatprep.subr.mxu0 0.0
      %824 = vmatpush1.msra.mxu0 0.0
      %825 = vmatprep.subr.mxu0 0.0
      %826 = vmatpush1.msra.mxu0 0.0
      %827 = vmatprep.subr.mxu0 0.0
      %828 = vmatpush1.msra.mxu0 0.0
      %829 = vmatprep.subr.mxu0 0.0
      %830 = vmatpush1.msra.mxu0 0.0
      %831 = vmatprep.subr.mxu0 0.0
      %832 = vmatpush1.msra.mxu0 0.0
      %833 = vmatprep.subr.mxu0 0.0
      %834 = vmatpush1.msra.mxu0 0.0
      %835 = vmatprep.subr.mxu0 0.0
      %836 = vmatpush1.msra.mxu0 0.0
      %837 = vmatprep.subr.mxu0 0.0
      %838 = vmatpush1.msra.mxu0 0.0
      %839 = vmatprep.subr.mxu0 0.0
      %840 = vmatpush1.msra.mxu0 0.0
      %841 = vmatprep.subr.mxu0 0.0
      %842 = vmatpush1.msra.mxu0 0.0
      %843 = vmatprep.subr.mxu0 0.0
      %844 = vmatpush1.msra.mxu0 0.0
      %845 = vmatprep.subr.mxu0 0.0
      %846 = vmatpush1.msra.mxu0 0.0
      %847 = vmatprep.subr.mxu0 0.0
      %848 = vmatpush1.msra.mxu0 0.0
      %849 = vmatprep.subr.mxu0 0.0
      %850 = vmatpush1.msra.mxu0 0.0
      %851 = vmatprep.subr.mxu0 0.0
      %852 = vmatpush1.msra.mxu0 0.0
      %853 = vmatprep.subr.mxu0 0.0
      %854 = vmatpush1.msra.mxu0 0.0
      %855 = vmatprep.subr.mxu0 0.0
      %856 = vmatpush1.msra.mxu0 0.0
      %857 = vmatprep.subr.mxu0 0.0
      %858 = vmatpush1.msra.mxu0 0.0
      %859 = vmatprep.subr.mxu0 0.0
      %860 = vmatpush1.msra.mxu0 0.0
      %861 = vmatprep.subr.mxu0 0.0
      %862 = vmatpush1.msra.mxu0 0.0
      %863 = vmatprep.subr.mxu0 0.0
      %864 = vmatpush1.msra.mxu0 0.0
      %865 = vmatprep.subr.mxu0 0.0
      %866 = vmatpush1.msra.mxu0 0.0
      %867 = vmatprep.subr.mxu0 0.0
      %868 = vmatpush1.msra.mxu0 0.0
      %869 = vmatprep.subr.mxu0 0.0
      %870 = vmatpush1.msra.mxu0 0.0
      %871 = vmatprep.subr.mxu0 0.0
      %872 = vmatpush1.msra.mxu0 0.0
      %873 = vmatprep.mubr.f32.mxu0 0.0
      %874 = vmatmul.mubr.f32.gmra.mrb[0].mxu0 %v621
      %v875 = vpop.f32.mrb[0].mxu0
      %v876 = vadd.f32 %v796, %v875
      %v877 = vpop.f32.mrb[0].mxu0
      %878 = vmatprep.mubr.f32.mxu0 0.0
      %879 = vmatmul.mubr.f32.gmra.mrb[0].mxu0 %v624
      %v880 = vpop.f32.mrb[0].mxu0
      %v881 = vadd.f32 %v801, %v880
      %v882 = vpop.f32.mrb[0].mxu0
      %883 = vmatprep.mubr.f32.mxu0 0.0
      %884 = vmatmul.mubr.f32.gmra.mrb[0].mxu0 %v627
      %v885 = vpop.f32.mrb[0].mxu0
      %v886 = vadd.f32 %v806, %v885
      %v887 = vpop.f32.mrb[0].mxu0
      %888 = vdwg.mxu0
      %v889 = vld [vmem:[%s9] sm:$0x1]
      %v891 = vlaneseq
      %v892 = vshrl.u32 %v891, 7
      %v893 = vsub.s32 0, %v892
      %v894 = vrot.slane %v889, %v893
      %v896 = vadd.f32 %v876, %v894
      %v897 = vadd.f32 %v881, %v894
      %v898 = vadd.f32 %v886, %v894
      %v899 = vtanh.pop %v716
      %v900 = vtanh.pop %v717
      %v901 = vtanh.pop %v718
      %v902 = vxor.u32 %v896, 2147483648
      %v903 = vxor.u32 %v897, 2147483648
      %v904 = vxor.u32 %v898, 2147483648
      %v905 = vmul.f32 %v902, 1.442695
      %v906 = vpow.pop %v905
      %v907 = vmul.f32 %v903, 1.442695
      %v908 = vpow.pop %v907
      %v909 = vmul.f32 %v904, 1.442695
      %v910 = vpow.pop %v909
      %v911 = vadd.f32 %v906, 1.0
      %v912 = vadd.f32 %v908, 1.0
      %v913 = vadd.f32 %v910, 1.0
      %v914 = vrcp.pop %v911
      %v915 = vmul.f32 1.0, %v914
      %v916 = vrcp.pop %v912
      %v917 = vmul.f32 1.0, %v916
      %v918 = vrcp.pop %v913
      %v919 = vmul.f32 1.0, %v918
      %v920 = vmul.f32 %v899, %v915
      %v921 = vmul.f32 %v900, %v917
      %v922 = vmul.f32 %v901, %v919
      %v923 = vadd.f32 %v920, %v517
      %v924 = vadd.f32 %v921, %v518
      %v925 = vadd.f32 %v922, %v519
      %926 = vst.msk [vmem:[%s479] sm:$0xff] %vm530, %v923
      %927 = vst.msk [vmem:[%s479 + $0x8] sm:$0xff] %vm530, %v924
      %928 = vst.msk [vmem:[%s479 + $0x10] sm:$0xff] %vm530, %v925
      %v929 = vlaneseq
      %v930 = vshrl.u32 %v929, 7
      %v931 = vadd.s32 %v930, 8
      %v932 = vadd.s32 %v930, 16
      %s933 = smul.u32 %s28, 24
      %v934 = vstv %s933
      %v935 = vadd.s32 %v930, %v934
      %v936 = vadd.s32 %v931, %v934
      %v937 = vadd.s32 %v932, %v934
      %vm938 = vcmp.lt.s32.totalorder %v935, 18
      %vm939 = vcmp.lt.s32.totalorder %v936, 18
      %vm940 = vcmp.lt.s32.totalorder %v937, 18
      %v941 = vsel %vm938, 1, 0
      %v942 = vsel %vm939, 1, 0
      %v943 = vsel %vm940, 1, 0
      %vm944 = vcmp.eq.s32.totalorder %v941, 1
      %vm945 = vcmp.eq.s32.totalorder %v942, 1
      %vm946 = vcmp.eq.s32.totalorder %v943, 1
      %v947 = vsel %vm944, %v923, 0.0
      %v948 = vsel %vm945, %v924, 0.0
      %v949 = vsel %vm946, %v925, 0.0
      %v950 = vsel %vm530, %v947, 0.0
      %v951 = vsel %vm530, %v948, 0.0
      %v952 = vadd.f32 %v950, %v951
      %v953 = vsel %vm530, %v949, 0.0
      %v954 = vadd.f32 %v952, %v953
      %v955 = vrot.slane %v954, 4
      %v956 = vadd.f32 %v954, %v955
      %v957 = vrot.slane %v956, 2
      %v958 = vadd.f32 %v956, %v957
      %v959 = vrot.slane %v958, 1
      %v960 = vadd.f32 %v958, %v959
      %v961 = vmul.f32 %v947, %v947
      %v962 = vmul.f32 %v948, %v948
      %v963 = vmul.f32 %v949, %v949
      %v964 = vsel %vm530, %v961, 0.0
      %v965 = vsel %vm530, %v962, 0.0
      %v966 = vadd.f32 %v964, %v965
      %v967 = vsel %vm530, %v963, 0.0
      %v968 = vadd.f32 %v966, %v967
      %v969 = vrot.slane %v968, 4
      %v970 = vadd.f32 %v968, %v969
      %v971 = vrot.slane %v970, 2
      %v972 = vadd.f32 %v970, %v971
      %v973 = vrot.slane %v972, 1
      %v974 = vadd.f32 %v972, %v973
      %vm975 = vcmask 1040384
      %v976 = vsel %vm975, %v960, %v974
      %vm977 = vcmask 1041408
      %v978 = vsel %vm977, %v976, 0.0
      %979 = vst.msk [vmem:[%s487] sm:$0xff] %vm530, %v978
      %s980 = smul.u32 3, %s28
      %p981 = scmp.lt.s32.totalorder %s27, 5
      %s982 = scalar_select %p981, %s27, 5
      %p983 = scmp.lt.s32.totalorder %s980, 2
      %s984 = scalar_select %p983, %s980, 2
      %s985 = smul.addr %s982, 3
      %s986 = sadd.s32 %s984, %s985
      %s987 = smul.addr %s986, 8
      %s988 = scalar_lea.vmem %s10, %s987
      %p989 = scmp.lt.s32.totalorder %s27, 5
      %s990 = scalar_select %p989, %s27, 5
      %p991 = scmp.lt.s32.totalorder %s28, 0
      %s992 = scalar_select %p991, %s28, 0
      %s993 = sadd.s32 %s992, %s990
      %s994 = smul.addr %s993, 8
      %s995 = scalar_lea.vmem %s11, %s994
      // Predicated region
      $region61: #{hidta_forward.8} parent=59 // pred_check
        %p996 = pneg %p281
      $region62: #{hidta_forward.8} parent=59 // pred_check_branch
        %998 = sbr.rel (%p996) target = $region64
      $region63: #{hidta_forward.8} parent=59 // pred_region
        %s999 = smul.u32 3, %s28
      $region64: #{hidta_forward.8} parent=59 // pred_fallthru
        _
      // Predicated region
      $region65: #{hidta_forward.8} parent=59 // pred_check
        %p1000 = pneg %p309
      $region66: #{hidta_forward.8} parent=59 // pred_check_branch
        %1002 = sbr.rel (%p1000) target = $region68
      $region67: #{hidta_forward.8} parent=59 // pred_region
        _
      $region68: #{hidta_forward.8} parent=59 // pred_fallthru
        _
    $region60: #{hidta_forward.8} parent=5 // pred_fallthru
      _
    %p1003 = scmp.le.s32.totalorder 2, %s18
    // Predicated region
    $region69: #{hidta_forward.8} parent=5 // pred_check
      %p1004 = pneg %p1003
    $region70: #{hidta_forward.8} parent=5 // pred_check_branch
      %1006 = sbr.rel (%p1004) target = $region72
    $region71: #{hidta_forward.8} parent=5 // pred_region
      %s1007 = ssub.s32 %s18, 2
      // Predicated region
      $region73: #{hidta_forward.8} parent=71 // pred_check
        %p1008 = pneg %p287
      $region74: #{hidta_forward.8} parent=71 // pred_check_branch
        %1010 = sbr.rel (%p1008) target = $region76
      $region75: #{hidta_forward.8} parent=71 // pred_region
        %s1011 = smul.u32 3, %s30
        %p1012 = scmp.lt.s32.totalorder %s29, 5
        %s1013 = scalar_select %p1012, %s29, 5
        %p1014 = scmp.lt.s32.totalorder %s1011, 2
        %s1015 = scalar_select %p1014, %s1011, 2
        %s1016 = smul.addr %s1013, 3
        %s1017 = sadd.s32 %s1015, %s1016
        %s1018 = smul.addr %s1017, 8
        %s1019 = scalar_lea.vmem %s10, %s1018
      $region76: #{hidta_forward.8} parent=71 // pred_fallthru
        _
      // Predicated region
      $region77: #{hidta_forward.8} parent=71 // pred_check
        %p1020 = pneg %p315
      $region78: #{hidta_forward.8} parent=71 // pred_check_branch
        %1022 = sbr.rel (%p1020) target = $region80
      $region79: #{hidta_forward.8} parent=71 // pred_region
        %p1023 = scmp.lt.s32.totalorder %s29, 5
        %s1024 = scalar_select %p1023, %s29, 5
        %p1025 = scmp.lt.s32.totalorder %s30, 0
        %s1026 = scalar_select %p1025, %s30, 0
        %s1027 = sadd.s32 %s1026, %s1024
        %s1028 = smul.addr %s1027, 8
        %s1029 = scalar_lea.vmem %s11, %s1028
      $region80: #{hidta_forward.8} parent=71 // pred_fallthru
        _
    $region72: #{hidta_forward.8} parent=5 // pred_fallthru
      _
  $region6: #{hidta_forward.8} parent=0 // loop_footer
    %s22 = sadd.s32 1, %s18
  $region7: #{hidta_forward.8} parent=0 // loop_footer_branch
    %17 = sbr.rel target = $region3
  $region8: #{hidta_forward.8} parent=0 // loop_exit
    _

// kernel: hidta_forward.9
$region0: #{hidta_forward.9}
  #allocation0 [shape = 'u32[]', space=smem, size = 0x4, offset = 0x4, fixed_abs, tag = 'smem constant byte address 0x4 - core index']
  #allocation1 [shape = 'u32[144,128]{1,0:T(1,128)}', space=vmem, size = 0x12000, scoped, tag = 'internal scratch']
  %s0 = inlined_call_operand.vmem [shape: f32[6,24,40], index: 0, kind: input, shape index: {}, may-alias: {0,1}]
  %s1 = inlined_call_operand.vmem [shape: f32[6,24,40], index: 1, kind: input, shape index: {}, may-alias: {0,1}]
  %s2 = inlined_call_operand.vmem [shape: f32[1,40], index: 2, kind: input, shape index: {}]
  %s3 = inlined_call_operand.vmem [shape: f32[1,40], index: 3, kind: input, shape index: {}]
  %s4 = inlined_call_operand.vmem [shape: f32[40,40], index: 4, kind: input, shape index: {}]
  %s5 = inlined_call_operand.vmem [shape: f32[40,40], index: 5, kind: input, shape index: {}]
  %s6 = inlined_call_operand.vmem [shape: f32[40,40], index: 6, kind: input, shape index: {}]
  %s7 = inlined_call_operand.vmem [shape: f32[40,40], index: 7, kind: input, shape index: {}]
  %s8 = inlined_call_operand.vmem [shape: f32[1,40], index: 8, kind: input, shape index: {}]
  %s9 = inlined_call_operand.vmem [shape: f32[1,40], index: 9, kind: input, shape index: {}]
  %s10 = inlined_call_operand.vmem [shape: f32[4,24,40], index: 10, kind: output, shape index: {0}]
  %s11 = inlined_call_operand.vmem [shape: f32[4,1,8,40], index: 11, kind: output, shape index: {1}]
  %12 = xla_tuple %s10, %s11
  %s13 = sld [smem:[#allocation0]]
  $region81: #{hidta_forward.9} parent=0
    _
  %s15 = ssub.s32 1, %s13
  %s16 = scalar_select 0, %s15, %s13
  loop: start=0, step=1, limit=6
  $region2: #{hidta_forward.9} parent=0 // loop_pre_header
    _
  $region3: #{hidta_forward.9} parent=0 // loop_header
    %s18 = sphi 0, %s22
    %p19 = scmp.ge.s32.totalorder %s18, 6
    %s25 = sphi 0, %s37
    %s26 = sphi 0, %s33
    %s27 = sphi 0, %s25
    %s28 = sphi 0, %s26
    %s29 = sphi 0, %s27
    %s30 = sphi 0, %s28
    %s42 = sphi 0, %s44
    %s45 = sphi 0, %s42
    %s46 = sphi 0, %s45
    %s62 = sphi 0, %s46
    %s72 = sphi 0, %s74
    %s75 = sphi 0, %s72
    %s76 = sphi 0, %s75
    %s92 = sphi 0, %s76
    %s96 = sphi 0, %s96
    %s98 = sphi 0, %s96
    %s99 = sphi 0, %s98
    %s113 = sphi 0, %s99
    %s117 = sphi 0, %s117
    %s119 = sphi 0, %s117
    %s120 = sphi 0, %s119
    %s134 = sphi 0, %s120
    %s138 = sphi 0, %s138
    %s140 = sphi 0, %s138
    %s141 = sphi 0, %s140
    %s155 = sphi 0, %s141
    %s159 = sphi 0, %s159
    %s161 = sphi 0, %s159
    %s162 = sphi 0, %s161
    %s176 = sphi 0, %s162
    %s180 = sphi 0, %s180
    %s182 = sphi 0, %s180
    %s183 = sphi 0, %s182
    %s197 = sphi 0, %s183
    %s201 = sphi 0, %s201
    %s203 = sphi 0, %s201
    %s204 = sphi 0, %s203
    %s218 = sphi 0, %s204
    %s222 = sphi 0, %s222
    %s224 = sphi 0, %s222
    %s225 = sphi 0, %s224
    %s239 = sphi 0, %s225
    %s243 = sphi 0, %s243
    %s245 = sphi 0, %s243
    %s246 = sphi 0, %s245
    %s260 = sphi 0, %s246
    %s268 = sphi 0, %s270
    %s271 = sphi 0, %s268
    %s272 = sphi 0, %s271
    %s288 = sphi 0, %s272
    %s296 = sphi 0, %s298
    %s299 = sphi 0, %s296
    %s300 = sphi 0, %s299
    %s316 = sphi 0, %s300
  $region4: #{hidta_forward.9} parent=0 // loop_header_branch
    %21 = sbr.rel (%p19) target = $region8
  $region5: #{hidta_forward.9} parent=0 // loop_body
    %s23 = ssub.s32 %s18, 1
    %s24 = ssub.s32 %s18, 2
    %s31 = sadd.s32 1, %s26
    %p32 = scmp.ge.s32.totalorder %s31, 1
    %s33 = scalar_select %p32, 0, %s31
    %s34 = sadd.s32 1, %s25
    %s35 = scalar_select %p32, %s34, %s25
    %p36 = scmp.ge.s32.totalorder %s35, 4
    %s37 = scalar_select %p36, 0, %s35
    %s38 = ssub.s32 %s25, %s37
    %s39 = ssub.s32 %s26, %s33
    %s40 = sor.u32 %s38, %s39
    %p41 = scmp.eq.s32.totalorder %s40, 0
    %s43 = sadd.s32 %s42, 1
    %s44 = scalar_select %p41, %s42, %s43
    %p47 = pneg %p41
    %p48 = scmp.eq.s32.totalorder %s18, 3
    %p49 = por %p47, %p48
    %p50 = scmp.ne.s32.totalorder %s42, %s45
    %p51 = scmp.eq.s32.totalorder %s18, 0
    %p52 = por %p50, %p51
    %p53 = scmp.ne.s32.totalorder %s42, %s45
    %p54 = scmp.eq.s32.totalorder %s23, 3
    %p55 = por %p53, %p54
    %p56 = scmp.ne.s32.totalorder %s45, %s46
    %p57 = scmp.eq.s32.totalorder %s23, 0
    %p58 = por %p56, %p57
    %p59 = scmp.ne.s32.totalorder %s45, %s46
    %p60 = scmp.eq.s32.totalorder %s24, 3
    %p61 = por %p59, %p60
    %p63 = scmp.ne.s32.totalorder %s46, %s62
    %p64 = scmp.eq.s32.totalorder %s24, 0
    %p65 = por %p63, %p64
    %s66 = sadd.s32 %s25, 2
    %s67 = sadd.s32 %s37, 2
    %s68 = ssub.s32 %s66, %s67
    %s69 = ssub.s32 %s26, %s33
    %s70 = sor.u32 %s68, %s69
    %p71 = scmp.eq.s32.totalorder %s70, 0
    %s73 = sadd.s32 %s72, 1
    %s74 = scalar_select %p71, %s72, %s73
    %p77 = pneg %p71
    %p78 = scmp.eq.s32.totalorder %s18, 3
    %p79 = por %p77, %p78
    %p80 = scmp.ne.s32.totalorder %s72, %s75
    %p81 = scmp.eq.s32.totalorder %s18, 0
    %p82 = por %p80, %p81
    %p83 = scmp.ne.s32.totalorder %s72, %s75
    %p84 = scmp.eq.s32.totalorder %s23, 3
    %p85 = por %p83, %p84
    %p86 = scmp.ne.s32.totalorder %s75, %s76
    %p87 = scmp.eq.s32.totalorder %s23, 0
    %p88 = por %p86, %p87
    %p89 = scmp.ne.s32.totalorder %s75, %s76
    %p90 = scmp.eq.s32.totalorder %s24, 3
    %p91 = por %p89, %p90
    %p93 = scmp.ne.s32.totalorder %s76, %s92
    %p94 = scmp.eq.s32.totalorder %s24, 0
    %p95 = por %p93, %p94
    %s97 = sadd.s32 %s96, 1
    %p100 = scmp.eq.s32.totalorder %s18, 3
    %p101 = scmp.ne.s32.totalorder %s96, %s98
    %p102 = scmp.eq.s32.totalorder %s18, 0
    %p103 = por %p101, %p102
    %p104 = scmp.ne.s32.totalorder %s96, %s98
    %p105 = scmp.eq.s32.totalorder %s23, 3
    %p106 = por %p104, %p105
    %p107 = scmp.ne.s32.totalorder %s98, %s99
    %p108 = scmp.eq.s32.totalorder %s23, 0
    %p109 = por %p107, %p108
    %p110 = scmp.ne.s32.totalorder %s98, %s99
    %p111 = scmp.eq.s32.totalorder %s24, 3
    %p112 = por %p110, %p111
    %p114 = scmp.ne.s32.totalorder %s99, %s113
    %p115 = scmp.eq.s32.totalorder %s24, 0
    %p116 = por %p114, %p115
    %s118 = sadd.s32 %s117, 1
    %p121 = scmp.eq.s32.totalorder %s18, 3
    %p122 = scmp.ne.s32.totalorder %s117, %s119
    %p123 = scmp.eq.s32.totalorder %s18, 0
    %p124 = por %p122, %p123
    %p125 = scmp.ne.s32.totalorder %s117, %s119
    %p126 = scmp.eq.s32.totalorder %s23, 3
    %p127 = por %p125, %p126
    %p128 = scmp.ne.s32.totalorder %s119, %s120
    %p129 = scmp.eq.s32.totalorder %s23, 0
    %p130 = por %p128, %p129
    %p131 = scmp.ne.s32.totalorder %s119, %s120
    %p132 = scmp.eq.s32.totalorder %s24, 3
    %p133 = por %p131, %p132
    %p135 = scmp.ne.s32.totalorder %s120, %s134
    %p136 = scmp.eq.s32.totalorder %s24, 0
    %p137 = por %p135, %p136
    %s139 = sadd.s32 %s138, 1
    %p142 = scmp.eq.s32.totalorder %s18, 3
    %p143 = scmp.ne.s32.totalorder %s138, %s140
    %p144 = scmp.eq.s32.totalorder %s18, 0
    %p145 = por %p143, %p144
    %p146 = scmp.ne.s32.totalorder %s138, %s140
    %p147 = scmp.eq.s32.totalorder %s23, 3
    %p148 = por %p146, %p147
    %p149 = scmp.ne.s32.totalorder %s140, %s141
    %p150 = scmp.eq.s32.totalorder %s23, 0
    %p151 = por %p149, %p150
    %p152 = scmp.ne.s32.totalorder %s140, %s141
    %p153 = scmp.eq.s32.totalorder %s24, 3
    %p154 = por %p152, %p153
    %p156 = scmp.ne.s32.totalorder %s141, %s155
    %p157 = scmp.eq.s32.totalorder %s24, 0
    %p158 = por %p156, %p157
    %s160 = sadd.s32 %s159, 1
    %p163 = scmp.eq.s32.totalorder %s18, 3
    %p164 = scmp.ne.s32.totalorder %s159, %s161
    %p165 = scmp.eq.s32.totalorder %s18, 0
    %p166 = por %p164, %p165
    %p167 = scmp.ne.s32.totalorder %s159, %s161
    %p168 = scmp.eq.s32.totalorder %s23, 3
    %p169 = por %p167, %p168
    %p170 = scmp.ne.s32.totalorder %s161, %s162
    %p171 = scmp.eq.s32.totalorder %s23, 0
    %p172 = por %p170, %p171
    %p173 = scmp.ne.s32.totalorder %s161, %s162
    %p174 = scmp.eq.s32.totalorder %s24, 3
    %p175 = por %p173, %p174
    %p177 = scmp.ne.s32.totalorder %s162, %s176
    %p178 = scmp.eq.s32.totalorder %s24, 0
    %p179 = por %p177, %p178
    %s181 = sadd.s32 %s180, 1
    %p184 = scmp.eq.s32.totalorder %s18, 3
    %p185 = scmp.ne.s32.totalorder %s180, %s182
    %p186 = scmp.eq.s32.totalorder %s18, 0
    %p187 = por %p185, %p186
    %p188 = scmp.ne.s32.totalorder %s180, %s182
    %p189 = scmp.eq.s32.totalorder %s23, 3
    %p190 = por %p188, %p189
    %p191 = scmp.ne.s32.totalorder %s182, %s183
    %p192 = scmp.eq.s32.totalorder %s23, 0
    %p193 = por %p191, %p192
    %p194 = scmp.ne.s32.totalorder %s182, %s183
    %p195 = scmp.eq.s32.totalorder %s24, 3
    %p196 = por %p194, %p195
    %p198 = scmp.ne.s32.totalorder %s183, %s197
    %p199 = scmp.eq.s32.totalorder %s24, 0
    %p200 = por %p198, %p199
    %s202 = sadd.s32 %s201, 1
    %p205 = scmp.eq.s32.totalorder %s18, 3
    %p206 = scmp.ne.s32.totalorder %s201, %s203
    %p207 = scmp.eq.s32.totalorder %s18, 0
    %p208 = por %p206, %p207
    %p209 = scmp.ne.s32.totalorder %s201, %s203
    %p210 = scmp.eq.s32.totalorder %s23, 3
    %p211 = por %p209, %p210
    %p212 = scmp.ne.s32.totalorder %s203, %s204
    %p213 = scmp.eq.s32.totalorder %s23, 0
    %p214 = por %p212, %p213
    %p215 = scmp.ne.s32.totalorder %s203, %s204
    %p216 = scmp.eq.s32.totalorder %s24, 3
    %p217 = por %p215, %p216
    %p219 = scmp.ne.s32.totalorder %s204, %s218
    %p220 = scmp.eq.s32.totalorder %s24, 0
    %p221 = por %p219, %p220
    %s223 = sadd.s32 %s222, 1
    %p226 = scmp.eq.s32.totalorder %s18, 3
    %p227 = scmp.ne.s32.totalorder %s222, %s224
    %p228 = scmp.eq.s32.totalorder %s18, 0
    %p229 = por %p227, %p228
    %p230 = scmp.ne.s32.totalorder %s222, %s224
    %p231 = scmp.eq.s32.totalorder %s23, 3
    %p232 = por %p230, %p231
    %p233 = scmp.ne.s32.totalorder %s224, %s225
    %p234 = scmp.eq.s32.totalorder %s23, 0
    %p235 = por %p233, %p234
    %p236 = scmp.ne.s32.totalorder %s224, %s225
    %p237 = scmp.eq.s32.totalorder %s24, 3
    %p238 = por %p236, %p237
    %p240 = scmp.ne.s32.totalorder %s225, %s239
    %p241 = scmp.eq.s32.totalorder %s24, 0
    %p242 = por %p240, %p241
    %s244 = sadd.s32 %s243, 1
    %p247 = scmp.eq.s32.totalorder %s18, 3
    %p248 = scmp.ne.s32.totalorder %s243, %s245
    %p249 = scmp.eq.s32.totalorder %s18, 0
    %p250 = por %p248, %p249
    %p251 = scmp.ne.s32.totalorder %s243, %s245
    %p252 = scmp.eq.s32.totalorder %s23, 3
    %p253 = por %p251, %p252
    %p254 = scmp.ne.s32.totalorder %s245, %s246
    %p255 = scmp.eq.s32.totalorder %s23, 0
    %p256 = por %p254, %p255
    %p257 = scmp.ne.s32.totalorder %s245, %s246
    %p258 = scmp.eq.s32.totalorder %s24, 3
    %p259 = por %p257, %p258
    %p261 = scmp.ne.s32.totalorder %s246, %s260
    %p262 = scmp.eq.s32.totalorder %s24, 0
    %p263 = por %p261, %p262
    %s264 = ssub.s32 %s25, %s37
    %s265 = ssub.s32 %s26, %s33
    %s266 = sor.u32 %s264, %s265
    %p267 = scmp.eq.s32.totalorder %s266, 0
    %s269 = sadd.s32 %s268, 1
    %s270 = scalar_select %p267, %s268, %s269
    %p273 = pneg %p267
    %p274 = scmp.eq.s32.totalorder %s18, 3
    %p275 = por %p273, %p274
    %p276 = scmp.ne.s32.totalorder %s268, %s271
    %p277 = scmp.eq.s32.totalorder %s18, 0
    %p278 = por %p276, %p277
    %p279 = scmp.ne.s32.totalorder %s268, %s271
    %p280 = scmp.eq.s32.totalorder %s23, 3
    %p281 = por %p279, %p280
    %p282 = scmp.ne.s32.totalorder %s271, %s272
    %p283 = scmp.eq.s32.totalorder %s23, 0
    %p284 = por %p282, %p283
    %p285 = scmp.ne.s32.totalorder %s271, %s272
    %p286 = scmp.eq.s32.totalorder %s24, 3
    %p287 = por %p285, %p286
    %p289 = scmp.ne.s32.totalorder %s272, %s288
    %p290 = scmp.eq.s32.totalorder %s24, 0
    %p291 = por %p289, %p290
    %s292 = ssub.s32 %s25, %s37
    %s293 = ssub.s32 %s26, %s33
    %s294 = sor.u32 %s292, %s293
    %p295 = scmp.eq.s32.totalorder %s294, 0
    %s297 = sadd.s32 %s296, 1
    %s298 = scalar_select %p295, %s296, %s297
    %p301 = pneg %p295
    %p302 = scmp.eq.s32.totalorder %s18, 3
    %p303 = por %p301, %p302
    %p304 = scmp.ne.s32.totalorder %s296, %s299
    %p305 = scmp.eq.s32.totalorder %s18, 0
    %p306 = por %p304, %p305
    %p307 = scmp.ne.s32.totalorder %s296, %s299
    %p308 = scmp.eq.s32.totalorder %s23, 3
    %p309 = por %p307, %p308
    %p310 = scmp.ne.s32.totalorder %s299, %s300
    %p311 = scmp.eq.s32.totalorder %s23, 0
    %p312 = por %p310, %p311
    %p313 = scmp.ne.s32.totalorder %s299, %s300
    %p314 = scmp.eq.s32.totalorder %s24, 3
    %p315 = por %p313, %p314
    %p317 = scmp.ne.s32.totalorder %s300, %s316
    %p318 = scmp.eq.s32.totalorder %s24, 0
    %p319 = por %p317, %p318
    %p320 = scmp.le.s32.totalorder 1, %s18
    %p321 = scmp.lt.s32.totalorder %s18, 5
    %p322 = pnand %p320, %p321
    %p323 = pneg %p322
    // Predicated region
    $region9: #{hidta_forward.9} parent=5 // pred_check
      _
    $region10: #{hidta_forward.9} parent=5 // pred_check_branch
      %325 = sbr.rel (%p322) target = $region12
    $region11: #{hidta_forward.9} parent=5 // pred_region
      %s326 = ssub.s32 %s18, 1
      // Predicated region
      $region13: #{hidta_forward.9} parent=11 // pred_check
        %p327 = pneg %p109
      $region14: #{hidta_forward.9} parent=11 // pred_check_branch
        %329 = sbr.rel (%p327) target = $region16
      $region15: #{hidta_forward.9} parent=11 // pred_region
        _
      $region16: #{hidta_forward.9} parent=11 // pred_fallthru
        _
      // Predicated region
      $region17: #{hidta_forward.9} parent=11 // pred_check
        %p330 = pneg %p130
      $region18: #{hidta_forward.9} parent=11 // pred_check_branch
        %332 = sbr.rel (%p330) target = $region20
      $region19: #{hidta_forward.9} parent=11 // pred_region
        _
      $region20: #{hidta_forward.9} parent=11 // pred_fallthru
        _
      // Predicated region
      $region21: #{hidta_forward.9} parent=11 // pred_check
        %p333 = pneg %p151
      $region22: #{hidta_forward.9} parent=11 // pred_check_branch
        %335 = sbr.rel (%p333) target = $region24
      $region23: #{hidta_forward.9} parent=11 // pred_region
        _
      $region24: #{hidta_forward.9} parent=11 // pred_fallthru
        _
      // Predicated region
      $region25: #{hidta_forward.9} parent=11 // pred_check
        %p336 = pneg %p172
      $region26: #{hidta_forward.9} parent=11 // pred_check_branch
        %338 = sbr.rel (%p336) target = $region28
      $region27: #{hidta_forward.9} parent=11 // pred_region
        _
      $region28: #{hidta_forward.9} parent=11 // pred_fallthru
        _
      // Predicated region
      $region29: #{hidta_forward.9} parent=11 // pred_check
        %p339 = pneg %p193
      $region30: #{hidta_forward.9} parent=11 // pred_check_branch
        %341 = sbr.rel (%p339) target = $region32
      $region31: #{hidta_forward.9} parent=11 // pred_region
        _
      $region32: #{hidta_forward.9} parent=11 // pred_fallthru
        _
      // Predicated region
      $region33: #{hidta_forward.9} parent=11 // pred_check
        %p342 = pneg %p214
      $region34: #{hidta_forward.9} parent=11 // pred_check_branch
        %344 = sbr.rel (%p342) target = $region36
      $region35: #{hidta_forward.9} parent=11 // pred_region
        _
      $region36: #{hidta_forward.9} parent=11 // pred_fallthru
        _
      // Predicated region
      $region37: #{hidta_forward.9} parent=11 // pred_check
        %p345 = pneg %p235
      $region38: #{hidta_forward.9} parent=11 // pred_check_branch
        %347 = sbr.rel (%p345) target = $region40
      $region39: #{hidta_forward.9} parent=11 // pred_region
        _
      $region40: #{hidta_forward.9} parent=11 // pred_fallthru
        _
      // Predicated region
      $region41: #{hidta_forward.9} parent=11 // pred_check
        %p348 = pneg %p256
      $region42: #{hidta_forward.9} parent=11 // pred_check_branch
        %350 = sbr.rel (%p348) target = $region44
      $region43: #{hidta_forward.9} parent=11 // pred_region
        _
      $region44: #{hidta_forward.9} parent=11 // pred_fallthru
        _
    $region12: #{hidta_forward.9} parent=5 // pred_fallthru
      _
    %p351 = scmp.lt.s32.totalorder %s18, 4
    // Predicated region
    $region45: #{hidta_forward.9} parent=5 // pred_check
      %p352 = pneg %p351
    $region46: #{hidta_forward.9} parent=5 // pred_check_branch
      %354 = sbr.rel (%p352) target = $region48
    $region47: #{hidta_forward.9} parent=5 // pred_region
      // Predicated region
      $region49: #{hidta_forward.9} parent=47 // pred_check
        %p355 = pneg %p52
      $region50: #{hidta_forward.9} parent=47 // pred_check_branch
        %357 = sbr.rel (%p355) target = $region52
      $region51: #{hidta_forward.9} parent=47 // pred_region
        %s358 = smul.u32 3, %s26
        %p359 = scmp.lt.s32.totalorder %s25, 5
        %s360 = scalar_select %p359, %s25, 5
        %p361 = scmp.lt.s32.totalorder %s358, 2
        %s362 = scalar_select %p361, %s358, 2
        %s363 = smul.addr %s360, 3
        %s364 = sadd.s32 %s362, %s363
        %s365 = smul.addr %s364, 8
        %s366 = scalar_lea.vmem %s0, %s365
        %s367 = smul.u32 3, %s26
      $region52: #{hidta_forward.9} parent=47 // pred_fallthru
        _
      // Predicated region
      $region53: #{hidta_forward.9} parent=47 // pred_check
        %p368 = pneg %p82
      $region54: #{hidta_forward.9} parent=47 // pred_check_branch
        %370 = sbr.rel (%p368) target = $region56
      $region55: #{hidta_forward.9} parent=47 // pred_region
        %s371 = sadd.s32 %s25, 2
        %s372 = smul.u32 3, %s26
        %p373 = scmp.lt.s32.totalorder %s371, 5
        %s374 = scalar_select %p373, %s371, 5
        %p375 = scmp.lt.s32.totalorder %s372, 2
        %s376 = scalar_select %p375, %s372, 2
        %s377 = smul.addr %s374, 3
        %s378 = sadd.s32 %s376, %s377
        %s379 = smul.addr %s378, 8
        %s380 = scalar_lea.vmem %s1, %s379
        %s381 = sadd.s32 %s25, 2
        %s382 = smul.u32 3, %s26
      $region56: #{hidta_forward.9} parent=47 // pred_fallthru
        _
    $region48: #{hidta_forward.9} parent=5 // pred_fallthru
      _
    %p383 = scmp.le.s32.totalorder 1, %s18
    %p384 = scmp.lt.s32.totalorder %s18, 5
    %p385 = pnand %p383, %p384
    %p386 = pneg %p385
    // Predicated region
    $region57: #{hidta_forward.9} parent=5 // pred_check
      _
    $region58: #{hidta_forward.9} parent=5 // pred_check_branch
      %388 = sbr.rel (%p385) target = $region60
    $region59: #{hidta_forward.9} parent=5 // pred_region
      %s389 = ssub.s32 %s18, 1
      %s390 = smul.u32 3, %s28
      %p391 = scmp.lt.s32.totalorder %s27, 5
      %s392 = scalar_select %p391, %s27, 5
      %p393 = scmp.lt.s32.totalorder %s390, 2
      %s394 = scalar_select %p393, %s390, 2
      %s395 = smul.addr %s392, 3
      %s396 = sadd.s32 %s394, %s395
      %s397 = smul.addr %s396, 8
      %s398 = scalar_lea.vmem %s0, %s397
      %p399 = pneg %p58
      %p400 = pneg %p55
      %s401 = sadd.s32 %s27, 2
      %s402 = smul.u32 3, %s28
      %p403 = scmp.lt.s32.totalorder %s401, 5
      %s404 = scalar_select %p403, %s401, 5
      %p405 = scmp.lt.s32.totalorder %s402, 2
      %s406 = scalar_select %p405, %s402, 2
      %s407 = smul.addr %s404, 3
      %s408 = sadd.s32 %s406, %s407
      %s409 = smul.addr %s408, 8
      %s410 = scalar_lea.vmem %s1, %s409
      %p411 = pneg %p88
      %p412 = pneg %p85
      %p413 = pneg %p109
      %p414 = pneg %p106
      %p415 = pneg %p130
      %p416 = pneg %p127
      %p417 = pneg %p151
      %p418 = pneg %p148
      %p419 = pneg %p172
      %p420 = pneg %p169
      %p421 = pneg %p193
      %p422 = pneg %p190
      %p423 = pneg %p214
      %p424 = pneg %p211
      %p425 = pneg %p235
      %p426 = pneg %p232
      %p427 = pneg %p256
      %p428 = pneg %p253
      %p429 = pneg %p284
      %p430 = pneg %p281
      %s431 = smul.u32 3, %s28
      %p432 = scmp.lt.s32.totalorder %s27, 3
      %s433 = scalar_select %p432, %s27, 3
      %p434 = scmp.lt.s32.totalorder %s431, 2
      %s435 = scalar_select %p434, %s431, 2
      %s436 = smul.addr %s433, 3
      %s437 = sadd.s32 %s435, %s436
      %s438 = smul.addr %s437, 8
      %s439 = scalar_lea.vmem %s10, %s438
      %p440 = pneg %p312
      %p441 = pneg %p309
      %p442 = scmp.lt.s32.totalorder %s27, 3
      %s443 = scalar_select %p442, %s27, 3
      %p444 = scmp.lt.s32.totalorder %s28, 0
      %s445 = scalar_select %p444, %s28, 0
      %s446 = sadd.s32 %s445, %s443
      %s447 = smul.addr %s446, 8
      %s448 = scalar_lea.vmem %s11, %s447
      %s449 = smul.u32 3, %s28
      %p450 = scmp.lt.s32.totalorder %s27, 5
      %s451 = scalar_select %p450, %s27, 5
      %p452 = scmp.lt.s32.totalorder %s449, 2
      %s453 = scalar_select %p452, %s449, 2
      %s454 = smul.addr %s451, 3
      %s455 = sadd.s32 %s453, %s454
      %s456 = smul.addr %s455, 8
      %s457 = scalar_lea.vmem %s0, %s456
      %s458 = smul.u32 3, %s28
      %s459 = sadd.s32 %s27, 2
      %s460 = smul.u32 3, %s28
      %p461 = scmp.lt.s32.totalorder %s459, 5
      %s462 = scalar_select %p461, %s459, 5
      %p463 = scmp.lt.s32.totalorder %s460, 2
      %s464 = scalar_select %p463, %s460, 2
      %s465 = smul.addr %s462, 3
      %s466 = sadd.s32 %s464, %s465
      %s467 = smul.addr %s466, 8
      %s468 = scalar_lea.vmem %s1, %s467
      %s469 = sadd.s32 %s27, 2
      %s470 = smul.u32 3, %s28
      %s471 = smul.u32 3, %s28
      %p472 = scmp.lt.s32.totalorder %s27, 3
      %s473 = scalar_select %p472, %s27, 3
      %p474 = scmp.lt.s32.totalorder %s471, 2
      %s475 = scalar_select %p474, %s471, 2
      %s476 = smul.addr %s473, 3
      %s477 = sadd.s32 %s475, %s476
      %s478 = smul.addr %s477, 8
      %s479 = scalar_lea.vmem %s10, %s478
      %s480 = smul.u32 3, %s28
      %p481 = scmp.lt.s32.totalorder %s27, 3
      %s482 = scalar_select %p481, %s27, 3
      %p483 = scmp.lt.s32.totalorder %s28, 0
      %s484 = scalar_select %p483, %s28, 0
      %s485 = sadd.s32 %s484, %s482
      %s486 = smul.addr %s485, 8
      %s487 = scalar_lea.vmem %s11, %s486
      %v488 = vld [vmem:[%s2] sm:$0x1]
      %v489 = vld [vmem:[%s3] sm:$0x1]
      %v490 = vld [vmem:[%s457] sm:$0xff]
      %v491 = vld [vmem:[%s457 + $0x8] sm:$0xff]
      %v492 = vld [vmem:[%s457 + $0x10] sm:$0xff]
      %v494 = vlaneseq
      %v495 = vshrl.u32 %v494, 7
      %v496 = vsub.s32 0, %v495
      %v497 = vrot.slane %v488, %v496
      %v499 = vmul.f32 %v490, %v497
      %v500 = vmul.f32 %v491, %v497
      %v501 = vmul.f32 %v492, %v497
      %v503 = vlaneseq
      %v504 = vshrl.u32 %v503, 7
      %v505 = vsub.s32 0, %v504
      %v506 = vrot.slane %v489, %v505
      %v508 = vadd.f32 %v499, %v506
      %v509 = vadd.f32 %v500, %v506
      %v510 = vadd.f32 %v501, %v506
      %v511 = vld [vmem:[%s468] sm:$0xff]
      %v512 = vld [vmem:[%s468 + $0x8] sm:$0xff]
      %v513 = vld [vmem:[%s468 + $0x10] sm:$0xff]
      %v514 = vmul.f32 %v511, %v497
      %v515 = vmul.f32 %v512, %v497
      %v516 = vmul.f32 %v513, %v497
      %v517 = vadd.f32 %v514, %v506
      %v518 = vadd.f32 %v515, %v506
      %v519 = vadd.f32 %v516, %v506
      %v520 = vld [vmem:[%s4] sm:$0xff]
      %v521 = vld [vmem:[%s4 + $0x8] sm:$0xff]
      %v522 = vld [vmem:[%s4 + $0x10] sm:$0xff]
      %v523 = vld [vmem:[%s4 + $0x18] sm:$0xff]
      %v524 = vld [vmem:[%s4 + $0x20] sm:$0xff]
      %v525 = vld [vmem:[%s5] sm:$0xff]
      %v526 = vld [vmem:[%s5 + $0x8] sm:$0xff]
      %v527 = vld [vmem:[%s5 + $0x10] sm:$0xff]
      %v528 = vld [vmem:[%s5 + $0x18] sm:$0xff]
      %v529 = vld [vmem:[%s5 + $0x20] sm:$0xff]
      %vm530 = vcmask 326656
      %v532 = vsel %vm530, %v517, 0
      %v535 = vsel %vm530, %v518, 0
      %v538 = vsel %vm530, %v519, 0
      %540 = vmatprep.subr.mxu0 0.0
      %541 = vmatpush1.msra.mxu0 %v525
      %542 = vmatprep.subr.mxu0 0.0
      %543 = vmatpush1.msra.mxu0 %v526
      %544 = vmatprep.subr.mxu0 0.0
      %545 = vmatpush1.msra.mxu0 %v527
      %546 = vmatprep.subr.mxu0 0.0
      %547 = vmatpush1.msra.mxu0 %v528
      %548 = vmatprep.subr.mxu0 0.0
      %549 = vmatpush1.msra.mxu0 %v529
      %550 = vmatprep.subr.mxu0 0.0
      %551 = vmatpush1.msra.mxu0 0.0
      %552 = vmatprep.subr.mxu0 0.0
      %553 = vmatpush1.msra.mxu0 0.0
      %554 = vmatprep.subr.mxu0 0.0
      %555 = vmatpush1.msra.mxu0 0.0
      %556 = vmatprep.subr.mxu0 0.0
      %557 = vmatpush1.msra.mxu0 0.0
      %558 = vmatprep.subr.mxu0 0.0
      %559 = vmatpush1.msra.mxu0 0.0
      %560 = vmatprep.subr.mxu0 0.0
      %561 = vmatpush1.msra.mxu0 0.0
      %562 = vmatprep.subr.mxu0 0.0
      %563 = vmatpush1.msra.mxu0 0.0
      %564 = vmatprep.subr.mxu0 0.0
      %565 = vmatpush1.msra.mxu0 0.0
      %566 = vmatprep.subr.mxu0 0.0
      %567 = vmatpush1.msra.mxu0 0.0
      %568 = vmatprep.subr.mxu0 0.0
      %569 = vmatpush1.msra.mxu0 0.0
      %570 = vmatprep.subr.mxu0 0.0
      %571 = vmatpush1.msra.mxu0 0.0
      %572 = vmatprep.subr.mxu0 0.0
      %573 = vmatpush1.msra.mxu0 0.0
      %574 = vmatprep.subr.mxu0 0.0
      %575 = vmatpush1.msra.mxu0 0.0
      %576 = vmatprep.subr.mxu0 0.0
      %577 = vmatpush1.msra.mxu0 0.0
      %578 = vmatprep.subr.mxu0 0.0
      %579 = vmatpush1.msra.mxu0 0.0
      %580 = vmatprep.subr.mxu0 0.0
      %581 = vmatpush1.msra.mxu0 0.0
      %582 = vmatprep.subr.mxu0 0.0
      %583 = vmatpush1.msra.mxu0 0.0
      %584 = vmatprep.subr.mxu0 0.0
      %585 = vmatpush1.msra.mxu0 0.0
      %586 = vmatprep.subr.mxu0 0.0
      %587 = vmatpush1.msra.mxu0 0.0
      %588 = vmatprep.subr.mxu0 0.0
      %589 = vmatpush1.msra.mxu0 0.0
      %590 = vmatprep.subr.mxu0 0.0
      %591 = vmatpush1.msra.mxu0 0.0
      %592 = vmatprep.subr.mxu0 0.0
      %593 = vmatpush1.msra.mxu0 0.0
      %594 = vmatprep.subr.mxu0 0.0
      %595 = vmatpush1.msra.mxu0 0.0
      %596 = vmatprep.subr.mxu0 0.0
      %597 = vmatpush1.msra.mxu0 0.0
      %598 = vmatprep.subr.mxu0 0.0
      %599 = vmatpush1.msra.mxu0 0.0
      %600 = vmatprep.subr.mxu0 0.0
      %601 = vmatpush1.msra.mxu0 0.0
      %602 = vmatprep.subr.mxu0 0.0
      %603 = vmatpush1.msra.mxu0 0.0
      %604 = vmatprep.mubr.f32.mxu0 0.0
      %605 = vmatmul.mubr.f32.gmra.mrb[0].mxu0 %v532
      %v606 = vpop.f32.mrb[0].mxu0
      %v607 = vadd.f32 0.0, %v606
      %v608 = vpop.f32.mrb[0].mxu0
      %609 = vmatprep.mubr.f32.mxu0 0.0
      %610 = vmatmul.mubr.f32.gmra.mrb[0].mxu0 %v535
      %v611 = vpop.f32.mrb[0].mxu0
      %v612 = vadd.f32 0.0, %v611
      %v613 = vpop.f32.mrb[0].mxu0
      %614 = vmatprep.mubr.f32.mxu0 0.0
      %615 = vmatmul.mubr.f32.gmra.mrb[0].mxu0 %v538
      %v616 = vpop.f32.mrb[0].mxu0
      %v617 = vadd.f32 0.0, %v616
      %v618 = vpop.f32.mrb[0].mxu0
      %619 = vdwg.mxu0
      %v621 = vsel %vm530, %v508, 0
      %v624 = vsel %vm530, %v509, 0
      %v627 = vsel %vm530, %v510, 0
      %629 = vmatprep.subr.mxu0 0.0
      %630 = vmatpush1.msra.mxu0 %v520
      %631 = vmatprep.subr.mxu0 0.0
      %632 = vmatpush1.msra.mxu0 %v521
      %633 = vmatprep.subr.mxu0 0.0
      %634 = vmatpush1.msra.mxu0 %v522
      %635 = vmatprep.subr.mxu0 0.0
      %636 = vmatpush1.msra.mxu0 %v523
      %637 = vmatprep.subr.mxu0 0.0
      %638 = vmatpush1.msra.mxu0 %v524
      %639 = vmatprep.subr.mxu0 0.0
      %640 = vmatpush1.msra.mxu0 0.0
      %641 = vmatprep.subr.mxu0 0.0
      %642 = vmatpush1.msra.mxu0 0.0
      %643 = vmatprep.subr.mxu0 0.0
      %644 = vmatpush1.msra.mxu0 0.0
      %645 = vmatprep.subr.mxu0 0.0
      %646 = vmatpush1.msra.mxu0 0.0
      %647 = vmatprep.subr.mxu0 0.0
      %648 = vmatpush1.msra.mxu0 0.0
      %649 = vmatprep.subr.mxu0 0.0
      %650 = vmatpush1.msra.mxu0 0.0
      %651 = vmatprep.subr.mxu0 0.0
      %652 = vmatpush1.msra.mxu0 0.0
      %653 = vmatprep.subr.mxu0 0.0
      %654 = vmatpush1.msra.mxu0 0.0
      %655 = vmatprep.subr.mxu0 0.0
      %656 = vmatpush1.msra.mxu0 0.0
      %657 = vmatprep.subr.mxu0 0.0
      %658 = vmatpush1.msra.mxu0 0.0
      %659 = vmatprep.subr.mxu0 0.0
      %660 = vmatpush1.msra.mxu0 0.0
      %661 = vmatprep.subr.mxu0 0.0
      %662 = vmatpush1.msra.mxu0 0.0
      %663 = vmatprep.subr.mxu0 0.0
      %664 = vmatpush1.msra.mxu0 0.0
      %665 = vmatprep.subr.mxu0 0.0
      %666 = vmatpush1.msra.mxu0 0.0
      %667 = vmatprep.subr.mxu0 0.0
      %668 = vmatpush1.msra.mxu0 0.0
      %669 = vmatprep.subr.mxu0 0.0
      %670 = vmatpush1.msra.mxu0 0.0
      %671 = vmatprep.subr.mxu0 0.0
      %672 = vmatpush1.msra.mxu0 0.0
      %673 = vmatprep.subr.mxu0 0.0
      %674 = vmatpush1.msra.mxu0 0.0
      %675 = vmatprep.subr.mxu0 0.0
      %676 = vmatpush1.msra.mxu0 0.0
      %677 = vmatprep.subr.mxu0 0.0
      %678 = vmatpush1.msra.mxu0 0.0
      %679 = vmatprep.subr.mxu0 0.0
      %680 = vmatpush1.msra.mxu0 0.0
      %681 = vmatprep.subr.mxu0 0.0
      %682 = vmatpush1.msra.mxu0 0.0
      %683 = vmatprep.subr.mxu0 0.0
      %684 = vmatpush1.msra.mxu0 0.0
      %685 = vmatprep.subr.mxu0 0.0
      %686 = vmatpush1.msra.mxu0 0.0
      %687 = vmatprep.subr.mxu0 0.0
      %688 = vmatpush1.msra.mxu0 0.0
      %689 = vmatprep.subr.mxu0 0.0
      %690 = vmatpush1.msra.mxu0 0.0
      %691 = vmatprep.subr.mxu0 0.0
      %692 = vmatpush1.msra.mxu0 0.0
      %693 = vmatprep.mubr.f32.mxu0 0.0
      %694 = vmatmul.mubr.f32.gmra.mrb[0].mxu0 %v621
      %v695 = vpop.f32.mrb[0].mxu0
      %v696 = vadd.f32 %v607, %v695
      %v697 = vpop.f32.mrb[0].mxu0
      %698 = vmatprep.mubr.f32.mxu0 0.0
      %699 = vmatmul.mubr.f32.gmra.mrb[0].mxu0 %v624
      %v700 = vpop.f32.mrb[0].mxu0
      %v701 = vadd.f32 %v612, %v700
      %v702 = vpop.f32.mrb[0].mxu0
      %703 = vmatprep.mubr.f32.mxu0 0.0
      %704 = vmatmul.mubr.f32.gmra.mrb[0].mxu0 %v627
      %v705 = vpop.f32.mrb[0].mxu0
      %v706 = vadd.f32 %v617, %v705
      %v707 = vpop.f32.mrb[0].mxu0
      %708 = vdwg.mxu0
      %v709 = vld [vmem:[%s8] sm:$0x1]
      %v711 = vlaneseq
      %v712 = vshrl.u32 %v711, 7
      %v713 = vsub.s32 0, %v712
      %v714 = vrot.slane %v709, %v713
      %v716 = vadd.f32 %v696, %v714
      %v717 = vadd.f32 %v701, %v714
      %v718 = vadd.f32 %v706, %v714
      %v719 = vld [vmem:[%s6] sm:$0xff]
      %v720 = vld [vmem:[%s6 + $0x8] sm:$0xff]
      %v721 = vld [vmem:[%s6 + $0x10] sm:$0xff]
      %v722 = vld [vmem:[%s6 + $0x18] sm:$0xff]
      %v723 = vld [vmem:[%s6 + $0x20] sm:$0xff]
      %v724 = vld [vmem:[%s7] sm:$0xff]
      %v725 = vld [vmem:[%s7 + $0x8] sm:$0xff]
      %v726 = vld [vmem:[%s7 + $0x10] sm:$0xff]
      %v727 = vld [vmem:[%s7 + $0x18] sm:$0xff]
      %v728 = vld [vmem:[%s7 + $0x20] sm:$0xff]
      %729 = vmatprep.subr.mxu0 0.0
      %730 = vmatpush1.msra.mxu0 %v724
      %731 = vmatprep.subr.mxu0 0.0
      %732 = vmatpush1.msra.mxu0 %v725
      %733 = vmatprep.subr.mxu0 0.0
      %734 = vmatpush1.msra.mxu0 %v726
      %735 = vmatprep.subr.mxu0 0.0
      %736 = vmatpush1.msra.mxu0 %v727
      %737 = vmatprep.subr.mxu0 0.0
      %738 = vmatpush1.msra.mxu0 %v728
      %739 = vmatprep.subr.mxu0 0.0
      %740 = vmatpush1.msra.mxu0 0.0
      %741 = vmatprep.subr.mxu0 0.0
      %742 = vmatpush1.msra.mxu0 0.0
      %743 = vmatprep.subr.mxu0 0.0
      %744 = vmatpush1.msra.mxu0 0.0
      %745 = vmatprep.subr.mxu0 0.0
      %746 = vmatpush1.msra.mxu0 0.0
      %747 = vmatprep.subr.mxu0 0.0
      %748 = vmatpush1.msra.mxu0 0.0
      %749 = vmatprep.subr.mxu0 0.0
      %750 = vmatpush1.msra.mxu0 0.0
      %751 = vmatprep.subr.mxu0 0.0
      %752 = vmatpush1.msra.mxu0 0.0
      %753 = vmatprep.subr.mxu0 0.0
      %754 = vmatpush1.msra.mxu0 0.0
      %755 = vmatprep.subr.mxu0 0.0
      %756 = vmatpush1.msra.mxu0 0.0
      %757 = vmatprep.subr.mxu0 0.0
      %758 = vmatpush1.msra.mxu0 0.0
      %759 = vmatprep.subr.mxu0 0.0
      %760 = vmatpush1.msra.mxu0 0.0
      %761 = vmatprep.subr.mxu0 0.0
      %762 = vmatpush1.msra.mxu0 0.0
      %763 = vmatprep.subr.mxu0 0.0
      %764 = vmatpush1.msra.mxu0 0.0
      %765 = vmatprep.subr.mxu0 0.0
      %766 = vmatpush1.msra.mxu0 0.0
      %767 = vmatprep.subr.mxu0 0.0
      %768 = vmatpush1.msra.mxu0 0.0
      %769 = vmatprep.subr.mxu0 0.0
      %770 = vmatpush1.msra.mxu0 0.0
      %771 = vmatprep.subr.mxu0 0.0
      %772 = vmatpush1.msra.mxu0 0.0
      %773 = vmatprep.subr.mxu0 0.0
      %774 = vmatpush1.msra.mxu0 0.0
      %775 = vmatprep.subr.mxu0 0.0
      %776 = vmatpush1.msra.mxu0 0.0
      %777 = vmatprep.subr.mxu0 0.0
      %778 = vmatpush1.msra.mxu0 0.0
      %779 = vmatprep.subr.mxu0 0.0
      %780 = vmatpush1.msra.mxu0 0.0
      %781 = vmatprep.subr.mxu0 0.0
      %782 = vmatpush1.msra.mxu0 0.0
      %783 = vmatprep.subr.mxu0 0.0
      %784 = vmatpush1.msra.mxu0 0.0
      %785 = vmatprep.subr.mxu0 0.0
      %786 = vmatpush1.msra.mxu0 0.0
      %787 = vmatprep.subr.mxu0 0.0
      %788 = vmatpush1.msra.mxu0 0.0
      %789 = vmatprep.subr.mxu0 0.0
      %790 = vmatpush1.msra.mxu0 0.0
      %791 = vmatprep.subr.mxu0 0.0
      %792 = vmatpush1.msra.mxu0 0.0
      %793 = vmatprep.mubr.f32.mxu0 0.0
      %794 = vmatmul.mubr.f32.gmra.mrb[0].mxu0 %v532
      %v795 = vpop.f32.mrb[0].mxu0
      %v796 = vadd.f32 0.0, %v795
      %v797 = vpop.f32.mrb[0].mxu0
      %798 = vmatprep.mubr.f32.mxu0 0.0
      %799 = vmatmul.mubr.f32.gmra.mrb[0].mxu0 %v535
      %v800 = vpop.f32.mrb[0].mxu0
      %v801 = vadd.f32 0.0, %v800
      %v802 = vpop.f32.mrb[0].mxu0
      %803 = vmatprep.mubr.f32.mxu0 0.0
      %804 = vmatmul.mubr.f32.gmra.mrb[0].mxu0 %v538
      %v805 = vpop.f32.mrb[0].mxu0
      %v806 = vadd.f32 0.0, %v805
      %v807 = vpop.f32.mrb[0].mxu0
      %808 = vdwg.mxu0
      %809 = vmatprep.subr.mxu0 0.0
      %810 = vmatpush1.msra.mxu0 %v719
      %811 = vmatprep.subr.mxu0 0.0
      %812 = vmatpush1.msra.mxu0 %v720
      %813 = vmatprep.subr.mxu0 0.0
      %814 = vmatpush1.msra.mxu0 %v721
      %815 = vmatprep.subr.mxu0 0.0
      %816 = vmatpush1.msra.mxu0 %v722
      %817 = vmatprep.subr.mxu0 0.0
      %818 = vmatpush1.msra.mxu0 %v723
      %819 = vmatprep.subr.mxu0 0.0
      %820 = vmatpush1.msra.mxu0 0.0
      %821 = vmatprep.subr.mxu0 0.0
      %822 = vmatpush1.msra.mxu0 0.0
      %823 = vmatprep.subr.mxu0 0.0
      %824 = vmatpush1.msra.mxu0 0.0
      %825 = vmatprep.subr.mxu0 0.0
      %826 = vmatpush1.msra.mxu0 0.0
      %827 = vmatprep.subr.mxu0 0.0
      %828 = vmatpush1.msra.mxu0 0.0
      %829 = vmatprep.subr.mxu0 0.0
      %830 = vmatpush1.msra.mxu0 0.0
      %831 = vmatprep.subr.mxu0 0.0
      %832 = vmatpush1.msra.mxu0 0.0
      %833 = vmatprep.subr.mxu0 0.0
      %834 = vmatpush1.msra.mxu0 0.0
      %835 = vmatprep.subr.mxu0 0.0
      %836 = vmatpush1.msra.mxu0 0.0
      %837 = vmatprep.subr.mxu0 0.0
      %838 = vmatpush1.msra.mxu0 0.0
      %839 = vmatprep.subr.mxu0 0.0
      %840 = vmatpush1.msra.mxu0 0.0
      %841 = vmatprep.subr.mxu0 0.0
      %842 = vmatpush1.msra.mxu0 0.0
      %843 = vmatprep.subr.mxu0 0.0
      %844 = vmatpush1.msra.mxu0 0.0
      %845 = vmatprep.subr.mxu0 0.0
      %846 = vmatpush1.msra.mxu0 0.0
      %847 = vmatprep.subr.mxu0 0.0
      %848 = vmatpush1.msra.mxu0 0.0
      %849 = vmatprep.subr.mxu0 0.0
      %850 = vmatpush1.msra.mxu0 0.0
      %851 = vmatprep.subr.mxu0 0.0
      %852 = vmatpush1.msra.mxu0 0.0
      %853 = vmatprep.subr.mxu0 0.0
      %854 = vmatpush1.msra.mxu0 0.0
      %855 = vmatprep.subr.mxu0 0.0
      %856 = vmatpush1.msra.mxu0 0.0
      %857 = vmatprep.subr.mxu0 0.0
      %858 = vmatpush1.msra.mxu0 0.0
      %859 = vmatprep.subr.mxu0 0.0
      %860 = vmatpush1.msra.mxu0 0.0
      %861 = vmatprep.subr.mxu0 0.0
      %862 = vmatpush1.msra.mxu0 0.0
      %863 = vmatprep.subr.mxu0 0.0
      %864 = vmatpush1.msra.mxu0 0.0
      %865 = vmatprep.subr.mxu0 0.0
      %866 = vmatpush1.msra.mxu0 0.0
      %867 = vmatprep.subr.mxu0 0.0
      %868 = vmatpush1.msra.mxu0 0.0
      %869 = vmatprep.subr.mxu0 0.0
      %870 = vmatpush1.msra.mxu0 0.0
      %871 = vmatprep.subr.mxu0 0.0
      %872 = vmatpush1.msra.mxu0 0.0
      %873 = vmatprep.mubr.f32.mxu0 0.0
      %874 = vmatmul.mubr.f32.gmra.mrb[0].mxu0 %v621
      %v875 = vpop.f32.mrb[0].mxu0
      %v876 = vadd.f32 %v796, %v875
      %v877 = vpop.f32.mrb[0].mxu0
      %878 = vmatprep.mubr.f32.mxu0 0.0
      %879 = vmatmul.mubr.f32.gmra.mrb[0].mxu0 %v624
      %v880 = vpop.f32.mrb[0].mxu0
      %v881 = vadd.f32 %v801, %v880
      %v882 = vpop.f32.mrb[0].mxu0
      %883 = vmatprep.mubr.f32.mxu0 0.0
      %884 = vmatmul.mubr.f32.gmra.mrb[0].mxu0 %v627
      %v885 = vpop.f32.mrb[0].mxu0
      %v886 = vadd.f32 %v806, %v885
      %v887 = vpop.f32.mrb[0].mxu0
      %888 = vdwg.mxu0
      %v889 = vld [vmem:[%s9] sm:$0x1]
      %v891 = vlaneseq
      %v892 = vshrl.u32 %v891, 7
      %v893 = vsub.s32 0, %v892
      %v894 = vrot.slane %v889, %v893
      %v896 = vadd.f32 %v876, %v894
      %v897 = vadd.f32 %v881, %v894
      %v898 = vadd.f32 %v886, %v894
      %v899 = vtanh.pop %v716
      %v900 = vtanh.pop %v717
      %v901 = vtanh.pop %v718
      %v902 = vxor.u32 %v896, 2147483648
      %v903 = vxor.u32 %v897, 2147483648
      %v904 = vxor.u32 %v898, 2147483648
      %v905 = vmul.f32 %v902, 1.442695
      %v906 = vpow.pop %v905
      %v907 = vmul.f32 %v903, 1.442695
      %v908 = vpow.pop %v907
      %v909 = vmul.f32 %v904, 1.442695
      %v910 = vpow.pop %v909
      %v911 = vadd.f32 %v906, 1.0
      %v912 = vadd.f32 %v908, 1.0
      %v913 = vadd.f32 %v910, 1.0
      %v914 = vrcp.pop %v911
      %v915 = vmul.f32 1.0, %v914
      %v916 = vrcp.pop %v912
      %v917 = vmul.f32 1.0, %v916
      %v918 = vrcp.pop %v913
      %v919 = vmul.f32 1.0, %v918
      %v920 = vmul.f32 %v899, %v915
      %v921 = vmul.f32 %v900, %v917
      %v922 = vmul.f32 %v901, %v919
      %v923 = vadd.f32 %v920, %v517
      %v924 = vadd.f32 %v921, %v518
      %v925 = vadd.f32 %v922, %v519
      %926 = vst.msk [vmem:[%s479] sm:$0xff] %vm530, %v923
      %927 = vst.msk [vmem:[%s479 + $0x8] sm:$0xff] %vm530, %v924
      %928 = vst.msk [vmem:[%s479 + $0x10] sm:$0xff] %vm530, %v925
      %v929 = vlaneseq
      %v930 = vshrl.u32 %v929, 7
      %v931 = vadd.s32 %v930, 8
      %v932 = vadd.s32 %v930, 16
      %s933 = smul.u32 %s28, 24
      %v934 = vstv %s933
      %v935 = vadd.s32 %v930, %v934
      %v936 = vadd.s32 %v931, %v934
      %v937 = vadd.s32 %v932, %v934
      %vm938 = vcmp.lt.s32.totalorder %v935, 18
      %vm939 = vcmp.lt.s32.totalorder %v936, 18
      %vm940 = vcmp.lt.s32.totalorder %v937, 18
      %v941 = vsel %vm938, 1, 0
      %v942 = vsel %vm939, 1, 0
      %v943 = vsel %vm940, 1, 0
      %vm944 = vcmp.eq.s32.totalorder %v941, 1
      %vm945 = vcmp.eq.s32.totalorder %v942, 1
      %vm946 = vcmp.eq.s32.totalorder %v943, 1
      %v947 = vsel %vm944, %v923, 0.0
      %v948 = vsel %vm945, %v924, 0.0
      %v949 = vsel %vm946, %v925, 0.0
      %v950 = vsel %vm530, %v947, 0.0
      %v951 = vsel %vm530, %v948, 0.0
      %v952 = vadd.f32 %v950, %v951
      %v953 = vsel %vm530, %v949, 0.0
      %v954 = vadd.f32 %v952, %v953
      %v955 = vrot.slane %v954, 4
      %v956 = vadd.f32 %v954, %v955
      %v957 = vrot.slane %v956, 2
      %v958 = vadd.f32 %v956, %v957
      %v959 = vrot.slane %v958, 1
      %v960 = vadd.f32 %v958, %v959
      %v961 = vmul.f32 %v947, %v947
      %v962 = vmul.f32 %v948, %v948
      %v963 = vmul.f32 %v949, %v949
      %v964 = vsel %vm530, %v961, 0.0
      %v965 = vsel %vm530, %v962, 0.0
      %v966 = vadd.f32 %v964, %v965
      %v967 = vsel %vm530, %v963, 0.0
      %v968 = vadd.f32 %v966, %v967
      %v969 = vrot.slane %v968, 4
      %v970 = vadd.f32 %v968, %v969
      %v971 = vrot.slane %v970, 2
      %v972 = vadd.f32 %v970, %v971
      %v973 = vrot.slane %v972, 1
      %v974 = vadd.f32 %v972, %v973
      %vm975 = vcmask 1040384
      %v976 = vsel %vm975, %v960, %v974
      %vm977 = vcmask 1041408
      %v978 = vsel %vm977, %v976, 0.0
      %979 = vst.msk [vmem:[%s487] sm:$0xff] %vm530, %v978
      %s980 = smul.u32 3, %s28
      %p981 = scmp.lt.s32.totalorder %s27, 3
      %s982 = scalar_select %p981, %s27, 3
      %p983 = scmp.lt.s32.totalorder %s980, 2
      %s984 = scalar_select %p983, %s980, 2
      %s985 = smul.addr %s982, 3
      %s986 = sadd.s32 %s984, %s985
      %s987 = smul.addr %s986, 8
      %s988 = scalar_lea.vmem %s10, %s987
      %p989 = scmp.lt.s32.totalorder %s27, 3
      %s990 = scalar_select %p989, %s27, 3
      %p991 = scmp.lt.s32.totalorder %s28, 0
      %s992 = scalar_select %p991, %s28, 0
      %s993 = sadd.s32 %s992, %s990
      %s994 = smul.addr %s993, 8
      %s995 = scalar_lea.vmem %s11, %s994
      // Predicated region
      $region61: #{hidta_forward.9} parent=59 // pred_check
        %p996 = pneg %p281
      $region62: #{hidta_forward.9} parent=59 // pred_check_branch
        %998 = sbr.rel (%p996) target = $region64
      $region63: #{hidta_forward.9} parent=59 // pred_region
        %s999 = smul.u32 3, %s28
      $region64: #{hidta_forward.9} parent=59 // pred_fallthru
        _
      // Predicated region
      $region65: #{hidta_forward.9} parent=59 // pred_check
        %p1000 = pneg %p309
      $region66: #{hidta_forward.9} parent=59 // pred_check_branch
        %1002 = sbr.rel (%p1000) target = $region68
      $region67: #{hidta_forward.9} parent=59 // pred_region
        _
      $region68: #{hidta_forward.9} parent=59 // pred_fallthru
        _
    $region60: #{hidta_forward.9} parent=5 // pred_fallthru
      _
    %p1003 = scmp.le.s32.totalorder 2, %s18
    // Predicated region
    $region69: #{hidta_forward.9} parent=5 // pred_check
      %p1004 = pneg %p1003
    $region70: #{hidta_forward.9} parent=5 // pred_check_branch
      %1006 = sbr.rel (%p1004) target = $region72
    $region71: #{hidta_forward.9} parent=5 // pred_region
      %s1007 = ssub.s32 %s18, 2
      // Predicated region
      $region73: #{hidta_forward.9} parent=71 // pred_check
        %p1008 = pneg %p287
      $region74: #{hidta_forward.9} parent=71 // pred_check_branch
        %1010 = sbr.rel (%p1008) target = $region76
      $region75: #{hidta_forward.9} parent=71 // pred_region
        %s1011 = smul.u32 3, %s30
        %p1012 = scmp.lt.s32.totalorder %s29, 3
        %s1013 = scalar_select %p1012, %s29, 3
        %p1014 = scmp.lt.s32.totalorder %s1011, 2
        %s1015 = scalar_select %p1014, %s1011, 2
        %s1016 = smul.addr %s1013, 3
        %s1017 = sadd.s32 %s1015, %s1016
        %s1018 = smul.addr %s1017, 8
        %s1019 = scalar_lea.vmem %s10, %s1018
      $region76: #{hidta_forward.9} parent=71 // pred_fallthru
        _
      // Predicated region
      $region77: #{hidta_forward.9} parent=71 // pred_check
        %p1020 = pneg %p315
      $region78: #{hidta_forward.9} parent=71 // pred_check_branch
        %1022 = sbr.rel (%p1020) target = $region80
      $region79: #{hidta_forward.9} parent=71 // pred_region
        %p1023 = scmp.lt.s32.totalorder %s29, 3
        %s1024 = scalar_select %p1023, %s29, 3
        %p1025 = scmp.lt.s32.totalorder %s30, 0
        %s1026 = scalar_select %p1025, %s30, 0
        %s1027 = sadd.s32 %s1026, %s1024
        %s1028 = smul.addr %s1027, 8
        %s1029 = scalar_lea.vmem %s11, %s1028
      $region80: #{hidta_forward.9} parent=71 // pred_fallthru
        _
    $region72: #{hidta_forward.9} parent=5 // pred_fallthru
      _
  $region6: #{hidta_forward.9} parent=0 // loop_footer
    %s22 = sadd.s32 1, %s18
  $region7: #{hidta_forward.9} parent=0 // loop_footer_branch
    %17 = sbr.rel target = $region3
  $region8: #{hidta_forward.9} parent=0 // loop_exit
    _

// kernel: hidta_forward.10
$region0: #{hidta_forward.10}
  #allocation0 [shape = 'u32[]', space=smem, size = 0x4, offset = 0x4, fixed_abs, tag = 'smem constant byte address 0x4 - core index']
  #allocation1 [shape = 'u32[144,128]{1,0:T(1,128)}', space=vmem, size = 0x12000, scoped, tag = 'internal scratch']
  %s0 = inlined_call_operand.vmem [shape: f32[4,24,40], index: 0, kind: input, shape index: {}, may-alias: {0,1}]
  %s1 = inlined_call_operand.vmem [shape: f32[4,24,40], index: 1, kind: input, shape index: {}, may-alias: {0,1}]
  %s2 = inlined_call_operand.vmem [shape: f32[1,40], index: 2, kind: input, shape index: {}]
  %s3 = inlined_call_operand.vmem [shape: f32[1,40], index: 3, kind: input, shape index: {}]
  %s4 = inlined_call_operand.vmem [shape: f32[40,40], index: 4, kind: input, shape index: {}]
  %s5 = inlined_call_operand.vmem [shape: f32[40,40], index: 5, kind: input, shape index: {}]
  %s6 = inlined_call_operand.vmem [shape: f32[40,40], index: 6, kind: input, shape index: {}]
  %s7 = inlined_call_operand.vmem [shape: f32[40,40], index: 7, kind: input, shape index: {}]
  %s8 = inlined_call_operand.vmem [shape: f32[1,40], index: 8, kind: input, shape index: {}]
  %s9 = inlined_call_operand.vmem [shape: f32[1,40], index: 9, kind: input, shape index: {}]
  %s10 = inlined_call_operand.vmem [shape: f32[2,24,40], index: 10, kind: output, shape index: {0}]
  %s11 = inlined_call_operand.vmem [shape: f32[2,1,8,40], index: 11, kind: output, shape index: {1}]
  %12 = xla_tuple %s10, %s11
  %s13 = sld [smem:[#allocation0]]
  $region81: #{hidta_forward.10} parent=0
    _
  %s15 = ssub.s32 1, %s13
  %s16 = scalar_select 0, %s15, %s13
  loop: start=0, step=1, limit=4
  $region2: #{hidta_forward.10} parent=0 // loop_pre_header
    _
  $region3: #{hidta_forward.10} parent=0 // loop_header
    %s18 = sphi 0, %s22
    %p19 = scmp.ge.s32.totalorder %s18, 4
    %s25 = sphi 0, %s37
    %s26 = sphi 0, %s33
    %s27 = sphi 0, %s25
    %s28 = sphi 0, %s26
    %s29 = sphi 0, %s27
    %s30 = sphi 0, %s28
    %s42 = sphi 0, %s44
    %s45 = sphi 0, %s42
    %s46 = sphi 0, %s45
    %s62 = sphi 0, %s46
    %s72 = sphi 0, %s74
    %s75 = sphi 0, %s72
    %s76 = sphi 0, %s75
    %s92 = sphi 0, %s76
    %s96 = sphi 0, %s96
    %s98 = sphi 0, %s96
    %s99 = sphi 0, %s98
    %s113 = sphi 0, %s99
    %s117 = sphi 0, %s117
    %s119 = sphi 0, %s117
    %s120 = sphi 0, %s119
    %s134 = sphi 0, %s120
    %s138 = sphi 0, %s138
    %s140 = sphi 0, %s138
    %s141 = sphi 0, %s140
    %s155 = sphi 0, %s141
    %s159 = sphi 0, %s159
    %s161 = sphi 0, %s159
    %s162 = sphi 0, %s161
    %s176 = sphi 0, %s162
    %s180 = sphi 0, %s180
    %s182 = sphi 0, %s180
    %s183 = sphi 0, %s182
    %s197 = sphi 0, %s183
    %s201 = sphi 0, %s201
    %s203 = sphi 0, %s201
    %s204 = sphi 0, %s203
    %s218 = sphi 0, %s204
    %s222 = sphi 0, %s222
    %s224 = sphi 0, %s222
    %s225 = sphi 0, %s224
    %s239 = sphi 0, %s225
    %s243 = sphi 0, %s243
    %s245 = sphi 0, %s243
    %s246 = sphi 0, %s245
    %s260 = sphi 0, %s246
    %s268 = sphi 0, %s270
    %s271 = sphi 0, %s268
    %s272 = sphi 0, %s271
    %s288 = sphi 0, %s272
    %s296 = sphi 0, %s298
    %s299 = sphi 0, %s296
    %s300 = sphi 0, %s299
    %s316 = sphi 0, %s300
  $region4: #{hidta_forward.10} parent=0 // loop_header_branch
    %21 = sbr.rel (%p19) target = $region8
  $region5: #{hidta_forward.10} parent=0 // loop_body
    %s23 = ssub.s32 %s18, 1
    %s24 = ssub.s32 %s18, 2
    %s31 = sadd.s32 1, %s26
    %p32 = scmp.ge.s32.totalorder %s31, 1
    %s33 = scalar_select %p32, 0, %s31
    %s34 = sadd.s32 1, %s25
    %s35 = scalar_select %p32, %s34, %s25
    %p36 = scmp.ge.s32.totalorder %s35, 2
    %s37 = scalar_select %p36, 0, %s35
    %s38 = ssub.s32 %s25, %s37
    %s39 = ssub.s32 %s26, %s33
    %s40 = sor.u32 %s38, %s39
    %p41 = scmp.eq.s32.totalorder %s40, 0
    %s43 = sadd.s32 %s42, 1
    %s44 = scalar_select %p41, %s42, %s43
    %p47 = pneg %p41
    %p48 = scmp.eq.s32.totalorder %s18, 1
    %p49 = por %p47, %p48
    %p50 = scmp.ne.s32.totalorder %s42, %s45
    %p51 = scmp.eq.s32.totalorder %s18, 0
    %p52 = por %p50, %p51
    %p53 = scmp.ne.s32.totalorder %s42, %s45
    %p54 = scmp.eq.s32.totalorder %s23, 1
    %p55 = por %p53, %p54
    %p56 = scmp.ne.s32.totalorder %s45, %s46
    %p57 = scmp.eq.s32.totalorder %s23, 0
    %p58 = por %p56, %p57
    %p59 = scmp.ne.s32.totalorder %s45, %s46
    %p60 = scmp.eq.s32.totalorder %s24, 1
    %p61 = por %p59, %p60
    %p63 = scmp.ne.s32.totalorder %s46, %s62
    %p64 = scmp.eq.s32.totalorder %s24, 0
    %p65 = por %p63, %p64
    %s66 = sadd.s32 %s25, 2
    %s67 = sadd.s32 %s37, 2
    %s68 = ssub.s32 %s66, %s67
    %s69 = ssub.s32 %s26, %s33
    %s70 = sor.u32 %s68, %s69
    %p71 = scmp.eq.s32.totalorder %s70, 0
    %s73 = sadd.s32 %s72, 1
    %s74 = scalar_select %p71, %s72, %s73
    %p77 = pneg %p71
    %p78 = scmp.eq.s32.totalorder %s18, 1
    %p79 = por %p77, %p78
    %p80 = scmp.ne.s32.totalorder %s72, %s75
    %p81 = scmp.eq.s32.totalorder %s18, 0
    %p82 = por %p80, %p81
    %p83 = scmp.ne.s32.totalorder %s72, %s75
    %p84 = scmp.eq.s32.totalorder %s23, 1
    %p85 = por %p83, %p84
    %p86 = scmp.ne.s32.totalorder %s75, %s76
    %p87 = scmp.eq.s32.totalorder %s23, 0
    %p88 = por %p86, %p87
    %p89 = scmp.ne.s32.totalorder %s75, %s76
    %p90 = scmp.eq.s32.totalorder %s24, 1
    %p91 = por %p89, %p90
    %p93 = scmp.ne.s32.totalorder %s76, %s92
    %p94 = scmp.eq.s32.totalorder %s24, 0
    %p95 = por %p93, %p94
    %s97 = sadd.s32 %s96, 1
    %p100 = scmp.eq.s32.totalorder %s18, 1
    %p101 = scmp.ne.s32.totalorder %s96, %s98
    %p102 = scmp.eq.s32.totalorder %s18, 0
    %p103 = por %p101, %p102
    %p104 = scmp.ne.s32.totalorder %s96, %s98
    %p105 = scmp.eq.s32.totalorder %s23, 1
    %p106 = por %p104, %p105
    %p107 = scmp.ne.s32.totalorder %s98, %s99
    %p108 = scmp.eq.s32.totalorder %s23, 0
    %p109 = por %p107, %p108
    %p110 = scmp.ne.s32.totalorder %s98, %s99
    %p111 = scmp.eq.s32.totalorder %s24, 1
    %p112 = por %p110, %p111
    %p114 = scmp.ne.s32.totalorder %s99, %s113
    %p115 = scmp.eq.s32.totalorder %s24, 0
    %p116 = por %p114, %p115
    %s118 = sadd.s32 %s117, 1
    %p121 = scmp.eq.s32.totalorder %s18, 1
    %p122 = scmp.ne.s32.totalorder %s117, %s119
    %p123 = scmp.eq.s32.totalorder %s18, 0
    %p124 = por %p122, %p123
    %p125 = scmp.ne.s32.totalorder %s117, %s119
    %p126 = scmp.eq.s32.totalorder %s23, 1
    %p127 = por %p125, %p126
    %p128 = scmp.ne.s32.totalorder %s119, %s120
    %p129 = scmp.eq.s32.totalorder %s23, 0
    %p130 = por %p128, %p129
    %p131 = scmp.ne.s32.totalorder %s119, %s120
    %p132 = scmp.eq.s32.totalorder %s24, 1
    %p133 = por %p131, %p132
    %p135 = scmp.ne.s32.totalorder %s120, %s134
    %p136 = scmp.eq.s32.totalorder %s24, 0
    %p137 = por %p135, %p136
    %s139 = sadd.s32 %s138, 1
    %p142 = scmp.eq.s32.totalorder %s18, 1
    %p143 = scmp.ne.s32.totalorder %s138, %s140
    %p144 = scmp.eq.s32.totalorder %s18, 0
    %p145 = por %p143, %p144
    %p146 = scmp.ne.s32.totalorder %s138, %s140
    %p147 = scmp.eq.s32.totalorder %s23, 1
    %p148 = por %p146, %p147
    %p149 = scmp.ne.s32.totalorder %s140, %s141
    %p150 = scmp.eq.s32.totalorder %s23, 0
    %p151 = por %p149, %p150
    %p152 = scmp.ne.s32.totalorder %s140, %s141
    %p153 = scmp.eq.s32.totalorder %s24, 1
    %p154 = por %p152, %p153
    %p156 = scmp.ne.s32.totalorder %s141, %s155
    %p157 = scmp.eq.s32.totalorder %s24, 0
    %p158 = por %p156, %p157
    %s160 = sadd.s32 %s159, 1
    %p163 = scmp.eq.s32.totalorder %s18, 1
    %p164 = scmp.ne.s32.totalorder %s159, %s161
    %p165 = scmp.eq.s32.totalorder %s18, 0
    %p166 = por %p164, %p165
    %p167 = scmp.ne.s32.totalorder %s159, %s161
    %p168 = scmp.eq.s32.totalorder %s23, 1
    %p169 = por %p167, %p168
    %p170 = scmp.ne.s32.totalorder %s161, %s162
    %p171 = scmp.eq.s32.totalorder %s23, 0
    %p172 = por %p170, %p171
    %p173 = scmp.ne.s32.totalorder %s161, %s162
    %p174 = scmp.eq.s32.totalorder %s24, 1
    %p175 = por %p173, %p174
    %p177 = scmp.ne.s32.totalorder %s162, %s176
    %p178 = scmp.eq.s32.totalorder %s24, 0
    %p179 = por %p177, %p178
    %s181 = sadd.s32 %s180, 1
    %p184 = scmp.eq.s32.totalorder %s18, 1
    %p185 = scmp.ne.s32.totalorder %s180, %s182
    %p186 = scmp.eq.s32.totalorder %s18, 0
    %p187 = por %p185, %p186
    %p188 = scmp.ne.s32.totalorder %s180, %s182
    %p189 = scmp.eq.s32.totalorder %s23, 1
    %p190 = por %p188, %p189
    %p191 = scmp.ne.s32.totalorder %s182, %s183
    %p192 = scmp.eq.s32.totalorder %s23, 0
    %p193 = por %p191, %p192
    %p194 = scmp.ne.s32.totalorder %s182, %s183
    %p195 = scmp.eq.s32.totalorder %s24, 1
    %p196 = por %p194, %p195
    %p198 = scmp.ne.s32.totalorder %s183, %s197
    %p199 = scmp.eq.s32.totalorder %s24, 0
    %p200 = por %p198, %p199
    %s202 = sadd.s32 %s201, 1
    %p205 = scmp.eq.s32.totalorder %s18, 1
    %p206 = scmp.ne.s32.totalorder %s201, %s203
    %p207 = scmp.eq.s32.totalorder %s18, 0
    %p208 = por %p206, %p207
    %p209 = scmp.ne.s32.totalorder %s201, %s203
    %p210 = scmp.eq.s32.totalorder %s23, 1
    %p211 = por %p209, %p210
    %p212 = scmp.ne.s32.totalorder %s203, %s204
    %p213 = scmp.eq.s32.totalorder %s23, 0
    %p214 = por %p212, %p213
    %p215 = scmp.ne.s32.totalorder %s203, %s204
    %p216 = scmp.eq.s32.totalorder %s24, 1
    %p217 = por %p215, %p216
    %p219 = scmp.ne.s32.totalorder %s204, %s218
    %p220 = scmp.eq.s32.totalorder %s24, 0
    %p221 = por %p219, %p220
    %s223 = sadd.s32 %s222, 1
    %p226 = scmp.eq.s32.totalorder %s18, 1
    %p227 = scmp.ne.s32.totalorder %s222, %s224
    %p228 = scmp.eq.s32.totalorder %s18, 0
    %p229 = por %p227, %p228
    %p230 = scmp.ne.s32.totalorder %s222, %s224
    %p231 = scmp.eq.s32.totalorder %s23, 1
    %p232 = por %p230, %p231
    %p233 = scmp.ne.s32.totalorder %s224, %s225
    %p234 = scmp.eq.s32.totalorder %s23, 0
    %p235 = por %p233, %p234
    %p236 = scmp.ne.s32.totalorder %s224, %s225
    %p237 = scmp.eq.s32.totalorder %s24, 1
    %p238 = por %p236, %p237
    %p240 = scmp.ne.s32.totalorder %s225, %s239
    %p241 = scmp.eq.s32.totalorder %s24, 0
    %p242 = por %p240, %p241
    %s244 = sadd.s32 %s243, 1
    %p247 = scmp.eq.s32.totalorder %s18, 1
    %p248 = scmp.ne.s32.totalorder %s243, %s245
    %p249 = scmp.eq.s32.totalorder %s18, 0
    %p250 = por %p248, %p249
    %p251 = scmp.ne.s32.totalorder %s243, %s245
    %p252 = scmp.eq.s32.totalorder %s23, 1
    %p253 = por %p251, %p252
    %p254 = scmp.ne.s32.totalorder %s245, %s246
    %p255 = scmp.eq.s32.totalorder %s23, 0
    %p256 = por %p254, %p255
    %p257 = scmp.ne.s32.totalorder %s245, %s246
    %p258 = scmp.eq.s32.totalorder %s24, 1
    %p259 = por %p257, %p258
    %p261 = scmp.ne.s32.totalorder %s246, %s260
    %p262 = scmp.eq.s32.totalorder %s24, 0
    %p263 = por %p261, %p262
    %s264 = ssub.s32 %s25, %s37
    %s265 = ssub.s32 %s26, %s33
    %s266 = sor.u32 %s264, %s265
    %p267 = scmp.eq.s32.totalorder %s266, 0
    %s269 = sadd.s32 %s268, 1
    %s270 = scalar_select %p267, %s268, %s269
    %p273 = pneg %p267
    %p274 = scmp.eq.s32.totalorder %s18, 1
    %p275 = por %p273, %p274
    %p276 = scmp.ne.s32.totalorder %s268, %s271
    %p277 = scmp.eq.s32.totalorder %s18, 0
    %p278 = por %p276, %p277
    %p279 = scmp.ne.s32.totalorder %s268, %s271
    %p280 = scmp.eq.s32.totalorder %s23, 1
    %p281 = por %p279, %p280
    %p282 = scmp.ne.s32.totalorder %s271, %s272
    %p283 = scmp.eq.s32.totalorder %s23, 0
    %p284 = por %p282, %p283
    %p285 = scmp.ne.s32.totalorder %s271, %s272
    %p286 = scmp.eq.s32.totalorder %s24, 1
    %p287 = por %p285, %p286
    %p289 = scmp.ne.s32.totalorder %s272, %s288
    %p290 = scmp.eq.s32.totalorder %s24, 0
    %p291 = por %p289, %p290
    %s292 = ssub.s32 %s25, %s37
    %s293 = ssub.s32 %s26, %s33
    %s294 = sor.u32 %s292, %s293
    %p295 = scmp.eq.s32.totalorder %s294, 0
    %s297 = sadd.s32 %s296, 1
    %s298 = scalar_select %p295, %s296, %s297
    %p301 = pneg %p295
    %p302 = scmp.eq.s32.totalorder %s18, 1
    %p303 = por %p301, %p302
    %p304 = scmp.ne.s32.totalorder %s296, %s299
    %p305 = scmp.eq.s32.totalorder %s18, 0
    %p306 = por %p304, %p305
    %p307 = scmp.ne.s32.totalorder %s296, %s299
    %p308 = scmp.eq.s32.totalorder %s23, 1
    %p309 = por %p307, %p308
    %p310 = scmp.ne.s32.totalorder %s299, %s300
    %p311 = scmp.eq.s32.totalorder %s23, 0
    %p312 = por %p310, %p311
    %p313 = scmp.ne.s32.totalorder %s299, %s300
    %p314 = scmp.eq.s32.totalorder %s24, 1
    %p315 = por %p313, %p314
    %p317 = scmp.ne.s32.totalorder %s300, %s316
    %p318 = scmp.eq.s32.totalorder %s24, 0
    %p319 = por %p317, %p318
    %p320 = scmp.le.s32.totalorder 1, %s18
    %p321 = scmp.lt.s32.totalorder %s18, 3
    %p322 = pnand %p320, %p321
    %p323 = pneg %p322
    // Predicated region
    $region9: #{hidta_forward.10} parent=5 // pred_check
      _
    $region10: #{hidta_forward.10} parent=5 // pred_check_branch
      %325 = sbr.rel (%p322) target = $region12
    $region11: #{hidta_forward.10} parent=5 // pred_region
      %s326 = ssub.s32 %s18, 1
      // Predicated region
      $region13: #{hidta_forward.10} parent=11 // pred_check
        %p327 = pneg %p109
      $region14: #{hidta_forward.10} parent=11 // pred_check_branch
        %329 = sbr.rel (%p327) target = $region16
      $region15: #{hidta_forward.10} parent=11 // pred_region
        _
      $region16: #{hidta_forward.10} parent=11 // pred_fallthru
        _
      // Predicated region
      $region17: #{hidta_forward.10} parent=11 // pred_check
        %p330 = pneg %p130
      $region18: #{hidta_forward.10} parent=11 // pred_check_branch
        %332 = sbr.rel (%p330) target = $region20
      $region19: #{hidta_forward.10} parent=11 // pred_region
        _
      $region20: #{hidta_forward.10} parent=11 // pred_fallthru
        _
      // Predicated region
      $region21: #{hidta_forward.10} parent=11 // pred_check
        %p333 = pneg %p151
      $region22: #{hidta_forward.10} parent=11 // pred_check_branch
        %335 = sbr.rel (%p333) target = $region24
      $region23: #{hidta_forward.10} parent=11 // pred_region
        _
      $region24: #{hidta_forward.10} parent=11 // pred_fallthru
        _
      // Predicated region
      $region25: #{hidta_forward.10} parent=11 // pred_check
        %p336 = pneg %p172
      $region26: #{hidta_forward.10} parent=11 // pred_check_branch
        %338 = sbr.rel (%p336) target = $region28
      $region27: #{hidta_forward.10} parent=11 // pred_region
        _
      $region28: #{hidta_forward.10} parent=11 // pred_fallthru
        _
      // Predicated region
      $region29: #{hidta_forward.10} parent=11 // pred_check
        %p339 = pneg %p193
      $region30: #{hidta_forward.10} parent=11 // pred_check_branch
        %341 = sbr.rel (%p339) target = $region32
      $region31: #{hidta_forward.10} parent=11 // pred_region
        _
      $region32: #{hidta_forward.10} parent=11 // pred_fallthru
        _
      // Predicated region
      $region33: #{hidta_forward.10} parent=11 // pred_check
        %p342 = pneg %p214
      $region34: #{hidta_forward.10} parent=11 // pred_check_branch
        %344 = sbr.rel (%p342) target = $region36
      $region35: #{hidta_forward.10} parent=11 // pred_region
        _
      $region36: #{hidta_forward.10} parent=11 // pred_fallthru
        _
      // Predicated region
      $region37: #{hidta_forward.10} parent=11 // pred_check
        %p345 = pneg %p235
      $region38: #{hidta_forward.10} parent=11 // pred_check_branch
        %347 = sbr.rel (%p345) target = $region40
      $region39: #{hidta_forward.10} parent=11 // pred_region
        _
      $region40: #{hidta_forward.10} parent=11 // pred_fallthru
        _
      // Predicated region
      $region41: #{hidta_forward.10} parent=11 // pred_check
        %p348 = pneg %p256
      $region42: #{hidta_forward.10} parent=11 // pred_check_branch
        %350 = sbr.rel (%p348) target = $region44
      $region43: #{hidta_forward.10} parent=11 // pred_region
        _
      $region44: #{hidta_forward.10} parent=11 // pred_fallthru
        _
    $region12: #{hidta_forward.10} parent=5 // pred_fallthru
      _
    %p351 = scmp.lt.s32.totalorder %s18, 2
    // Predicated region
    $region45: #{hidta_forward.10} parent=5 // pred_check
      %p352 = pneg %p351
    $region46: #{hidta_forward.10} parent=5 // pred_check_branch
      %354 = sbr.rel (%p352) target = $region48
    $region47: #{hidta_forward.10} parent=5 // pred_region
      // Predicated region
      $region49: #{hidta_forward.10} parent=47 // pred_check
        %p355 = pneg %p52
      $region50: #{hidta_forward.10} parent=47 // pred_check_branch
        %357 = sbr.rel (%p355) target = $region52
      $region51: #{hidta_forward.10} parent=47 // pred_region
        %s358 = smul.u32 3, %s26
        %p359 = scmp.lt.s32.totalorder %s25, 3
        %s360 = scalar_select %p359, %s25, 3
        %p361 = scmp.lt.s32.totalorder %s358, 2
        %s362 = scalar_select %p361, %s358, 2
        %s363 = smul.addr %s360, 3
        %s364 = sadd.s32 %s362, %s363
        %s365 = smul.addr %s364, 8
        %s366 = scalar_lea.vmem %s0, %s365
        %s367 = smul.u32 3, %s26
      $region52: #{hidta_forward.10} parent=47 // pred_fallthru
        _
      // Predicated region
      $region53: #{hidta_forward.10} parent=47 // pred_check
        %p368 = pneg %p82
      $region54: #{hidta_forward.10} parent=47 // pred_check_branch
        %370 = sbr.rel (%p368) target = $region56
      $region55: #{hidta_forward.10} parent=47 // pred_region
        %s371 = sadd.s32 %s25, 2
        %s372 = smul.u32 3, %s26
        %p373 = scmp.lt.s32.totalorder %s371, 3
        %s374 = scalar_select %p373, %s371, 3
        %p375 = scmp.lt.s32.totalorder %s372, 2
        %s376 = scalar_select %p375, %s372, 2
        %s377 = smul.addr %s374, 3
        %s378 = sadd.s32 %s376, %s377
        %s379 = smul.addr %s378, 8
        %s380 = scalar_lea.vmem %s1, %s379
        %s381 = sadd.s32 %s25, 2
        %s382 = smul.u32 3, %s26
      $region56: #{hidta_forward.10} parent=47 // pred_fallthru
        _
    $region48: #{hidta_forward.10} parent=5 // pred_fallthru
      _
    %p383 = scmp.le.s32.totalorder 1, %s18
    %p384 = scmp.lt.s32.totalorder %s18, 3
    %p385 = pnand %p383, %p384
    %p386 = pneg %p385
    // Predicated region
    $region57: #{hidta_forward.10} parent=5 // pred_check
      _
    $region58: #{hidta_forward.10} parent=5 // pred_check_branch
      %388 = sbr.rel (%p385) target = $region60
    $region59: #{hidta_forward.10} parent=5 // pred_region
      %s389 = ssub.s32 %s18, 1
      %s390 = smul.u32 3, %s28
      %p391 = scmp.lt.s32.totalorder %s27, 3
      %s392 = scalar_select %p391, %s27, 3
      %p393 = scmp.lt.s32.totalorder %s390, 2
      %s394 = scalar_select %p393, %s390, 2
      %s395 = smul.addr %s392, 3
      %s396 = sadd.s32 %s394, %s395
      %s397 = smul.addr %s396, 8
      %s398 = scalar_lea.vmem %s0, %s397
      %p399 = pneg %p58
      %p400 = pneg %p55
      %s401 = sadd.s32 %s27, 2
      %s402 = smul.u32 3, %s28
      %p403 = scmp.lt.s32.totalorder %s401, 3
      %s404 = scalar_select %p403, %s401, 3
      %p405 = scmp.lt.s32.totalorder %s402, 2
      %s406 = scalar_select %p405, %s402, 2
      %s407 = smul.addr %s404, 3
      %s408 = sadd.s32 %s406, %s407
      %s409 = smul.addr %s408, 8
      %s410 = scalar_lea.vmem %s1, %s409
      %p411 = pneg %p88
      %p412 = pneg %p85
      %p413 = pneg %p109
      %p414 = pneg %p106
      %p415 = pneg %p130
      %p416 = pneg %p127
      %p417 = pneg %p151
      %p418 = pneg %p148
      %p419 = pneg %p172
      %p420 = pneg %p169
      %p421 = pneg %p193
      %p422 = pneg %p190
      %p423 = pneg %p214
      %p424 = pneg %p211
      %p425 = pneg %p235
      %p426 = pneg %p232
      %p427 = pneg %p256
      %p428 = pneg %p253
      %p429 = pneg %p284
      %p430 = pneg %p281
      %s431 = smul.u32 3, %s28
      %p432 = scmp.lt.s32.totalorder %s27, 1
      %s433 = scalar_select %p432, %s27, 1
      %p434 = scmp.lt.s32.totalorder %s431, 2
      %s435 = scalar_select %p434, %s431, 2
      %s436 = smul.addr %s433, 3
      %s437 = sadd.s32 %s435, %s436
      %s438 = smul.addr %s437, 8
      %s439 = scalar_lea.vmem %s10, %s438
      %p440 = pneg %p312
      %p441 = pneg %p309
      %p442 = scmp.lt.s32.totalorder %s27, 1
      %s443 = scalar_select %p442, %s27, 1
      %p444 = scmp.lt.s32.totalorder %s28, 0
      %s445 = scalar_select %p444, %s28, 0
      %s446 = sadd.s32 %s445, %s443
      %s447 = smul.addr %s446, 8
      %s448 = scalar_lea.vmem %s11, %s447
      %s449 = smul.u32 3, %s28
      %p450 = scmp.lt.s32.totalorder %s27, 3
      %s451 = scalar_select %p450, %s27, 3
      %p452 = scmp.lt.s32.totalorder %s449, 2
      %s453 = scalar_select %p452, %s449, 2
      %s454 = smul.addr %s451, 3
      %s455 = sadd.s32 %s453, %s454
      %s456 = smul.addr %s455, 8
      %s457 = scalar_lea.vmem %s0, %s456
      %s458 = smul.u32 3, %s28
      %s459 = sadd.s32 %s27, 2
      %s460 = smul.u32 3, %s28
      %p461 = scmp.lt.s32.totalorder %s459, 3
      %s462 = scalar_select %p461, %s459, 3
      %p463 = scmp.lt.s32.totalorder %s460, 2
      %s464 = scalar_select %p463, %s460, 2
      %s465 = smul.addr %s462, 3
      %s466 = sadd.s32 %s464, %s465
      %s467 = smul.addr %s466, 8
      %s468 = scalar_lea.vmem %s1, %s467
      %s469 = sadd.s32 %s27, 2
      %s470 = smul.u32 3, %s28
      %s471 = smul.u32 3, %s28
      %p472 = scmp.lt.s32.totalorder %s27, 1
      %s473 = scalar_select %p472, %s27, 1
      %p474 = scmp.lt.s32.totalorder %s471, 2
      %s475 = scalar_select %p474, %s471, 2
      %s476 = smul.addr %s473, 3
      %s477 = sadd.s32 %s475, %s476
      %s478 = smul.addr %s477, 8
      %s479 = scalar_lea.vmem %s10, %s478
      %s480 = smul.u32 3, %s28
      %p481 = scmp.lt.s32.totalorder %s27, 1
      %s482 = scalar_select %p481, %s27, 1
      %p483 = scmp.lt.s32.totalorder %s28, 0
      %s484 = scalar_select %p483, %s28, 0
      %s485 = sadd.s32 %s484, %s482
      %s486 = smul.addr %s485, 8
      %s487 = scalar_lea.vmem %s11, %s486
      %v488 = vld [vmem:[%s2] sm:$0x1]
      %v489 = vld [vmem:[%s3] sm:$0x1]
      %v490 = vld [vmem:[%s457] sm:$0xff]
      %v491 = vld [vmem:[%s457 + $0x8] sm:$0xff]
      %v492 = vld [vmem:[%s457 + $0x10] sm:$0xff]
      %v494 = vlaneseq
      %v495 = vshrl.u32 %v494, 7
      %v496 = vsub.s32 0, %v495
      %v497 = vrot.slane %v488, %v496
      %v499 = vmul.f32 %v490, %v497
      %v500 = vmul.f32 %v491, %v497
      %v501 = vmul.f32 %v492, %v497
      %v503 = vlaneseq
      %v504 = vshrl.u32 %v503, 7
      %v505 = vsub.s32 0, %v504
      %v506 = vrot.slane %v489, %v505
      %v508 = vadd.f32 %v499, %v506
      %v509 = vadd.f32 %v500, %v506
      %v510 = vadd.f32 %v501, %v506
      %v511 = vld [vmem:[%s468] sm:$0xff]
      %v512 = vld [vmem:[%s468 + $0x8] sm:$0xff]
      %v513 = vld [vmem:[%s468 + $0x10] sm:$0xff]
      %v514 = vmul.f32 %v511, %v497
      %v515 = vmul.f32 %v512, %v497
      %v516 = vmul.f32 %v513, %v497
      %v517 = vadd.f32 %v514, %v506
      %v518 = vadd.f32 %v515, %v506
      %v519 = vadd.f32 %v516, %v506
      %v520 = vld [vmem:[%s4] sm:$0xff]
      %v521 = vld [vmem:[%s4 + $0x8] sm:$0xff]
      %v522 = vld [vmem:[%s4 + $0x10] sm:$0xff]
      %v523 = vld [vmem:[%s4 + $0x18] sm:$0xff]
      %v524 = vld [vmem:[%s4 + $0x20] sm:$0xff]
      %v525 = vld [vmem:[%s5] sm:$0xff]
      %v526 = vld [vmem:[%s5 + $0x8] sm:$0xff]
      %v527 = vld [vmem:[%s5 + $0x10] sm:$0xff]
      %v528 = vld [vmem:[%s5 + $0x18] sm:$0xff]
      %v529 = vld [vmem:[%s5 + $0x20] sm:$0xff]
      %vm530 = vcmask 326656
      %v532 = vsel %vm530, %v517, 0
      %v535 = vsel %vm530, %v518, 0
      %v538 = vsel %vm530, %v519, 0
      %540 = vmatprep.subr.mxu0 0.0
      %541 = vmatpush1.msra.mxu0 %v525
      %542 = vmatprep.subr.mxu0 0.0
      %543 = vmatpush1.msra.mxu0 %v526
      %544 = vmatprep.subr.mxu0 0.0
      %545 = vmatpush1.msra.mxu0 %v527
      %546 = vmatprep.subr.mxu0 0.0
      %547 = vmatpush1.msra.mxu0 %v528
      %548 = vmatprep.subr.mxu0 0.0
      %549 = vmatpush1.msra.mxu0 %v529
      %550 = vmatprep.subr.mxu0 0.0
      %551 = vmatpush1.msra.mxu0 0.0
      %552 = vmatprep.subr.mxu0 0.0
      %553 = vmatpush1.msra.mxu0 0.0
      %554 = vmatprep.subr.mxu0 0.0
      %555 = vmatpush1.msra.mxu0 0.0
      %556 = vmatprep.subr.mxu0 0.0
      %557 = vmatpush1.msra.mxu0 0.0
      %558 = vmatprep.subr.mxu0 0.0
      %559 = vmatpush1.msra.mxu0 0.0
      %560 = vmatprep.subr.mxu0 0.0
      %561 = vmatpush1.msra.mxu0 0.0
      %562 = vmatprep.subr.mxu0 0.0
      %563 = vmatpush1.msra.mxu0 0.0
      %564 = vmatprep.subr.mxu0 0.0
      %565 = vmatpush1.msra.mxu0 0.0
      %566 = vmatprep.subr.mxu0 0.0
      %567 = vmatpush1.msra.mxu0 0.0
      %568 = vmatprep.subr.mxu0 0.0
      %569 = vmatpush1.msra.mxu0 0.0
      %570 = vmatprep.subr.mxu0 0.0
      %571 = vmatpush1.msra.mxu0 0.0
      %572 = vmatprep.subr.mxu0 0.0
      %573 = vmatpush1.msra.mxu0 0.0
      %574 = vmatprep.subr.mxu0 0.0
      %575 = vmatpush1.msra.mxu0 0.0
      %576 = vmatprep.subr.mxu0 0.0
      %577 = vmatpush1.msra.mxu0 0.0
      %578 = vmatprep.subr.mxu0 0.0
      %579 = vmatpush1.msra.mxu0 0.0
      %580 = vmatprep.subr.mxu0 0.0
      %581 = vmatpush1.msra.mxu0 0.0
      %582 = vmatprep.subr.mxu0 0.0
      %583 = vmatpush1.msra.mxu0 0.0
      %584 = vmatprep.subr.mxu0 0.0
      %585 = vmatpush1.msra.mxu0 0.0
      %586 = vmatprep.subr.mxu0 0.0
      %587 = vmatpush1.msra.mxu0 0.0
      %588 = vmatprep.subr.mxu0 0.0
      %589 = vmatpush1.msra.mxu0 0.0
      %590 = vmatprep.subr.mxu0 0.0
      %591 = vmatpush1.msra.mxu0 0.0
      %592 = vmatprep.subr.mxu0 0.0
      %593 = vmatpush1.msra.mxu0 0.0
      %594 = vmatprep.subr.mxu0 0.0
      %595 = vmatpush1.msra.mxu0 0.0
      %596 = vmatprep.subr.mxu0 0.0
      %597 = vmatpush1.msra.mxu0 0.0
      %598 = vmatprep.subr.mxu0 0.0
      %599 = vmatpush1.msra.mxu0 0.0
      %600 = vmatprep.subr.mxu0 0.0
      %601 = vmatpush1.msra.mxu0 0.0
      %602 = vmatprep.subr.mxu0 0.0
      %603 = vmatpush1.msra.mxu0 0.0
      %604 = vmatprep.mubr.f32.mxu0 0.0
      %605 = vmatmul.mubr.f32.gmra.mrb[0].mxu0 %v532
      %v606 = vpop.f32.mrb[0].mxu0
      %v607 = vadd.f32 0.0, %v606
      %v608 = vpop.f32.mrb[0].mxu0
      %609 = vmatprep.mubr.f32.mxu0 0.0
      %610 = vmatmul.mubr.f32.gmra.mrb[0].mxu0 %v535
      %v611 = vpop.f32.mrb[0].mxu0
      %v612 = vadd.f32 0.0, %v611
      %v613 = vpop.f32.mrb[0].mxu0
      %614 = vmatprep.mubr.f32.mxu0 0.0
      %615 = vmatmul.mubr.f32.gmra.mrb[0].mxu0 %v538
      %v616 = vpop.f32.mrb[0].mxu0
      %v617 = vadd.f32 0.0, %v616
      %v618 = vpop.f32.mrb[0].mxu0
      %619 = vdwg.mxu0
      %v621 = vsel %vm530, %v508, 0
      %v624 = vsel %vm530, %v509, 0
      %v627 = vsel %vm530, %v510, 0
      %629 = vmatprep.subr.mxu0 0.0
      %630 = vmatpush1.msra.mxu0 %v520
      %631 = vmatprep.subr.mxu0 0.0
      %632 = vmatpush1.msra.mxu0 %v521
      %633 = vmatprep.subr.mxu0 0.0
      %634 = vmatpush1.msra.mxu0 %v522
      %635 = vmatprep.subr.mxu0 0.0
      %636 = vmatpush1.msra.mxu0 %v523
      %637 = vmatprep.subr.mxu0 0.0
      %638 = vmatpush1.msra.mxu0 %v524
      %639 = vmatprep.subr.mxu0 0.0
      %640 = vmatpush1.msra.mxu0 0.0
      %641 = vmatprep.subr.mxu0 0.0
      %642 = vmatpush1.msra.mxu0 0.0
      %643 = vmatprep.subr.mxu0 0.0
      %644 = vmatpush1.msra.mxu0 0.0
      %645 = vmatprep.subr.mxu0 0.0
      %646 = vmatpush1.msra.mxu0 0.0
      %647 = vmatprep.subr.mxu0 0.0
      %648 = vmatpush1.msra.mxu0 0.0
      %649 = vmatprep.subr.mxu0 0.0
      %650 = vmatpush1.msra.mxu0 0.0
      %651 = vmatprep.subr.mxu0 0.0
      %652 = vmatpush1.msra.mxu0 0.0
      %653 = vmatprep.subr.mxu0 0.0
      %654 = vmatpush1.msra.mxu0 0.0
      %655 = vmatprep.subr.mxu0 0.0
      %656 = vmatpush1.msra.mxu0 0.0
      %657 = vmatprep.subr.mxu0 0.0
      %658 = vmatpush1.msra.mxu0 0.0
      %659 = vmatprep.subr.mxu0 0.0
      %660 = vmatpush1.msra.mxu0 0.0
      %661 = vmatprep.subr.mxu0 0.0
      %662 = vmatpush1.msra.mxu0 0.0
      %663 = vmatprep.subr.mxu0 0.0
      %664 = vmatpush1.msra.mxu0 0.0
      %665 = vmatprep.subr.mxu0 0.0
      %666 = vmatpush1.msra.mxu0 0.0
      %667 = vmatprep.subr.mxu0 0.0
      %668 = vmatpush1.msra.mxu0 0.0
      %669 = vmatprep.subr.mxu0 0.0
      %670 = vmatpush1.msra.mxu0 0.0
      %671 = vmatprep.subr.mxu0 0.0
      %672 = vmatpush1.msra.mxu0 0.0
      %673 = vmatprep.subr.mxu0 0.0
      %674 = vmatpush1.msra.mxu0 0.0
      %675 = vmatprep.subr.mxu0 0.0
      %676 = vmatpush1.msra.mxu0 0.0
      %677 = vmatprep.subr.mxu0 0.0
      %678 = vmatpush1.msra.mxu0 0.0
      %679 = vmatprep.subr.mxu0 0.0
      %680 = vmatpush1.msra.mxu0 0.0
      %681 = vmatprep.subr.mxu0 0.0
      %682 = vmatpush1.msra.mxu0 0.0
      %683 = vmatprep.subr.mxu0 0.0
      %684 = vmatpush1.msra.mxu0 0.0
      %685 = vmatprep.subr.mxu0 0.0
      %686 = vmatpush1.msra.mxu0 0.0
      %687 = vmatprep.subr.mxu0 0.0
      %688 = vmatpush1.msra.mxu0 0.0
      %689 = vmatprep.subr.mxu0 0.0
      %690 = vmatpush1.msra.mxu0 0.0
      %691 = vmatprep.subr.mxu0 0.0
      %692 = vmatpush1.msra.mxu0 0.0
      %693 = vmatprep.mubr.f32.mxu0 0.0
      %694 = vmatmul.mubr.f32.gmra.mrb[0].mxu0 %v621
      %v695 = vpop.f32.mrb[0].mxu0
      %v696 = vadd.f32 %v607, %v695
      %v697 = vpop.f32.mrb[0].mxu0
      %698 = vmatprep.mubr.f32.mxu0 0.0
      %699 = vmatmul.mubr.f32.gmra.mrb[0].mxu0 %v624
      %v700 = vpop.f32.mrb[0].mxu0
      %v701 = vadd.f32 %v612, %v700
      %v702 = vpop.f32.mrb[0].mxu0
      %703 = vmatprep.mubr.f32.mxu0 0.0
      %704 = vmatmul.mubr.f32.gmra.mrb[0].mxu0 %v627
      %v705 = vpop.f32.mrb[0].mxu0
      %v706 = vadd.f32 %v617, %v705
      %v707 = vpop.f32.mrb[0].mxu0
      %708 = vdwg.mxu0
      %v709 = vld [vmem:[%s8] sm:$0x1]
      %v711 = vlaneseq
      %v712 = vshrl.u32 %v711, 7
      %v713 = vsub.s32 0, %v712
      %v714 = vrot.slane %v709, %v713
      %v716 = vadd.f32 %v696, %v714
      %v717 = vadd.f32 %v701, %v714
      %v718 = vadd.f32 %v706, %v714
      %v719 = vld [vmem:[%s6] sm:$0xff]
      %v720 = vld [vmem:[%s6 + $0x8] sm:$0xff]
      %v721 = vld [vmem:[%s6 + $0x10] sm:$0xff]
      %v722 = vld [vmem:[%s6 + $0x18] sm:$0xff]
      %v723 = vld [vmem:[%s6 + $0x20] sm:$0xff]
      %v724 = vld [vmem:[%s7] sm:$0xff]
      %v725 = vld [vmem:[%s7 + $0x8] sm:$0xff]
      %v726 = vld [vmem:[%s7 + $0x10] sm:$0xff]
      %v727 = vld [vmem:[%s7 + $0x18] sm:$0xff]
      %v728 = vld [vmem:[%s7 + $0x20] sm:$0xff]
      %729 = vmatprep.subr.mxu0 0.0
      %730 = vmatpush1.msra.mxu0 %v724
      %731 = vmatprep.subr.mxu0 0.0
      %732 = vmatpush1.msra.mxu0 %v725
      %733 = vmatprep.subr.mxu0 0.0
      %734 = vmatpush1.msra.mxu0 %v726
      %735 = vmatprep.subr.mxu0 0.0
      %736 = vmatpush1.msra.mxu0 %v727
      %737 = vmatprep.subr.mxu0 0.0
      %738 = vmatpush1.msra.mxu0 %v728
      %739 = vmatprep.subr.mxu0 0.0
      %740 = vmatpush1.msra.mxu0 0.0
      %741 = vmatprep.subr.mxu0 0.0
      %742 = vmatpush1.msra.mxu0 0.0
      %743 = vmatprep.subr.mxu0 0.0
      %744 = vmatpush1.msra.mxu0 0.0
      %745 = vmatprep.subr.mxu0 0.0
      %746 = vmatpush1.msra.mxu0 0.0
      %747 = vmatprep.subr.mxu0 0.0
      %748 = vmatpush1.msra.mxu0 0.0
      %749 = vmatprep.subr.mxu0 0.0
      %750 = vmatpush1.msra.mxu0 0.0
      %751 = vmatprep.subr.mxu0 0.0
      %752 = vmatpush1.msra.mxu0 0.0
      %753 = vmatprep.subr.mxu0 0.0
      %754 = vmatpush1.msra.mxu0 0.0
      %755 = vmatprep.subr.mxu0 0.0
      %756 = vmatpush1.msra.mxu0 0.0
      %757 = vmatprep.subr.mxu0 0.0
      %758 = vmatpush1.msra.mxu0 0.0
      %759 = vmatprep.subr.mxu0 0.0
      %760 = vmatpush1.msra.mxu0 0.0
      %761 = vmatprep.subr.mxu0 0.0
      %762 = vmatpush1.msra.mxu0 0.0
      %763 = vmatprep.subr.mxu0 0.0
      %764 = vmatpush1.msra.mxu0 0.0
      %765 = vmatprep.subr.mxu0 0.0
      %766 = vmatpush1.msra.mxu0 0.0
      %767 = vmatprep.subr.mxu0 0.0
      %768 = vmatpush1.msra.mxu0 0.0
      %769 = vmatprep.subr.mxu0 0.0
      %770 = vmatpush1.msra.mxu0 0.0
      %771 = vmatprep.subr.mxu0 0.0
      %772 = vmatpush1.msra.mxu0 0.0
      %773 = vmatprep.subr.mxu0 0.0
      %774 = vmatpush1.msra.mxu0 0.0
      %775 = vmatprep.subr.mxu0 0.0
      %776 = vmatpush1.msra.mxu0 0.0
      %777 = vmatprep.subr.mxu0 0.0
      %778 = vmatpush1.msra.mxu0 0.0
      %779 = vmatprep.subr.mxu0 0.0
      %780 = vmatpush1.msra.mxu0 0.0
      %781 = vmatprep.subr.mxu0 0.0
      %782 = vmatpush1.msra.mxu0 0.0
      %783 = vmatprep.subr.mxu0 0.0
      %784 = vmatpush1.msra.mxu0 0.0
      %785 = vmatprep.subr.mxu0 0.0
      %786 = vmatpush1.msra.mxu0 0.0
      %787 = vmatprep.subr.mxu0 0.0
      %788 = vmatpush1.msra.mxu0 0.0
      %789 = vmatprep.subr.mxu0 0.0
      %790 = vmatpush1.msra.mxu0 0.0
      %791 = vmatprep.subr.mxu0 0.0
      %792 = vmatpush1.msra.mxu0 0.0
      %793 = vmatprep.mubr.f32.mxu0 0.0
      %794 = vmatmul.mubr.f32.gmra.mrb[0].mxu0 %v532
      %v795 = vpop.f32.mrb[0].mxu0
      %v796 = vadd.f32 0.0, %v795
      %v797 = vpop.f32.mrb[0].mxu0
      %798 = vmatprep.mubr.f32.mxu0 0.0
      %799 = vmatmul.mubr.f32.gmra.mrb[0].mxu0 %v535
      %v800 = vpop.f32.mrb[0].mxu0
      %v801 = vadd.f32 0.0, %v800
      %v802 = vpop.f32.mrb[0].mxu0
      %803 = vmatprep.mubr.f32.mxu0 0.0
      %804 = vmatmul.mubr.f32.gmra.mrb[0].mxu0 %v538
      %v805 = vpop.f32.mrb[0].mxu0
      %v806 = vadd.f32 0.0, %v805
      %v807 = vpop.f32.mrb[0].mxu0
      %808 = vdwg.mxu0
      %809 = vmatprep.subr.mxu0 0.0
      %810 = vmatpush1.msra.mxu0 %v719
      %811 = vmatprep.subr.mxu0 0.0
      %812 = vmatpush1.msra.mxu0 %v720
      %813 = vmatprep.subr.mxu0 0.0
      %814 = vmatpush1.msra.mxu0 %v721
      %815 = vmatprep.subr.mxu0 0.0
      %816 = vmatpush1.msra.mxu0 %v722
      %817 = vmatprep.subr.mxu0 0.0
      %818 = vmatpush1.msra.mxu0 %v723
      %819 = vmatprep.subr.mxu0 0.0
      %820 = vmatpush1.msra.mxu0 0.0
      %821 = vmatprep.subr.mxu0 0.0
      %822 = vmatpush1.msra.mxu0 0.0
      %823 = vmatprep.subr.mxu0 0.0
      %824 = vmatpush1.msra.mxu0 0.0
      %825 = vmatprep.subr.mxu0 0.0
      %826 = vmatpush1.msra.mxu0 0.0
      %827 = vmatprep.subr.mxu0 0.0
      %828 = vmatpush1.msra.mxu0 0.0
      %829 = vmatprep.subr.mxu0 0.0
      %830 = vmatpush1.msra.mxu0 0.0
      %831 = vmatprep.subr.mxu0 0.0
      %832 = vmatpush1.msra.mxu0 0.0
      %833 = vmatprep.subr.mxu0 0.0
      %834 = vmatpush1.msra.mxu0 0.0
      %835 = vmatprep.subr.mxu0 0.0
      %836 = vmatpush1.msra.mxu0 0.0
      %837 = vmatprep.subr.mxu0 0.0
      %838 = vmatpush1.msra.mxu0 0.0
      %839 = vmatprep.subr.mxu0 0.0
      %840 = vmatpush1.msra.mxu0 0.0
      %841 = vmatprep.subr.mxu0 0.0
      %842 = vmatpush1.msra.mxu0 0.0
      %843 = vmatprep.subr.mxu0 0.0
      %844 = vmatpush1.msra.mxu0 0.0
      %845 = vmatprep.subr.mxu0 0.0
      %846 = vmatpush1.msra.mxu0 0.0
      %847 = vmatprep.subr.mxu0 0.0
      %848 = vmatpush1.msra.mxu0 0.0
      %849 = vmatprep.subr.mxu0 0.0
      %850 = vmatpush1.msra.mxu0 0.0
      %851 = vmatprep.subr.mxu0 0.0
      %852 = vmatpush1.msra.mxu0 0.0
      %853 = vmatprep.subr.mxu0 0.0
      %854 = vmatpush1.msra.mxu0 0.0
      %855 = vmatprep.subr.mxu0 0.0
      %856 = vmatpush1.msra.mxu0 0.0
      %857 = vmatprep.subr.mxu0 0.0
      %858 = vmatpush1.msra.mxu0 0.0
      %859 = vmatprep.subr.mxu0 0.0
      %860 = vmatpush1.msra.mxu0 0.0
      %861 = vmatprep.subr.mxu0 0.0
      %862 = vmatpush1.msra.mxu0 0.0
      %863 = vmatprep.subr.mxu0 0.0
      %864 = vmatpush1.msra.mxu0 0.0
      %865 = vmatprep.subr.mxu0 0.0
      %866 = vmatpush1.msra.mxu0 0.0
      %867 = vmatprep.subr.mxu0 0.0
      %868 = vmatpush1.msra.mxu0 0.0
      %869 = vmatprep.subr.mxu0 0.0
      %870 = vmatpush1.msra.mxu0 0.0
      %871 = vmatprep.subr.mxu0 0.0
      %872 = vmatpush1.msra.mxu0 0.0
      %873 = vmatprep.mubr.f32.mxu0 0.0
      %874 = vmatmul.mubr.f32.gmra.mrb[0].mxu0 %v621
      %v875 = vpop.f32.mrb[0].mxu0
      %v876 = vadd.f32 %v796, %v875
      %v877 = vpop.f32.mrb[0].mxu0
      %878 = vmatprep.mubr.f32.mxu0 0.0
      %879 = vmatmul.mubr.f32.gmra.mrb[0].mxu0 %v624
      %v880 = vpop.f32.mrb[0].mxu0
      %v881 = vadd.f32 %v801, %v880
      %v882 = vpop.f32.mrb[0].mxu0
      %883 = vmatprep.mubr.f32.mxu0 0.0
      %884 = vmatmul.mubr.f32.gmra.mrb[0].mxu0 %v627
      %v885 = vpop.f32.mrb[0].mxu0
      %v886 = vadd.f32 %v806, %v885
      %v887 = vpop.f32.mrb[0].mxu0
      %888 = vdwg.mxu0
      %v889 = vld [vmem:[%s9] sm:$0x1]
      %v891 = vlaneseq
      %v892 = vshrl.u32 %v891, 7
      %v893 = vsub.s32 0, %v892
      %v894 = vrot.slane %v889, %v893
      %v896 = vadd.f32 %v876, %v894
      %v897 = vadd.f32 %v881, %v894
      %v898 = vadd.f32 %v886, %v894
      %v899 = vtanh.pop %v716
      %v900 = vtanh.pop %v717
      %v901 = vtanh.pop %v718
      %v902 = vxor.u32 %v896, 2147483648
      %v903 = vxor.u32 %v897, 2147483648
      %v904 = vxor.u32 %v898, 2147483648
      %v905 = vmul.f32 %v902, 1.442695
      %v906 = vpow.pop %v905
      %v907 = vmul.f32 %v903, 1.442695
      %v908 = vpow.pop %v907
      %v909 = vmul.f32 %v904, 1.442695
      %v910 = vpow.pop %v909
      %v911 = vadd.f32 %v906, 1.0
      %v912 = vadd.f32 %v908, 1.0
      %v913 = vadd.f32 %v910, 1.0
      %v914 = vrcp.pop %v911
      %v915 = vmul.f32 1.0, %v914
      %v916 = vrcp.pop %v912
      %v917 = vmul.f32 1.0, %v916
      %v918 = vrcp.pop %v913
      %v919 = vmul.f32 1.0, %v918
      %v920 = vmul.f32 %v899, %v915
      %v921 = vmul.f32 %v900, %v917
      %v922 = vmul.f32 %v901, %v919
      %v923 = vadd.f32 %v920, %v517
      %v924 = vadd.f32 %v921, %v518
      %v925 = vadd.f32 %v922, %v519
      %926 = vst.msk [vmem:[%s479] sm:$0xff] %vm530, %v923
      %927 = vst.msk [vmem:[%s479 + $0x8] sm:$0xff] %vm530, %v924
      %928 = vst.msk [vmem:[%s479 + $0x10] sm:$0xff] %vm530, %v925
      %v929 = vlaneseq
      %v930 = vshrl.u32 %v929, 7
      %v931 = vadd.s32 %v930, 8
      %v932 = vadd.s32 %v930, 16
      %s933 = smul.u32 %s28, 24
      %v934 = vstv %s933
      %v935 = vadd.s32 %v930, %v934
      %v936 = vadd.s32 %v931, %v934
      %v937 = vadd.s32 %v932, %v934
      %vm938 = vcmp.lt.s32.totalorder %v935, 18
      %vm939 = vcmp.lt.s32.totalorder %v936, 18
      %vm940 = vcmp.lt.s32.totalorder %v937, 18
      %v941 = vsel %vm938, 1, 0
      %v942 = vsel %vm939, 1, 0
      %v943 = vsel %vm940, 1, 0
      %vm944 = vcmp.eq.s32.totalorder %v941, 1
      %vm945 = vcmp.eq.s32.totalorder %v942, 1
      %vm946 = vcmp.eq.s32.totalorder %v943, 1
      %v947 = vsel %vm944, %v923, 0.0
      %v948 = vsel %vm945, %v924, 0.0
      %v949 = vsel %vm946, %v925, 0.0
      %v950 = vsel %vm530, %v947, 0.0
      %v951 = vsel %vm530, %v948, 0.0
      %v952 = vadd.f32 %v950, %v951
      %v953 = vsel %vm530, %v949, 0.0
      %v954 = vadd.f32 %v952, %v953
      %v955 = vrot.slane %v954, 4
      %v956 = vadd.f32 %v954, %v955
      %v957 = vrot.slane %v956, 2
      %v958 = vadd.f32 %v956, %v957
      %v959 = vrot.slane %v958, 1
      %v960 = vadd.f32 %v958, %v959
      %v961 = vmul.f32 %v947, %v947
      %v962 = vmul.f32 %v948, %v948
      %v963 = vmul.f32 %v949, %v949
      %v964 = vsel %vm530, %v961, 0.0
      %v965 = vsel %vm530, %v962, 0.0
      %v966 = vadd.f32 %v964, %v965
      %v967 = vsel %vm530, %v963, 0.0
      %v968 = vadd.f32 %v966, %v967
      %v969 = vrot.slane %v968, 4
      %v970 = vadd.f32 %v968, %v969
      %v971 = vrot.slane %v970, 2
      %v972 = vadd.f32 %v970, %v971
      %v973 = vrot.slane %v972, 1
      %v974 = vadd.f32 %v972, %v973
      %vm975 = vcmask 1040384
      %v976 = vsel %vm975, %v960, %v974
      %vm977 = vcmask 1041408
      %v978 = vsel %vm977, %v976, 0.0
      %979 = vst.msk [vmem:[%s487] sm:$0xff] %vm530, %v978
      %s980 = smul.u32 3, %s28
      %p981 = scmp.lt.s32.totalorder %s27, 1
      %s982 = scalar_select %p981, %s27, 1
      %p983 = scmp.lt.s32.totalorder %s980, 2
      %s984 = scalar_select %p983, %s980, 2
      %s985 = smul.addr %s982, 3
      %s986 = sadd.s32 %s984, %s985
      %s987 = smul.addr %s986, 8
      %s988 = scalar_lea.vmem %s10, %s987
      %p989 = scmp.lt.s32.totalorder %s27, 1
      %s990 = scalar_select %p989, %s27, 1
      %p991 = scmp.lt.s32.totalorder %s28, 0
      %s992 = scalar_select %p991, %s28, 0
      %s993 = sadd.s32 %s992, %s990
      %s994 = smul.addr %s993, 8
      %s995 = scalar_lea.vmem %s11, %s994
      // Predicated region
      $region61: #{hidta_forward.10} parent=59 // pred_check
        %p996 = pneg %p281
      $region62: #{hidta_forward.10} parent=59 // pred_check_branch
        %998 = sbr.rel (%p996) target = $region64
      $region63: #{hidta_forward.10} parent=59 // pred_region
        %s999 = smul.u32 3, %s28
      $region64: #{hidta_forward.10} parent=59 // pred_fallthru
        _
      // Predicated region
      $region65: #{hidta_forward.10} parent=59 // pred_check
        %p1000 = pneg %p309
      $region66: #{hidta_forward.10} parent=59 // pred_check_branch
        %1002 = sbr.rel (%p1000) target = $region68
      $region67: #{hidta_forward.10} parent=59 // pred_region
        _
      $region68: #{hidta_forward.10} parent=59 // pred_fallthru
        _
    $region60: #{hidta_forward.10} parent=5 // pred_fallthru
      _
    %p1003 = scmp.le.s32.totalorder 2, %s18
    // Predicated region
    $region69: #{hidta_forward.10} parent=5 // pred_check
      %p1004 = pneg %p1003
    $region70: #{hidta_forward.10} parent=5 // pred_check_branch
      %1006 = sbr.rel (%p1004) target = $region72
    $region71: #{hidta_forward.10} parent=5 // pred_region
      %s1007 = ssub.s32 %s18, 2
      // Predicated region
      $region73: #{hidta_forward.10} parent=71 // pred_check
        %p1008 = pneg %p287
      $region74: #{hidta_forward.10} parent=71 // pred_check_branch
        %1010 = sbr.rel (%p1008) target = $region76
      $region75: #{hidta_forward.10} parent=71 // pred_region
        %s1011 = smul.u32 3, %s30
        %p1012 = scmp.lt.s32.totalorder %s29, 1
        %s1013 = scalar_select %p1012, %s29, 1
        %p1014 = scmp.lt.s32.totalorder %s1011, 2
        %s1015 = scalar_select %p1014, %s1011, 2
        %s1016 = smul.addr %s1013, 3
        %s1017 = sadd.s32 %s1015, %s1016
        %s1018 = smul.addr %s1017, 8
        %s1019 = scalar_lea.vmem %s10, %s1018
      $region76: #{hidta_forward.10} parent=71 // pred_fallthru
        _
      // Predicated region
      $region77: #{hidta_forward.10} parent=71 // pred_check
        %p1020 = pneg %p315
      $region78: #{hidta_forward.10} parent=71 // pred_check_branch
        %1022 = sbr.rel (%p1020) target = $region80
      $region79: #{hidta_forward.10} parent=71 // pred_region
        %p1023 = scmp.lt.s32.totalorder %s29, 1
        %s1024 = scalar_select %p1023, %s29, 1
        %p1025 = scmp.lt.s32.totalorder %s30, 0
        %s1026 = scalar_select %p1025, %s30, 0
        %s1027 = sadd.s32 %s1026, %s1024
        %s1028 = smul.addr %s1027, 8
        %s1029 = scalar_lea.vmem %s11, %s1028
      $region80: #{hidta_forward.10} parent=71 // pred_fallthru
        _
    $region72: #{hidta_forward.10} parent=5 // pred_fallthru
      _
  $region6: #{hidta_forward.10} parent=0 // loop_footer
    %s22 = sadd.s32 1, %s18
  $region7: #{hidta_forward.10} parent=0 // loop_footer_branch
    %17 = sbr.rel target = $region3
  $region8: #{hidta_forward.10} parent=0 // loop_exit
    _

// kernel: hidta_forward.6
$region0: #{hidta_forward.6}
  #allocation0 [shape = 'u32[]', space=smem, size = 0x4, offset = 0x4, fixed_abs, tag = 'smem constant byte address 0x4 - core index']
  #allocation1 [shape = 'u32[144,128]{1,0:T(1,128)}', space=vmem, size = 0x12000, scoped, tag = 'internal scratch']
  %s0 = inlined_call_operand.vmem [shape: f32[16,10], index: 0, kind: input, shape index: {}]
  %s1 = inlined_call_operand.vmem [shape: f32[10,128], index: 1, kind: input, shape index: {}]
  %s2 = inlined_call_operand.hbm [shape: f32[16,128], index: 2, kind: output, shape index: {}]
  %s3 = sld [smem:[#allocation0]]
  $region18: #{hidta_forward.6} parent=0
    _
  %s5 = ssub.s32 1, %s3
  %s6 = scalar_select 0, %s5, %s3
  $region1: #{hidta_forward.6} parent=0
    #allocation2 [shape = 'u8[8192]{0}', space=vmem, size = 0x2000, scoped, tag = 'output window, operand 0, single buffered']
    #allocation3 [shape = 's32[1]{0}', space=sflag, size = 0x4, scoped, tag = 'scoped memory for hidta_forward.6']
    %7 = vsyncpa [#allocation3], 0
    // Predicated region
    $region2: #{hidta_forward.6} parent=1 // pred_check
      _
    $region3: #{hidta_forward.6} parent=1 // pred_check_branch
      %9 = sbr.rel (0) target = $region5
    $region4: #{hidta_forward.6} parent=1 // pred_region
      _
    $region5: #{hidta_forward.6} parent=1 // pred_fallthru
      _
    // Predicated region
    $region6: #{hidta_forward.6} parent=1 // pred_check
      _
    $region7: #{hidta_forward.6} parent=1 // pred_check_branch
      %11 = sbr.rel (0) target = $region9
    $region8: #{hidta_forward.6} parent=1 // pred_region
      _
    $region9: #{hidta_forward.6} parent=1 // pred_fallthru
      _
    %v12 = vld [vmem:[%s0] sm:$0xff]
    %v13 = vld [vmem:[%s0 + $0x8] sm:$0xff]
    %v14 = vld [vmem:[%s1] sm:$0xff]
    %v15 = vld [vmem:[%s1 + $0x8] sm:$0x3]
    %vm16 = vcmask 80896
    %v18 = vsel %vm16, %v12, 0
    %v21 = vsel %vm16, %v13, 0
    %vm23 = vcmask 1041408
    %v25 = vsel %vm23, %v15, 0
    %27 = vmatprep.subr.mxu0 0.0
    %28 = vmatpush1.msra.mxu0 %v14
    %29 = vmatprep.subr.mxu0 0.0
    %30 = vmatpush1.msra.mxu0 %v25
    %31 = vmatprep.subr.mxu0 0.0
    %32 = vmatpush1.msra.mxu0 0.0
    %33 = vmatprep.subr.mxu0 0.0
    %34 = vmatpush1.msra.mxu0 0.0
    %35 = vmatprep.subr.mxu0 0.0
    %36 = vmatpush1.msra.mxu0 0.0
    %37 = vmatprep.subr.mxu0 0.0
    %38 = vmatpush1.msra.mxu0 0.0
    %39 = vmatprep.subr.mxu0 0.0
    %40 = vmatpush1.msra.mxu0 0.0
    %41 = vmatprep.subr.mxu0 0.0
    %42 = vmatpush1.msra.mxu0 0.0
    %43 = vmatprep.subr.mxu0 0.0
    %44 = vmatpush1.msra.mxu0 0.0
    %45 = vmatprep.subr.mxu0 0.0
    %46 = vmatpush1.msra.mxu0 0.0
    %47 = vmatprep.subr.mxu0 0.0
    %48 = vmatpush1.msra.mxu0 0.0
    %49 = vmatprep.subr.mxu0 0.0
    %50 = vmatpush1.msra.mxu0 0.0
    %51 = vmatprep.subr.mxu0 0.0
    %52 = vmatpush1.msra.mxu0 0.0
    %53 = vmatprep.subr.mxu0 0.0
    %54 = vmatpush1.msra.mxu0 0.0
    %55 = vmatprep.subr.mxu0 0.0
    %56 = vmatpush1.msra.mxu0 0.0
    %57 = vmatprep.subr.mxu0 0.0
    %58 = vmatpush1.msra.mxu0 0.0
    %59 = vmatprep.subr.mxu0 0.0
    %60 = vmatpush1.msra.mxu0 0.0
    %61 = vmatprep.subr.mxu0 0.0
    %62 = vmatpush1.msra.mxu0 0.0
    %63 = vmatprep.subr.mxu0 0.0
    %64 = vmatpush1.msra.mxu0 0.0
    %65 = vmatprep.subr.mxu0 0.0
    %66 = vmatpush1.msra.mxu0 0.0
    %67 = vmatprep.subr.mxu0 0.0
    %68 = vmatpush1.msra.mxu0 0.0
    %69 = vmatprep.subr.mxu0 0.0
    %70 = vmatpush1.msra.mxu0 0.0
    %71 = vmatprep.subr.mxu0 0.0
    %72 = vmatpush1.msra.mxu0 0.0
    %73 = vmatprep.subr.mxu0 0.0
    %74 = vmatpush1.msra.mxu0 0.0
    %75 = vmatprep.subr.mxu0 0.0
    %76 = vmatpush1.msra.mxu0 0.0
    %77 = vmatprep.subr.mxu0 0.0
    %78 = vmatpush1.msra.mxu0 0.0
    %79 = vmatprep.subr.mxu0 0.0
    %80 = vmatpush1.msra.mxu0 0.0
    %81 = vmatprep.subr.mxu0 0.0
    %82 = vmatpush1.msra.mxu0 0.0
    %83 = vmatprep.subr.mxu0 0.0
    %84 = vmatpush1.msra.mxu0 0.0
    %85 = vmatprep.subr.mxu0 0.0
    %86 = vmatpush1.msra.mxu0 0.0
    %87 = vmatprep.subr.mxu0 0.0
    %88 = vmatpush1.msra.mxu0 0.0
    %89 = vmatprep.subr.mxu0 0.0
    %90 = vmatpush1.msra.mxu0 0.0
    %91 = vmatprep.mubr.f32.mxu0 0.0
    %92 = vmatmul.mubr.f32.gmra.mrb[0].mxu0 %v18
    %v93 = vpop.f32.mrb[0].mxu0
    %v94 = vadd.f32 0.0, %v93
    %v95 = vpop.f32.mrb[0].mxu0
    %96 = vmatprep.mubr.f32.mxu0 0.0
    %97 = vmatmul.mubr.f32.gmra.mrb[0].mxu0 %v21
    %v98 = vpop.f32.mrb[0].mxu0
    %v99 = vadd.f32 0.0, %v98
    %v100 = vpop.f32.mrb[0].mxu0
    %101 = vdwg.mxu0
    %v102 = vmax.f32 %v94, 0.0
    %v103 = vmax.f32 %v99, 0.0
    %v104 = vlaneseq
    %v105 = vand.u32 %v104, 127
    %vm106 = vcmp.lt.s32.totalorder %v105, 9
    %v107 = vsel %vm106, %v102, -inf
    %v108 = vsel %vm106, %v103, -inf
    %109 = vmax.xlane.f32.xlu0 %v107
    %v110 = vpop.xlane.xlu0 %109
    %111 = vmax.xlane.f32.xlu0 %v108
    %v112 = vpop.xlane.xlu0 %111
    %v113 = vsub.f32 %v107, %v110
    %v114 = vsub.f32 %v108, %v112
    %v115 = vmul.f32 %v113, 1.442695
    %v116 = vpow.pop %v115
    %v117 = vmul.f32 %v114, 1.442695
    %v118 = vpow.pop %v117
    %119 = vadd.xlane.f32.xlu0 %v116
    %v120 = vpop.xlane.xlu0 %119
    %121 = vadd.xlane.f32.xlu0 %v118
    %v122 = vpop.xlane.xlu0 %121
    %v123 = vrcp.pop %v120
    %v124 = vmul.f32 %v116, %v123
    %v125 = vrcp.pop %v122
    %v126 = vmul.f32 %v118, %v125
    %127 = vst [vmem:[#allocation2] sm:$0xff] %v124
    %128 = vst [vmem:[#allocation2 + $0x8] sm:$0xff] %v126
    // Predicated region
    $region10: #{hidta_forward.6} parent=1 // pred_check
      _
    $region11: #{hidta_forward.6} parent=1 // pred_check_branch
      %130 = sbr.rel (0) target = $region13
    $region12: #{hidta_forward.6} parent=1 // pred_region
      %s132 = ssub.s32 256, 256
      %133 = vsyncadd [#allocation3], %s132
      %s134 = sshll.u32 [#allocation2], 4
      %s135 = int_to_ptr.vmem [resolvable:$true] %s134
      %140 = dma.vmem_to_hbm [thread:$0]  %s135, 256, %s2, [#allocation3], 128, 128, 8
    $region13: #{hidta_forward.6} parent=1 // pred_fallthru
      _
    // Predicated region
    $region14: #{hidta_forward.6} parent=1 // pred_check
      _
    $region15: #{hidta_forward.6} parent=1 // pred_check_branch
      %142 = sbr.rel (0) target = $region17
    $region16: #{hidta_forward.6} parent=1 // pred_region
      %143 = dma.done [#allocation3], 256
    $region17: #{hidta_forward.6} parent=1 // pred_fallthru
      _
    %144 = vsyncpa [#allocation3], 1

// kernel: hidta_forward.11
$region0: #{hidta_forward.11}
  #allocation0 [shape = 'u32[]', space=smem, size = 0x4, offset = 0x4, fixed_abs, tag = 'smem constant byte address 0x4 - core index']
  #allocation1 [shape = 'u32[144,128]{1,0:T(1,128)}', space=vmem, size = 0x12000, scoped, tag = 'internal scratch']
  %s0 = inlined_call_operand.vmem [shape: f32[6,24,40], index: 0, kind: input, shape index: {}]
  %s1 = inlined_call_operand.vmem [shape: f32[4,24,40], index: 1, kind: input, shape index: {}]
  %s2 = inlined_call_operand.vmem [shape: f32[2,24,40], index: 2, kind: input, shape index: {}]
  %s3 = inlined_call_operand.vmem [shape: f32[1,40], index: 3, kind: input, shape index: {}]
  %s4 = inlined_call_operand.vmem [shape: f32[1,40], index: 4, kind: input, shape index: {}]
  %s5 = inlined_call_operand.vmem [shape: f32[1,40], index: 5, kind: input, shape index: {}]
  %s6 = inlined_call_operand.vmem [shape: f32[1,40], index: 6, kind: input, shape index: {}]
  %s7 = inlined_call_operand.vmem [shape: f32[1,40], index: 7, kind: input, shape index: {}]
  %s8 = inlined_call_operand.vmem [shape: f32[1,40], index: 8, kind: input, shape index: {}]
  %s9 = inlined_call_operand.vmem [shape: f32[40,320], index: 9, kind: input, shape index: {}]
  %s10 = inlined_call_operand.vmem [shape: f32[40,320], index: 10, kind: input, shape index: {}]
  %s11 = inlined_call_operand.vmem [shape: f32[40,320], index: 11, kind: input, shape index: {}]
  %s12 = inlined_call_operand.vmem [shape: f32[1,320], index: 12, kind: input, shape index: {}]
  %s13 = inlined_call_operand.vmem [shape: f32[320,640], index: 13, kind: input, shape index: {}]
  %s14 = inlined_call_operand.vmem [shape: f32[1,640], index: 14, kind: input, shape index: {}]
  %s15 = inlined_call_operand.vmem [shape: f32[640,128], index: 15, kind: input, shape index: {}]
  %s16 = inlined_call_operand.vmem [shape: f32[1,128], index: 16, kind: input, shape index: {}]
  %s17 = inlined_call_operand.vmem [shape: f32[2,24,128], index: 17, kind: output, shape index: {}]
  %s18 = sld [smem:[#allocation0]]
  $region101: #{hidta_forward.11} parent=0
    _
  %s20 = ssub.s32 1, %s18
  %s21 = scalar_select 0, %s20, %s18
  loop: start=0, step=1, limit=4
  $region2: #{hidta_forward.11} parent=0 // loop_pre_header
    _
  $region3: #{hidta_forward.11} parent=0 // loop_header
    %s23 = sphi 0, %s27
    %p24 = scmp.ge.s32.totalorder %s23, 4
    %s30 = sphi 0, %s42
    %s31 = sphi 0, %s38
    %s32 = sphi 0, %s30
    %s33 = sphi 0, %s31
    %s34 = sphi 0, %s32
    %s35 = sphi 0, %s33
    %s49 = sphi 0, %s51
    %s52 = sphi 0, %s49
    %s53 = sphi 0, %s52
    %s69 = sphi 0, %s53
    %s79 = sphi 0, %s81
    %s82 = sphi 0, %s79
    %s83 = sphi 0, %s82
    %s99 = sphi 0, %s83
    %s107 = sphi 0, %s109
    %s110 = sphi 0, %s107
    %s111 = sphi 0, %s110
    %s127 = sphi 0, %s111
    %s131 = sphi 0, %s131
    %s133 = sphi 0, %s131
    %s134 = sphi 0, %s133
    %s148 = sphi 0, %s134
    %s152 = sphi 0, %s152
    %s154 = sphi 0, %s152
    %s155 = sphi 0, %s154
    %s169 = sphi 0, %s155
    %s173 = sphi 0, %s173
    %s175 = sphi 0, %s173
    %s176 = sphi 0, %s175
    %s190 = sphi 0, %s176
    %s194 = sphi 0, %s194
    %s196 = sphi 0, %s194
    %s197 = sphi 0, %s196
    %s211 = sphi 0, %s197
    %s215 = sphi 0, %s215
    %s217 = sphi 0, %s215
    %s218 = sphi 0, %s217
    %s232 = sphi 0, %s218
    %s236 = sphi 0, %s236
    %s238 = sphi 0, %s236
    %s239 = sphi 0, %s238
    %s253 = sphi 0, %s239
    %s257 = sphi 0, %s257
    %s259 = sphi 0, %s257
    %s260 = sphi 0, %s259
    %s274 = sphi 0, %s260
    %s278 = sphi 0, %s278
    %s280 = sphi 0, %s278
    %s281 = sphi 0, %s280
    %s295 = sphi 0, %s281
    %s299 = sphi 0, %s299
    %s301 = sphi 0, %s299
    %s302 = sphi 0, %s301
    %s316 = sphi 0, %s302
    %s320 = sphi 0, %s320
    %s322 = sphi 0, %s320
    %s323 = sphi 0, %s322
    %s337 = sphi 0, %s323
    %s341 = sphi 0, %s341
    %s343 = sphi 0, %s341
    %s344 = sphi 0, %s343
    %s358 = sphi 0, %s344
    %s362 = sphi 0, %s362
    %s364 = sphi 0, %s362
    %s365 = sphi 0, %s364
    %s379 = sphi 0, %s365
    %s383 = sphi 0, %s383
    %s385 = sphi 0, %s383
    %s386 = sphi 0, %s385
    %s400 = sphi 0, %s386
    %s404 = sphi 0, %s404
    %s406 = sphi 0, %s404
    %s407 = sphi 0, %s406
    %s421 = sphi 0, %s407
    %s429 = sphi 0, %s431
    %s432 = sphi 0, %s429
    %s433 = sphi 0, %s432
    %s449 = sphi 0, %s433
  $region4: #{hidta_forward.11} parent=0 // loop_header_branch
    %26 = sbr.rel (%p24) target = $region8
  $region5: #{hidta_forward.11} parent=0 // loop_body
    %s28 = ssub.s32 %s23, 1
    %s29 = ssub.s32 %s23, 2
    %s36 = sadd.s32 1, %s31
    %p37 = scmp.ge.s32.totalorder %s36, 1
    %s38 = scalar_select %p37, 0, %s36
    %s39 = sadd.s32 1, %s30
    %s40 = scalar_select %p37, %s39, %s30
    %p41 = scmp.ge.s32.totalorder %s40, 2
    %s42 = scalar_select %p41, 0, %s40
    %s43 = sadd.s32 %s30, 4
    %s44 = sadd.s32 %s42, 4
    %s45 = ssub.s32 %s43, %s44
    %s46 = ssub.s32 %s31, %s38
    %s47 = sor.u32 %s45, %s46
    %p48 = scmp.eq.s32.totalorder %s47, 0
    %s50 = sadd.s32 %s49, 1
    %s51 = scalar_select %p48, %s49, %s50
    %p54 = pneg %p48
    %p55 = scmp.eq.s32.totalorder %s23, 1
    %p56 = por %p54, %p55
    %p57 = scmp.ne.s32.totalorder %s49, %s52
    %p58 = scmp.eq.s32.totalorder %s23, 0
    %p59 = por %p57, %p58
    %p60 = scmp.ne.s32.totalorder %s49, %s52
    %p61 = scmp.eq.s32.totalorder %s28, 1
    %p62 = por %p60, %p61
    %p63 = scmp.ne.s32.totalorder %s52, %s53
    %p64 = scmp.eq.s32.totalorder %s28, 0
    %p65 = por %p63, %p64
    %p66 = scmp.ne.s32.totalorder %s52, %s53
    %p67 = scmp.eq.s32.totalorder %s29, 1
    %p68 = por %p66, %p67
    %p70 = scmp.ne.s32.totalorder %s53, %s69
    %p71 = scmp.eq.s32.totalorder %s29, 0
    %p72 = por %p70, %p71
    %s73 = sadd.s32 %s30, 2
    %s74 = sadd.s32 %s42, 2
    %s75 = ssub.s32 %s73, %s74
    %s76 = ssub.s32 %s31, %s38
    %s77 = sor.u32 %s75, %s76
    %p78 = scmp.eq.s32.totalorder %s77, 0
    %s80 = sadd.s32 %s79, 1
    %s81 = scalar_select %p78, %s79, %s80
    %p84 = pneg %p78
    %p85 = scmp.eq.s32.totalorder %s23, 1
    %p86 = por %p84, %p85
    %p87 = scmp.ne.s32.totalorder %s79, %s82
    %p88 = scmp.eq.s32.totalorder %s23, 0
    %p89 = por %p87, %p88
    %p90 = scmp.ne.s32.totalorder %s79, %s82
    %p91 = scmp.eq.s32.totalorder %s28, 1
    %p92 = por %p90, %p91
    %p93 = scmp.ne.s32.totalorder %s82, %s83
    %p94 = scmp.eq.s32.totalorder %s28, 0
    %p95 = por %p93, %p94
    %p96 = scmp.ne.s32.totalorder %s82, %s83
    %p97 = scmp.eq.s32.totalorder %s29, 1
    %p98 = por %p96, %p97
    %p100 = scmp.ne.s32.totalorder %s83, %s99
    %p101 = scmp.eq.s32.totalorder %s29, 0
    %p102 = por %p100, %p101
    %s103 = ssub.s32 %s30, %s42
    %s104 = ssub.s32 %s31, %s38
    %s105 = sor.u32 %s103, %s104
    %p106 = scmp.eq.s32.totalorder %s105, 0
    %s108 = sadd.s32 %s107, 1
    %s109 = scalar_select %p106, %s107, %s108
    %p112 = pneg %p106
    %p113 = scmp.eq.s32.totalorder %s23, 1
    %p114 = por %p112, %p113
    %p115 = scmp.ne.s32.totalorder %s107, %s110
    %p116 = scmp.eq.s32.totalorder %s23, 0
    %p117 = por %p115, %p116
    %p118 = scmp.ne.s32.totalorder %s107, %s110
    %p119 = scmp.eq.s32.totalorder %s28, 1
    %p120 = por %p118, %p119
    %p121 = scmp.ne.s32.totalorder %s110, %s111
    %p122 = scmp.eq.s32.totalorder %s28, 0
    %p123 = por %p121, %p122
    %p124 = scmp.ne.s32.totalorder %s110, %s111
    %p125 = scmp.eq.s32.totalorder %s29, 1
    %p126 = por %p124, %p125
    %p128 = scmp.ne.s32.totalorder %s111, %s127
    %p129 = scmp.eq.s32.totalorder %s29, 0
    %p130 = por %p128, %p129
    %s132 = sadd.s32 %s131, 1
    %p135 = scmp.eq.s32.totalorder %s23, 1
    %p136 = scmp.ne.s32.totalorder %s131, %s133
    %p137 = scmp.eq.s32.totalorder %s23, 0
    %p138 = por %p136, %p137
    %p139 = scmp.ne.s32.totalorder %s131, %s133
    %p140 = scmp.eq.s32.totalorder %s28, 1
    %p141 = por %p139, %p140
    %p142 = scmp.ne.s32.totalorder %s133, %s134
    %p143 = scmp.eq.s32.totalorder %s28, 0
    %p144 = por %p142, %p143
    %p145 = scmp.ne.s32.totalorder %s133, %s134
    %p146 = scmp.eq.s32.totalorder %s29, 1
    %p147 = por %p145, %p146
    %p149 = scmp.ne.s32.totalorder %s134, %s148
    %p150 = scmp.eq.s32.totalorder %s29, 0
    %p151 = por %p149, %p150
    %s153 = sadd.s32 %s152, 1
    %p156 = scmp.eq.s32.totalorder %s23, 1
    %p157 = scmp.ne.s32.totalorder %s152, %s154
    %p158 = scmp.eq.s32.totalorder %s23, 0
    %p159 = por %p157, %p158
    %p160 = scmp.ne.s32.totalorder %s152, %s154
    %p161 = scmp.eq.s32.totalorder %s28, 1
    %p162 = por %p160, %p161
    %p163 = scmp.ne.s32.totalorder %s154, %s155
    %p164 = scmp.eq.s32.totalorder %s28, 0
    %p165 = por %p163, %p164
    %p166 = scmp.ne.s32.totalorder %s154, %s155
    %p167 = scmp.eq.s32.totalorder %s29, 1
    %p168 = por %p166, %p167
    %p170 = scmp.ne.s32.totalorder %s155, %s169
    %p171 = scmp.eq.s32.totalorder %s29, 0
    %p172 = por %p170, %p171
    %s174 = sadd.s32 %s173, 1
    %p177 = scmp.eq.s32.totalorder %s23, 1
    %p178 = scmp.ne.s32.totalorder %s173, %s175
    %p179 = scmp.eq.s32.totalorder %s23, 0
    %p180 = por %p178, %p179
    %p181 = scmp.ne.s32.totalorder %s173, %s175
    %p182 = scmp.eq.s32.totalorder %s28, 1
    %p183 = por %p181, %p182
    %p184 = scmp.ne.s32.totalorder %s175, %s176
    %p185 = scmp.eq.s32.totalorder %s28, 0
    %p186 = por %p184, %p185
    %p187 = scmp.ne.s32.totalorder %s175, %s176
    %p188 = scmp.eq.s32.totalorder %s29, 1
    %p189 = por %p187, %p188
    %p191 = scmp.ne.s32.totalorder %s176, %s190
    %p192 = scmp.eq.s32.totalorder %s29, 0
    %p193 = por %p191, %p192
    %s195 = sadd.s32 %s194, 1
    %p198 = scmp.eq.s32.totalorder %s23, 1
    %p199 = scmp.ne.s32.totalorder %s194, %s196
    %p200 = scmp.eq.s32.totalorder %s23, 0
    %p201 = por %p199, %p200
    %p202 = scmp.ne.s32.totalorder %s194, %s196
    %p203 = scmp.eq.s32.totalorder %s28, 1
    %p204 = por %p202, %p203
    %p205 = scmp.ne.s32.totalorder %s196, %s197
    %p206 = scmp.eq.s32.totalorder %s28, 0
    %p207 = por %p205, %p206
    %p208 = scmp.ne.s32.totalorder %s196, %s197
    %p209 = scmp.eq.s32.totalorder %s29, 1
    %p210 = por %p208, %p209
    %p212 = scmp.ne.s32.totalorder %s197, %s211
    %p213 = scmp.eq.s32.totalorder %s29, 0
    %p214 = por %p212, %p213
    %s216 = sadd.s32 %s215, 1
    %p219 = scmp.eq.s32.totalorder %s23, 1
    %p220 = scmp.ne.s32.totalorder %s215, %s217
    %p221 = scmp.eq.s32.totalorder %s23, 0
    %p222 = por %p220, %p221
    %p223 = scmp.ne.s32.totalorder %s215, %s217
    %p224 = scmp.eq.s32.totalorder %s28, 1
    %p225 = por %p223, %p224
    %p226 = scmp.ne.s32.totalorder %s217, %s218
    %p227 = scmp.eq.s32.totalorder %s28, 0
    %p228 = por %p226, %p227
    %p229 = scmp.ne.s32.totalorder %s217, %s218
    %p230 = scmp.eq.s32.totalorder %s29, 1
    %p231 = por %p229, %p230
    %p233 = scmp.ne.s32.totalorder %s218, %s232
    %p234 = scmp.eq.s32.totalorder %s29, 0
    %p235 = por %p233, %p234
    %s237 = sadd.s32 %s236, 1
    %p240 = scmp.eq.s32.totalorder %s23, 1
    %p241 = scmp.ne.s32.totalorder %s236, %s238
    %p242 = scmp.eq.s32.totalorder %s23, 0
    %p243 = por %p241, %p242
    %p244 = scmp.ne.s32.totalorder %s236, %s238
    %p245 = scmp.eq.s32.totalorder %s28, 1
    %p246 = por %p244, %p245
    %p247 = scmp.ne.s32.totalorder %s238, %s239
    %p248 = scmp.eq.s32.totalorder %s28, 0
    %p249 = por %p247, %p248
    %p250 = scmp.ne.s32.totalorder %s238, %s239
    %p251 = scmp.eq.s32.totalorder %s29, 1
    %p252 = por %p250, %p251
    %p254 = scmp.ne.s32.totalorder %s239, %s253
    %p255 = scmp.eq.s32.totalorder %s29, 0
    %p256 = por %p254, %p255
    %s258 = sadd.s32 %s257, 1
    %p261 = scmp.eq.s32.totalorder %s23, 1
    %p262 = scmp.ne.s32.totalorder %s257, %s259
    %p263 = scmp.eq.s32.totalorder %s23, 0
    %p264 = por %p262, %p263
    %p265 = scmp.ne.s32.totalorder %s257, %s259
    %p266 = scmp.eq.s32.totalorder %s28, 1
    %p267 = por %p265, %p266
    %p268 = scmp.ne.s32.totalorder %s259, %s260
    %p269 = scmp.eq.s32.totalorder %s28, 0
    %p270 = por %p268, %p269
    %p271 = scmp.ne.s32.totalorder %s259, %s260
    %p272 = scmp.eq.s32.totalorder %s29, 1
    %p273 = por %p271, %p272
    %p275 = scmp.ne.s32.totalorder %s260, %s274
    %p276 = scmp.eq.s32.totalorder %s29, 0
    %p277 = por %p275, %p276
    %s279 = sadd.s32 %s278, 1
    %p282 = scmp.eq.s32.totalorder %s23, 1
    %p283 = scmp.ne.s32.totalorder %s278, %s280
    %p284 = scmp.eq.s32.totalorder %s23, 0
    %p285 = por %p283, %p284
    %p286 = scmp.ne.s32.totalorder %s278, %s280
    %p287 = scmp.eq.s32.totalorder %s28, 1
    %p288 = por %p286, %p287
    %p289 = scmp.ne.s32.totalorder %s280, %s281
    %p290 = scmp.eq.s32.totalorder %s28, 0
    %p291 = por %p289, %p290
    %p292 = scmp.ne.s32.totalorder %s280, %s281
    %p293 = scmp.eq.s32.totalorder %s29, 1
    %p294 = por %p292, %p293
    %p296 = scmp.ne.s32.totalorder %s281, %s295
    %p297 = scmp.eq.s32.totalorder %s29, 0
    %p298 = por %p296, %p297
    %s300 = sadd.s32 %s299, 1
    %p303 = scmp.eq.s32.totalorder %s23, 1
    %p304 = scmp.ne.s32.totalorder %s299, %s301
    %p305 = scmp.eq.s32.totalorder %s23, 0
    %p306 = por %p304, %p305
    %p307 = scmp.ne.s32.totalorder %s299, %s301
    %p308 = scmp.eq.s32.totalorder %s28, 1
    %p309 = por %p307, %p308
    %p310 = scmp.ne.s32.totalorder %s301, %s302
    %p311 = scmp.eq.s32.totalorder %s28, 0
    %p312 = por %p310, %p311
    %p313 = scmp.ne.s32.totalorder %s301, %s302
    %p314 = scmp.eq.s32.totalorder %s29, 1
    %p315 = por %p313, %p314
    %p317 = scmp.ne.s32.totalorder %s302, %s316
    %p318 = scmp.eq.s32.totalorder %s29, 0
    %p319 = por %p317, %p318
    %s321 = sadd.s32 %s320, 1
    %p324 = scmp.eq.s32.totalorder %s23, 1
    %p325 = scmp.ne.s32.totalorder %s320, %s322
    %p326 = scmp.eq.s32.totalorder %s23, 0
    %p327 = por %p325, %p326
    %p328 = scmp.ne.s32.totalorder %s320, %s322
    %p329 = scmp.eq.s32.totalorder %s28, 1
    %p330 = por %p328, %p329
    %p331 = scmp.ne.s32.totalorder %s322, %s323
    %p332 = scmp.eq.s32.totalorder %s28, 0
    %p333 = por %p331, %p332
    %p334 = scmp.ne.s32.totalorder %s322, %s323
    %p335 = scmp.eq.s32.totalorder %s29, 1
    %p336 = por %p334, %p335
    %p338 = scmp.ne.s32.totalorder %s323, %s337
    %p339 = scmp.eq.s32.totalorder %s29, 0
    %p340 = por %p338, %p339
    %s342 = sadd.s32 %s341, 1
    %p345 = scmp.eq.s32.totalorder %s23, 1
    %p346 = scmp.ne.s32.totalorder %s341, %s343
    %p347 = scmp.eq.s32.totalorder %s23, 0
    %p348 = por %p346, %p347
    %p349 = scmp.ne.s32.totalorder %s341, %s343
    %p350 = scmp.eq.s32.totalorder %s28, 1
    %p351 = por %p349, %p350
    %p352 = scmp.ne.s32.totalorder %s343, %s344
    %p353 = scmp.eq.s32.totalorder %s28, 0
    %p354 = por %p352, %p353
    %p355 = scmp.ne.s32.totalorder %s343, %s344
    %p356 = scmp.eq.s32.totalorder %s29, 1
    %p357 = por %p355, %p356
    %p359 = scmp.ne.s32.totalorder %s344, %s358
    %p360 = scmp.eq.s32.totalorder %s29, 0
    %p361 = por %p359, %p360
    %s363 = sadd.s32 %s362, 1
    %p366 = scmp.eq.s32.totalorder %s23, 1
    %p367 = scmp.ne.s32.totalorder %s362, %s364
    %p368 = scmp.eq.s32.totalorder %s23, 0
    %p369 = por %p367, %p368
    %p370 = scmp.ne.s32.totalorder %s362, %s364
    %p371 = scmp.eq.s32.totalorder %s28, 1
    %p372 = por %p370, %p371
    %p373 = scmp.ne.s32.totalorder %s364, %s365
    %p374 = scmp.eq.s32.totalorder %s28, 0
    %p375 = por %p373, %p374
    %p376 = scmp.ne.s32.totalorder %s364, %s365
    %p377 = scmp.eq.s32.totalorder %s29, 1
    %p378 = por %p376, %p377
    %p380 = scmp.ne.s32.totalorder %s365, %s379
    %p381 = scmp.eq.s32.totalorder %s29, 0
    %p382 = por %p380, %p381
    %s384 = sadd.s32 %s383, 1
    %p387 = scmp.eq.s32.totalorder %s23, 1
    %p388 = scmp.ne.s32.totalorder %s383, %s385
    %p389 = scmp.eq.s32.totalorder %s23, 0
    %p390 = por %p388, %p389
    %p391 = scmp.ne.s32.totalorder %s383, %s385
    %p392 = scmp.eq.s32.totalorder %s28, 1
    %p393 = por %p391, %p392
    %p394 = scmp.ne.s32.totalorder %s385, %s386
    %p395 = scmp.eq.s32.totalorder %s28, 0
    %p396 = por %p394, %p395
    %p397 = scmp.ne.s32.totalorder %s385, %s386
    %p398 = scmp.eq.s32.totalorder %s29, 1
    %p399 = por %p397, %p398
    %p401 = scmp.ne.s32.totalorder %s386, %s400
    %p402 = scmp.eq.s32.totalorder %s29, 0
    %p403 = por %p401, %p402
    %s405 = sadd.s32 %s404, 1
    %p408 = scmp.eq.s32.totalorder %s23, 1
    %p409 = scmp.ne.s32.totalorder %s404, %s406
    %p410 = scmp.eq.s32.totalorder %s23, 0
    %p411 = por %p409, %p410
    %p412 = scmp.ne.s32.totalorder %s404, %s406
    %p413 = scmp.eq.s32.totalorder %s28, 1
    %p414 = por %p412, %p413
    %p415 = scmp.ne.s32.totalorder %s406, %s407
    %p416 = scmp.eq.s32.totalorder %s28, 0
    %p417 = por %p415, %p416
    %p418 = scmp.ne.s32.totalorder %s406, %s407
    %p419 = scmp.eq.s32.totalorder %s29, 1
    %p420 = por %p418, %p419
    %p422 = scmp.ne.s32.totalorder %s407, %s421
    %p423 = scmp.eq.s32.totalorder %s29, 0
    %p424 = por %p422, %p423
    %s425 = ssub.s32 %s30, %s42
    %s426 = ssub.s32 %s31, %s38
    %s427 = sor.u32 %s425, %s426
    %p428 = scmp.eq.s32.totalorder %s427, 0
    %s430 = sadd.s32 %s429, 1
    %s431 = scalar_select %p428, %s429, %s430
    %p434 = pneg %p428
    %p435 = scmp.eq.s32.totalorder %s23, 1
    %p436 = por %p434, %p435
    %p437 = scmp.ne.s32.totalorder %s429, %s432
    %p438 = scmp.eq.s32.totalorder %s23, 0
    %p439 = por %p437, %p438
    %p440 = scmp.ne.s32.totalorder %s429, %s432
    %p441 = scmp.eq.s32.totalorder %s28, 1
    %p442 = por %p440, %p441
    %p443 = scmp.ne.s32.totalorder %s432, %s433
    %p444 = scmp.eq.s32.totalorder %s28, 0
    %p445 = por %p443, %p444
    %p446 = scmp.ne.s32.totalorder %s432, %s433
    %p447 = scmp.eq.s32.totalorder %s29, 1
    %p448 = por %p446, %p447
    %p450 = scmp.ne.s32.totalorder %s433, %s449
    %p451 = scmp.eq.s32.totalorder %s29, 0
    %p452 = por %p450, %p451
    %p453 = scmp.le.s32.totalorder 1, %s23
    %p454 = scmp.lt.s32.totalorder %s23, 3
    %p455 = pnand %p453, %p454
    %p456 = pneg %p455
    // Predicated region
    $region9: #{hidta_forward.11} parent=5 // pred_check
      _
    $region10: #{hidta_forward.11} parent=5 // pred_check_branch
      %458 = sbr.rel (%p455) target = $region12
    $region11: #{hidta_forward.11} parent=5 // pred_region
      %s459 = ssub.s32 %s23, 1
      // Predicated region
      $region13: #{hidta_forward.11} parent=11 // pred_check
        %p460 = pneg %p144
      $region14: #{hidta_forward.11} parent=11 // pred_check_branch
        %462 = sbr.rel (%p460) target = $region16
      $region15: #{hidta_forward.11} parent=11 // pred_region
        _
      $region16: #{hidta_forward.11} parent=11 // pred_fallthru
        _
      // Predicated region
      $region17: #{hidta_forward.11} parent=11 // pred_check
        %p463 = pneg %p165
      $region18: #{hidta_forward.11} parent=11 // pred_check_branch
        %465 = sbr.rel (%p463) target = $region20
      $region19: #{hidta_forward.11} parent=11 // pred_region
        _
      $region20: #{hidta_forward.11} parent=11 // pred_fallthru
        _
      // Predicated region
      $region21: #{hidta_forward.11} parent=11 // pred_check
        %p466 = pneg %p186
      $region22: #{hidta_forward.11} parent=11 // pred_check_branch
        %468 = sbr.rel (%p466) target = $region24
      $region23: #{hidta_forward.11} parent=11 // pred_region
        _
      $region24: #{hidta_forward.11} parent=11 // pred_fallthru
        _
      // Predicated region
      $region25: #{hidta_forward.11} parent=11 // pred_check
        %p469 = pneg %p207
      $region26: #{hidta_forward.11} parent=11 // pred_check_branch
        %471 = sbr.rel (%p469) target = $region28
      $region27: #{hidta_forward.11} parent=11 // pred_region
        _
      $region28: #{hidta_forward.11} parent=11 // pred_fallthru
        _
      // Predicated region
      $region29: #{hidta_forward.11} parent=11 // pred_check
        %p472 = pneg %p228
      $region30: #{hidta_forward.11} parent=11 // pred_check_branch
        %474 = sbr.rel (%p472) target = $region32
      $region31: #{hidta_forward.11} parent=11 // pred_region
        _
      $region32: #{hidta_forward.11} parent=11 // pred_fallthru
        _
      // Predicated region
      $region33: #{hidta_forward.11} parent=11 // pred_check
        %p475 = pneg %p249
      $region34: #{hidta_forward.11} parent=11 // pred_check_branch
        %477 = sbr.rel (%p475) target = $region36
      $region35: #{hidta_forward.11} parent=11 // pred_region
        _
      $region36: #{hidta_forward.11} parent=11 // pred_fallthru
        _
      // Predicated region
      $region37: #{hidta_forward.11} parent=11 // pred_check
        %p478 = pneg %p270
      $region38: #{hidta_forward.11} parent=11 // pred_check_branch
        %480 = sbr.rel (%p478) target = $region40
      $region39: #{hidta_forward.11} parent=11 // pred_region
        _
      $region40: #{hidta_forward.11} parent=11 // pred_fallthru
        _
      // Predicated region
      $region41: #{hidta_forward.11} parent=11 // pred_check
        %p481 = pneg %p291
      $region42: #{hidta_forward.11} parent=11 // pred_check_branch
        %483 = sbr.rel (%p481) target = $region44
      $region43: #{hidta_forward.11} parent=11 // pred_region
        _
      $region44: #{hidta_forward.11} parent=11 // pred_fallthru
        _
      // Predicated region
      $region45: #{hidta_forward.11} parent=11 // pred_check
        %p484 = pneg %p312
      $region46: #{hidta_forward.11} parent=11 // pred_check_branch
        %486 = sbr.rel (%p484) target = $region48
      $region47: #{hidta_forward.11} parent=11 // pred_region
        _
      $region48: #{hidta_forward.11} parent=11 // pred_fallthru
        _
      // Predicated region
      $region49: #{hidta_forward.11} parent=11 // pred_check
        %p487 = pneg %p333
      $region50: #{hidta_forward.11} parent=11 // pred_check_branch
        %489 = sbr.rel (%p487) target = $region52
      $region51: #{hidta_forward.11} parent=11 // pred_region
        _
      $region52: #{hidta_forward.11} parent=11 // pred_fallthru
        _
      // Predicated region
      $region53: #{hidta_forward.11} parent=11 // pred_check
        %p490 = pneg %p354
      $region54: #{hidta_forward.11} parent=11 // pred_check_branch
        %492 = sbr.rel (%p490) target = $region56
      $region55: #{hidta_forward.11} parent=11 // pred_region
        _
      $region56: #{hidta_forward.11} parent=11 // pred_fallthru
        _
      // Predicated region
      $region57: #{hidta_forward.11} parent=11 // pred_check
        %p493 = pneg %p375
      $region58: #{hidta_forward.11} parent=11 // pred_check_branch
        %495 = sbr.rel (%p493) target = $region60
      $region59: #{hidta_forward.11} parent=11 // pred_region
        _
      $region60: #{hidta_forward.11} parent=11 // pred_fallthru
        _
      // Predicated region
      $region61: #{hidta_forward.11} parent=11 // pred_check
        %p496 = pneg %p396
      $region62: #{hidta_forward.11} parent=11 // pred_check_branch
        %498 = sbr.rel (%p496) target = $region64
      $region63: #{hidta_forward.11} parent=11 // pred_region
        _
      $region64: #{hidta_forward.11} parent=11 // pred_fallthru
        _
      // Predicated region
      $region65: #{hidta_forward.11} parent=11 // pred_check
        %p499 = pneg %p417
      $region66: #{hidta_forward.11} parent=11 // pred_check_branch
        %501 = sbr.rel (%p499) target = $region68
      $region67: #{hidta_forward.11} parent=11 // pred_region
        _
      $region68: #{hidta_forward.11} parent=11 // pred_fallthru
        _
    $region12: #{hidta_forward.11} parent=5 // pred_fallthru
      _
    %p502 = scmp.lt.s32.totalorder %s23, 2
    // Predicated region
    $region69: #{hidta_forward.11} parent=5 // pred_check
      %p503 = pneg %p502
    $region70: #{hidta_forward.11} parent=5 // pred_check_branch
      %505 = sbr.rel (%p503) target = $region72
    $region71: #{hidta_forward.11} parent=5 // pred_region
      // Predicated region
      $region73: #{hidta_forward.11} parent=71 // pred_check
        %p506 = pneg %p59
      $region74: #{hidta_forward.11} parent=71 // pred_check_branch
        %508 = sbr.rel (%p506) target = $region76
      $region75: #{hidta_forward.11} parent=71 // pred_region
        %s509 = sadd.s32 %s30, 4
        %s510 = smul.u32 3, %s31
        %p511 = scmp.lt.s32.totalorder %s509, 5
        %s512 = scalar_select %p511, %s509, 5
        %p513 = scmp.lt.s32.totalorder %s510, 2
        %s514 = scalar_select %p513, %s510, 2
        %s515 = smul.addr %s512, 3
        %s516 = sadd.s32 %s514, %s515
        %s517 = smul.addr %s516, 8
        %s518 = scalar_lea.vmem %s0, %s517
        %s519 = sadd.s32 %s30, 4
        %s520 = smul.u32 3, %s31
      $region76: #{hidta_forward.11} parent=71 // pred_fallthru
        _
      // Predicated region
      $region77: #{hidta_forward.11} parent=71 // pred_check
        %p521 = pneg %p89
      $region78: #{hidta_forward.11} parent=71 // pred_check_branch
        %523 = sbr.rel (%p521) target = $region80
      $region79: #{hidta_forward.11} parent=71 // pred_region
        %s524 = sadd.s32 %s30, 2
        %s525 = smul.u32 3, %s31
        %p526 = scmp.lt.s32.totalorder %s524, 3
        %s527 = scalar_select %p526, %s524, 3
        %p528 = scmp.lt.s32.totalorder %s525, 2
        %s529 = scalar_select %p528, %s525, 2
        %s530 = smul.addr %s527, 3
        %s531 = sadd.s32 %s529, %s530
        %s532 = smul.addr %s531, 8
        %s533 = scalar_lea.vmem %s1, %s532
        %s534 = sadd.s32 %s30, 2
        %s535 = smul.u32 3, %s31
      $region80: #{hidta_forward.11} parent=71 // pred_fallthru
        _
      // Predicated region
      $region81: #{hidta_forward.11} parent=71 // pred_check
        %p536 = pneg %p117
      $region82: #{hidta_forward.11} parent=71 // pred_check_branch
        %538 = sbr.rel (%p536) target = $region84
      $region83: #{hidta_forward.11} parent=71 // pred_region
        %s539 = smul.u32 3, %s31
        %p540 = scmp.lt.s32.totalorder %s30, 1
        %s541 = scalar_select %p540, %s30, 1
        %p542 = scmp.lt.s32.totalorder %s539, 2
        %s543 = scalar_select %p542, %s539, 2
        %s544 = smul.addr %s541, 3
        %s545 = sadd.s32 %s543, %s544
        %s546 = smul.addr %s545, 8
        %s547 = scalar_lea.vmem %s2, %s546
        %s548 = smul.u32 3, %s31
      $region84: #{hidta_forward.11} parent=71 // pred_fallthru
        _
    $region72: #{hidta_forward.11} parent=5 // pred_fallthru
      _
    %p549 = scmp.le.s32.totalorder 1, %s23
    %p550 = scmp.lt.s32.totalorder %s23, 3
    %p551 = pnand %p549, %p550
    %p552 = pneg %p551
    // Predicated region
    $region85: #{hidta_forward.11} parent=5 // pred_check
      _
    $region86: #{hidta_forward.11} parent=5 // pred_check_branch
      %554 = sbr.rel (%p551) target = $region88
    $region87: #{hidta_forward.11} parent=5 // pred_region
      %s555 = ssub.s32 %s23, 1
      %s556 = sadd.s32 %s32, 4
      %s557 = smul.u32 3, %s33
      %p558 = scmp.lt.s32.totalorder %s556, 5
      %s559 = scalar_select %p558, %s556, 5
      %p560 = scmp.lt.s32.totalorder %s557, 2
      %s561 = scalar_select %p560, %s557, 2
      %s562 = smul.addr %s559, 3
      %s563 = sadd.s32 %s561, %s562
      %s564 = smul.addr %s563, 8
      %s565 = scalar_lea.vmem %s0, %s564
      %p566 = pneg %p65
      %p567 = pneg %p62
      %s568 = sadd.s32 %s32, 2
      %s569 = smul.u32 3, %s33
      %p570 = scmp.lt.s32.totalorder %s568, 3
      %s571 = scalar_select %p570, %s568, 3
      %p572 = scmp.lt.s32.totalorder %s569, 2
      %s573 = scalar_select %p572, %s569, 2
      %s574 = smul.addr %s571, 3
      %s575 = sadd.s32 %s573, %s574
      %s576 = smul.addr %s575, 8
      %s577 = scalar_lea.vmem %s1, %s576
      %p578 = pneg %p95
      %p579 = pneg %p92
      %s580 = smul.u32 3, %s33
      %p581 = scmp.lt.s32.totalorder %s32, 1
      %s582 = scalar_select %p581, %s32, 1
      %p583 = scmp.lt.s32.totalorder %s580, 2
      %s584 = scalar_select %p583, %s580, 2
      %s585 = smul.addr %s582, 3
      %s586 = sadd.s32 %s584, %s585
      %s587 = smul.addr %s586, 8
      %s588 = scalar_lea.vmem %s2, %s587
      %p589 = pneg %p123
      %p590 = pneg %p120
      %p591 = pneg %p144
      %p592 = pneg %p141
      %p593 = pneg %p165
      %p594 = pneg %p162
      %p595 = pneg %p186
      %p596 = pneg %p183
      %p597 = pneg %p207
      %p598 = pneg %p204
      %p599 = pneg %p228
      %p600 = pneg %p225
      %p601 = pneg %p249
      %p602 = pneg %p246
      %p603 = pneg %p270
      %p604 = pneg %p267
      %p605 = pneg %p291
      %p606 = pneg %p288
      %p607 = pneg %p312
      %p608 = pneg %p309
      %p609 = pneg %p333
      %p610 = pneg %p330
      %p611 = pneg %p354
      %p612 = pneg %p351
      %p613 = pneg %p375
      %p614 = pneg %p372
      %p615 = pneg %p396
      %p616 = pneg %p393
      %p617 = pneg %p417
      %p618 = pneg %p414
      %p619 = pneg %p445
      %p620 = pneg %p442
      %s621 = smul.u32 3, %s33
      %p622 = scmp.lt.s32.totalorder %s32, 1
      %s623 = scalar_select %p622, %s32, 1
      %p624 = scmp.lt.s32.totalorder %s621, 2
      %s625 = scalar_select %p624, %s621, 2
      %s626 = smul.addr %s623, 3
      %s627 = sadd.s32 %s625, %s626
      %s628 = smul.addr %s627, 8
      %s629 = scalar_lea.vmem %s17, %s628
      %s630 = sadd.s32 %s32, 4
      %s631 = smul.u32 3, %s33
      %p632 = scmp.lt.s32.totalorder %s630, 5
      %s633 = scalar_select %p632, %s630, 5
      %p634 = scmp.lt.s32.totalorder %s631, 2
      %s635 = scalar_select %p634, %s631, 2
      %s636 = smul.addr %s633, 3
      %s637 = sadd.s32 %s635, %s636
      %s638 = smul.addr %s637, 8
      %s639 = scalar_lea.vmem %s0, %s638
      %s640 = sadd.s32 %s32, 4
      %s641 = smul.u32 3, %s33
      %s642 = sadd.s32 %s32, 2
      %s643 = smul.u32 3, %s33
      %p644 = scmp.lt.s32.totalorder %s642, 3
      %s645 = scalar_select %p644, %s642, 3
      %p646 = scmp.lt.s32.totalorder %s643, 2
      %s647 = scalar_select %p646, %s643, 2
      %s648 = smul.addr %s645, 3
      %s649 = sadd.s32 %s647, %s648
      %s650 = smul.addr %s649, 8
      %s651 = scalar_lea.vmem %s1, %s650
      %s652 = sadd.s32 %s32, 2
      %s653 = smul.u32 3, %s33
      %s654 = smul.u32 3, %s33
      %p655 = scmp.lt.s32.totalorder %s32, 1
      %s656 = scalar_select %p655, %s32, 1
      %p657 = scmp.lt.s32.totalorder %s654, 2
      %s658 = scalar_select %p657, %s654, 2
      %s659 = smul.addr %s656, 3
      %s660 = sadd.s32 %s658, %s659
      %s661 = smul.addr %s660, 8
      %s662 = scalar_lea.vmem %s2, %s661
      %s663 = smul.u32 3, %s33
      %s664 = smul.u32 3, %s33
      %p665 = scmp.lt.s32.totalorder %s32, 1
      %s666 = scalar_select %p665, %s32, 1
      %p667 = scmp.lt.s32.totalorder %s664, 2
      %s668 = scalar_select %p667, %s664, 2
      %s669 = smul.addr %s666, 3
      %s670 = sadd.s32 %s668, %s669
      %s671 = smul.addr %s670, 8
      %s672 = scalar_lea.vmem %s17, %s671
      %s673 = smul.u32 3, %s33
      %v674 = vld [vmem:[%s12] sm:$0x7]
      %v675 = vld [vmem:[%s639] sm:$0xff]
      %v676 = vld [vmem:[%s639 + $0x8] sm:$0xff]
      %v677 = vld [vmem:[%s639 + $0x10] sm:$0xff]
      %v678 = vld [vmem:[%s3] sm:$0x1]
      %v680 = vlaneseq
      %v681 = vshrl.u32 %v680, 7
      %v682 = vsub.s32 0, %v681
      %v683 = vrot.slane %v678, %v682
      %v685 = vmul.f32 %v675, %v683
      %v686 = vmul.f32 %v676, %v683
      %v687 = vmul.f32 %v677, %v683
      %v688 = vld [vmem:[%s6] sm:$0x1]
      %v690 = vlaneseq
      %v691 = vshrl.u32 %v690, 7
      %v692 = vsub.s32 0, %v691
      %v693 = vrot.slane %v688, %v692
      %v695 = vadd.f32 %v685, %v693
      %v696 = vadd.f32 %v686, %v693
      %v697 = vadd.f32 %v687, %v693
      %v698 = vld [vmem:[%s9] sm:$0xff]
      %v699 = vld [vmem:[%s9 + $0x8] sm:$0xff]
      %v700 = vld [vmem:[%s9 + $0x10] sm:$0xff]
      %v701 = vld [vmem:[%s9 + $0x18] sm:$0xff]
      %v702 = vld [vmem:[%s9 + $0x20] sm:$0xff]
      %v703 = vld [vmem:[%s9 + $0x28] sm:$0xff]
      %v704 = vld [vmem:[%s9 + $0x30] sm:$0xff]
      %v705 = vld [vmem:[%s9 + $0x38] sm:$0xff]
      %v706 = vld [vmem:[%s9 + $0x40] sm:$0xff]
      %v707 = vld [vmem:[%s9 + $0x48] sm:$0xff]
      %v708 = vld [vmem:[%s9 + $0x50] sm:$0xff]
      %v709 = vld [vmem:[%s9 + $0x58] sm:$0xff]
      %v710 = vld [vmem:[%s9 + $0x60] sm:$0xff]
      %v711 = vld [vmem:[%s9 + $0x68] sm:$0xff]
      %v712 = vld [vmem:[%s9 + $0x70] sm:$0xff]
      %vm713 = vcmask 326656
      %v715 = vsel %vm713, %v695, 0
      %v718 = vsel %vm713, %v696, 0
      %v721 = vsel %vm713, %v697, 0
      %723 = vmatprep.subr.mxu0 %v699
      %724 = vmatpush1.msra.mxu0 %v698
      %725 = vmatprep.subr.mxu0 %v702
      %726 = vmatpush1.msra.mxu0 %v701
      %727 = vmatprep.subr.mxu0 %v705
      %728 = vmatpush1.msra.mxu0 %v704
      %729 = vmatprep.subr.mxu0 %v708
      %730 = vmatpush1.msra.mxu0 %v707
      %731 = vmatprep.subr.mxu0 %v711
      %732 = vmatpush1.msra.mxu0 %v710
      %733 = vmatprep.subr.mxu0 0.0
      %734 = vmatpush1.msra.mxu0 0.0
      %735 = vmatprep.subr.mxu0 0.0
      %736 = vmatpush1.msra.mxu0 0.0
      %737 = vmatprep.subr.mxu0 0.0
      %738 = vmatpush1.msra.mxu0 0.0
      %739 = vmatprep.subr.mxu0 0.0
      %740 = vmatpush1.msra.mxu0 0.0
      %741 = vmatprep.subr.mxu0 0.0
      %742 = vmatpush1.msra.mxu0 0.0
      %743 = vmatprep.subr.mxu0 0.0
      %744 = vmatpush1.msra.mxu0 0.0
      %745 = vmatprep.subr.mxu0 0.0
      %746 = vmatpush1.msra.mxu0 0.0
      %747 = vmatprep.subr.mxu0 0.0
      %748 = vmatpush1.msra.mxu0 0.0
      %749 = vmatprep.subr.mxu0 0.0
      %750 = vmatpush1.msra.mxu0 0.0
      %751 = vmatprep.subr.mxu0 0.0
      %752 = vmatpush1.msra.mxu0 0.0
      %753 = vmatprep.subr.mxu0 0.0
      %754 = vmatpush1.msra.mxu0 0.0
      %755 = vmatprep.subr.mxu0 0.0
      %756 = vmatpush1.msra.mxu0 0.0
      %757 = vmatprep.subr.mxu0 0.0
      %758 = vmatpush1.msra.mxu0 0.0
      %759 = vmatprep.subr.mxu0 0.0
      %760 = vmatpush1.msra.mxu0 0.0
      %761 = vmatprep.subr.mxu0 0.0
      %762 = vmatpush1.msra.mxu0 0.0
      %763 = vmatprep.subr.mxu0 0.0
      %764 = vmatpush1.msra.mxu0 0.0
      %765 = vmatprep.subr.mxu0 0.0
      %766 = vmatpush1.msra.mxu0 0.0
      %767 = vmatprep.subr.mxu0 0.0
      %768 = vmatpush1.msra.mxu0 0.0
      %769 = vmatprep.subr.mxu0 0.0
      %770 = vmatpush1.msra.mxu0 0.0
      %771 = vmatprep.subr.mxu0 0.0
      %772 = vmatpush1.msra.mxu0 0.0
      %773 = vmatprep.subr.mxu0 0.0
      %774 = vmatpush1.msra.mxu0 0.0
      %775 = vmatprep.subr.mxu0 0.0
      %776 = vmatpush1.msra.mxu0 0.0
      %777 = vmatprep.subr.mxu0 0.0
      %778 = vmatpush1.msra.mxu0 0.0
      %779 = vmatprep.subr.mxu0 0.0
      %780 = vmatpush1.msra.mxu0 0.0
      %781 = vmatprep.subr.mxu0 0.0
      %782 = vmatpush1.msra.mxu0 0.0
      %783 = vmatprep.subr.mxu0 0.0
      %784 = vmatpush1.msra.mxu0 0.0
      %785 = vmatprep.subr.mxu0 0.0
      %786 = vmatpush1.msra.mxu0 0.0
      %787 = vmatprep.mubr.f32.mxu0 0.0
      %788 = vmatmul.mubr.f32.gmra.mrb[0].mxu0 %v715
      %v789 = vpop.f32.mrb[0].mxu0
      %v790 = vadd.f32 0.0, %v789
      %v791 = vpop.f32.mrb[0].mxu0
      %v792 = vadd.f32 0.0, %v791
      %793 = vmatprep.mubr.f32.mxu0 0.0
      %794 = vmatmul.mubr.f32.gmra.mrb[0].mxu0 %v718
      %v795 = vpop.f32.mrb[0].mxu0
      %v796 = vadd.f32 0.0, %v795
      %v797 = vpop.f32.mrb[0].mxu0
      %v798 = vadd.f32 0.0, %v797
      %799 = vmatprep.mubr.f32.mxu0 0.0
      %800 = vmatmul.mubr.f32.gmra.mrb[0].mxu0 %v721
      %v801 = vpop.f32.mrb[0].mxu0
      %v802 = vadd.f32 0.0, %v801
      %v803 = vpop.f32.mrb[0].mxu0
      %v804 = vadd.f32 0.0, %v803
      %805 = vdwg.mxu0
      %806 = vmatprep.subr.mxu0 0.0
      %807 = vmatpush1.msra.mxu0 %v700
      %808 = vmatprep.subr.mxu0 0.0
      %809 = vmatpush1.msra.mxu0 %v703
      %810 = vmatprep.subr.mxu0 0.0
      %811 = vmatpush1.msra.mxu0 %v706
      %812 = vmatprep.subr.mxu0 0.0
      %813 = vmatpush1.msra.mxu0 %v709
      %814 = vmatprep.subr.mxu0 0.0
      %815 = vmatpush1.msra.mxu0 %v712
      %816 = vmatprep.subr.mxu0 0.0
      %817 = vmatpush1.msra.mxu0 0.0
      %818 = vmatprep.subr.mxu0 0.0
      %819 = vmatpush1.msra.mxu0 0.0
      %820 = vmatprep.subr.mxu0 0.0
      %821 = vmatpush1.msra.mxu0 0.0
      %822 = vmatprep.subr.mxu0 0.0
      %823 = vmatpush1.msra.mxu0 0.0
      %824 = vmatprep.subr.mxu0 0.0
      %825 = vmatpush1.msra.mxu0 0.0
      %826 = vmatprep.subr.mxu0 0.0
      %827 = vmatpush1.msra.mxu0 0.0
      %828 = vmatprep.subr.mxu0 0.0
      %829 = vmatpush1.msra.mxu0 0.0
      %830 = vmatprep.subr.mxu0 0.0
      %831 = vmatpush1.msra.mxu0 0.0
      %832 = vmatprep.subr.mxu0 0.0
      %833 = vmatpush1.msra.mxu0 0.0
      %834 = vmatprep.subr.mxu0 0.0
      %835 = vmatpush1.msra.mxu0 0.0
      %836 = vmatprep.subr.mxu0 0.0
      %837 = vmatpush1.msra.mxu0 0.0
      %838 = vmatprep.subr.mxu0 0.0
      %839 = vmatpush1.msra.mxu0 0.0
      %840 = vmatprep.subr.mxu0 0.0
      %841 = vmatpush1.msra.mxu0 0.0
      %842 = vmatprep.subr.mxu0 0.0
      %843 = vmatpush1.msra.mxu0 0.0
      %844 = vmatprep.subr.mxu0 0.0
      %845 = vmatpush1.msra.mxu0 0.0
      %846 = vmatprep.subr.mxu0 0.0
      %847 = vmatpush1.msra.mxu0 0.0
      %848 = vmatprep.subr.mxu0 0.0
      %849 = vmatpush1.msra.mxu0 0.0
      %850 = vmatprep.subr.mxu0 0.0
      %851 = vmatpush1.msra.mxu0 0.0
      %852 = vmatprep.subr.mxu0 0.0
      %853 = vmatpush1.msra.mxu0 0.0
      %854 = vmatprep.subr.mxu0 0.0
      %855 = vmatpush1.msra.mxu0 0.0
      %856 = vmatprep.subr.mxu0 0.0
      %857 = vmatpush1.msra.mxu0 0.0
      %858 = vmatprep.subr.mxu0 0.0
      %859 = vmatpush1.msra.mxu0 0.0
      %860 = vmatprep.subr.mxu0 0.0
      %861 = vmatpush1.msra.mxu0 0.0
      %862 = vmatprep.subr.mxu0 0.0
      %863 = vmatpush1.msra.mxu0 0.0
      %864 = vmatprep.subr.mxu0 0.0
      %865 = vmatpush1.msra.mxu0 0.0
      %866 = vmatprep.subr.mxu0 0.0
      %867 = vmatpush1.msra.mxu0 0.0
      %868 = vmatprep.subr.mxu0 0.0
      %869 = vmatpush1.msra.mxu0 0.0
      %870 = vmatprep.mubr.f32.mxu0 0.0
      %871 = vmatmul.mubr.f32.gmra.mrb[0].mxu0 %v715
      %v872 = vpop.f32.mrb[0].mxu0
      %v873 = vadd.f32 0.0, %v872
      %v874 = vpop.f32.mrb[0].mxu0
      %875 = vmatprep.mubr.f32.mxu0 0.0
      %876 = vmatmul.mubr.f32.gmra.mrb[0].mxu0 %v718
      %v877 = vpop.f32.mrb[0].mxu0
      %v878 = vadd.f32 0.0, %v877
      %v879 = vpop.f32.mrb[0].mxu0
      %880 = vmatprep.mubr.f32.mxu0 0.0
      %881 = vmatmul.mubr.f32.gmra.mrb[0].mxu0 %v721
      %v882 = vpop.f32.mrb[0].mxu0
      %v883 = vadd.f32 0.0, %v882
      %v884 = vpop.f32.mrb[0].mxu0
      %885 = vdwg.mxu0
      %v887 = vlaneseq
      %v888 = vshrl.u32 %v887, 7
      %v889 = vsub.s32 0, %v888
      %v890 = vrot.slane %v674, %v889
      %v891 = vlaneseq
      %v892 = vshrl.u32 %v891, 7
      %v893 = vsub.s32 1, %v892
      %v894 = vrot.slane %v674, %v893
      %v895 = vlaneseq
      %v896 = vshrl.u32 %v895, 7
      %v897 = vsub.s32 2, %v896
      %v898 = vrot.slane %v674, %v897
      %v902 = vadd.f32 %v890, %v790
      %v903 = vadd.f32 %v894, %v792
      %v904 = vadd.f32 %v898, %v873
      %v905 = vadd.f32 %v890, %v796
      %v906 = vadd.f32 %v894, %v798
      %v907 = vadd.f32 %v898, %v878
      %v908 = vadd.f32 %v890, %v802
      %v909 = vadd.f32 %v894, %v804
      %v910 = vadd.f32 %v898, %v883
      %v911 = vld [vmem:[%s651] sm:$0xff]
      %v912 = vld [vmem:[%s651 + $0x8] sm:$0xff]
      %v913 = vld [vmem:[%s651 + $0x10] sm:$0xff]
      %v914 = vld [vmem:[%s4] sm:$0x1]
      %v916 = vlaneseq
      %v917 = vshrl.u32 %v916, 7
      %v918 = vsub.s32 0, %v917
      %v919 = vrot.slane %v914, %v918
      %v921 = vmul.f32 %v911, %v919
      %v922 = vmul.f32 %v912, %v919
      %v923 = vmul.f32 %v913, %v919
      %v924 = vld [vmem:[%s7] sm:$0x1]
      %v926 = vlaneseq
      %v927 = vshrl.u32 %v926, 7
      %v928 = vsub.s32 0, %v927
      %v929 = vrot.slane %v924, %v928
      %v931 = vadd.f32 %v921, %v929
      %v932 = vadd.f32 %v922, %v929
      %v933 = vadd.f32 %v923, %v929
      %v934 = vld [vmem:[%s10] sm:$0xff]
      %v935 = vld [vmem:[%s10 + $0x8] sm:$0xff]
      %v936 = vld [vmem:[%s10 + $0x10] sm:$0xff]
      %v937 = vld [vmem:[%s10 + $0x18] sm:$0xff]
      %v938 = vld [vmem:[%s10 + $0x20] sm:$0xff]
      %v939 = vld [vmem:[%s10 + $0x28] sm:$0xff]
      %v940 = vld [vmem:[%s10 + $0x30] sm:$0xff]
      %v941 = vld [vmem:[%s10 + $0x38] sm:$0xff]
      %v942 = vld [vmem:[%s10 + $0x40] sm:$0xff]
      %v943 = vld [vmem:[%s10 + $0x48] sm:$0xff]
      %v944 = vld [vmem:[%s10 + $0x50] sm:$0xff]
      %v945 = vld [vmem:[%s10 + $0x58] sm:$0xff]
      %v946 = vld [vmem:[%s10 + $0x60] sm:$0xff]
      %v947 = vld [vmem:[%s10 + $0x68] sm:$0xff]
      %v948 = vld [vmem:[%s10 + $0x70] sm:$0xff]
      %v950 = vsel %vm713, %v931, 0
      %v953 = vsel %vm713, %v932, 0
      %v956 = vsel %vm713, %v933, 0
      %958 = vmatprep.subr.mxu0 %v935
      %959 = vmatpush1.msra.mxu0 %v934
      %960 = vmatprep.subr.mxu0 %v938
      %961 = vmatpush1.msra.mxu0 %v937
      %962 = vmatprep.subr.mxu0 %v941
      %963 = vmatpush1.msra.mxu0 %v940
      %964 = vmatprep.subr.mxu0 %v944
      %965 = vmatpush1.msra.mxu0 %v943
      %966 = vmatprep.subr.mxu0 %v947
      %967 = vmatpush1.msra.mxu0 %v946
      %968 = vmatprep.subr.mxu0 0.0
      %969 = vmatpush1.msra.mxu0 0.0
      %970 = vmatprep.subr.mxu0 0.0
      %971 = vmatpush1.msra.mxu0 0.0
      %972 = vmatprep.subr.mxu0 0.0
      %973 = vmatpush1.msra.mxu0 0.0
      %974 = vmatprep.subr.mxu0 0.0
      %975 = vmatpush1.msra.mxu0 0.0
      %976 = vmatprep.subr.mxu0 0.0
      %977 = vmatpush1.msra.mxu0 0.0
      %978 = vmatprep.subr.mxu0 0.0
      %979 = vmatpush1.msra.mxu0 0.0
      %980 = vmatprep.subr.mxu0 0.0
      %981 = vmatpush1.msra.mxu0 0.0
      %982 = vmatprep.subr.mxu0 0.0
      %983 = vmatpush1.msra.mxu0 0.0
      %984 = vmatprep.subr.mxu0 0.0
      %985 = vmatpush1.msra.mxu0 0.0
      %986 = vmatprep.subr.mxu0 0.0
      %987 = vmatpush1.msra.mxu0 0.0
      %988 = vmatprep.subr.mxu0 0.0
      %989 = vmatpush1.msra.mxu0 0.0
      %990 = vmatprep.subr.mxu0 0.0
      %991 = vmatpush1.msra.mxu0 0.0
      %992 = vmatprep.subr.mxu0 0.0
      %993 = vmatpush1.msra.mxu0 0.0
      %994 = vmatprep.subr.mxu0 0.0
      %995 = vmatpush1.msra.mxu0 0.0
      %996 = vmatprep.subr.mxu0 0.0
      %997 = vmatpush1.msra.mxu0 0.0
      %998 = vmatprep.subr.mxu0 0.0
      %999 = vmatpush1.msra.mxu0 0.0
      %1000 = vmatprep.subr.mxu0 0.0
      %1001 = vmatpush1.msra.mxu0 0.0
      %1002 = vmatprep.subr.mxu0 0.0
      %1003 = vmatpush1.msra.mxu0 0.0
      %1004 = vmatprep.subr.mxu0 0.0
      %1005 = vmatpush1.msra.mxu0 0.0
      %1006 = vmatprep.subr.mxu0 0.0
      %1007 = vmatpush1.msra.mxu0 0.0
      %1008 = vmatprep.subr.mxu0 0.0
      %1009 = vmatpush1.msra.mxu0 0.0
      %1010 = vmatprep.subr.mxu0 0.0
      %1011 = vmatpush1.msra.mxu0 0.0
      %1012 = vmatprep.subr.mxu0 0.0
      %1013 = vmatpush1.msra.mxu0 0.0
      %1014 = vmatprep.subr.mxu0 0.0
      %1015 = vmatpush1.msra.mxu0 0.0
      %1016 = vmatprep.subr.mxu0 0.0
      %1017 = vmatpush1.msra.mxu0 0.0
      %1018 = vmatprep.subr.mxu0 0.0
      %1019 = vmatpush1.msra.mxu0 0.0
      %1020 = vmatprep.subr.mxu0 0.0
      %1021 = vmatpush1.msra.mxu0 0.0
      %1022 = vmatprep.mubr.f32.mxu0 0.0
      %1023 = vmatmul.mubr.f32.gmra.mrb[0].mxu0 %v950
      %v1024 = vpop.f32.mrb[0].mxu0
      %v1025 = vadd.f32 0.0, %v1024
      %v1026 = vpop.f32.mrb[0].mxu0
      %v1027 = vadd.f32 0.0, %v1026
      %1028 = vmatprep.mubr.f32.mxu0 0.0
      %1029 = vmatmul.mubr.f32.gmra.mrb[0].mxu0 %v953
      %v1030 = vpop.f32.mrb[0].mxu0
      %v1031 = vadd.f32 0.0, %v1030
      %v1032 = vpop.f32.mrb[0].mxu0
      %v1033 = vadd.f32 0.0, %v1032
      %1034 = vmatprep.mubr.f32.mxu0 0.0
      %1035 = vmatmul.mubr.f32.gmra.mrb[0].mxu0 %v956
      %v1036 = vpop.f32.mrb[0].mxu0
      %v1037 = vadd.f32 0.0, %v1036
      %v1038 = vpop.f32.mrb[0].mxu0
      %v1039 = vadd.f32 0.0, %v1038
      %1040 = vdwg.mxu0
      %1041 = vmatprep.subr.mxu0 0.0
      %1042 = vmatpush1.msra.mxu0 %v936
      %1043 = vmatprep.subr.mxu0 0.0
      %1044 = vmatpush1.msra.mxu0 %v939
      %1045 = vmatprep.subr.mxu0 0.0
      %1046 = vmatpush1.msra.mxu0 %v942
      %1047 = vmatprep.subr.mxu0 0.0
      %1048 = vmatpush1.msra.mxu0 %v945
      %1049 = vmatprep.subr.mxu0 0.0
      %1050 = vmatpush1.msra.mxu0 %v948
      %1051 = vmatprep.subr.mxu0 0.0
      %1052 = vmatpush1.msra.mxu0 0.0
      %1053 = vmatprep.subr.mxu0 0.0
      %1054 = vmatpush1.msra.mxu0 0.0
      %1055 = vmatprep.subr.mxu0 0.0
      %1056 = vmatpush1.msra.mxu0 0.0
      %1057 = vmatprep.subr.mxu0 0.0
      %1058 = vmatpush1.msra.mxu0 0.0
      %1059 = vmatprep.subr.mxu0 0.0
      %1060 = vmatpush1.msra.mxu0 0.0
      %1061 = vmatprep.subr.mxu0 0.0
      %1062 = vmatpush1.msra.mxu0 0.0
      %1063 = vmatprep.subr.mxu0 0.0
      %1064 = vmatpush1.msra.mxu0 0.0
      %1065 = vmatprep.subr.mxu0 0.0
      %1066 = vmatpush1.msra.mxu0 0.0
      %1067 = vmatprep.subr.mxu0 0.0
      %1068 = vmatpush1.msra.mxu0 0.0
      %1069 = vmatprep.subr.mxu0 0.0
      %1070 = vmatpush1.msra.mxu0 0.0
      %1071 = vmatprep.subr.mxu0 0.0
      %1072 = vmatpush1.msra.mxu0 0.0
      %1073 = vmatprep.subr.mxu0 0.0
      %1074 = vmatpush1.msra.mxu0 0.0
      %1075 = vmatprep.subr.mxu0 0.0
      %1076 = vmatpush1.msra.mxu0 0.0
      %1077 = vmatprep.subr.mxu0 0.0
      %1078 = vmatpush1.msra.mxu0 0.0
      %1079 = vmatprep.subr.mxu0 0.0
      %1080 = vmatpush1.msra.mxu0 0.0
      %1081 = vmatprep.subr.mxu0 0.0
      %1082 = vmatpush1.msra.mxu0 0.0
      %1083 = vmatprep.subr.mxu0 0.0
      %1084 = vmatpush1.msra.mxu0 0.0
      %1085 = vmatprep.subr.mxu0 0.0
      %1086 = vmatpush1.msra.mxu0 0.0
      %1087 = vmatprep.subr.mxu0 0.0
      %1088 = vmatpush1.msra.mxu0 0.0
      %1089 = vmatprep.subr.mxu0 0.0
      %1090 = vmatpush1.msra.mxu0 0.0
      %1091 = vmatprep.subr.mxu0 0.0
      %1092 = vmatpush1.msra.mxu0 0.0
      %1093 = vmatprep.subr.mxu0 0.0
      %1094 = vmatpush1.msra.mxu0 0.0
      %1095 = vmatprep.subr.mxu0 0.0
      %1096 = vmatpush1.msra.mxu0 0.0
      %1097 = vmatprep.subr.mxu0 0.0
      %1098 = vmatpush1.msra.mxu0 0.0
      %1099 = vmatprep.subr.mxu0 0.0
      %1100 = vmatpush1.msra.mxu0 0.0
      %1101 = vmatprep.subr.mxu0 0.0
      %1102 = vmatpush1.msra.mxu0 0.0
      %1103 = vmatprep.subr.mxu0 0.0
      %1104 = vmatpush1.msra.mxu0 0.0
      %1105 = vmatprep.mubr.f32.mxu0 0.0
      %1106 = vmatmul.mubr.f32.gmra.mrb[0].mxu0 %v950
      %v1107 = vpop.f32.mrb[0].mxu0
      %v1108 = vadd.f32 0.0, %v1107
      %v1109 = vpop.f32.mrb[0].mxu0
      %1110 = vmatprep.mubr.f32.mxu0 0.0
      %1111 = vmatmul.mubr.f32.gmra.mrb[0].mxu0 %v953
      %v1112 = vpop.f32.mrb[0].mxu0
      %v1113 = vadd.f32 0.0, %v1112
      %v1114 = vpop.f32.mrb[0].mxu0
      %1115 = vmatprep.mubr.f32.mxu0 0.0
      %1116 = vmatmul.mubr.f32.gmra.mrb[0].mxu0 %v956
      %v1117 = vpop.f32.mrb[0].mxu0
      %v1118 = vadd.f32 0.0, %v1117
      %v1119 = vpop.f32.mrb[0].mxu0
      %1120 = vdwg.mxu0
      %v1121 = vadd.f32 %v902, %v1025
      %v1122 = vadd.f32 %v903, %v1027
      %v1123 = vadd.f32 %v904, %v1108
      %v1124 = vadd.f32 %v905, %v1031
      %v1125 = vadd.f32 %v906, %v1033
      %v1126 = vadd.f32 %v907, %v1113
      %v1127 = vadd.f32 %v908, %v1037
      %v1128 = vadd.f32 %v909, %v1039
      %v1129 = vadd.f32 %v910, %v1118
      %v1130 = vld [vmem:[%s662] sm:$0xff]
      %v1131 = vld [vmem:[%s662 + $0x8] sm:$0xff]
      %v1132 = vld [vmem:[%s662 + $0x10] sm:$0xff]
      %v1133 = vld [vmem:[%s5] sm:$0x1]
      %v1135 = vlaneseq
      %v1136 = vshrl.u32 %v1135, 7
      %v1137 = vsub.s32 0, %v1136
      %v1138 = vrot.slane %v1133, %v1137
      %v1140 = vmul.f32 %v1130, %v1138
      %v1141 = vmul.f32 %v1131, %v1138
      %v1142 = vmul.f32 %v1132, %v1138
      %v1143 = vld [vmem:[%s8] sm:$0x1]
      %v1145 = vlaneseq
      %v1146 = vshrl.u32 %v1145, 7
      %v1147 = vsub.s32 0, %v1146
      %v1148 = vrot.slane %v1143, %v1147
      %v1150 = vadd.f32 %v1140, %v1148
      %v1151 = vadd.f32 %v1141, %v1148
      %v1152 = vadd.f32 %v1142, %v1148
      %v1153 = vld [vmem:[%s11] sm:$0xff]
      %v1154 = vld [vmem:[%s11 + $0x8] sm:$0xff]
      %v1155 = vld [vmem:[%s11 + $0x10] sm:$0xff]
      %v1156 = vld [vmem:[%s11 + $0x18] sm:$0xff]
      %v1157 = vld [vmem:[%s11 + $0x20] sm:$0xff]
      %v1158 = vld [vmem:[%s11 + $0x28] sm:$0xff]
      %v1159 = vld [vmem:[%s11 + $0x30] sm:$0xff]
      %v1160 = vld [vmem:[%s11 + $0x38] sm:$0xff]
      %v1161 = vld [vmem:[%s11 + $0x40] sm:$0xff]
      %v1162 = vld [vmem:[%s11 + $0x48] sm:$0xff]
      %v1163 = vld [vmem:[%s11 + $0x50] sm:$0xff]
      %v1164 = vld [vmem:[%s11 + $0x58] sm:$0xff]
      %v1165 = vld [vmem:[%s11 + $0x60] sm:$0xff]
      %v1166 = vld [vmem:[%s11 + $0x68] sm:$0xff]
      %v1167 = vld [vmem:[%s11 + $0x70] sm:$0xff]
      %v1169 = vsel %vm713, %v1150, 0
      %v1172 = vsel %vm713, %v1151, 0
      %v1175 = vsel %vm713, %v1152, 0
      %1177 = vmatprep.subr.mxu0 %v1154
      %1178 = vmatpush1.msra.mxu0 %v1153
      %1179 = vmatprep.subr.mxu0 %v1157
      %1180 = vmatpush1.msra.mxu0 %v1156
      %1181 = vmatprep.subr.mxu0 %v1160
      %1182 = vmatpush1.msra.mxu0 %v1159
      %1183 = vmatprep.subr.mxu0 %v1163
      %1184 = vmatpush1.msra.mxu0 %v1162
      %1185 = vmatprep.subr.mxu0 %v1166
      %1186 = vmatpush1.msra.mxu0 %v1165
      %1187 = vmatprep.subr.mxu0 0.0
      %1188 = vmatpush1.msra.mxu0 0.0
      %1189 = vmatprep.subr.mxu0 0.0
      %1190 = vmatpush1.msra.mxu0 0.0
      %1191 = vmatprep.subr.mxu0 0.0
      %1192 = vmatpush1.msra.mxu0 0.0
      %1193 = vmatprep.subr.mxu0 0.0
      %1194 = vmatpush1.msra.mxu0 0.0
      %1195 = vmatprep.subr.mxu0 0.0
      %1196 = vmatpush1.msra.mxu0 0.0
      %1197 = vmatprep.subr.mxu0 0.0
      %1198 = vmatpush1.msra.mxu0 0.0
      %1199 = vmatprep.subr.mxu0 0.0
      %1200 = vmatpush1.msra.mxu0 0.0
      %1201 = vmatprep.subr.mxu0 0.0
      %1202 = vmatpush1.msra.mxu0 0.0
      %1203 = vmatprep.subr.mxu0 0.0
      %1204 = vmatpush1.msra.mxu0 0.0
      %1205 = vmatprep.subr.mxu0 0.0
      %1206 = vmatpush1.msra.mxu0 0.0
      %1207 = vmatprep.subr.mxu0 0.0
      %1208 = vmatpush1.msra.mxu0 0.0
      %1209 = vmatprep.subr.mxu0 0.0
      %1210 = vmatpush1.msra.mxu0 0.0
      %1211 = vmatprep.subr.mxu0 0.0
      %1212 = vmatpush1.msra.mxu0 0.0
      %1213 = vmatprep.subr.mxu0 0.0
      %1214 = vmatpush1.msra.mxu0 0.0
      %1215 = vmatprep.subr.mxu0 0.0
      %1216 = vmatpush1.msra.mxu0 0.0
      %1217 = vmatprep.subr.mxu0 0.0
      %1218 = vmatpush1.msra.mxu0 0.0
      %1219 = vmatprep.subr.mxu0 0.0
      %1220 = vmatpush1.msra.mxu0 0.0
      %1221 = vmatprep.subr.mxu0 0.0
      %1222 = vmatpush1.msra.mxu0 0.0
      %1223 = vmatprep.subr.mxu0 0.0
      %1224 = vmatpush1.msra.mxu0 0.0
      %1225 = vmatprep.subr.mxu0 0.0
      %1226 = vmatpush1.msra.mxu0 0.0
      %1227 = vmatprep.subr.mxu0 0.0
      %1228 = vmatpush1.msra.mxu0 0.0
      %1229 = vmatprep.subr.mxu0 0.0
      %1230 = vmatpush1.msra.mxu0 0.0
      %1231 = vmatprep.subr.mxu0 0.0
      %1232 = vmatpush1.msra.mxu0 0.0
      %1233 = vmatprep.subr.mxu0 0.0
      %1234 = vmatpush1.msra.mxu0 0.0
      %1235 = vmatprep.subr.mxu0 0.0
      %1236 = vmatpush1.msra.mxu0 0.0
      %1237 = vmatprep.subr.mxu0 0.0
      %1238 = vmatpush1.msra.mxu0 0.0
      %1239 = vmatprep.subr.mxu0 0.0
      %1240 = vmatpush1.msra.mxu0 0.0
      %1241 = vmatprep.mubr.f32.mxu0 0.0
      %1242 = vmatmul.mubr.f32.gmra.mrb[0].mxu0 %v1169
      %v1243 = vpop.f32.mrb[0].mxu0
      %v1244 = vadd.f32 0.0, %v1243
      %v1245 = vpop.f32.mrb[0].mxu0
      %v1246 = vadd.f32 0.0, %v1245
      %1247 = vmatprep.mubr.f32.mxu0 0.0
      %1248 = vmatmul.mubr.f32.gmra.mrb[0].mxu0 %v1172
      %v1249 = vpop.f32.mrb[0].mxu0
      %v1250 = vadd.f32 0.0, %v1249
      %v1251 = vpop.f32.mrb[0].mxu0
      %v1252 = vadd.f32 0.0, %v1251
      %1253 = vmatprep.mubr.f32.mxu0 0.0
      %1254 = vmatmul.mubr.f32.gmra.mrb[0].mxu0 %v1175
      %v1255 = vpop.f32.mrb[0].mxu0
      %v1256 = vadd.f32 0.0, %v1255
      %v1257 = vpop.f32.mrb[0].mxu0
      %v1258 = vadd.f32 0.0, %v1257
      %1259 = vdwg.mxu0
      %1260 = vmatprep.subr.mxu0 0.0
      %1261 = vmatpush1.msra.mxu0 %v1155
      %1262 = vmatprep.subr.mxu0 0.0
      %1263 = vmatpush1.msra.mxu0 %v1158
      %1264 = vmatprep.subr.mxu0 0.0
      %1265 = vmatpush1.msra.mxu0 %v1161
      %1266 = vmatprep.subr.mxu0 0.0
      %1267 = vmatpush1.msra.mxu0 %v1164
      %1268 = vmatprep.subr.mxu0 0.0
      %1269 = vmatpush1.msra.mxu0 %v1167
      %1270 = vmatprep.subr.mxu0 0.0
      %1271 = vmatpush1.msra.mxu0 0.0
      %1272 = vmatprep.subr.mxu0 0.0
      %1273 = vmatpush1.msra.mxu0 0.0
      %1274 = vmatprep.subr.mxu0 0.0
      %1275 = vmatpush1.msra.mxu0 0.0
      %1276 = vmatprep.subr.mxu0 0.0
      %1277 = vmatpush1.msra.mxu0 0.0
      %1278 = vmatprep.subr.mxu0 0.0
      %1279 = vmatpush1.msra.mxu0 0.0
      %1280 = vmatprep.subr.mxu0 0.0
      %1281 = vmatpush1.msra.mxu0 0.0
      %1282 = vmatprep.subr.mxu0 0.0
      %1283 = vmatpush1.msra.mxu0 0.0
      %1284 = vmatprep.subr.mxu0 0.0
      %1285 = vmatpush1.msra.mxu0 0.0
      %1286 = vmatprep.subr.mxu0 0.0
      %1287 = vmatpush1.msra.mxu0 0.0
      %1288 = vmatprep.subr.mxu0 0.0
      %1289 = vmatpush1.msra.mxu0 0.0
      %1290 = vmatprep.subr.mxu0 0.0
      %1291 = vmatpush1.msra.mxu0 0.0
      %1292 = vmatprep.subr.mxu0 0.0
      %1293 = vmatpush1.msra.mxu0 0.0
      %1294 = vmatprep.subr.mxu0 0.0
      %1295 = vmatpush1.msra.mxu0 0.0
      %1296 = vmatprep.subr.mxu0 0.0
      %1297 = vmatpush1.msra.mxu0 0.0
      %1298 = vmatprep.subr.mxu0 0.0
      %1299 = vmatpush1.msra.mxu0 0.0
      %1300 = vmatprep.subr.mxu0 0.0
      %1301 = vmatpush1.msra.mxu0 0.0
      %1302 = vmatprep.subr.mxu0 0.0
      %1303 = vmatpush1.msra.mxu0 0.0
      %1304 = vmatprep.subr.mxu0 0.0
      %1305 = vmatpush1.msra.mxu0 0.0
      %1306 = vmatprep.subr.mxu0 0.0
      %1307 = vmatpush1.msra.mxu0 0.0
      %1308 = vmatprep.subr.mxu0 0.0
      %1309 = vmatpush1.msra.mxu0 0.0
      %1310 = vmatprep.subr.mxu0 0.0
      %1311 = vmatpush1.msra.mxu0 0.0
      %1312 = vmatprep.subr.mxu0 0.0
      %1313 = vmatpush1.msra.mxu0 0.0
      %1314 = vmatprep.subr.mxu0 0.0
      %1315 = vmatpush1.msra.mxu0 0.0
      %1316 = vmatprep.subr.mxu0 0.0
      %1317 = vmatpush1.msra.mxu0 0.0
      %1318 = vmatprep.subr.mxu0 0.0
      %1319 = vmatpush1.msra.mxu0 0.0
      %1320 = vmatprep.subr.mxu0 0.0
      %1321 = vmatpush1.msra.mxu0 0.0
      %1322 = vmatprep.subr.mxu0 0.0
      %1323 = vmatpush1.msra.mxu0 0.0
      %1324 = vmatprep.mubr.f32.mxu0 0.0
      %1325 = vmatmul.mubr.f32.gmra.mrb[0].mxu0 %v1169
      %v1326 = vpop.f32.mrb[0].mxu0
      %v1327 = vadd.f32 0.0, %v1326
      %v1328 = vpop.f32.mrb[0].mxu0
      %1329 = vmatprep.mubr.f32.mxu0 0.0
      %1330 = vmatmul.mubr.f32.gmra.mrb[0].mxu0 %v1172
      %v1331 = vpop.f32.mrb[0].mxu0
      %v1332 = vadd.f32 0.0, %v1331
      %v1333 = vpop.f32.mrb[0].mxu0
      %1334 = vmatprep.mubr.f32.mxu0 0.0
      %1335 = vmatmul.mubr.f32.gmra.mrb[0].mxu0 %v1175
      %v1336 = vpop.f32.mrb[0].mxu0
      %v1337 = vadd.f32 0.0, %v1336
      %v1338 = vpop.f32.mrb[0].mxu0
      %1339 = vdwg.mxu0
      %v1340 = vadd.f32 %v1121, %v1244
      %v1341 = vadd.f32 %v1122, %v1246
      %v1342 = vadd.f32 %v1123, %v1327
      %v1343 = vadd.f32 %v1124, %v1250
      %v1344 = vadd.f32 %v1125, %v1252
      %v1345 = vadd.f32 %v1126, %v1332
      %v1346 = vadd.f32 %v1127, %v1256
      %v1347 = vadd.f32 %v1128, %v1258
      %v1348 = vadd.f32 %v1129, %v1337
      %vm1349 = vcmp.ge.f32.partialorder %v1340, 0.0
      %vm1350 = vcmp.ge.f32.partialorder %v1341, 0.0
      %vm1351 = vcmp.ge.f32.partialorder %v1342, 0.0
      %vm1352 = vcmp.ge.f32.partialorder %v1343, 0.0
      %vm1353 = vcmp.ge.f32.partialorder %v1344, 0.0
      %vm1354 = vcmp.ge.f32.partialorder %v1345, 0.0
      %vm1355 = vcmp.ge.f32.partialorder %v1346, 0.0
      %vm1356 = vcmp.ge.f32.partialorder %v1347, 0.0
      %vm1357 = vcmp.ge.f32.partialorder %v1348, 0.0
      %v1358 = vmul.f32 %v1340, 0.01
      %v1359 = vmul.f32 %v1341, 0.01
      %v1360 = vmul.f32 %v1342, 0.01
      %v1361 = vmul.f32 %v1343, 0.01
      %v1362 = vmul.f32 %v1344, 0.01
      %v1363 = vmul.f32 %v1345, 0.01
      %v1364 = vmul.f32 %v1346, 0.01
      %v1365 = vmul.f32 %v1347, 0.01
      %v1366 = vmul.f32 %v1348, 0.01
      %v1367 = vsel %vm1349, %v1340, %v1358
      %v1368 = vsel %vm1350, %v1341, %v1359
      %v1369 = vsel %vm1351, %v1342, %v1360
      %v1370 = vsel %vm1352, %v1343, %v1361
      %v1371 = vsel %vm1353, %v1344, %v1362
      %v1372 = vsel %vm1354, %v1345, %v1363
      %v1373 = vsel %vm1355, %v1346, %v1364
      %v1374 = vsel %vm1356, %v1347, %v1365
      %v1375 = vsel %vm1357, %v1348, %v1366
      %v1376 = vld [vmem:[%s13] sm:$0xff]
      %v1377 = vld [vmem:[%s13 + $0x8] sm:$0xff]
      %v1378 = vld [vmem:[%s13 + $0x10] sm:$0xff]
      %v1379 = vld [vmem:[%s13 + $0x18] sm:$0xff]
      %v1380 = vld [vmem:[%s13 + $0x20] sm:$0xff]
      %v1381 = vld [vmem:[%s13 + $0x28] sm:$0xff]
      %v1382 = vld [vmem:[%s13 + $0x30] sm:$0xff]
      %v1383 = vld [vmem:[%s13 + $0x38] sm:$0xff]
      %v1384 = vld [vmem:[%s13 + $0x40] sm:$0xff]
      %v1385 = vld [vmem:[%s13 + $0x48] sm:$0xff]
      %v1386 = vld [vmem:[%s13 + $0x50] sm:$0xff]
      %v1387 = vld [vmem:[%s13 + $0x58] sm:$0xff]
      %v1388 = vld [vmem:[%s13 + $0x60] sm:$0xff]
      %v1389 = vld [vmem:[%s13 + $0x68] sm:$0xff]
      %v1390 = vld [vmem:[%s13 + $0x70] sm:$0xff]
      %v1391 = vld [vmem:[%s13 + $0x78] sm:$0xff]
      %v1392 = vld [vmem:[%s13 + $0x80] sm:$0xff]
      %v1393 = vld [vmem:[%s13 + $0x88] sm:$0xff]
      %v1394 = vld [vmem:[%s13 + $0x90] sm:$0xff]
      %v1395 = vld [vmem:[%s13 + $0x98] sm:$0xff]
      %v1396 = vld [vmem:[%s13 + $0xa0] sm:$0xff]
      %v1397 = vld [vmem:[%s13 + $0xa8] sm:$0xff]
      %v1398 = vld [vmem:[%s13 + $0xb0] sm:$0xff]
      %v1399 = vld [vmem:[%s13 + $0xb8] sm:$0xff]
      %v1400 = vld [vmem:[%s13 + $0xc0] sm:$0xff]
      %v1401 = vld [vmem:[%s13 + $0xc8] sm:$0xff]
      %v1402 = vld [vmem:[%s13 + $0xd0] sm:$0xff]
      %v1403 = vld [vmem:[%s13 + $0xd8] sm:$0xff]
      %v1404 = vld [vmem:[%s13 + $0xe0] sm:$0xff]
      %v1405 = vld [vmem:[%s13 + $0xe8] sm:$0xff]
      %v1406 = vld [vmem:[%s13 + $0xf0] sm:$0xff]
      %v1407 = vld [vmem:[%s13 + $0xf8] sm:$0xff]
      %v1408 = vld [vmem:[%s13 + $0x100] sm:$0xff]
      %v1409 = vld [vmem:[%s13 + $0x108] sm:$0xff]
      %v1410 = vld [vmem:[%s13 + $0x110] sm:$0xff]
      %v1411 = vld [vmem:[%s13 + $0x118] sm:$0xff]
      %v1412 = vld [vmem:[%s13 + $0x120] sm:$0xff]
      %v1413 = vld [vmem:[%s13 + $0x128] sm:$0xff]
      %v1414 = vld [vmem:[%s13 + $0x130] sm:$0xff]
      %v1415 = vld [vmem:[%s13 + $0x138] sm:$0xff]
      %v1416 = vld [vmem:[%s13 + $0x140] sm:$0xff]
      %v1417 = vld [vmem:[%s13 + $0x148] sm:$0xff]
      %v1418 = vld [vmem:[%s13 + $0x150] sm:$0xff]
      %v1419 = vld [vmem:[%s13 + $0x158] sm:$0xff]
      %v1420 = vld [vmem:[%s13 + $0x160] sm:$0xff]
      %v1421 = vld [vmem:[%s13 + $0x168] sm:$0xff]
      %v1422 = vld [vmem:[%s13 + $0x170] sm:$0xff]
      %v1423 = vld [vmem:[%s13 + $0x178] sm:$0xff]
      %v1424 = vld [vmem:[%s13 + $0x180] sm:$0xff]
      %v1425 = vld [vmem:[%s13 + $0x188] sm:$0xff]
      %v1426 = vld [vmem:[%s13 + $0x190] sm:$0xff]
      %v1427 = vld [vmem:[%s13 + $0x198] sm:$0xff]
      %v1428 = vld [vmem:[%s13 + $0x1a0] sm:$0xff]
      %v1429 = vld [vmem:[%s13 + $0x1a8] sm:$0xff]
      %v1430 = vld [vmem:[%s13 + $0x1b0] sm:$0xff]
      %v1431 = vld [vmem:[%s13 + $0x1b8] sm:$0xff]
      %v1432 = vld [vmem:[%s13 + $0x1c0] sm:$0xff]
      %v1433 = vld [vmem:[%s13 + $0x1c8] sm:$0xff]
      %v1434 = vld [vmem:[%s13 + $0x1d0] sm:$0xff]
      %v1435 = vld [vmem:[%s13 + $0x1d8] sm:$0xff]
      %v1436 = vld [vmem:[%s13 + $0x1e0] sm:$0xff]
      %v1437 = vld [vmem:[%s13 + $0x1e8] sm:$0xff]
      %v1438 = vld [vmem:[%s13 + $0x1f0] sm:$0xff]
      %v1439 = vld [vmem:[%s13 + $0x1f8] sm:$0xff]
      %v1440 = vld [vmem:[%s13 + $0x200] sm:$0xff]
      %v1441 = vld [vmem:[%s13 + $0x208] sm:$0xff]
      %v1442 = vld [vmem:[%s13 + $0x210] sm:$0xff]
      %v1443 = vld [vmem:[%s13 + $0x218] sm:$0xff]
      %v1444 = vld [vmem:[%s13 + $0x220] sm:$0xff]
      %v1445 = vld [vmem:[%s13 + $0x228] sm:$0xff]
      %v1446 = vld [vmem:[%s13 + $0x230] sm:$0xff]
      %v1447 = vld [vmem:[%s13 + $0x238] sm:$0xff]
      %v1448 = vld [vmem:[%s13 + $0x240] sm:$0xff]
      %v1449 = vld [vmem:[%s13 + $0x248] sm:$0xff]
      %v1450 = vld [vmem:[%s13 + $0x250] sm:$0xff]
      %v1451 = vld [vmem:[%s13 + $0x258] sm:$0xff]
      %v1452 = vld [vmem:[%s13 + $0x260] sm:$0xff]
      %v1453 = vld [vmem:[%s13 + $0x268] sm:$0xff]
      %v1454 = vld [vmem:[%s13 + $0x270] sm:$0xff]
      %v1455 = vld [vmem:[%s13 + $0x278] sm:$0xff]
      %v1456 = vld [vmem:[%s13 + $0x280] sm:$0xff]
      %v1457 = vld [vmem:[%s13 + $0x288] sm:$0xff]
      %v1458 = vld [vmem:[%s13 + $0x290] sm:$0xff]
      %v1459 = vld [vmem:[%s13 + $0x298] sm:$0xff]
      %v1460 = vld [vmem:[%s13 + $0x2a0] sm:$0xff]
      %v1461 = vld [vmem:[%s13 + $0x2a8] sm:$0xff]
      %v1462 = vld [vmem:[%s13 + $0x2b0] sm:$0xff]
      %v1463 = vld [vmem:[%s13 + $0x2b8] sm:$0xff]
      %v1464 = vld [vmem:[%s13 + $0x2c0] sm:$0xff]
      %v1465 = vld [vmem:[%s13 + $0x2c8] sm:$0xff]
      %v1466 = vld [vmem:[%s13 + $0x2d0] sm:$0xff]
      %v1467 = vld [vmem:[%s13 + $0x2d8] sm:$0xff]
      %v1468 = vld [vmem:[%s13 + $0x2e0] sm:$0xff]
      %v1469 = vld [vmem:[%s13 + $0x2e8] sm:$0xff]
      %v1470 = vld [vmem:[%s13 + $0x2f0] sm:$0xff]
      %v1471 = vld [vmem:[%s13 + $0x2f8] sm:$0xff]
      %v1472 = vld [vmem:[%s13 + $0x300] sm:$0xff]
      %v1473 = vld [vmem:[%s13 + $0x308] sm:$0xff]
      %v1474 = vld [vmem:[%s13 + $0x310] sm:$0xff]
      %v1475 = vld [vmem:[%s13 + $0x318] sm:$0xff]
      %v1476 = vld [vmem:[%s13 + $0x320] sm:$0xff]
      %v1477 = vld [vmem:[%s13 + $0x328] sm:$0xff]
      %v1478 = vld [vmem:[%s13 + $0x330] sm:$0xff]
      %v1479 = vld [vmem:[%s13 + $0x338] sm:$0xff]
      %v1480 = vld [vmem:[%s13 + $0x340] sm:$0xff]
      %v1481 = vld [vmem:[%s13 + $0x348] sm:$0xff]
      %v1482 = vld [vmem:[%s13 + $0x350] sm:$0xff]
      %v1483 = vld [vmem:[%s13 + $0x358] sm:$0xff]
      %v1484 = vld [vmem:[%s13 + $0x360] sm:$0xff]
      %v1485 = vld [vmem:[%s13 + $0x368] sm:$0xff]
      %v1486 = vld [vmem:[%s13 + $0x370] sm:$0xff]
      %v1487 = vld [vmem:[%s13 + $0x378] sm:$0xff]
      %v1488 = vld [vmem:[%s13 + $0x380] sm:$0xff]
      %v1489 = vld [vmem:[%s13 + $0x388] sm:$0xff]
      %v1490 = vld [vmem:[%s13 + $0x390] sm:$0xff]
      %v1491 = vld [vmem:[%s13 + $0x398] sm:$0xff]
      %v1492 = vld [vmem:[%s13 + $0x3a0] sm:$0xff]
      %v1493 = vld [vmem:[%s13 + $0x3a8] sm:$0xff]
      %v1494 = vld [vmem:[%s13 + $0x3b0] sm:$0xff]
      %v1495 = vld [vmem:[%s13 + $0x3b8] sm:$0xff]
      %v1496 = vld [vmem:[%s13 + $0x3c0] sm:$0xff]
      %v1497 = vld [vmem:[%s13 + $0x3c8] sm:$0xff]
      %v1498 = vld [vmem:[%s13 + $0x3d0] sm:$0xff]
      %v1499 = vld [vmem:[%s13 + $0x3d8] sm:$0xff]
      %v1500 = vld [vmem:[%s13 + $0x3e0] sm:$0xff]
      %v1501 = vld [vmem:[%s13 + $0x3e8] sm:$0xff]
      %v1502 = vld [vmem:[%s13 + $0x3f0] sm:$0xff]
      %v1503 = vld [vmem:[%s13 + $0x3f8] sm:$0xff]
      %v1504 = vld [vmem:[%s13 + $0x400] sm:$0xff]
      %v1505 = vld [vmem:[%s13 + $0x408] sm:$0xff]
      %v1506 = vld [vmem:[%s13 + $0x410] sm:$0xff]
      %v1507 = vld [vmem:[%s13 + $0x418] sm:$0xff]
      %v1508 = vld [vmem:[%s13 + $0x420] sm:$0xff]
      %v1509 = vld [vmem:[%s13 + $0x428] sm:$0xff]
      %v1510 = vld [vmem:[%s13 + $0x430] sm:$0xff]
      %v1511 = vld [vmem:[%s13 + $0x438] sm:$0xff]
      %v1512 = vld [vmem:[%s13 + $0x440] sm:$0xff]
      %v1513 = vld [vmem:[%s13 + $0x448] sm:$0xff]
      %v1514 = vld [vmem:[%s13 + $0x450] sm:$0xff]
      %v1515 = vld [vmem:[%s13 + $0x458] sm:$0xff]
      %v1516 = vld [vmem:[%s13 + $0x460] sm:$0xff]
      %v1517 = vld [vmem:[%s13 + $0x468] sm:$0xff]
      %v1518 = vld [vmem:[%s13 + $0x470] sm:$0xff]
      %v1519 = vld [vmem:[%s13 + $0x478] sm:$0xff]
      %v1520 = vld [vmem:[%s13 + $0x480] sm:$0xff]
      %v1521 = vld [vmem:[%s13 + $0x488] sm:$0xff]
      %v1522 = vld [vmem:[%s13 + $0x490] sm:$0xff]
      %v1523 = vld [vmem:[%s13 + $0x498] sm:$0xff]
      %v1524 = vld [vmem:[%s13 + $0x4a0] sm:$0xff]
      %v1525 = vld [vmem:[%s13 + $0x4a8] sm:$0xff]
      %v1526 = vld [vmem:[%s13 + $0x4b0] sm:$0xff]
      %v1527 = vld [vmem:[%s13 + $0x4b8] sm:$0xff]
      %v1528 = vld [vmem:[%s13 + $0x4c0] sm:$0xff]
      %v1529 = vld [vmem:[%s13 + $0x4c8] sm:$0xff]
      %v1530 = vld [vmem:[%s13 + $0x4d0] sm:$0xff]
      %v1531 = vld [vmem:[%s13 + $0x4d8] sm:$0xff]
      %v1532 = vld [vmem:[%s13 + $0x4e0] sm:$0xff]
      %v1533 = vld [vmem:[%s13 + $0x4e8] sm:$0xff]
      %v1534 = vld [vmem:[%s13 + $0x4f0] sm:$0xff]
      %v1535 = vld [vmem:[%s13 + $0x4f8] sm:$0xff]
      %v1536 = vld [vmem:[%s13 + $0x500] sm:$0xff]
      %v1537 = vld [vmem:[%s13 + $0x508] sm:$0xff]
      %v1538 = vld [vmem:[%s13 + $0x510] sm:$0xff]
      %v1539 = vld [vmem:[%s13 + $0x518] sm:$0xff]
      %v1540 = vld [vmem:[%s13 + $0x520] sm:$0xff]
      %v1541 = vld [vmem:[%s13 + $0x528] sm:$0xff]
      %v1542 = vld [vmem:[%s13 + $0x530] sm:$0xff]
      %v1543 = vld [vmem:[%s13 + $0x538] sm:$0xff]
      %v1544 = vld [vmem:[%s13 + $0x540] sm:$0xff]
      %v1545 = vld [vmem:[%s13 + $0x548] sm:$0xff]
      %v1546 = vld [vmem:[%s13 + $0x550] sm:$0xff]
      %v1547 = vld [vmem:[%s13 + $0x558] sm:$0xff]
      %v1548 = vld [vmem:[%s13 + $0x560] sm:$0xff]
      %v1549 = vld [vmem:[%s13 + $0x568] sm:$0xff]
      %v1550 = vld [vmem:[%s13 + $0x570] sm:$0xff]
      %v1551 = vld [vmem:[%s13 + $0x578] sm:$0xff]
      %v1552 = vld [vmem:[%s13 + $0x580] sm:$0xff]
      %v1553 = vld [vmem:[%s13 + $0x588] sm:$0xff]
      %v1554 = vld [vmem:[%s13 + $0x590] sm:$0xff]
      %v1555 = vld [vmem:[%s13 + $0x598] sm:$0xff]
      %v1556 = vld [vmem:[%s13 + $0x5a0] sm:$0xff]
      %v1557 = vld [vmem:[%s13 + $0x5a8] sm:$0xff]
      %v1558 = vld [vmem:[%s13 + $0x5b0] sm:$0xff]
      %v1559 = vld [vmem:[%s13 + $0x5b8] sm:$0xff]
      %v1560 = vld [vmem:[%s13 + $0x5c0] sm:$0xff]
      %v1561 = vld [vmem:[%s13 + $0x5c8] sm:$0xff]
      %v1562 = vld [vmem:[%s13 + $0x5d0] sm:$0xff]
      %v1563 = vld [vmem:[%s13 + $0x5d8] sm:$0xff]
      %v1564 = vld [vmem:[%s13 + $0x5e0] sm:$0xff]
      %v1565 = vld [vmem:[%s13 + $0x5e8] sm:$0xff]
      %v1566 = vld [vmem:[%s13 + $0x5f0] sm:$0xff]
      %v1567 = vld [vmem:[%s13 + $0x5f8] sm:$0xff]
      %v1568 = vld [vmem:[%s13 + $0x600] sm:$0xff]
      %v1569 = vld [vmem:[%s13 + $0x608] sm:$0xff]
      %v1570 = vld [vmem:[%s13 + $0x610] sm:$0xff]
      %v1571 = vld [vmem:[%s13 + $0x618] sm:$0xff]
      %v1572 = vld [vmem:[%s13 + $0x620] sm:$0xff]
      %v1573 = vld [vmem:[%s13 + $0x628] sm:$0xff]
      %v1574 = vld [vmem:[%s13 + $0x630] sm:$0xff]
      %v1575 = vld [vmem:[%s13 + $0x638] sm:$0xff]
      %v1576 = vld [vmem:[%s14] sm:$0x1f]
      %v1578 = vlaneseq
      %v1579 = vshrl.u32 %v1578, 7
      %v1580 = vsub.s32 0, %v1579
      %v1581 = vrot.slane %v1576, %v1580
      %v1582 = vlaneseq
      %v1583 = vshrl.u32 %v1582, 7
      %v1584 = vsub.s32 1, %v1583
      %v1585 = vrot.slane %v1576, %v1584
      %v1586 = vlaneseq
      %v1587 = vshrl.u32 %v1586, 7
      %v1588 = vsub.s32 2, %v1587
      %v1589 = vrot.slane %v1576, %v1588
      %v1590 = vlaneseq
      %v1591 = vshrl.u32 %v1590, 7
      %v1592 = vsub.s32 3, %v1591
      %v1593 = vrot.slane %v1576, %v1592
      %v1594 = vlaneseq
      %v1595 = vshrl.u32 %v1594, 7
      %v1596 = vsub.s32 4, %v1595
      %v1597 = vrot.slane %v1576, %v1596
      %vm1603 = vcmask 523264
      %v1605 = vsel %vm1603, %v1369, 0
      %v1608 = vsel %vm1603, %v1372, 0
      %v1611 = vsel %vm1603, %v1375, 0
      %1613 = vmatprep.subr.mxu0 %v1377
      %1614 = vmatpush1.msra.mxu0 %v1376
      %1615 = vmatprep.subr.mxu0 %v1382
      %1616 = vmatpush1.msra.mxu0 %v1381
      %1617 = vmatprep.subr.mxu0 %v1387
      %1618 = vmatpush1.msra.mxu0 %v1386
      %1619 = vmatprep.subr.mxu0 %v1392
      %1620 = vmatpush1.msra.mxu0 %v1391
      %1621 = vmatprep.subr.mxu0 %v1397
      %1622 = vmatpush1.msra.mxu0 %v1396
      %1623 = vmatprep.subr.mxu0 %v1402
      %1624 = vmatpush1.msra.mxu0 %v1401
      %1625 = vmatprep.subr.mxu0 %v1407
      %1626 = vmatpush1.msra.mxu0 %v1406
      %1627 = vmatprep.subr.mxu0 %v1412
      %1628 = vmatpush1.msra.mxu0 %v1411
      %1629 = vmatprep.subr.mxu0 %v1417
      %1630 = vmatpush1.msra.mxu0 %v1416
      %1631 = vmatprep.subr.mxu0 %v1422
      %1632 = vmatpush1.msra.mxu0 %v1421
      %1633 = vmatprep.subr.mxu0 %v1427
      %1634 = vmatpush1.msra.mxu0 %v1426
      %1635 = vmatprep.subr.mxu0 %v1432
      %1636 = vmatpush1.msra.mxu0 %v1431
      %1637 = vmatprep.subr.mxu0 %v1437
      %1638 = vmatpush1.msra.mxu0 %v1436
      %1639 = vmatprep.subr.mxu0 %v1442
      %1640 = vmatpush1.msra.mxu0 %v1441
      %1641 = vmatprep.subr.mxu0 %v1447
      %1642 = vmatpush1.msra.mxu0 %v1446
      %1643 = vmatprep.subr.mxu0 %v1452
      %1644 = vmatpush1.msra.mxu0 %v1451
      %1645 = vmatprep.subr.mxu0 %v1457
      %1646 = vmatpush1.msra.mxu0 %v1456
      %1647 = vmatprep.subr.mxu0 %v1462
      %1648 = vmatpush1.msra.mxu0 %v1461
      %1649 = vmatprep.subr.mxu0 %v1467
      %1650 = vmatpush1.msra.mxu0 %v1466
      %1651 = vmatprep.subr.mxu0 %v1472
      %1652 = vmatpush1.msra.mxu0 %v1471
      %1653 = vmatprep.subr.mxu0 %v1477
      %1654 = vmatpush1.msra.mxu0 %v1476
      %1655 = vmatprep.subr.mxu0 %v1482
      %1656 = vmatpush1.msra.mxu0 %v1481
      %1657 = vmatprep.subr.mxu0 %v1487
      %1658 = vmatpush1.msra.mxu0 %v1486
      %1659 = vmatprep.subr.mxu0 %v1492
      %1660 = vmatpush1.msra.mxu0 %v1491
      %1661 = vmatprep.subr.mxu0 %v1497
      %1662 = vmatpush1.msra.mxu0 %v1496
      %1663 = vmatprep.subr.mxu0 %v1502
      %1664 = vmatpush1.msra.mxu0 %v1501
      %1665 = vmatprep.subr.mxu0 %v1507
      %1666 = vmatpush1.msra.mxu0 %v1506
      %1667 = vmatprep.subr.mxu0 %v1512
      %1668 = vmatpush1.msra.mxu0 %v1511
      %1669 = vmatprep.subr.mxu0 %v1517
      %1670 = vmatpush1.msra.mxu0 %v1516
      %1671 = vmatprep.subr.mxu0 %v1522
      %1672 = vmatpush1.msra.mxu0 %v1521
      %1673 = vmatprep.subr.mxu0 %v1527
      %1674 = vmatpush1.msra.mxu0 %v1526
      %1675 = vmatprep.subr.mxu0 %v1532
      %1676 = vmatpush1.msra.mxu0 %v1531
      %1677 = vmatprep.mubr.f32.mxu0 %v1368
      %1678 = vmatmul.mubr.f32.gmra.mrb[0].mxu0 %v1367
      %v1679 = vpop.f32.mrb[0].mxu0
      %v1680 = vadd.f32 %v1581, %v1679
      %v1681 = vpop.f32.mrb[0].mxu0
      %v1682 = vadd.f32 %v1585, %v1681
      %1683 = vmatprep.mubr.f32.mxu0 %v1371
      %1684 = vmatmul.mubr.f32.gmra.mrb[0].mxu0 %v1370
      %v1685 = vpop.f32.mrb[0].mxu0
      %v1686 = vadd.f32 %v1581, %v1685
      %v1687 = vpop.f32.mrb[0].mxu0
      %v1688 = vadd.f32 %v1585, %v1687
      %1689 = vmatprep.mubr.f32.mxu0 %v1374
      %1690 = vmatmul.mubr.f32.gmra.mrb[0].mxu0 %v1373
      %v1691 = vpop.f32.mrb[0].mxu0
      %v1692 = vadd.f32 %v1581, %v1691
      %v1693 = vpop.f32.mrb[0].mxu0
      %v1694 = vadd.f32 %v1585, %v1693
      %1695 = vdwg.mxu0
      %1696 = vmatprep.subr.mxu0 %v1537
      %1697 = vmatpush1.msra.mxu0 %v1536
      %1698 = vmatprep.subr.mxu0 %v1542
      %1699 = vmatpush1.msra.mxu0 %v1541
      %1700 = vmatprep.subr.mxu0 %v1547
      %1701 = vmatpush1.msra.mxu0 %v1546
      %1702 = vmatprep.subr.mxu0 %v1552
      %1703 = vmatpush1.msra.mxu0 %v1551
      %1704 = vmatprep.subr.mxu0 %v1557
      %1705 = vmatpush1.msra.mxu0 %v1556
      %1706 = vmatprep.subr.mxu0 %v1562
      %1707 = vmatpush1.msra.mxu0 %v1561
      %1708 = vmatprep.subr.mxu0 %v1567
      %1709 = vmatpush1.msra.mxu0 %v1566
      %1710 = vmatprep.subr.mxu0 %v1572
      %1711 = vmatpush1.msra.mxu0 %v1571
      %1712 = vmatprep.subr.mxu0 0.0
      %1713 = vmatpush1.msra.mxu0 0.0
      %1714 = vmatprep.subr.mxu0 0.0
      %1715 = vmatpush1.msra.mxu0 0.0
      %1716 = vmatprep.subr.mxu0 0.0
      %1717 = vmatpush1.msra.mxu0 0.0
      %1718 = vmatprep.subr.mxu0 0.0
      %1719 = vmatpush1.msra.mxu0 0.0
      %1720 = vmatprep.subr.mxu0 0.0
      %1721 = vmatpush1.msra.mxu0 0.0
      %1722 = vmatprep.subr.mxu0 0.0
      %1723 = vmatpush1.msra.mxu0 0.0
      %1724 = vmatprep.subr.mxu0 0.0
      %1725 = vmatpush1.msra.mxu0 0.0
      %1726 = vmatprep.subr.mxu0 0.0
      %1727 = vmatpush1.msra.mxu0 0.0
      %1728 = vmatprep.subr.mxu0 0.0
      %1729 = vmatpush1.msra.mxu0 0.0
      %1730 = vmatprep.subr.mxu0 0.0
      %1731 = vmatpush1.msra.mxu0 0.0
      %1732 = vmatprep.subr.mxu0 0.0
      %1733 = vmatpush1.msra.mxu0 0.0
      %1734 = vmatprep.subr.mxu0 0.0
      %1735 = vmatpush1.msra.mxu0 0.0
      %1736 = vmatprep.subr.mxu0 0.0
      %1737 = vmatpush1.msra.mxu0 0.0
      %1738 = vmatprep.subr.mxu0 0.0
      %1739 = vmatpush1.msra.mxu0 0.0
      %1740 = vmatprep.subr.mxu0 0.0
      %1741 = vmatpush1.msra.mxu0 0.0
      %1742 = vmatprep.subr.mxu0 0.0
      %1743 = vmatpush1.msra.mxu0 0.0
      %1744 = vmatprep.subr.mxu0 0.0
      %1745 = vmatpush1.msra.mxu0 0.0
      %1746 = vmatprep.subr.mxu0 0.0
      %1747 = vmatpush1.msra.mxu0 0.0
      %1748 = vmatprep.subr.mxu0 0.0
      %1749 = vmatpush1.msra.mxu0 0.0
      %1750 = vmatprep.subr.mxu0 0.0
      %1751 = vmatpush1.msra.mxu0 0.0
      %1752 = vmatprep.subr.mxu0 0.0
      %1753 = vmatpush1.msra.mxu0 0.0
      %1754 = vmatprep.subr.mxu0 0.0
      %1755 = vmatpush1.msra.mxu0 0.0
      %1756 = vmatprep.subr.mxu0 0.0
      %1757 = vmatpush1.msra.mxu0 0.0
      %1758 = vmatprep.subr.mxu0 0.0
      %1759 = vmatpush1.msra.mxu0 0.0
      %1760 = vmatprep.mubr.f32.mxu0 0.0
      %1761 = vmatmul.mubr.f32.gmra.mrb[0].mxu0 %v1605
      %v1762 = vpop.f32.mrb[0].mxu0
      %v1763 = vadd.f32 %v1680, %v1762
      %v1764 = vpop.f32.mrb[0].mxu0
      %v1765 = vadd.f32 %v1682, %v1764
      %1766 = vmatprep.mubr.f32.mxu0 0.0
      %1767 = vmatmul.mubr.f32.gmra.mrb[0].mxu0 %v1608
      %v1768 = vpop.f32.mrb[0].mxu0
      %v1769 = vadd.f32 %v1686, %v1768
      %v1770 = vpop.f32.mrb[0].mxu0
      %v1771 = vadd.f32 %v1688, %v1770
      %1772 = vmatprep.mubr.f32.mxu0 0.0
      %1773 = vmatmul.mubr.f32.gmra.mrb[0].mxu0 %v1611
      %v1774 = vpop.f32.mrb[0].mxu0
      %v1775 = vadd.f32 %v1692, %v1774
      %v1776 = vpop.f32.mrb[0].mxu0
      %v1777 = vadd.f32 %v1694, %v1776
      %1778 = vdwg.mxu0
      %1779 = vmatprep.subr.mxu0 %v1379
      %1780 = vmatpush1.msra.mxu0 %v1378
      %1781 = vmatprep.subr.mxu0 %v1384
      %1782 = vmatpush1.msra.mxu0 %v1383
      %1783 = vmatprep.subr.mxu0 %v1389
      %1784 = vmatpush1.msra.mxu0 %v1388
      %1785 = vmatprep.subr.mxu0 %v1394
      %1786 = vmatpush1.msra.mxu0 %v1393
      %1787 = vmatprep.subr.mxu0 %v1399
      %1788 = vmatpush1.msra.mxu0 %v1398
      %1789 = vmatprep.subr.mxu0 %v1404
      %1790 = vmatpush1.msra.mxu0 %v1403
      %1791 = vmatprep.subr.mxu0 %v1409
      %1792 = vmatpush1.msra.mxu0 %v1408
      %1793 = vmatprep.subr.mxu0 %v1414
      %1794 = vmatpush1.msra.mxu0 %v1413
      %1795 = vmatprep.subr.mxu0 %v1419
      %1796 = vmatpush1.msra.mxu0 %v1418
      %1797 = vmatprep.subr.mxu0 %v1424
      %1798 = vmatpush1.msra.mxu0 %v1423
      %1799 = vmatprep.subr.mxu0 %v1429
      %1800 = vmatpush1.msra.mxu0 %v1428
      %1801 = vmatprep.subr.mxu0 %v1434
      %1802 = vmatpush1.msra.mxu0 %v1433
      %1803 = vmatprep.subr.mxu0 %v1439
      %1804 = vmatpush1.msra.mxu0 %v1438
      %1805 = vmatprep.subr.mxu0 %v1444
      %1806 = vmatpush1.msra.mxu0 %v1443
      %1807 = vmatprep.subr.mxu0 %v1449
      %1808 = vmatpush1.msra.mxu0 %v1448
      %1809 = vmatprep.subr.mxu0 %v1454
      %1810 = vmatpush1.msra.mxu0 %v1453
      %1811 = vmatprep.subr.mxu0 %v1459
      %1812 = vmatpush1.msra.mxu0 %v1458
      %1813 = vmatprep.subr.mxu0 %v1464
      %1814 = vmatpush1.msra.mxu0 %v1463
      %1815 = vmatprep.subr.mxu0 %v1469
      %1816 = vmatpush1.msra.mxu0 %v1468
      %1817 = vmatprep.subr.mxu0 %v1474
      %1818 = vmatpush1.msra.mxu0 %v1473
      %1819 = vmatprep.subr.mxu0 %v1479
      %1820 = vmatpush1.msra.mxu0 %v1478
      %1821 = vmatprep.subr.mxu0 %v1484
      %1822 = vmatpush1.msra.mxu0 %v1483
      %1823 = vmatprep.subr.mxu0 %v1489
      %1824 = vmatpush1.msra.mxu0 %v1488
      %1825 = vmatprep.subr.mxu0 %v1494
      %1826 = vmatpush1.msra.mxu0 %v1493
      %1827 = vmatprep.subr.mxu0 %v1499
      %1828 = vmatpush1.msra.mxu0 %v1498
      %1829 = vmatprep.subr.mxu0 %v1504
      %1830 = vmatpush1.msra.mxu0 %v1503
      %1831 = vmatprep.subr.mxu0 %v1509
      %1832 = vmatpush1.msra.mxu0 %v1508
      %1833 = vmatprep.subr.mxu0 %v1514
      %1834 = vmatpush1.msra.mxu0 %v1513
      %1835 = vmatprep.subr.mxu0 %v1519
      %1836 = vmatpush1.msra.mxu0 %v1518
      %1837 = vmatprep.subr.mxu0 %v1524
      %1838 = vmatpush1.msra.mxu0 %v1523
      %1839 = vmatprep.subr.mxu0 %v1529
      %1840 = vmatpush1.msra.mxu0 %v1528
      %1841 = vmatprep.subr.mxu0 %v1534
      %1842 = vmatpush1.msra.mxu0 %v1533
      %1843 = vmatprep.mubr.f32.mxu0 %v1368
      %1844 = vmatmul.mubr.f32.gmra.mrb[0].mxu0 %v1367
      %v1845 = vpop.f32.mrb[0].mxu0
      %v1846 = vadd.f32 %v1589, %v1845
      %v1847 = vpop.f32.mrb[0].mxu0
      %v1848 = vadd.f32 %v1593, %v1847
      %1849 = vmatprep.mubr.f32.mxu0 %v1371
      %1850 = vmatmul.mubr.f32.gmra.mrb[0].mxu0 %v1370
      %v1851 = vpop.f32.mrb[0].mxu0
      %v1852 = vadd.f32 %v1589, %v1851
      %v1853 = vpop.f32.mrb[0].mxu0
      %v1854 = vadd.f32 %v1593, %v1853
      %1855 = vmatprep.mubr.f32.mxu0 %v1374
      %1856 = vmatmul.mubr.f32.gmra.mrb[0].mxu0 %v1373
      %v1857 = vpop.f32.mrb[0].mxu0
      %v1858 = vadd.f32 %v1589, %v1857
      %v1859 = vpop.f32.mrb[0].mxu0
      %v1860 = vadd.f32 %v1593, %v1859
      %1861 = vdwg.mxu0
      %1862 = vmatprep.subr.mxu0 %v1539
      %1863 = vmatpush1.msra.mxu0 %v1538
      %1864 = vmatprep.subr.mxu0 %v1544
      %1865 = vmatpush1.msra.mxu0 %v1543
      %1866 = vmatprep.subr.mxu0 %v1549
      %1867 = vmatpush1.msra.mxu0 %v1548
      %1868 = vmatprep.subr.mxu0 %v1554
      %1869 = vmatpush1.msra.mxu0 %v1553
      %1870 = vmatprep.subr.mxu0 %v1559
      %1871 = vmatpush1.msra.mxu0 %v1558
      %1872 = vmatprep.subr.mxu0 %v1564
      %1873 = vmatpush1.msra.mxu0 %v1563
      %1874 = vmatprep.subr.mxu0 %v1569
      %1875 = vmatpush1.msra.mxu0 %v1568
      %1876 = vmatprep.subr.mxu0 %v1574
      %1877 = vmatpush1.msra.mxu0 %v1573
      %1878 = vmatprep.subr.mxu0 0.0
      %1879 = vmatpush1.msra.mxu0 0.0
      %1880 = vmatprep.subr.mxu0 0.0
      %1881 = vmatpush1.msra.mxu0 0.0
      %1882 = vmatprep.subr.mxu0 0.0
      %1883 = vmatpush1.msra.mxu0 0.0
      %1884 = vmatprep.subr.mxu0 0.0
      %1885 = vmatpush1.msra.mxu0 0.0
      %1886 = vmatprep.subr.mxu0 0.0
      %1887 = vmatpush1.msra.mxu0 0.0
      %1888 = vmatprep.subr.mxu0 0.0
      %1889 = vmatpush1.msra.mxu0 0.0
      %1890 = vmatprep.subr.mxu0 0.0
      %1891 = vmatpush1.msra.mxu0 0.0
      %1892 = vmatprep.subr.mxu0 0.0
      %1893 = vmatpush1.msra.mxu0 0.0
      %1894 = vmatprep.subr.mxu0 0.0
      %1895 = vmatpush1.msra.mxu0 0.0
      %1896 = vmatprep.subr.mxu0 0.0
      %1897 = vmatpush1.msra.mxu0 0.0
      %1898 = vmatprep.subr.mxu0 0.0
      %1899 = vmatpush1.msra.mxu0 0.0
      %1900 = vmatprep.subr.mxu0 0.0
      %1901 = vmatpush1.msra.mxu0 0.0
      %1902 = vmatprep.subr.mxu0 0.0
      %1903 = vmatpush1.msra.mxu0 0.0
      %1904 = vmatprep.subr.mxu0 0.0
      %1905 = vmatpush1.msra.mxu0 0.0
      %1906 = vmatprep.subr.mxu0 0.0
      %1907 = vmatpush1.msra.mxu0 0.0
      %1908 = vmatprep.subr.mxu0 0.0
      %1909 = vmatpush1.msra.mxu0 0.0
      %1910 = vmatprep.subr.mxu0 0.0
      %1911 = vmatpush1.msra.mxu0 0.0
      %1912 = vmatprep.subr.mxu0 0.0
      %1913 = vmatpush1.msra.mxu0 0.0
      %1914 = vmatprep.subr.mxu0 0.0
      %1915 = vmatpush1.msra.mxu0 0.0
      %1916 = vmatprep.subr.mxu0 0.0
      %1917 = vmatpush1.msra.mxu0 0.0
      %1918 = vmatprep.subr.mxu0 0.0
      %1919 = vmatpush1.msra.mxu0 0.0
      %1920 = vmatprep.subr.mxu0 0.0
      %1921 = vmatpush1.msra.mxu0 0.0
      %1922 = vmatprep.subr.mxu0 0.0
      %1923 = vmatpush1.msra.mxu0 0.0
      %1924 = vmatprep.subr.mxu0 0.0
      %1925 = vmatpush1.msra.mxu0 0.0
      %1926 = vmatprep.mubr.f32.mxu0 0.0
      %1927 = vmatmul.mubr.f32.gmra.mrb[0].mxu0 %v1605
      %v1928 = vpop.f32.mrb[0].mxu0
      %v1929 = vadd.f32 %v1846, %v1928
      %v1930 = vpop.f32.mrb[0].mxu0
      %v1931 = vadd.f32 %v1848, %v1930
      %1932 = vmatprep.mubr.f32.mxu0 0.0
      %1933 = vmatmul.mubr.f32.gmra.mrb[0].mxu0 %v1608
      %v1934 = vpop.f32.mrb[0].mxu0
      %v1935 = vadd.f32 %v1852, %v1934
      %v1936 = vpop.f32.mrb[0].mxu0
      %v1937 = vadd.f32 %v1854, %v1936
      %1938 = vmatprep.mubr.f32.mxu0 0.0
      %1939 = vmatmul.mubr.f32.gmra.mrb[0].mxu0 %v1611
      %v1940 = vpop.f32.mrb[0].mxu0
      %v1941 = vadd.f32 %v1858, %v1940
      %v1942 = vpop.f32.mrb[0].mxu0
      %v1943 = vadd.f32 %v1860, %v1942
      %1944 = vdwg.mxu0
      %1945 = vmatprep.subr.mxu0 0.0
      %1946 = vmatpush1.msra.mxu0 %v1380
      %1947 = vmatprep.subr.mxu0 0.0
      %1948 = vmatpush1.msra.mxu0 %v1385
      %1949 = vmatprep.subr.mxu0 0.0
      %1950 = vmatpush1.msra.mxu0 %v1390
      %1951 = vmatprep.subr.mxu0 0.0
      %1952 = vmatpush1.msra.mxu0 %v1395
      %1953 = vmatprep.subr.mxu0 0.0
      %1954 = vmatpush1.msra.mxu0 %v1400
      %1955 = vmatprep.subr.mxu0 0.0
      %1956 = vmatpush1.msra.mxu0 %v1405
      %1957 = vmatprep.subr.mxu0 0.0
      %1958 = vmatpush1.msra.mxu0 %v1410
      %1959 = vmatprep.subr.mxu0 0.0
      %1960 = vmatpush1.msra.mxu0 %v1415
      %1961 = vmatprep.subr.mxu0 0.0
      %1962 = vmatpush1.msra.mxu0 %v1420
      %1963 = vmatprep.subr.mxu0 0.0
      %1964 = vmatpush1.msra.mxu0 %v1425
      %1965 = vmatprep.subr.mxu0 0.0
      %1966 = vmatpush1.msra.mxu0 %v1430
      %1967 = vmatprep.subr.mxu0 0.0
      %1968 = vmatpush1.msra.mxu0 %v1435
      %1969 = vmatprep.subr.mxu0 0.0
      %1970 = vmatpush1.msra.mxu0 %v1440
      %1971 = vmatprep.subr.mxu0 0.0
      %1972 = vmatpush1.msra.mxu0 %v1445
      %1973 = vmatprep.subr.mxu0 0.0
      %1974 = vmatpush1.msra.mxu0 %v1450
      %1975 = vmatprep.subr.mxu0 0.0
      %1976 = vmatpush1.msra.mxu0 %v1455
      %1977 = vmatprep.subr.mxu0 0.0
      %1978 = vmatpush1.msra.mxu0 %v1460
      %1979 = vmatprep.subr.mxu0 0.0
      %1980 = vmatpush1.msra.mxu0 %v1465
      %1981 = vmatprep.subr.mxu0 0.0
      %1982 = vmatpush1.msra.mxu0 %v1470
      %1983 = vmatprep.subr.mxu0 0.0
      %1984 = vmatpush1.msra.mxu0 %v1475
      %1985 = vmatprep.subr.mxu0 0.0
      %1986 = vmatpush1.msra.mxu0 %v1480
      %1987 = vmatprep.subr.mxu0 0.0
      %1988 = vmatpush1.msra.mxu0 %v1485
      %1989 = vmatprep.subr.mxu0 0.0
      %1990 = vmatpush1.msra.mxu0 %v1490
      %1991 = vmatprep.subr.mxu0 0.0
      %1992 = vmatpush1.msra.mxu0 %v1495
      %1993 = vmatprep.subr.mxu0 0.0
      %1994 = vmatpush1.msra.mxu0 %v1500
      %1995 = vmatprep.subr.mxu0 0.0
      %1996 = vmatpush1.msra.mxu0 %v1505
      %1997 = vmatprep.subr.mxu0 0.0
      %1998 = vmatpush1.msra.mxu0 %v1510
      %1999 = vmatprep.subr.mxu0 0.0
      %2000 = vmatpush1.msra.mxu0 %v1515
      %2001 = vmatprep.subr.mxu0 0.0
      %2002 = vmatpush1.msra.mxu0 %v1520
      %2003 = vmatprep.subr.mxu0 0.0
      %2004 = vmatpush1.msra.mxu0 %v1525
      %2005 = vmatprep.subr.mxu0 0.0
      %2006 = vmatpush1.msra.mxu0 %v1530
      %2007 = vmatprep.subr.mxu0 0.0
      %2008 = vmatpush1.msra.mxu0 %v1535
      %2009 = vmatprep.mubr.f32.mxu0 %v1368
      %2010 = vmatmul.mubr.f32.gmra.mrb[0].mxu0 %v1367
      %v2011 = vpop.f32.mrb[0].mxu0
      %v2012 = vadd.f32 %v1597, %v2011
      %v2013 = vpop.f32.mrb[0].mxu0
      %2014 = vmatprep.mubr.f32.mxu0 %v1371
      %2015 = vmatmul.mubr.f32.gmra.mrb[0].mxu0 %v1370
      %v2016 = vpop.f32.mrb[0].mxu0
      %v2017 = vadd.f32 %v1597, %v2016
      %v2018 = vpop.f32.mrb[0].mxu0
      %2019 = vmatprep.mubr.f32.mxu0 %v1374
      %2020 = vmatmul.mubr.f32.gmra.mrb[0].mxu0 %v1373
      %v2021 = vpop.f32.mrb[0].mxu0
      %v2022 = vadd.f32 %v1597, %v2021
      %v2023 = vpop.f32.mrb[0].mxu0
      %2024 = vdwg.mxu0
      %2025 = vmatprep.subr.mxu0 0.0
      %2026 = vmatpush1.msra.mxu0 %v1540
      %2027 = vmatprep.subr.mxu0 0.0
      %2028 = vmatpush1.msra.mxu0 %v1545
      %2029 = vmatprep.subr.mxu0 0.0
      %2030 = vmatpush1.msra.mxu0 %v1550
      %2031 = vmatprep.subr.mxu0 0.0
      %2032 = vmatpush1.msra.mxu0 %v1555
      %2033 = vmatprep.subr.mxu0 0.0
      %2034 = vmatpush1.msra.mxu0 %v1560
      %2035 = vmatprep.subr.mxu0 0.0
      %2036 = vmatpush1.msra.mxu0 %v1565
      %2037 = vmatprep.subr.mxu0 0.0
      %2038 = vmatpush1.msra.mxu0 %v1570
      %2039 = vmatprep.subr.mxu0 0.0
      %2040 = vmatpush1.msra.mxu0 %v1575
      %2041 = vmatprep.subr.mxu0 0.0
      %2042 = vmatpush1.msra.mxu0 0.0
      %2043 = vmatprep.subr.mxu0 0.0
      %2044 = vmatpush1.msra.mxu0 0.0
      %2045 = vmatprep.subr.mxu0 0.0
      %2046 = vmatpush1.msra.mxu0 0.0
      %2047 = vmatprep.subr.mxu0 0.0
      %2048 = vmatpush1.msra.mxu0 0.0
      %2049 = vmatprep.subr.mxu0 0.0
      %2050 = vmatpush1.msra.mxu0 0.0
      %2051 = vmatprep.subr.mxu0 0.0
      %2052 = vmatpush1.msra.mxu0 0.0
      %2053 = vmatprep.subr.mxu0 0.0
      %2054 = vmatpush1.msra.mxu0 0.0
      %2055 = vmatprep.subr.mxu0 0.0
      %2056 = vmatpush1.msra.mxu0 0.0
      %2057 = vmatprep.subr.mxu0 0.0
      %2058 = vmatpush1.msra.mxu0 0.0
      %2059 = vmatprep.subr.mxu0 0.0
      %2060 = vmatpush1.msra.mxu0 0.0
      %2061 = vmatprep.subr.mxu0 0.0
      %2062 = vmatpush1.msra.mxu0 0.0
      %2063 = vmatprep.subr.mxu0 0.0
      %2064 = vmatpush1.msra.mxu0 0.0
      %2065 = vmatprep.subr.mxu0 0.0
      %2066 = vmatpush1.msra.mxu0 0.0
      %2067 = vmatprep.subr.mxu0 0.0
      %2068 = vmatpush1.msra.mxu0 0.0
      %2069 = vmatprep.subr.mxu0 0.0
      %2070 = vmatpush1.msra.mxu0 0.0
      %2071 = vmatprep.subr.mxu0 0.0
      %2072 = vmatpush1.msra.mxu0 0.0
      %2073 = vmatprep.subr.mxu0 0.0
      %2074 = vmatpush1.msra.mxu0 0.0
      %2075 = vmatprep.subr.mxu0 0.0
      %2076 = vmatpush1.msra.mxu0 0.0
      %2077 = vmatprep.subr.mxu0 0.0
      %2078 = vmatpush1.msra.mxu0 0.0
      %2079 = vmatprep.subr.mxu0 0.0
      %2080 = vmatpush1.msra.mxu0 0.0
      %2081 = vmatprep.subr.mxu0 0.0
      %2082 = vmatpush1.msra.mxu0 0.0
      %2083 = vmatprep.subr.mxu0 0.0
      %2084 = vmatpush1.msra.mxu0 0.0
      %2085 = vmatprep.subr.mxu0 0.0
      %2086 = vmatpush1.msra.mxu0 0.0
      %2087 = vmatprep.subr.mxu0 0.0
      %2088 = vmatpush1.msra.mxu0 0.0
      %2089 = vmatprep.mubr.f32.mxu0 0.0
      %2090 = vmatmul.mubr.f32.gmra.mrb[0].mxu0 %v1605
      %v2091 = vpop.f32.mrb[0].mxu0
      %v2092 = vadd.f32 %v2012, %v2091
      %v2093 = vpop.f32.mrb[0].mxu0
      %2094 = vmatprep.mubr.f32.mxu0 0.0
      %2095 = vmatmul.mubr.f32.gmra.mrb[0].mxu0 %v1608
      %v2096 = vpop.f32.mrb[0].mxu0
      %v2097 = vadd.f32 %v2017, %v2096
      %v2098 = vpop.f32.mrb[0].mxu0
      %2099 = vmatprep.mubr.f32.mxu0 0.0
      %2100 = vmatmul.mubr.f32.gmra.mrb[0].mxu0 %v1611
      %v2101 = vpop.f32.mrb[0].mxu0
      %v2102 = vadd.f32 %v2022, %v2101
      %v2103 = vpop.f32.mrb[0].mxu0
      %2104 = vdwg.mxu0
      %vm2105 = vcmp.ge.f32.partialorder %v1763, 0.0
      %vm2106 = vcmp.ge.f32.partialorder %v1765, 0.0
      %vm2107 = vcmp.ge.f32.partialorder %v1929, 0.0
      %vm2108 = vcmp.ge.f32.partialorder %v1931, 0.0
      %vm2109 = vcmp.ge.f32.partialorder %v2092, 0.0
      %vm2110 = vcmp.ge.f32.partialorder %v1769, 0.0
      %vm2111 = vcmp.ge.f32.partialorder %v1771, 0.0
      %vm2112 = vcmp.ge.f32.partialorder %v1935, 0.0
      %vm2113 = vcmp.ge.f32.partialorder %v1937, 0.0
      %vm2114 = vcmp.ge.f32.partialorder %v2097, 0.0
      %vm2115 = vcmp.ge.f32.partialorder %v1775, 0.0
      %vm2116 = vcmp.ge.f32.partialorder %v1777, 0.0
      %vm2117 = vcmp.ge.f32.partialorder %v1941, 0.0
      %vm2118 = vcmp.ge.f32.partialorder %v1943, 0.0
      %vm2119 = vcmp.ge.f32.partialorder %v2102, 0.0
      %v2120 = vmul.f32 %v1763, 0.01
      %v2121 = vmul.f32 %v1765, 0.01
      %v2122 = vmul.f32 %v1929, 0.01
      %v2123 = vmul.f32 %v1931, 0.01
      %v2124 = vmul.f32 %v2092, 0.01
      %v2125 = vmul.f32 %v1769, 0.01
      %v2126 = vmul.f32 %v1771, 0.01
      %v2127 = vmul.f32 %v1935, 0.01
      %v2128 = vmul.f32 %v1937, 0.01
      %v2129 = vmul.f32 %v2097, 0.01
      %v2130 = vmul.f32 %v1775, 0.01
      %v2131 = vmul.f32 %v1777, 0.01
      %v2132 = vmul.f32 %v1941, 0.01
      %v2133 = vmul.f32 %v1943, 0.01
      %v2134 = vmul.f32 %v2102, 0.01
      %v2135 = vsel %vm2105, %v1763, %v2120
      %v2136 = vsel %vm2106, %v1765, %v2121
      %v2137 = vsel %vm2107, %v1929, %v2122
      %v2138 = vsel %vm2108, %v1931, %v2123
      %v2139 = vsel %vm2109, %v2092, %v2124
      %v2140 = vsel %vm2110, %v1769, %v2125
      %v2141 = vsel %vm2111, %v1771, %v2126
      %v2142 = vsel %vm2112, %v1935, %v2127
      %v2143 = vsel %vm2113, %v1937, %v2128
      %v2144 = vsel %vm2114, %v2097, %v2129
      %v2145 = vsel %vm2115, %v1775, %v2130
      %v2146 = vsel %vm2116, %v1777, %v2131
      %v2147 = vsel %vm2117, %v1941, %v2132
      %v2148 = vsel %vm2118, %v1943, %v2133
      %v2149 = vsel %vm2119, %v2102, %v2134
      %v2150 = vld [vmem:[%s15] sm:$0xff]
      %v2151 = vld [vmem:[%s15 + $0x8] sm:$0xff]
      %v2152 = vld [vmem:[%s15 + $0x10] sm:$0xff]
      %v2153 = vld [vmem:[%s15 + $0x18] sm:$0xff]
      %v2154 = vld [vmem:[%s15 + $0x20] sm:$0xff]
      %v2155 = vld [vmem:[%s15 + $0x28] sm:$0xff]
      %v2156 = vld [vmem:[%s15 + $0x30] sm:$0xff]
      %v2157 = vld [vmem:[%s15 + $0x38] sm:$0xff]
      %v2158 = vld [vmem:[%s15 + $0x40] sm:$0xff]
      %v2159 = vld [vmem:[%s15 + $0x48] sm:$0xff]
      %v2160 = vld [vmem:[%s15 + $0x50] sm:$0xff]
      %v2161 = vld [vmem:[%s15 + $0x58] sm:$0xff]
      %v2162 = vld [vmem:[%s15 + $0x60] sm:$0xff]
      %v2163 = vld [vmem:[%s15 + $0x68] sm:$0xff]
      %v2164 = vld [vmem:[%s15 + $0x70] sm:$0xff]
      %v2165 = vld [vmem:[%s15 + $0x78] sm:$0xff]
      %v2166 = vld [vmem:[%s15 + $0x80] sm:$0xff]
      %v2167 = vld [vmem:[%s15 + $0x88] sm:$0xff]
      %v2168 = vld [vmem:[%s15 + $0x90] sm:$0xff]
      %v2169 = vld [vmem:[%s15 + $0x98] sm:$0xff]
      %v2170 = vld [vmem:[%s15 + $0xa0] sm:$0xff]
      %v2171 = vld [vmem:[%s15 + $0xa8] sm:$0xff]
      %v2172 = vld [vmem:[%s15 + $0xb0] sm:$0xff]
      %v2173 = vld [vmem:[%s15 + $0xb8] sm:$0xff]
      %v2174 = vld [vmem:[%s15 + $0xc0] sm:$0xff]
      %v2175 = vld [vmem:[%s15 + $0xc8] sm:$0xff]
      %v2176 = vld [vmem:[%s15 + $0xd0] sm:$0xff]
      %v2177 = vld [vmem:[%s15 + $0xd8] sm:$0xff]
      %v2178 = vld [vmem:[%s15 + $0xe0] sm:$0xff]
      %v2179 = vld [vmem:[%s15 + $0xe8] sm:$0xff]
      %v2180 = vld [vmem:[%s15 + $0xf0] sm:$0xff]
      %v2181 = vld [vmem:[%s15 + $0xf8] sm:$0xff]
      %v2182 = vld [vmem:[%s15 + $0x100] sm:$0xff]
      %v2183 = vld [vmem:[%s15 + $0x108] sm:$0xff]
      %v2184 = vld [vmem:[%s15 + $0x110] sm:$0xff]
      %v2185 = vld [vmem:[%s15 + $0x118] sm:$0xff]
      %v2186 = vld [vmem:[%s15 + $0x120] sm:$0xff]
      %v2187 = vld [vmem:[%s15 + $0x128] sm:$0xff]
      %v2188 = vld [vmem:[%s15 + $0x130] sm:$0xff]
      %v2189 = vld [vmem:[%s15 + $0x138] sm:$0xff]
      %v2190 = vld [vmem:[%s15 + $0x140] sm:$0xff]
      %v2191 = vld [vmem:[%s15 + $0x148] sm:$0xff]
      %v2192 = vld [vmem:[%s15 + $0x150] sm:$0xff]
      %v2193 = vld [vmem:[%s15 + $0x158] sm:$0xff]
      %v2194 = vld [vmem:[%s15 + $0x160] sm:$0xff]
      %v2195 = vld [vmem:[%s15 + $0x168] sm:$0xff]
      %v2196 = vld [vmem:[%s15 + $0x170] sm:$0xff]
      %v2197 = vld [vmem:[%s15 + $0x178] sm:$0xff]
      %v2198 = vld [vmem:[%s15 + $0x180] sm:$0xff]
      %v2199 = vld [vmem:[%s15 + $0x188] sm:$0xff]
      %v2200 = vld [vmem:[%s15 + $0x190] sm:$0xff]
      %v2201 = vld [vmem:[%s15 + $0x198] sm:$0xff]
      %v2202 = vld [vmem:[%s15 + $0x1a0] sm:$0xff]
      %v2203 = vld [vmem:[%s15 + $0x1a8] sm:$0xff]
      %v2204 = vld [vmem:[%s15 + $0x1b0] sm:$0xff]
      %v2205 = vld [vmem:[%s15 + $0x1b8] sm:$0xff]
      %v2206 = vld [vmem:[%s15 + $0x1c0] sm:$0xff]
      %v2207 = vld [vmem:[%s15 + $0x1c8] sm:$0xff]
      %v2208 = vld [vmem:[%s15 + $0x1d0] sm:$0xff]
      %v2209 = vld [vmem:[%s15 + $0x1d8] sm:$0xff]
      %v2210 = vld [vmem:[%s15 + $0x1e0] sm:$0xff]
      %v2211 = vld [vmem:[%s15 + $0x1e8] sm:$0xff]
      %v2212 = vld [vmem:[%s15 + $0x1f0] sm:$0xff]
      %v2213 = vld [vmem:[%s15 + $0x1f8] sm:$0xff]
      %v2214 = vld [vmem:[%s15 + $0x200] sm:$0xff]
      %v2215 = vld [vmem:[%s15 + $0x208] sm:$0xff]
      %v2216 = vld [vmem:[%s15 + $0x210] sm:$0xff]
      %v2217 = vld [vmem:[%s15 + $0x218] sm:$0xff]
      %v2218 = vld [vmem:[%s15 + $0x220] sm:$0xff]
      %v2219 = vld [vmem:[%s15 + $0x228] sm:$0xff]
      %v2220 = vld [vmem:[%s15 + $0x230] sm:$0xff]
      %v2221 = vld [vmem:[%s15 + $0x238] sm:$0xff]
      %v2222 = vld [vmem:[%s15 + $0x240] sm:$0xff]
      %v2223 = vld [vmem:[%s15 + $0x248] sm:$0xff]
      %v2224 = vld [vmem:[%s15 + $0x250] sm:$0xff]
      %v2225 = vld [vmem:[%s15 + $0x258] sm:$0xff]
      %v2226 = vld [vmem:[%s15 + $0x260] sm:$0xff]
      %v2227 = vld [vmem:[%s15 + $0x268] sm:$0xff]
      %v2228 = vld [vmem:[%s15 + $0x270] sm:$0xff]
      %v2229 = vld [vmem:[%s15 + $0x278] sm:$0xff]
      %v2230 = vld [vmem:[%s16] sm:$0x1]
      %v2232 = vlaneseq
      %v2233 = vshrl.u32 %v2232, 7
      %v2234 = vsub.s32 0, %v2233
      %v2235 = vrot.slane %v2230, %v2234
      %2237 = vmatprep.subr.mxu0 0.0
      %2238 = vmatpush1.msra.mxu0 %v2150
      %2239 = vmatprep.subr.mxu0 0.0
      %2240 = vmatpush1.msra.mxu0 %v2151
      %2241 = vmatprep.subr.mxu0 0.0
      %2242 = vmatpush1.msra.mxu0 %v2152
      %2243 = vmatprep.subr.mxu0 0.0
      %2244 = vmatpush1.msra.mxu0 %v2153
      %2245 = vmatprep.subr.mxu0 0.0
      %2246 = vmatpush1.msra.mxu0 %v2154
      %2247 = vmatprep.subr.mxu0 0.0
      %2248 = vmatpush1.msra.mxu0 %v2155
      %2249 = vmatprep.subr.mxu0 0.0
      %2250 = vmatpush1.msra.mxu0 %v2156
      %2251 = vmatprep.subr.mxu0 0.0
      %2252 = vmatpush1.msra.mxu0 %v2157
      %2253 = vmatprep.subr.mxu0 0.0
      %2254 = vmatpush1.msra.mxu0 %v2158
      %2255 = vmatprep.subr.mxu0 0.0
      %2256 = vmatpush1.msra.mxu0 %v2159
      %2257 = vmatprep.subr.mxu0 0.0
      %2258 = vmatpush1.msra.mxu0 %v2160
      %2259 = vmatprep.subr.mxu0 0.0
      %2260 = vmatpush1.msra.mxu0 %v2161
      %2261 = vmatprep.subr.mxu0 0.0
      %2262 = vmatpush1.msra.mxu0 %v2162
      %2263 = vmatprep.subr.mxu0 0.0
      %2264 = vmatpush1.msra.mxu0 %v2163
      %2265 = vmatprep.subr.mxu0 0.0
      %2266 = vmatpush1.msra.mxu0 %v2164
      %2267 = vmatprep.subr.mxu0 0.0
      %2268 = vmatpush1.msra.mxu0 %v2165
      %2269 = vmatprep.subr.mxu0 0.0
      %2270 = vmatpush1.msra.mxu0 %v2166
      %2271 = vmatprep.subr.mxu0 0.0
      %2272 = vmatpush1.msra.mxu0 %v2167
      %2273 = vmatprep.subr.mxu0 0.0
      %2274 = vmatpush1.msra.mxu0 %v2168
      %2275 = vmatprep.subr.mxu0 0.0
      %2276 = vmatpush1.msra.mxu0 %v2169
      %2277 = vmatprep.subr.mxu0 0.0
      %2278 = vmatpush1.msra.mxu0 %v2170
      %2279 = vmatprep.subr.mxu0 0.0
      %2280 = vmatpush1.msra.mxu0 %v2171
      %2281 = vmatprep.subr.mxu0 0.0
      %2282 = vmatpush1.msra.mxu0 %v2172
      %2283 = vmatprep.subr.mxu0 0.0
      %2284 = vmatpush1.msra.mxu0 %v2173
      %2285 = vmatprep.subr.mxu0 0.0
      %2286 = vmatpush1.msra.mxu0 %v2174
      %2287 = vmatprep.subr.mxu0 0.0
      %2288 = vmatpush1.msra.mxu0 %v2175
      %2289 = vmatprep.subr.mxu0 0.0
      %2290 = vmatpush1.msra.mxu0 %v2176
      %2291 = vmatprep.subr.mxu0 0.0
      %2292 = vmatpush1.msra.mxu0 %v2177
      %2293 = vmatprep.subr.mxu0 0.0
      %2294 = vmatpush1.msra.mxu0 %v2178
      %2295 = vmatprep.subr.mxu0 0.0
      %2296 = vmatpush1.msra.mxu0 %v2179
      %2297 = vmatprep.subr.mxu0 0.0
      %2298 = vmatpush1.msra.mxu0 %v2180
      %2299 = vmatprep.subr.mxu0 0.0
      %2300 = vmatpush1.msra.mxu0 %v2181
      %2301 = vmatprep.mubr.f32.mxu0 %v2136
      %2302 = vmatmul.mubr.f32.gmra.mrb[0].mxu0 %v2135
      %v2303 = vpop.f32.mrb[0].mxu0
      %v2304 = vadd.f32 %v2235, %v2303
      %v2305 = vpop.f32.mrb[0].mxu0
      %2306 = vmatprep.mubr.f32.mxu0 %v2141
      %2307 = vmatmul.mubr.f32.gmra.mrb[0].mxu0 %v2140
      %v2308 = vpop.f32.mrb[0].mxu0
      %v2309 = vadd.f32 %v2235, %v2308
      %v2310 = vpop.f32.mrb[0].mxu0
      %2311 = vmatprep.mubr.f32.mxu0 %v2146
      %2312 = vmatmul.mubr.f32.gmra.mrb[0].mxu0 %v2145
      %v2313 = vpop.f32.mrb[0].mxu0
      %v2314 = vadd.f32 %v2235, %v2313
      %v2315 = vpop.f32.mrb[0].mxu0
      %2316 = vdwg.mxu0
      %2317 = vmatprep.subr.mxu0 0.0
      %2318 = vmatpush1.msra.mxu0 %v2182
      %2319 = vmatprep.subr.mxu0 0.0
      %2320 = vmatpush1.msra.mxu0 %v2183
      %2321 = vmatprep.subr.mxu0 0.0
      %2322 = vmatpush1.msra.mxu0 %v2184
      %2323 = vmatprep.subr.mxu0 0.0
      %2324 = vmatpush1.msra.mxu0 %v2185
      %2325 = vmatprep.subr.mxu0 0.0
      %2326 = vmatpush1.msra.mxu0 %v2186
      %2327 = vmatprep.subr.mxu0 0.0
      %2328 = vmatpush1.msra.mxu0 %v2187
      %2329 = vmatprep.subr.mxu0 0.0
      %2330 = vmatpush1.msra.mxu0 %v2188
      %2331 = vmatprep.subr.mxu0 0.0
      %2332 = vmatpush1.msra.mxu0 %v2189
      %2333 = vmatprep.subr.mxu0 0.0
      %2334 = vmatpush1.msra.mxu0 %v2190
      %2335 = vmatprep.subr.mxu0 0.0
      %2336 = vmatpush1.msra.mxu0 %v2191
      %2337 = vmatprep.subr.mxu0 0.0
      %2338 = vmatpush1.msra.mxu0 %v2192
      %2339 = vmatprep.subr.mxu0 0.0
      %2340 = vmatpush1.msra.mxu0 %v2193
      %2341 = vmatprep.subr.mxu0 0.0
      %2342 = vmatpush1.msra.mxu0 %v2194
      %2343 = vmatprep.subr.mxu0 0.0
      %2344 = vmatpush1.msra.mxu0 %v2195
      %2345 = vmatprep.subr.mxu0 0.0
      %2346 = vmatpush1.msra.mxu0 %v2196
      %2347 = vmatprep.subr.mxu0 0.0
      %2348 = vmatpush1.msra.mxu0 %v2197
      %2349 = vmatprep.subr.mxu0 0.0
      %2350 = vmatpush1.msra.mxu0 %v2198
      %2351 = vmatprep.subr.mxu0 0.0
      %2352 = vmatpush1.msra.mxu0 %v2199
      %2353 = vmatprep.subr.mxu0 0.0
      %2354 = vmatpush1.msra.mxu0 %v2200
      %2355 = vmatprep.subr.mxu0 0.0
      %2356 = vmatpush1.msra.mxu0 %v2201
      %2357 = vmatprep.subr.mxu0 0.0
      %2358 = vmatpush1.msra.mxu0 %v2202
      %2359 = vmatprep.subr.mxu0 0.0
      %2360 = vmatpush1.msra.mxu0 %v2203
      %2361 = vmatprep.subr.mxu0 0.0
      %2362 = vmatpush1.msra.mxu0 %v2204
      %2363 = vmatprep.subr.mxu0 0.0
      %2364 = vmatpush1.msra.mxu0 %v2205
      %2365 = vmatprep.subr.mxu0 0.0
      %2366 = vmatpush1.msra.mxu0 %v2206
      %2367 = vmatprep.subr.mxu0 0.0
      %2368 = vmatpush1.msra.mxu0 %v2207
      %2369 = vmatprep.subr.mxu0 0.0
      %2370 = vmatpush1.msra.mxu0 %v2208
      %2371 = vmatprep.subr.mxu0 0.0
      %2372 = vmatpush1.msra.mxu0 %v2209
      %2373 = vmatprep.subr.mxu0 0.0
      %2374 = vmatpush1.msra.mxu0 %v2210
      %2375 = vmatprep.subr.mxu0 0.0
      %2376 = vmatpush1.msra.mxu0 %v2211
      %2377 = vmatprep.subr.mxu0 0.0
      %2378 = vmatpush1.msra.mxu0 %v2212
      %2379 = vmatprep.subr.mxu0 0.0
      %2380 = vmatpush1.msra.mxu0 %v2213
      %2381 = vmatprep.mubr.f32.mxu0 %v2138
      %2382 = vmatmul.mubr.f32.gmra.mrb[0].mxu0 %v2137
      %v2383 = vpop.f32.mrb[0].mxu0
      %v2384 = vadd.f32 %v2304, %v2383
      %v2385 = vpop.f32.mrb[0].mxu0
      %2386 = vmatprep.mubr.f32.mxu0 %v2143
      %2387 = vmatmul.mubr.f32.gmra.mrb[0].mxu0 %v2142
      %v2388 = vpop.f32.mrb[0].mxu0
      %v2389 = vadd.f32 %v2309, %v2388
      %v2390 = vpop.f32.mrb[0].mxu0
      %2391 = vmatprep.mubr.f32.mxu0 %v2148
      %2392 = vmatmul.mubr.f32.gmra.mrb[0].mxu0 %v2147
      %v2393 = vpop.f32.mrb[0].mxu0
      %v2394 = vadd.f32 %v2314, %v2393
      %v2395 = vpop.f32.mrb[0].mxu0
      %2396 = vdwg.mxu0
      %2397 = vmatprep.subr.mxu0 0.0
      %2398 = vmatpush1.msra.mxu0 %v2214
      %2399 = vmatprep.subr.mxu0 0.0
      %2400 = vmatpush1.msra.mxu0 %v2215
      %2401 = vmatprep.subr.mxu0 0.0
      %2402 = vmatpush1.msra.mxu0 %v2216
      %2403 = vmatprep.subr.mxu0 0.0
      %2404 = vmatpush1.msra.mxu0 %v2217
      %2405 = vmatprep.subr.mxu0 0.0
      %2406 = vmatpush1.msra.mxu0 %v2218
      %2407 = vmatprep.subr.mxu0 0.0
      %2408 = vmatpush1.msra.mxu0 %v2219
      %2409 = vmatprep.subr.mxu0 0.0
      %2410 = vmatpush1.msra.mxu0 %v2220
      %2411 = vmatprep.subr.mxu0 0.0
      %2412 = vmatpush1.msra.mxu0 %v2221
      %2413 = vmatprep.subr.mxu0 0.0
      %2414 = vmatpush1.msra.mxu0 %v2222
      %2415 = vmatprep.subr.mxu0 0.0
      %2416 = vmatpush1.msra.mxu0 %v2223
      %2417 = vmatprep.subr.mxu0 0.0
      %2418 = vmatpush1.msra.mxu0 %v2224
      %2419 = vmatprep.subr.mxu0 0.0
      %2420 = vmatpush1.msra.mxu0 %v2225
      %2421 = vmatprep.subr.mxu0 0.0
      %2422 = vmatpush1.msra.mxu0 %v2226
      %2423 = vmatprep.subr.mxu0 0.0
      %2424 = vmatpush1.msra.mxu0 %v2227
      %2425 = vmatprep.subr.mxu0 0.0
      %2426 = vmatpush1.msra.mxu0 %v2228
      %2427 = vmatprep.subr.mxu0 0.0
      %2428 = vmatpush1.msra.mxu0 %v2229
      %2429 = vmatprep.subr.mxu0 0.0
      %2430 = vmatpush1.msra.mxu0 0.0
      %2431 = vmatprep.subr.mxu0 0.0
      %2432 = vmatpush1.msra.mxu0 0.0
      %2433 = vmatprep.subr.mxu0 0.0
      %2434 = vmatpush1.msra.mxu0 0.0
      %2435 = vmatprep.subr.mxu0 0.0
      %2436 = vmatpush1.msra.mxu0 0.0
      %2437 = vmatprep.subr.mxu0 0.0
      %2438 = vmatpush1.msra.mxu0 0.0
      %2439 = vmatprep.subr.mxu0 0.0
      %2440 = vmatpush1.msra.mxu0 0.0
      %2441 = vmatprep.subr.mxu0 0.0
      %2442 = vmatpush1.msra.mxu0 0.0
      %2443 = vmatprep.subr.mxu0 0.0
      %2444 = vmatpush1.msra.mxu0 0.0
      %2445 = vmatprep.subr.mxu0 0.0
      %2446 = vmatpush1.msra.mxu0 0.0
      %2447 = vmatprep.subr.mxu0 0.0
      %2448 = vmatpush1.msra.mxu0 0.0
      %2449 = vmatprep.subr.mxu0 0.0
      %2450 = vmatpush1.msra.mxu0 0.0
      %2451 = vmatprep.subr.mxu0 0.0
      %2452 = vmatpush1.msra.mxu0 0.0
      %2453 = vmatprep.subr.mxu0 0.0
      %2454 = vmatpush1.msra.mxu0 0.0
      %2455 = vmatprep.subr.mxu0 0.0
      %2456 = vmatpush1.msra.mxu0 0.0
      %2457 = vmatprep.subr.mxu0 0.0
      %2458 = vmatpush1.msra.mxu0 0.0
      %2459 = vmatprep.subr.mxu0 0.0
      %2460 = vmatpush1.msra.mxu0 0.0
      %2461 = vmatprep.mubr.f32.mxu0 0.0
      %2462 = vmatmul.mubr.f32.gmra.mrb[0].mxu0 %v2139
      %v2463 = vpop.f32.mrb[0].mxu0
      %v2464 = vadd.f32 %v2384, %v2463
      %v2465 = vpop.f32.mrb[0].mxu0
      %2466 = vmatprep.mubr.f32.mxu0 0.0
      %2467 = vmatmul.mubr.f32.gmra.mrb[0].mxu0 %v2144
      %v2468 = vpop.f32.mrb[0].mxu0
      %v2469 = vadd.f32 %v2389, %v2468
      %v2470 = vpop.f32.mrb[0].mxu0
      %2471 = vmatprep.mubr.f32.mxu0 0.0
      %2472 = vmatmul.mubr.f32.gmra.mrb[0].mxu0 %v2149
      %v2473 = vpop.f32.mrb[0].mxu0
      %v2474 = vadd.f32 %v2394, %v2473
      %v2475 = vpop.f32.mrb[0].mxu0
      %2476 = vdwg.mxu0
      %2477 = vst [vmem:[%s672] sm:$0xff] %v2464
      %2478 = vst [vmem:[%s672 + $0x8] sm:$0xff] %v2469
      %2479 = vst [vmem:[%s672 + $0x10] sm:$0xff] %v2474
      %s2480 = smul.u32 3, %s33
      %p2481 = scmp.lt.s32.totalorder %s32, 1
      %s2482 = scalar_select %p2481, %s32, 1
      %p2483 = scmp.lt.s32.totalorder %s2480, 2
      %s2484 = scalar_select %p2483, %s2480, 2
      %s2485 = smul.addr %s2482, 3
      %s2486 = sadd.s32 %s2484, %s2485
      %s2487 = smul.addr %s2486, 8
      %s2488 = scalar_lea.vmem %s17, %s2487
      // Predicated region
      $region89: #{hidta_forward.11} parent=87 // pred_check
        %p2489 = pneg %p442
      $region90: #{hidta_forward.11} parent=87 // pred_check_branch
        %2491 = sbr.rel (%p2489) target = $region92
      $region91: #{hidta_forward.11} parent=87 // pred_region
        %s2492 = smul.u32 3, %s33
      $region92: #{hidta_forward.11} parent=87 // pred_fallthru
        _
    $region88: #{hidta_forward.11} parent=5 // pred_fallthru
      _
    %p2493 = scmp.le.s32.totalorder 2, %s23
    // Predicated region
    $region93: #{hidta_forward.11} parent=5 // pred_check
      %p2494 = pneg %p2493
    $region94: #{hidta_forward.11} parent=5 // pred_check_branch
      %2496 = sbr.rel (%p2494) target = $region96
    $region95: #{hidta_forward.11} parent=5 // pred_region
      %s2497 = ssub.s32 %s23, 2
      // Predicated region
      $region97: #{hidta_forward.11} parent=95 // pred_check
        %p2498 = pneg %p448
      $region98: #{hidta_forward.11} parent=95 // pred_check_branch
        %2500 = sbr.rel (%p2498) target = $region100
      $region99: #{hidta_forward.11} parent=95 // pred_region
        %s2501 = smul.u32 3, %s35
        %p2502 = scmp.lt.s32.totalorder %s34, 1
        %s2503 = scalar_select %p2502, %s34, 1
        %p2504 = scmp.lt.s32.totalorder %s2501, 2
        %s2505 = scalar_select %p2504, %s2501, 2
        %s2506 = smul.addr %s2503, 3
        %s2507 = sadd.s32 %s2505, %s2506
        %s2508 = smul.addr %s2507, 8
        %s2509 = scalar_lea.vmem %s17, %s2508
      $region100: #{hidta_forward.11} parent=95 // pred_fallthru
        _
    $region96: #{hidta_forward.11} parent=5 // pred_fallthru
      _
  $region6: #{hidta_forward.11} parent=0 // loop_footer
    %s27 = sadd.s32 1, %s23
  $region7: #{hidta_forward.11} parent=0 // loop_footer_branch
    %22 = sbr.rel target = $region3
  $region8: #{hidta_forward.11} parent=0 // loop_exit
    _

</llo_original>
